<compile_context>
chip_gen: v7x
topology: tpu7x:2x2x1
jax: 0.10.0
libtpu: 0.0.40
codegen_flags: <defaults>
</compile_context>

<pallas_src>
import functools

import jax
import jax.numpy as jnp
import numpy as np
from jax import lax
from jax.experimental import pallas as pl
from jax.experimental.pallas import tpu as pltpu

CH = 128  # in-kernel activations carry 128 channels (lane-aligned)


# ------------------------------ fused kernel --------------------------------

def decoder_kernel(x_ref, w1_ref, b1_ref, r0w3_ref, r0w1_ref, r1w3_ref, r1w1_ref,
                   wt1_ref, bt1_ref, wt2_ref, bt2_ref, out_ref,
                   pad_ref, ppad_ref, slab_ref, slab2_ref, *, H, W, NB):
    f32 = jnp.float32
    HW = H * W
    HP = H + 2
    Wp = pad_ref.shape[2]                      # sublane-rounded padded width

    # --- zero ONLY the 1-pixel halos (interiors are fully rewritten below) ---
    row0 = jnp.zeros((NB, 1, Wp, CH), f32)
    col0 = jnp.zeros((NB, HP, 1, CH), f32)
    pad_ref[:, pl.ds(0, 1), :, :] = row0
    pad_ref[:, pl.ds(H + 1, 1), :, :] = row0
    pad_ref[:, :, pl.ds(0, 1), :] = col0
    pad_ref[:, :, pl.ds(W + 1, 1), :] = col0
    pcol0 = jnp.zeros((NB, 4 * HP, 1, CH), f32)
    for k in range(4):
        ppad_ref[:, pl.ds(k * HP, 1), :, :] = row0
        ppad_ref[:, pl.ds(k * HP + H + 1, 1), :, :] = row0
    ppad_ref[:, :, pl.ds(0, 1), :] = pcol0
    ppad_ref[:, :, pl.ds(W + 1, 1), :] = pcol0

    def im2col3(v):
        """(NB, H, W, 128) -> (NB*H*W, 9*128): all 3x3-window taps, written by
        direct stores into the shared VMEM slab scratch (no concatenates)."""
        pad_ref[:, pl.ds(1, H), pl.ds(1, W), :] = v
        for t in range(9):
            i, j = divmod(t, 3)
            slab_ref[:, :, :, pl.ds(t * CH, CH)] = \
                pad_ref[:, pl.ds(i, H), pl.ds(j, W), :]
        return slab_ref[...].reshape(NB * HW, 9 * CH)

    # ---- _conv_1: 3x3, 64 (zero-padded to 128) -> 128, pad 1, bias ----------
    h = jnp.dot(im2col3(x_ref[...]), w1_ref[...],
                preferred_element_type=f32) + b1_ref[...]          # (NB*HW, 128)

    # ---- ResidualStack: 2 x [ReLU -> 3x3 (->32, lane-padded) -> ReLU -> 1x1 -> +x]
    for w3_ref, w1x_ref in ((r0w3_ref, r0w1_ref), (r1w3_ref, r1w1_ref)):
        a = jnp.maximum(h, 0.0).reshape(NB, H, W, CH)
        t = jnp.maximum(jnp.dot(im2col3(a), w3_ref[...],
                                preferred_element_type=f32), 0.0)  # (NB*HW, 128)
        h = h + jnp.dot(t, w1x_ref[...], preferred_element_type=f32)
    h = jnp.maximum(h, 0.0)                    # trailing ReLU of the stack

    # ---- _conv_trans_1: 4x4 stride 2 pad 1, 128 -> 64, + ReLU ---------------
    # Sub-pixel phase decomposition; all 4 phases come from ONE
    # (NB*HW,1152)x(1152,512) matmul (phase-major 128-lane column groups),
    # then 4 sliced stores into the padded phase planes.
    slab1 = im2col3(h.reshape(NB, H, W, CH))
    p4 = jnp.maximum(jnp.dot(slab1, wt1_ref[...], preferred_element_type=f32)
                     + bt1_ref[...], 0.0)                          # (NB*HW, 512)
    for k in range(4):                                             # k = ph*2 + pw
        ppad_ref[:, pl.ds(k * HP + 1, H), pl.ds(1, W), :] = \
            p4[:, k * CH:(k + 1) * CH].reshape(NB, H, W, CH)

    # ---- _conv_trans_2: 4x4 stride 2 pad 1, 64 -> 3 (lane-padded to 128) ----
    # The (2H, 2W) intermediate is never materialised: for each parity class
    # (alpha, beta) of its virtual input grid the 3x3-window taps are static
    # slices of the padded conv_trans_1 phase planes, copied straight into the
    # slab2 scratch; one big dot produces all 4*H*W output rows, lane-dense.
    for cls in range(4):                                           # cls = alpha*2 + beta
        alpha, beta = divmod(cls, 2)
        for ti in range(3):
            gh = alpha + ti - 1
            ph, oh = gh % 2, (gh + 2) // 2
            for tj in range(3):
                gw = beta + tj - 1
                pw, ow = gw % 2, (gw + 2) // 2
                tap = ti * 3 + tj
                slab2_ref[:, pl.ds(cls * H, H), :, pl.ds(tap * CH, CH)] = \
                    ppad_ref[:, pl.ds((ph * 2 + pw) * HP + oh, H), pl.ds(ow, W), :]
    z = jnp.dot(slab2_ref[...].reshape(NB * 4 * HW, 9 * CH), wt2_ref[...],
                preferred_element_type=f32) + bt2_ref[...]         # (NB*4HW, 128)
    out_ref[...] = z.reshape(NB, 4 * HW, CH)   # rows (a,b,q,r); lanes (ph,pw,co)+pad


# ------------------------------- wrapper -------------------------------------

def decoder_forward(x_nchw, pp, *, batch_block=1):
    """x_nchw: (N, 64, H, W) f32.  Returns (N, 3, 4H, 4W).

    batch_block: samples folded into one grid step.  Use 1 on v7x (2 TCs keep
    busy via the parallel batch grid); use N on single-TC v5e/v6e.
    """
    N, Cin, H, W = x_nchw.shape
    NB = batch_block
    assert N % NB == 0
    HW = H * W
    Wp = ((W + 2 + 7) // 8) * 8                # sublane-rounded padded width

    x = jnp.transpose(x_nchw, (0, 2, 3, 1)).astype(jnp.float32)    # NHWC
    x = jnp.pad(x, ((0, 0), (0, 0), (0, 0), (0, CH - Cin)))        # lane-align channels

    weights = (pp['w1'], pp['b1'], pp['r0w3'], pp['r0w1'], pp['r1w3'], pp['r1w1'],
               pp['wt1'], pp['bt1'], pp['wt2'], pp['bt2'])

    def _full(a):
        nd = a.ndim
        return pl.BlockSpec(a.shape, lambda n, _nd=nd: (0,) * _nd)

    out_packed = pl.pallas_call(
        functools.partial(decoder_kernel, H=H, W=W, NB=NB),
        grid=(N // NB,),
        in_specs=[pl.BlockSpec((NB, H, W, CH), lambda n: (n, 0, 0, 0))]
                 + [_full(w) for w in weights],
        out_specs=pl.BlockSpec((NB, 4 * HW, CH), lambda n: (n, 0, 0)),
        out_shape=jax.ShapeDtypeStruct((N, 4 * HW, CH), jnp.float32),
        scratch_shapes=[
            pltpu.VMEM((NB, H + 2, Wp, CH), jnp.float32),          # padded plane
            pltpu.VMEM((NB, 4 * (H + 2), Wp, CH), jnp.float32),    # padded convT1 phases
            pltpu.VMEM((NB, H, W, 9 * CH), jnp.float32),           # shared im2col slab
            pltpu.VMEM((NB, 4 * H, W, 9 * CH), jnp.float32),       # convT2 slab
        ],
        compiler_params=pltpu.CompilerParams(
            dimension_semantics=("parallel",),
            vmem_limit_bytes=48 * 1024 * 1024,
        ),
    )(x, *weights)

    # keep the 12 real lanes, then de-interleave the 4x4 phase packing -> NCHW
    z = out_packed[..., :12].reshape(N, 2, 2, H, W, 2, 2, 3)  # (n,a,b,q,r,ph2,pw2,co)
    z = z.transpose(0, 7, 3, 1, 5, 4, 2, 6).reshape(N, 3, 4 * H, 4 * W)
    return z


# --------------------------- one-time weight prep ----------------------------

def _pack_convt_weight(wt):
    """torch ConvTranspose2d weight (Cin, Cout, 4, 4), stride 2, pad 1 ->
    combined 3x3-window weight (9*Cin, 4*Cout); output columns ordered
    (ph, pw, co) where (ph, pw) is the output sub-pixel phase."""
    wt = np.asarray(wt, np.float32)
    Cin, Cout = wt.shape[0], wt.shape[1]
    w = np.zeros((3, 3, Cin, 2, 2, Cout), np.float32)
    for ph in range(2):
        for pw in range(2):
            for dh in range(2):
                for dw in range(2):
                    w[ph + dh, pw + dw, :, ph, pw, :] = \
                        wt[:, :, 3 - ph - 2 * dh, 3 - pw - 2 * dw]
    return jnp.asarray(w.reshape(9 * Cin, 4 * Cout))


def prepare_params(p):
    """Hoisted, one-time packing of the torch-layout params for the kernel."""
    f32 = jnp.float32
    # conv_1: zero-pad Cin 64 -> 128 so every im2col piece is lane-aligned.
    w1 = jnp.pad(p['w1'], ((0, 0), (0, 0), (0, CH - 64), (0, 0))).reshape(9 * CH, CH)
    # residual bottleneck padded to 128 lanes (zero cols / rows).
    r0w3 = jnp.pad(p['res0_w3'].reshape(9 * CH, 32), ((0, 0), (0, CH - 32)))
    r1w3 = jnp.pad(p['res1_w3'].reshape(9 * CH, 32), ((0, 0), (0, CH - 32)))
    r0w1 = jnp.pad(p['res0_w1'].reshape(32, CH), ((0, CH - 32), (0, 0)))
    r1w1 = jnp.pad(p['res1_w1'].reshape(32, CH), ((0, CH - 32), (0, 0)))
    # conv_trans_1: phase-major (1152, 512), each phase a 128-lane group.
    wt1c = _pack_convt_weight(p['wt1'])                               # (1152, 256)
    wt1 = jnp.pad(wt1c.reshape(9 * CH, 4, 64),
                  ((0, 0), (0, 0), (0, CH - 64))).reshape(9 * CH, 4 * CH)
    bt1 = jnp.tile(jnp.pad(p['bt1'], (0, CH - 64)), 4).reshape(1, 4 * CH)
    # conv_trans_2: input channels padded 64 -> 128, output lanes padded 12 -> 128.
    wt2c = _pack_convt_weight(p['wt2'])                               # (576, 12)
    wt2 = jnp.pad(wt2c.reshape(9, 64, 12),
                  ((0, 0), (0, CH - 64), (0, 0))).reshape(9 * CH, 12)
    wt2 = jnp.pad(wt2, ((0, 0), (0, CH - 12)))                        # lane-dense output
    bt2 = jnp.pad(jnp.tile(p['bt2'], 4), (0, CH - 12)).reshape(1, CH)
    return {
        'w1': w1.astype(f32), 'b1': p['b1'].reshape(1, CH).astype(f32),
        'r0w3': r0w3.astype(f32), 'r0w1': r0w1.astype(f32),
        'r1w3': r1w3.astype(f32), 'r1w1': r1w1.astype(f32),
        'wt1': wt1.astype(f32), 'bt1': bt1.astype(f32),
        'wt2': wt2.astype(f32), 'bt2': bt2.astype(f32),
    }


# --------------------------- deterministic params ----------------------------

def init_params(key):
    ks = jax.random.split(key, 8)
    s = 0.05
    return {
        'w1':      jax.random.normal(ks[0], (3, 3, 64, 128), jnp.float32) * s,   # HWIO
        'b1':      jax.random.normal(ks[1], (128,), jnp.float32) * s,
        'res0_w3': jax.random.normal(ks[2], (3, 3, 128, 32), jnp.float32) * s,
        'res0_w1': jax.random.normal(ks[3], (1, 1, 32, 128), jnp.float32) * s,
        'res1_w3': jax.random.normal(ks[4], (3, 3, 128, 32), jnp.float32) * s,
        'res1_w1': jax.random.normal(ks[5], (1, 1, 32, 128), jnp.float32) * s,
        # torch ConvTranspose2d weight layout: (Cin, Cout, K, K)
        'wt1':     jax.random.normal(ks[6], (128, 64, 4, 4), jnp.float32) * s,
        'bt1':     jnp.linspace(-0.1, 0.1, 64).astype(jnp.float32),
        'wt2':     jax.random.normal(ks[7], (64, 3, 4, 4), jnp.float32) * s,
        'bt2':     jnp.array([0.01, -0.02, 0.03], jnp.float32),
    }


# ------------------------------ pure-JAX reference ---------------------------
# Full f32 reference (HIGHEST precision); the kernel is f32 end-to-end too, so
# the only differences are summation order inside the contractions.

def _ref_forward(x_nchw, p):
    dn = ('NHWC', 'HWIO', 'NHWC')
    hi = lax.Precision.HIGHEST

    def conv(x, w, b, pad):
        return lax.conv_general_dilated(
            x, w, (1, 1), ((pad, pad), (pad, pad)),
            dimension_numbers=dn, precision=hi) + b

    def convt(x, wt, b, K=4, stride=2, pad=1):
        w = jnp.flip(wt, axis=(2, 3)).transpose(2, 3, 0, 1)
        p2 = K - 1 - pad
        return lax.conv_general_dilated(
            x, w, (1, 1), ((p2, p2), (p2, p2)),
            lhs_dilation=(stride, stride), dimension_numbers=dn,
            precision=hi) + b

    x = jnp.transpose(x_nchw, (0, 2, 3, 1)).astype(jnp.float32)
    x = conv(x, p['w1'], p['b1'], 1)
    for i in range(2):
        t = jnp.maximum(conv(jnp.maximum(x, 0.0), p[f'res{i}_w3'], 0.0, 1), 0.0)
        x = x + conv(t, p[f'res{i}_w1'], 0.0, 0)
    x = jnp.maximum(x, 0.0)
    x = jnp.maximum(convt(x, p['wt1'], p['bt1']), 0.0)
    x = convt(x, p['wt2'], p['bt2'])
    return jnp.transpose(x, (0, 3, 1, 2))


# ------------------------------------ main ------------------------------------

if __name__ == "__main__":
    torch_params = init_params(jax.random.PRNGKey(1))
    pp = prepare_params(torch_params)

    # small shapes consistent with the module: N=2, C=64, H=W=8
    x = jax.random.normal(jax.random.PRNGKey(0), (2, 64, 8, 8), jnp.float32)

    ref = jax.block_until_ready(_ref_forward(x, torch_params))

    # v7x-style: one sample per grid step, batch grid marked "parallel".
    fwd1 = jax.jit(functools.partial(decoder_forward, batch_block=1))
    out1 = jax.block_until_ready(fwd1(x, pp))
    assert out1.shape == (2, 3, 32, 32), out1.shape
    np.testing.assert_allclose(np.asarray(out1), np.asarray(ref),
                               rtol=1e-2, atol=2e-3)

    # v5e/v6e-style: whole batch folded into one grid step (bigger matmul M,
    # no per-step grid overhead on single-TC chips).
    fwd2 = jax.jit(functools.partial(decoder_forward, batch_block=2))
    out2 = jax.block_until_ready(fwd2(x, pp))
    np.testing.assert_allclose(np.asarray(out2), np.asarray(ref),
                               rtol=1e-2, atol=2e-3)

    print("KERNEL_OK")
</pallas_src>

<mosaic_0001>
module attributes {stable_mosaic.version = 11 : i64} {
  func.func @decoder_kernel(%arg0: i32, %arg1: memref<1x8x8x128xf32, #tpu.memory_space<vmem>>, %arg2: memref<1152x128xf32, #tpu.memory_space<vmem>>, %arg3: memref<1x128xf32, #tpu.memory_space<vmem>>, %arg4: memref<1152x128xf32, #tpu.memory_space<vmem>>, %arg5: memref<128x128xf32, #tpu.memory_space<vmem>>, %arg6: memref<1152x128xf32, #tpu.memory_space<vmem>>, %arg7: memref<128x128xf32, #tpu.memory_space<vmem>>, %arg8: memref<1152x512xf32, #tpu.memory_space<vmem>>, %arg9: memref<1x512xf32, #tpu.memory_space<vmem>>, %arg10: memref<1152x128xf32, #tpu.memory_space<vmem>>, %arg11: memref<1x128xf32, #tpu.memory_space<vmem>>, %arg12: memref<1x256x128xf32, #tpu.memory_space<vmem>>, %arg13: memref<1x10x16x128xf32, #tpu.memory_space<vmem>>, %arg14: memref<1x40x16x128xf32, #tpu.memory_space<vmem>>, %arg15: memref<1x8x8x1152xf32, #tpu.memory_space<vmem>>, %arg16: memref<1x32x8x1152xf32, #tpu.memory_space<vmem>>) attributes {dimension_semantics = [#tpu.dimension_semantics<parallel>], iteration_bounds = array<i64: 2>, scalar_prefetch = 0 : i64, scratch_operands = 4 : i64, tpu.core_type = #tpu.core_type<tc>, window_params = [{transform_indices = @transform_0, window_bounds = array<i64: 1, 8, 8, 128>}, {pipeline_mode = #tpu.pipeline_mode<synchronous>, transform_indices = @transform_1, window_bounds = array<i64: 1152, 128>}, {pipeline_mode = #tpu.pipeline_mode<synchronous>, transform_indices = @transform_2, window_bounds = array<i64: 1, 128>}, {pipeline_mode = #tpu.pipeline_mode<synchronous>, transform_indices = @transform_3, window_bounds = array<i64: 1152, 128>}, {pipeline_mode = #tpu.pipeline_mode<synchronous>, transform_indices = @transform_4, window_bounds = array<i64: 128, 128>}, {pipeline_mode = #tpu.pipeline_mode<synchronous>, transform_indices = @transform_5, window_bounds = array<i64: 1152, 128>}, {pipeline_mode = #tpu.pipeline_mode<synchronous>, transform_indices = @transform_6, window_bounds = array<i64: 128, 128>}, {pipeline_mode = #tpu.pipeline_mode<synchronous>, transform_indices = @transform_7, window_bounds = array<i64: 1152, 512>}, {pipeline_mode = #tpu.pipeline_mode<synchronous>, transform_indices = @transform_8, window_bounds = array<i64: 1, 512>}, {pipeline_mode = #tpu.pipeline_mode<synchronous>, transform_indices = @transform_9, window_bounds = array<i64: 1152, 128>}, {pipeline_mode = #tpu.pipeline_mode<synchronous>, transform_indices = @transform_10, window_bounds = array<i64: 1, 128>}, {transform_indices = @transform_11, window_bounds = array<i64: 1, 256, 128>}]} {
    %cst = arith.constant 0.000000e+00 : f32
    %0 = vector.broadcast %cst : f32 to vector<1x1x16x128xf32>
    %cst_0 = arith.constant 0.000000e+00 : f32
    %1 = vector.broadcast %cst_0 : f32 to vector<1x10x1x128xf32>
    %c0 = arith.constant 0 : index
    %c0_1 = arith.constant 0 : index
    %c0_2 = arith.constant 0 : index
    %c0_3 = arith.constant 0 : index
    %2 = vector.load %arg13[%c0, %c0_1, %c0_2, %c0_3] : memref<1x10x16x128xf32, #tpu.memory_space<vmem>>, vector<1x1x16x128xf32>
    tpu.vector_store %arg13[%c0, %c0_1, %c0_2, %c0_3], %0 {strides = array<i32>} : memref<1x10x16x128xf32, #tpu.memory_space<vmem>>, vector<1x1x16x128xf32>,
    %c0_4 = arith.constant 0 : index
    %c9 = arith.constant 9 : index
    %c0_5 = arith.constant 0 : index
    %c0_6 = arith.constant 0 : index
    %3 = vector.load %arg13[%c0_4, %c9, %c0_5, %c0_6] : memref<1x10x16x128xf32, #tpu.memory_space<vmem>>, vector<1x1x16x128xf32>
    tpu.vector_store %arg13[%c0_4, %c9, %c0_5, %c0_6], %0 {strides = array<i32>} : memref<1x10x16x128xf32, #tpu.memory_space<vmem>>, vector<1x1x16x128xf32>,
    %c0_7 = arith.constant 0 : index
    %c0_8 = arith.constant 0 : index
    %c0_9 = arith.constant 0 : index
    %c0_10 = arith.constant 0 : index
    %4 = vector.load %arg13[%c0_7, %c0_8, %c0_9, %c0_10] : memref<1x10x16x128xf32, #tpu.memory_space<vmem>>, vector<1x10x1x128xf32>
    tpu.vector_store %arg13[%c0_7, %c0_8, %c0_9, %c0_10], %1 {strides = array<i32>} : memref<1x10x16x128xf32, #tpu.memory_space<vmem>>, vector<1x10x1x128xf32>,
    %c0_11 = arith.constant 0 : index
    %c0_12 = arith.constant 0 : index
    %c9_13 = arith.constant 9 : index
    %c0_14 = arith.constant 0 : index
    %5 = vector.load %arg13[%c0_11, %c0_12, %c9_13, %c0_14] : memref<1x10x16x128xf32, #tpu.memory_space<vmem>>, vector<1x10x1x128xf32>
    tpu.vector_store %arg13[%c0_11, %c0_12, %c9_13, %c0_14], %1 {strides = array<i32>} : memref<1x10x16x128xf32, #tpu.memory_space<vmem>>, vector<1x10x1x128xf32>,
    %cst_15 = arith.constant 0.000000e+00 : f32
    %6 = vector.broadcast %cst_15 : f32 to vector<1x40x1x128xf32>
    %c0_16 = arith.constant 0 : index
    %c0_17 = arith.constant 0 : index
    %c0_18 = arith.constant 0 : index
    %c0_19 = arith.constant 0 : index
    %7 = vector.load %arg14[%c0_16, %c0_17, %c0_18, %c0_19] : memref<1x40x16x128xf32, #tpu.memory_space<vmem>>, vector<1x1x16x128xf32>
    tpu.vector_store %arg14[%c0_16, %c0_17, %c0_18, %c0_19], %0 {strides = array<i32>} : memref<1x40x16x128xf32, #tpu.memory_space<vmem>>, vector<1x1x16x128xf32>,
    %c0_20 = arith.constant 0 : index
    %c9_21 = arith.constant 9 : index
    %c0_22 = arith.constant 0 : index
    %c0_23 = arith.constant 0 : index
    %8 = vector.load %arg14[%c0_20, %c9_21, %c0_22, %c0_23] : memref<1x40x16x128xf32, #tpu.memory_space<vmem>>, vector<1x1x16x128xf32>
    tpu.vector_store %arg14[%c0_20, %c9_21, %c0_22, %c0_23], %0 {strides = array<i32>} : memref<1x40x16x128xf32, #tpu.memory_space<vmem>>, vector<1x1x16x128xf32>,
    %c0_24 = arith.constant 0 : index
    %c10 = arith.constant 10 : index
    %c0_25 = arith.constant 0 : index
    %c0_26 = arith.constant 0 : index
    %9 = vector.load %arg14[%c0_24, %c10, %c0_25, %c0_26] : memref<1x40x16x128xf32, #tpu.memory_space<vmem>>, vector<1x1x16x128xf32>
    tpu.vector_store %arg14[%c0_24, %c10, %c0_25, %c0_26], %0 {strides = array<i32>} : memref<1x40x16x128xf32, #tpu.memory_space<vmem>>, vector<1x1x16x128xf32>,
    %c0_27 = arith.constant 0 : index
    %c19 = arith.constant 19 : index
    %c0_28 = arith.constant 0 : index
    %c0_29 = arith.constant 0 : index
    %10 = vector.load %arg14[%c0_27, %c19, %c0_28, %c0_29] : memref<1x40x16x128xf32, #tpu.memory_space<vmem>>, vector<1x1x16x128xf32>
    tpu.vector_store %arg14[%c0_27, %c19, %c0_28, %c0_29], %0 {strides = array<i32>} : memref<1x40x16x128xf32, #tpu.memory_space<vmem>>, vector<1x1x16x128xf32>,
    %c0_30 = arith.constant 0 : index
    %c20 = arith.constant 20 : index
    %c0_31 = arith.constant 0 : index
    %c0_32 = arith.constant 0 : index
    %11 = vector.load %arg14[%c0_30, %c20, %c0_31, %c0_32] : memref<1x40x16x128xf32, #tpu.memory_space<vmem>>, vector<1x1x16x128xf32>
    tpu.vector_store %arg14[%c0_30, %c20, %c0_31, %c0_32], %0 {strides = array<i32>} : memref<1x40x16x128xf32, #tpu.memory_space<vmem>>, vector<1x1x16x128xf32>,
    %c0_33 = arith.constant 0 : index
    %c29 = arith.constant 29 : index
    %c0_34 = arith.constant 0 : index
    %c0_35 = arith.constant 0 : index
    %12 = vector.load %arg14[%c0_33, %c29, %c0_34, %c0_35] : memref<1x40x16x128xf32, #tpu.memory_space<vmem>>, vector<1x1x16x128xf32>
    tpu.vector_store %arg14[%c0_33, %c29, %c0_34, %c0_35], %0 {strides = array<i32>} : memref<1x40x16x128xf32, #tpu.memory_space<vmem>>, vector<1x1x16x128xf32>,
    %c0_36 = arith.constant 0 : index
    %c30 = arith.constant 30 : index
    %c0_37 = arith.constant 0 : index
    %c0_38 = arith.constant 0 : index
    %13 = vector.load %arg14[%c0_36, %c30, %c0_37, %c0_38] : memref<1x40x16x128xf32, #tpu.memory_space<vmem>>, vector<1x1x16x128xf32>
    tpu.vector_store %arg14[%c0_36, %c30, %c0_37, %c0_38], %0 {strides = array<i32>} : memref<1x40x16x128xf32, #tpu.memory_space<vmem>>, vector<1x1x16x128xf32>,
    %c0_39 = arith.constant 0 : index
    %c39 = arith.constant 39 : index
    %c0_40 = arith.constant 0 : index
    %c0_41 = arith.constant 0 : index
    %14 = vector.load %arg14[%c0_39, %c39, %c0_40, %c0_41] : memref<1x40x16x128xf32, #tpu.memory_space<vmem>>, vector<1x1x16x128xf32>
    tpu.vector_store %arg14[%c0_39, %c39, %c0_40, %c0_41], %0 {strides = array<i32>} : memref<1x40x16x128xf32, #tpu.memory_space<vmem>>, vector<1x1x16x128xf32>,
    %c0_42 = arith.constant 0 : index
    %c0_43 = arith.constant 0 : index
    %c0_44 = arith.constant 0 : index
    %c0_45 = arith.constant 0 : index
    %15 = vector.load %arg14[%c0_42, %c0_43, %c0_44, %c0_45] : memref<1x40x16x128xf32, #tpu.memory_space<vmem>>, vector<1x40x1x128xf32>
    tpu.vector_store %arg14[%c0_42, %c0_43, %c0_44, %c0_45], %6 {strides = array<i32>} : memref<1x40x16x128xf32, #tpu.memory_space<vmem>>, vector<1x40x1x128xf32>,
    %c0_46 = arith.constant 0 : index
    %c0_47 = arith.constant 0 : index
    %c9_48 = arith.constant 9 : index
    %c0_49 = arith.constant 0 : index
    %16 = vector.load %arg14[%c0_46, %c0_47, %c9_48, %c0_49] : memref<1x40x16x128xf32, #tpu.memory_space<vmem>>, vector<1x40x1x128xf32>
    tpu.vector_store %arg14[%c0_46, %c0_47, %c9_48, %c0_49], %6 {strides = array<i32>} : memref<1x40x16x128xf32, #tpu.memory_space<vmem>>, vector<1x40x1x128xf32>,
    %c0_50 = arith.constant 0 : index
    %c0_51 = arith.constant 0 : index
    %c0_52 = arith.constant 0 : index
    %c0_53 = arith.constant 0 : index
    %17 = vector.load %arg1[%c0_50, %c0_51, %c0_52, %c0_53] : memref<1x8x8x128xf32, #tpu.memory_space<vmem>>, vector<1x8x8x128xf32>
    %c0_54 = arith.constant 0 : index
    %c1 = arith.constant 1 : index
    %c1_55 = arith.constant 1 : index
    %c0_56 = arith.constant 0 : index
    %18 = vector.load %arg13[%c0_54, %c1, %c1_55, %c0_56] : memref<1x10x16x128xf32, #tpu.memory_space<vmem>>, vector<1x8x8x128xf32>
    tpu.vector_store %arg13[%c0_54, %c1, %c1_55, %c0_56], %17 {strides = array<i32>} : memref<1x10x16x128xf32, #tpu.memory_space<vmem>>, vector<1x8x8x128xf32>,
    %c0_57 = arith.constant 0 : index
    %c0_58 = arith.constant 0 : index
    %c0_59 = arith.constant 0 : index
    %c0_60 = arith.constant 0 : index
    %19 = vector.load %arg13[%c0_57, %c0_58, %c0_59, %c0_60] : memref<1x10x16x128xf32, #tpu.memory_space<vmem>>, vector<1x8x8x128xf32>
    %c0_61 = arith.constant 0 : index
    %c0_62 = arith.constant 0 : index
    %c0_63 = arith.constant 0 : index
    %c0_64 = arith.constant 0 : index
    %20 = vector.load %arg15[%c0_61, %c0_62, %c0_63, %c0_64] : memref<1x8x8x1152xf32, #tpu.memory_space<vmem>>, vector<1x8x8x128xf32>
    tpu.vector_store %arg15[%c0_61, %c0_62, %c0_63, %c0_64], %19 {strides = array<i32>} : memref<1x8x8x1152xf32, #tpu.memory_space<vmem>>, vector<1x8x8x128xf32>,
    %c0_65 = arith.constant 0 : index
    %c0_66 = arith.constant 0 : index
    %c1_67 = arith.constant 1 : index
    %c0_68 = arith.constant 0 : index
    %21 = vector.load %arg13[%c0_65, %c0_66, %c1_67, %c0_68] : memref<1x10x16x128xf32, #tpu.memory_space<vmem>>, vector<1x8x8x128xf32>
    %c0_69 = arith.constant 0 : index
    %c0_70 = arith.constant 0 : index
    %c0_71 = arith.constant 0 : index
    %c128 = arith.constant 128 : index
    %22 = vector.load %arg15[%c0_69, %c0_70, %c0_71, %c128] : memref<1x8x8x1152xf32, #tpu.memory_space<vmem>>, vector<1x8x8x128xf32>
    tpu.vector_store %arg15[%c0_69, %c0_70, %c0_71, %c128], %21 {strides = array<i32>} : memref<1x8x8x1152xf32, #tpu.memory_space<vmem>>, vector<1x8x8x128xf32>,
    %c0_72 = arith.constant 0 : index
    %c0_73 = arith.constant 0 : index
    %c2 = arith.constant 2 : index
    %c0_74 = arith.constant 0 : index
    %23 = vector.load %arg13[%c0_72, %c0_73, %c2, %c0_74] : memref<1x10x16x128xf32, #tpu.memory_space<vmem>>, vector<1x8x8x128xf32>
    %c0_75 = arith.constant 0 : index
    %c0_76 = arith.constant 0 : index
    %c0_77 = arith.constant 0 : index
    %c256 = arith.constant 256 : index
    %24 = vector.load %arg15[%c0_75, %c0_76, %c0_77, %c256] : memref<1x8x8x1152xf32, #tpu.memory_space<vmem>>, vector<1x8x8x128xf32>
    tpu.vector_store %arg15[%c0_75, %c0_76, %c0_77, %c256], %23 {strides = array<i32>} : memref<1x8x8x1152xf32, #tpu.memory_space<vmem>>, vector<1x8x8x128xf32>,
    %c0_78 = arith.constant 0 : index
    %c1_79 = arith.constant 1 : index
    %c0_80 = arith.constant 0 : index
    %c0_81 = arith.constant 0 : index
    %25 = vector.load %arg13[%c0_78, %c1_79, %c0_80, %c0_81] : memref<1x10x16x128xf32, #tpu.memory_space<vmem>>, vector<1x8x8x128xf32>
    %c0_82 = arith.constant 0 : index
    %c0_83 = arith.constant 0 : index
    %c0_84 = arith.constant 0 : index
    %c384 = arith.constant 384 : index
    %26 = vector.load %arg15[%c0_82, %c0_83, %c0_84, %c384] : memref<1x8x8x1152xf32, #tpu.memory_space<vmem>>, vector<1x8x8x128xf32>
    tpu.vector_store %arg15[%c0_82, %c0_83, %c0_84, %c384], %25 {strides = array<i32>} : memref<1x8x8x1152xf32, #tpu.memory_space<vmem>>, vector<1x8x8x128xf32>,
    %c0_85 = arith.constant 0 : index
    %c1_86 = arith.constant 1 : index
    %c1_87 = arith.constant 1 : index
    %c0_88 = arith.constant 0 : index
    %27 = vector.load %arg13[%c0_85, %c1_86, %c1_87, %c0_88] : memref<1x10x16x128xf32, #tpu.memory_space<vmem>>, vector<1x8x8x128xf32>
    %c0_89 = arith.constant 0 : index
    %c0_90 = arith.constant 0 : index
    %c0_91 = arith.constant 0 : index
    %c512 = arith.constant 512 : index
    %28 = vector.load %arg15[%c0_89, %c0_90, %c0_91, %c512] : memref<1x8x8x1152xf32, #tpu.memory_space<vmem>>, vector<1x8x8x128xf32>
    tpu.vector_store %arg15[%c0_89, %c0_90, %c0_91, %c512], %27 {strides = array<i32>} : memref<1x8x8x1152xf32, #tpu.memory_space<vmem>>, vector<1x8x8x128xf32>,
    %c0_92 = arith.constant 0 : index
    %c1_93 = arith.constant 1 : index
    %c2_94 = arith.constant 2 : index
    %c0_95 = arith.constant 0 : index
    %29 = vector.load %arg13[%c0_92, %c1_93, %c2_94, %c0_95] : memref<1x10x16x128xf32, #tpu.memory_space<vmem>>, vector<1x8x8x128xf32>
    %c0_96 = arith.constant 0 : index
    %c0_97 = arith.constant 0 : index
    %c0_98 = arith.constant 0 : index
    %c640 = arith.constant 640 : index
    %30 = vector.load %arg15[%c0_96, %c0_97, %c0_98, %c640] : memref<1x8x8x1152xf32, #tpu.memory_space<vmem>>, vector<1x8x8x128xf32>
    tpu.vector_store %arg15[%c0_96, %c0_97, %c0_98, %c640], %29 {strides = array<i32>} : memref<1x8x8x1152xf32, #tpu.memory_space<vmem>>, vector<1x8x8x128xf32>,
    %c0_99 = arith.constant 0 : index
    %c2_100 = arith.constant 2 : index
    %c0_101 = arith.constant 0 : index
    %c0_102 = arith.constant 0 : index
    %31 = vector.load %arg13[%c0_99, %c2_100, %c0_101, %c0_102] : memref<1x10x16x128xf32, #tpu.memory_space<vmem>>, vector<1x8x8x128xf32>
    %c0_103 = arith.constant 0 : index
    %c0_104 = arith.constant 0 : index
    %c0_105 = arith.constant 0 : index
    %c768 = arith.constant 768 : index
    %32 = vector.load %arg15[%c0_103, %c0_104, %c0_105, %c768] : memref<1x8x8x1152xf32, #tpu.memory_space<vmem>>, vector<1x8x8x128xf32>
    tpu.vector_store %arg15[%c0_103, %c0_104, %c0_105, %c768], %31 {strides = array<i32>} : memref<1x8x8x1152xf32, #tpu.memory_space<vmem>>, vector<1x8x8x128xf32>,
    %c0_106 = arith.constant 0 : index
    %c2_107 = arith.constant 2 : index
    %c1_108 = arith.constant 1 : index
    %c0_109 = arith.constant 0 : index
    %33 = vector.load %arg13[%c0_106, %c2_107, %c1_108, %c0_109] : memref<1x10x16x128xf32, #tpu.memory_space<vmem>>, vector<1x8x8x128xf32>
    %c0_110 = arith.constant 0 : index
    %c0_111 = arith.constant 0 : index
    %c0_112 = arith.constant 0 : index
    %c896 = arith.constant 896 : index
    %34 = vector.load %arg15[%c0_110, %c0_111, %c0_112, %c896] : memref<1x8x8x1152xf32, #tpu.memory_space<vmem>>, vector<1x8x8x128xf32>
    tpu.vector_store %arg15[%c0_110, %c0_111, %c0_112, %c896], %33 {strides = array<i32>} : memref<1x8x8x1152xf32, #tpu.memory_space<vmem>>, vector<1x8x8x128xf32>,
    %c0_113 = arith.constant 0 : index
    %c2_114 = arith.constant 2 : index
    %c2_115 = arith.constant 2 : index
    %c0_116 = arith.constant 0 : index
    %35 = vector.load %arg13[%c0_113, %c2_114, %c2_115, %c0_116] : memref<1x10x16x128xf32, #tpu.memory_space<vmem>>, vector<1x8x8x128xf32>
    %c0_117 = arith.constant 0 : index
    %c0_118 = arith.constant 0 : index
    %c0_119 = arith.constant 0 : index
    %c1024 = arith.constant 1024 : index
    %36 = vector.load %arg15[%c0_117, %c0_118, %c0_119, %c1024] : memref<1x8x8x1152xf32, #tpu.memory_space<vmem>>, vector<1x8x8x128xf32>
    tpu.vector_store %arg15[%c0_117, %c0_118, %c0_119, %c1024], %35 {strides = array<i32>} : memref<1x8x8x1152xf32, #tpu.memory_space<vmem>>, vector<1x8x8x128xf32>,
    %c0_120 = arith.constant 0 : index
    %c0_121 = arith.constant 0 : index
    %c0_122 = arith.constant 0 : index
    %c0_123 = arith.constant 0 : index
    %37 = vector.load %arg15[%c0_120, %c0_121, %c0_122, %c0_123] : memref<1x8x8x1152xf32, #tpu.memory_space<vmem>>, vector<1x8x8x1152xf32>
    %38 = vector.shape_cast %37 : vector<1x8x8x1152xf32> to vector<64x1152xf32>
    %c0_124 = arith.constant 0 : index
    %c0_125 = arith.constant 0 : index
    %39 = vector.load %arg2[%c0_124, %c0_125] : memref<1152x128xf32, #tpu.memory_space<vmem>>, vector<1152x128xf32>
    %cst_126 = arith.constant dense<0.000000e+00> : vector<64x128xf32>
    %40 = tpu.matmul %38, %39, %cst_126 {dimension_numbers = #tpu.dot_dimension_numbers<[1], [0], [0], [1], [0, 0, 1, 1], [], []>} : vector<64x1152xf32>, vector<1152x128xf32>, vector<64x128xf32> -> vector<64x128xf32>
    %c0_127 = arith.constant 0 : index
    %c0_128 = arith.constant 0 : index
    %41 = vector.load %arg3[%c0_127, %c0_128] : memref<1x128xf32, #tpu.memory_space<vmem>>, vector<1x128xf32>
    %42 = vector.broadcast %41 : vector<1x128xf32> to vector<64x128xf32>
    %43 = arith.addf %40, %42 : vector<64x128xf32>
    %cst_129 = arith.constant 0.000000e+00 : f32
    %44 = vector.broadcast %cst_129 : f32 to vector<64x128xf32>
    %45 = arith.maximumf %43, %44 : vector<64x128xf32>
    %46 = vector.shape_cast %45 : vector<64x128xf32> to vector<1x8x8x128xf32>
    %c0_130 = arith.constant 0 : index
    %c1_131 = arith.constant 1 : index
    %c1_132 = arith.constant 1 : index
    %c0_133 = arith.constant 0 : index
    %47 = vector.load %arg13[%c0_130, %c1_131, %c1_132, %c0_133] : memref<1x10x16x128xf32, #tpu.memory_space<vmem>>, vector<1x8x8x128xf32>
    tpu.vector_store %arg13[%c0_130, %c1_131, %c1_132, %c0_133], %46 {strides = array<i32>} : memref<1x10x16x128xf32, #tpu.memory_space<vmem>>, vector<1x8x8x128xf32>,
    %c0_134 = arith.constant 0 : index
    %c0_135 = arith.constant 0 : index
    %c0_136 = arith.constant 0 : index
    %c0_137 = arith.constant 0 : index
    %48 = vector.load %arg13[%c0_134, %c0_135, %c0_136, %c0_137] : memref<1x10x16x128xf32, #tpu.memory_space<vmem>>, vector<1x8x8x128xf32>
    %c0_138 = arith.constant 0 : index
    %c0_139 = arith.constant 0 : index
    %c0_140 = arith.constant 0 : index
    %c0_141 = arith.constant 0 : index
    %49 = vector.load %arg15[%c0_138, %c0_139, %c0_140, %c0_141] : memref<1x8x8x1152xf32, #tpu.memory_space<vmem>>, vector<1x8x8x128xf32>
    tpu.vector_store %arg15[%c0_138, %c0_139, %c0_140, %c0_141], %48 {strides = array<i32>} : memref<1x8x8x1152xf32, #tpu.memory_space<vmem>>, vector<1x8x8x128xf32>,
    %c0_142 = arith.constant 0 : index
    %c0_143 = arith.constant 0 : index
    %c1_144 = arith.constant 1 : index
    %c0_145 = arith.constant 0 : index
    %50 = vector.load %arg13[%c0_142, %c0_143, %c1_144, %c0_145] : memref<1x10x16x128xf32, #tpu.memory_space<vmem>>, vector<1x8x8x128xf32>
    %c0_146 = arith.constant 0 : index
    %c0_147 = arith.constant 0 : index
    %c0_148 = arith.constant 0 : index
    %c128_149 = arith.constant 128 : index
    %51 = vector.load %arg15[%c0_146, %c0_147, %c0_148, %c128_149] : memref<1x8x8x1152xf32, #tpu.memory_space<vmem>>, vector<1x8x8x128xf32>
    tpu.vector_store %arg15[%c0_146, %c0_147, %c0_148, %c128_149], %50 {strides = array<i32>} : memref<1x8x8x1152xf32, #tpu.memory_space<vmem>>, vector<1x8x8x128xf32>,
    %c0_150 = arith.constant 0 : index
    %c0_151 = arith.constant 0 : index
    %c2_152 = arith.constant 2 : index
    %c0_153 = arith.constant 0 : index
    %52 = vector.load %arg13[%c0_150, %c0_151, %c2_152, %c0_153] : memref<1x10x16x128xf32, #tpu.memory_space<vmem>>, vector<1x8x8x128xf32>
    %c0_154 = arith.constant 0 : index
    %c0_155 = arith.constant 0 : index
    %c0_156 = arith.constant 0 : index
    %c256_157 = arith.constant 256 : index
    %53 = vector.load %arg15[%c0_154, %c0_155, %c0_156, %c256_157] : memref<1x8x8x1152xf32, #tpu.memory_space<vmem>>, vector<1x8x8x128xf32>
    tpu.vector_store %arg15[%c0_154, %c0_155, %c0_156, %c256_157], %52 {strides = array<i32>} : memref<1x8x8x1152xf32, #tpu.memory_space<vmem>>, vector<1x8x8x128xf32>,
    %c0_158 = arith.constant 0 : index
    %c1_159 = arith.constant 1 : index
    %c0_160 = arith.constant 0 : index
    %c0_161 = arith.constant 0 : index
    %54 = vector.load %arg13[%c0_158, %c1_159, %c0_160, %c0_161] : memref<1x10x16x128xf32, #tpu.memory_space<vmem>>, vector<1x8x8x128xf32>
    %c0_162 = arith.constant 0 : index
    %c0_163 = arith.constant 0 : index
    %c0_164 = arith.constant 0 : index
    %c384_165 = arith.constant 384 : index
    %55 = vector.load %arg15[%c0_162, %c0_163, %c0_164, %c384_165] : memref<1x8x8x1152xf32, #tpu.memory_space<vmem>>, vector<1x8x8x128xf32>
    tpu.vector_store %arg15[%c0_162, %c0_163, %c0_164, %c384_165], %54 {strides = array<i32>} : memref<1x8x8x1152xf32, #tpu.memory_space<vmem>>, vector<1x8x8x128xf32>,
    %c0_166 = arith.constant 0 : index
    %c1_167 = arith.constant 1 : index
    %c1_168 = arith.constant 1 : index
    %c0_169 = arith.constant 0 : index
    %56 = vector.load %arg13[%c0_166, %c1_167, %c1_168, %c0_169] : memref<1x10x16x128xf32, #tpu.memory_space<vmem>>, vector<1x8x8x128xf32>
    %c0_170 = arith.constant 0 : index
    %c0_171 = arith.constant 0 : index
    %c0_172 = arith.constant 0 : index
    %c512_173 = arith.constant 512 : index
    %57 = vector.load %arg15[%c0_170, %c0_171, %c0_172, %c512_173] : memref<1x8x8x1152xf32, #tpu.memory_space<vmem>>, vector<1x8x8x128xf32>
    tpu.vector_store %arg15[%c0_170, %c0_171, %c0_172, %c512_173], %56 {strides = array<i32>} : memref<1x8x8x1152xf32, #tpu.memory_space<vmem>>, vector<1x8x8x128xf32>,
    %c0_174 = arith.constant 0 : index
    %c1_175 = arith.constant 1 : index
    %c2_176 = arith.constant 2 : index
    %c0_177 = arith.constant 0 : index
    %58 = vector.load %arg13[%c0_174, %c1_175, %c2_176, %c0_177] : memref<1x10x16x128xf32, #tpu.memory_space<vmem>>, vector<1x8x8x128xf32>
    %c0_178 = arith.constant 0 : index
    %c0_179 = arith.constant 0 : index
    %c0_180 = arith.constant 0 : index
    %c640_181 = arith.constant 640 : index
    %59 = vector.load %arg15[%c0_178, %c0_179, %c0_180, %c640_181] : memref<1x8x8x1152xf32, #tpu.memory_space<vmem>>, vector<1x8x8x128xf32>
    tpu.vector_store %arg15[%c0_178, %c0_179, %c0_180, %c640_181], %58 {strides = array<i32>} : memref<1x8x8x1152xf32, #tpu.memory_space<vmem>>, vector<1x8x8x128xf32>,
    %c0_182 = arith.constant 0 : index
    %c2_183 = arith.constant 2 : index
    %c0_184 = arith.constant 0 : index
    %c0_185 = arith.constant 0 : index
    %60 = vector.load %arg13[%c0_182, %c2_183, %c0_184, %c0_185] : memref<1x10x16x128xf32, #tpu.memory_space<vmem>>, vector<1x8x8x128xf32>
    %c0_186 = arith.constant 0 : index
    %c0_187 = arith.constant 0 : index
    %c0_188 = arith.constant 0 : index
    %c768_189 = arith.constant 768 : index
    %61 = vector.load %arg15[%c0_186, %c0_187, %c0_188, %c768_189] : memref<1x8x8x1152xf32, #tpu.memory_space<vmem>>, vector<1x8x8x128xf32>
    tpu.vector_store %arg15[%c0_186, %c0_187, %c0_188, %c768_189], %60 {strides = array<i32>} : memref<1x8x8x1152xf32, #tpu.memory_space<vmem>>, vector<1x8x8x128xf32>,
    %c0_190 = arith.constant 0 : index
    %c2_191 = arith.constant 2 : index
    %c1_192 = arith.constant 1 : index
    %c0_193 = arith.constant 0 : index
    %62 = vector.load %arg13[%c0_190, %c2_191, %c1_192, %c0_193] : memref<1x10x16x128xf32, #tpu.memory_space<vmem>>, vector<1x8x8x128xf32>
    %c0_194 = arith.constant 0 : index
    %c0_195 = arith.constant 0 : index
    %c0_196 = arith.constant 0 : index
    %c896_197 = arith.constant 896 : index
    %63 = vector.load %arg15[%c0_194, %c0_195, %c0_196, %c896_197] : memref<1x8x8x1152xf32, #tpu.memory_space<vmem>>, vector<1x8x8x128xf32>
    tpu.vector_store %arg15[%c0_194, %c0_195, %c0_196, %c896_197], %62 {strides = array<i32>} : memref<1x8x8x1152xf32, #tpu.memory_space<vmem>>, vector<1x8x8x128xf32>,
    %c0_198 = arith.constant 0 : index
    %c2_199 = arith.constant 2 : index
    %c2_200 = arith.constant 2 : index
    %c0_201 = arith.constant 0 : index
    %64 = vector.load %arg13[%c0_198, %c2_199, %c2_200, %c0_201] : memref<1x10x16x128xf32, #tpu.memory_space<vmem>>, vector<1x8x8x128xf32>
    %c0_202 = arith.constant 0 : index
    %c0_203 = arith.constant 0 : index
    %c0_204 = arith.constant 0 : index
    %c1024_205 = arith.constant 1024 : index
    %65 = vector.load %arg15[%c0_202, %c0_203, %c0_204, %c1024_205] : memref<1x8x8x1152xf32, #tpu.memory_space<vmem>>, vector<1x8x8x128xf32>
    tpu.vector_store %arg15[%c0_202, %c0_203, %c0_204, %c1024_205], %64 {strides = array<i32>} : memref<1x8x8x1152xf32, #tpu.memory_space<vmem>>, vector<1x8x8x128xf32>,
    %c0_206 = arith.constant 0 : index
    %c0_207 = arith.constant 0 : index
    %c0_208 = arith.constant 0 : index
    %c0_209 = arith.constant 0 : index
    %66 = vector.load %arg15[%c0_206, %c0_207, %c0_208, %c0_209] : memref<1x8x8x1152xf32, #tpu.memory_space<vmem>>, vector<1x8x8x1152xf32>
    %67 = vector.shape_cast %66 : vector<1x8x8x1152xf32> to vector<64x1152xf32>
    %c0_210 = arith.constant 0 : index
    %c0_211 = arith.constant 0 : index
    %68 = vector.load %arg4[%c0_210, %c0_211] : memref<1152x128xf32, #tpu.memory_space<vmem>>, vector<1152x128xf32>
    %cst_212 = arith.constant dense<0.000000e+00> : vector<64x128xf32>
    %69 = tpu.matmul %67, %68, %cst_212 {dimension_numbers = #tpu.dot_dimension_numbers<[1], [0], [0], [1], [0, 0, 1, 1], [], []>} : vector<64x1152xf32>, vector<1152x128xf32>, vector<64x128xf32> -> vector<64x128xf32>
    %cst_213 = arith.constant 0.000000e+00 : f32
    %70 = vector.broadcast %cst_213 : f32 to vector<64x128xf32>
    %71 = arith.maximumf %69, %70 : vector<64x128xf32>
    %c0_214 = arith.constant 0 : index
    %c0_215 = arith.constant 0 : index
    %72 = vector.load %arg5[%c0_214, %c0_215] : memref<128x128xf32, #tpu.memory_space<vmem>>, vector<128x128xf32>
    %cst_216 = arith.constant dense<0.000000e+00> : vector<64x128xf32>
    %73 = tpu.matmul %71, %72, %cst_216 {dimension_numbers = #tpu.dot_dimension_numbers<[1], [0], [0], [1], [0, 0, 1, 1], [], []>} : vector<64x128xf32>, vector<128x128xf32>, vector<64x128xf32> -> vector<64x128xf32>
    %74 = arith.addf %43, %73 : vector<64x128xf32>
    %cst_217 = arith.constant 0.000000e+00 : f32
    %75 = vector.broadcast %cst_217 : f32 to vector<64x128xf32>
    %76 = arith.maximumf %74, %75 : vector<64x128xf32>
    %77 = vector.shape_cast %76 : vector<64x128xf32> to vector<1x8x8x128xf32>
    %c0_218 = arith.constant 0 : index
    %c1_219 = arith.constant 1 : index
    %c1_220 = arith.constant 1 : index
    %c0_221 = arith.constant 0 : index
    %78 = vector.load %arg13[%c0_218, %c1_219, %c1_220, %c0_221] : memref<1x10x16x128xf32, #tpu.memory_space<vmem>>, vector<1x8x8x128xf32>
    tpu.vector_store %arg13[%c0_218, %c1_219, %c1_220, %c0_221], %77 {strides = array<i32>} : memref<1x10x16x128xf32, #tpu.memory_space<vmem>>, vector<1x8x8x128xf32>,
    %c0_222 = arith.constant 0 : index
    %c0_223 = arith.constant 0 : index
    %c0_224 = arith.constant 0 : index
    %c0_225 = arith.constant 0 : index
    %79 = vector.load %arg13[%c0_222, %c0_223, %c0_224, %c0_225] : memref<1x10x16x128xf32, #tpu.memory_space<vmem>>, vector<1x8x8x128xf32>
    %c0_226 = arith.constant 0 : index
    %c0_227 = arith.constant 0 : index
    %c0_228 = arith.constant 0 : index
    %c0_229 = arith.constant 0 : index
    %80 = vector.load %arg15[%c0_226, %c0_227, %c0_228, %c0_229] : memref<1x8x8x1152xf32, #tpu.memory_space<vmem>>, vector<1x8x8x128xf32>
    tpu.vector_store %arg15[%c0_226, %c0_227, %c0_228, %c0_229], %79 {strides = array<i32>} : memref<1x8x8x1152xf32, #tpu.memory_space<vmem>>, vector<1x8x8x128xf32>,
    %c0_230 = arith.constant 0 : index
    %c0_231 = arith.constant 0 : index
    %c1_232 = arith.constant 1 : index
    %c0_233 = arith.constant 0 : index
    %81 = vector.load %arg13[%c0_230, %c0_231, %c1_232, %c0_233] : memref<1x10x16x128xf32, #tpu.memory_space<vmem>>, vector<1x8x8x128xf32>
    %c0_234 = arith.constant 0 : index
    %c0_235 = arith.constant 0 : index
    %c0_236 = arith.constant 0 : index
    %c128_237 = arith.constant 128 : index
    %82 = vector.load %arg15[%c0_234, %c0_235, %c0_236, %c128_237] : memref<1x8x8x1152xf32, #tpu.memory_space<vmem>>, vector<1x8x8x128xf32>
    tpu.vector_store %arg15[%c0_234, %c0_235, %c0_236, %c128_237], %81 {strides = array<i32>} : memref<1x8x8x1152xf32, #tpu.memory_space<vmem>>, vector<1x8x8x128xf32>,
    %c0_238 = arith.constant 0 : index
    %c0_239 = arith.constant 0 : index
    %c2_240 = arith.constant 2 : index
    %c0_241 = arith.constant 0 : index
    %83 = vector.load %arg13[%c0_238, %c0_239, %c2_240, %c0_241] : memref<1x10x16x128xf32, #tpu.memory_space<vmem>>, vector<1x8x8x128xf32>
    %c0_242 = arith.constant 0 : index
    %c0_243 = arith.constant 0 : index
    %c0_244 = arith.constant 0 : index
    %c256_245 = arith.constant 256 : index
    %84 = vector.load %arg15[%c0_242, %c0_243, %c0_244, %c256_245] : memref<1x8x8x1152xf32, #tpu.memory_space<vmem>>, vector<1x8x8x128xf32>
    tpu.vector_store %arg15[%c0_242, %c0_243, %c0_244, %c256_245], %83 {strides = array<i32>} : memref<1x8x8x1152xf32, #tpu.memory_space<vmem>>, vector<1x8x8x128xf32>,
    %c0_246 = arith.constant 0 : index
    %c1_247 = arith.constant 1 : index
    %c0_248 = arith.constant 0 : index
    %c0_249 = arith.constant 0 : index
    %85 = vector.load %arg13[%c0_246, %c1_247, %c0_248, %c0_249] : memref<1x10x16x128xf32, #tpu.memory_space<vmem>>, vector<1x8x8x128xf32>
    %c0_250 = arith.constant 0 : index
    %c0_251 = arith.constant 0 : index
    %c0_252 = arith.constant 0 : index
    %c384_253 = arith.constant 384 : index
    %86 = vector.load %arg15[%c0_250, %c0_251, %c0_252, %c384_253] : memref<1x8x8x1152xf32, #tpu.memory_space<vmem>>, vector<1x8x8x128xf32>
    tpu.vector_store %arg15[%c0_250, %c0_251, %c0_252, %c384_253], %85 {strides = array<i32>} : memref<1x8x8x1152xf32, #tpu.memory_space<vmem>>, vector<1x8x8x128xf32>,
    %c0_254 = arith.constant 0 : index
    %c1_255 = arith.constant 1 : index
    %c1_256 = arith.constant 1 : index
    %c0_257 = arith.constant 0 : index
    %87 = vector.load %arg13[%c0_254, %c1_255, %c1_256, %c0_257] : memref<1x10x16x128xf32, #tpu.memory_space<vmem>>, vector<1x8x8x128xf32>
    %c0_258 = arith.constant 0 : index
    %c0_259 = arith.constant 0 : index
    %c0_260 = arith.constant 0 : index
    %c512_261 = arith.constant 512 : index
    %88 = vector.load %arg15[%c0_258, %c0_259, %c0_260, %c512_261] : memref<1x8x8x1152xf32, #tpu.memory_space<vmem>>, vector<1x8x8x128xf32>
    tpu.vector_store %arg15[%c0_258, %c0_259, %c0_260, %c512_261], %87 {strides = array<i32>} : memref<1x8x8x1152xf32, #tpu.memory_space<vmem>>, vector<1x8x8x128xf32>,
    %c0_262 = arith.constant 0 : index
    %c1_263 = arith.constant 1 : index
    %c2_264 = arith.constant 2 : index
    %c0_265 = arith.constant 0 : index
    %89 = vector.load %arg13[%c0_262, %c1_263, %c2_264, %c0_265] : memref<1x10x16x128xf32, #tpu.memory_space<vmem>>, vector<1x8x8x128xf32>
    %c0_266 = arith.constant 0 : index
    %c0_267 = arith.constant 0 : index
    %c0_268 = arith.constant 0 : index
    %c640_269 = arith.constant 640 : index
    %90 = vector.load %arg15[%c0_266, %c0_267, %c0_268, %c640_269] : memref<1x8x8x1152xf32, #tpu.memory_space<vmem>>, vector<1x8x8x128xf32>
    tpu.vector_store %arg15[%c0_266, %c0_267, %c0_268, %c640_269], %89 {strides = array<i32>} : memref<1x8x8x1152xf32, #tpu.memory_space<vmem>>, vector<1x8x8x128xf32>,
    %c0_270 = arith.constant 0 : index
    %c2_271 = arith.constant 2 : index
    %c0_272 = arith.constant 0 : index
    %c0_273 = arith.constant 0 : index
    %91 = vector.load %arg13[%c0_270, %c2_271, %c0_272, %c0_273] : memref<1x10x16x128xf32, #tpu.memory_space<vmem>>, vector<1x8x8x128xf32>
    %c0_274 = arith.constant 0 : index
    %c0_275 = arith.constant 0 : index
    %c0_276 = arith.constant 0 : index
    %c768_277 = arith.constant 768 : index
    %92 = vector.load %arg15[%c0_274, %c0_275, %c0_276, %c768_277] : memref<1x8x8x1152xf32, #tpu.memory_space<vmem>>, vector<1x8x8x128xf32>
    tpu.vector_store %arg15[%c0_274, %c0_275, %c0_276, %c768_277], %91 {strides = array<i32>} : memref<1x8x8x1152xf32, #tpu.memory_space<vmem>>, vector<1x8x8x128xf32>,
    %c0_278 = arith.constant 0 : index
    %c2_279 = arith.constant 2 : index
    %c1_280 = arith.constant 1 : index
    %c0_281 = arith.constant 0 : index
    %93 = vector.load %arg13[%c0_278, %c2_279, %c1_280, %c0_281] : memref<1x10x16x128xf32, #tpu.memory_space<vmem>>, vector<1x8x8x128xf32>
    %c0_282 = arith.constant 0 : index
    %c0_283 = arith.constant 0 : index
    %c0_284 = arith.constant 0 : index
    %c896_285 = arith.constant 896 : index
    %94 = vector.load %arg15[%c0_282, %c0_283, %c0_284, %c896_285] : memref<1x8x8x1152xf32, #tpu.memory_space<vmem>>, vector<1x8x8x128xf32>
    tpu.vector_store %arg15[%c0_282, %c0_283, %c0_284, %c896_285], %93 {strides = array<i32>} : memref<1x8x8x1152xf32, #tpu.memory_space<vmem>>, vector<1x8x8x128xf32>,
    %c0_286 = arith.constant 0 : index
    %c2_287 = arith.constant 2 : index
    %c2_288 = arith.constant 2 : index
    %c0_289 = arith.constant 0 : index
    %95 = vector.load %arg13[%c0_286, %c2_287, %c2_288, %c0_289] : memref<1x10x16x128xf32, #tpu.memory_space<vmem>>, vector<1x8x8x128xf32>
    %c0_290 = arith.constant 0 : index
    %c0_291 = arith.constant 0 : index
    %c0_292 = arith.constant 0 : index
    %c1024_293 = arith.constant 1024 : index
    %96 = vector.load %arg15[%c0_290, %c0_291, %c0_292, %c1024_293] : memref<1x8x8x1152xf32, #tpu.memory_space<vmem>>, vector<1x8x8x128xf32>
    tpu.vector_store %arg15[%c0_290, %c0_291, %c0_292, %c1024_293], %95 {strides = array<i32>} : memref<1x8x8x1152xf32, #tpu.memory_space<vmem>>, vector<1x8x8x128xf32>,
    %c0_294 = arith.constant 0 : index
    %c0_295 = arith.constant 0 : index
    %c0_296 = arith.constant 0 : index
    %c0_297 = arith.constant 0 : index
    %97 = vector.load %arg15[%c0_294, %c0_295, %c0_296, %c0_297] : memref<1x8x8x1152xf32, #tpu.memory_space<vmem>>, vector<1x8x8x1152xf32>
    %98 = vector.shape_cast %97 : vector<1x8x8x1152xf32> to vector<64x1152xf32>
    %c0_298 = arith.constant 0 : index
    %c0_299 = arith.constant 0 : index
    %99 = vector.load %arg6[%c0_298, %c0_299] : memref<1152x128xf32, #tpu.memory_space<vmem>>, vector<1152x128xf32>
    %cst_300 = arith.constant dense<0.000000e+00> : vector<64x128xf32>
    %100 = tpu.matmul %98, %99, %cst_300 {dimension_numbers = #tpu.dot_dimension_numbers<[1], [0], [0], [1], [0, 0, 1, 1], [], []>} : vector<64x1152xf32>, vector<1152x128xf32>, vector<64x128xf32> -> vector<64x128xf32>
    %cst_301 = arith.constant 0.000000e+00 : f32
    %101 = vector.broadcast %cst_301 : f32 to vector<64x128xf32>
    %102 = arith.maximumf %100, %101 : vector<64x128xf32>
    %c0_302 = arith.constant 0 : index
    %c0_303 = arith.constant 0 : index
    %103 = vector.load %arg7[%c0_302, %c0_303] : memref<128x128xf32, #tpu.memory_space<vmem>>, vector<128x128xf32>
    %cst_304 = arith.constant dense<0.000000e+00> : vector<64x128xf32>
    %104 = tpu.matmul %102, %103, %cst_304 {dimension_numbers = #tpu.dot_dimension_numbers<[1], [0], [0], [1], [0, 0, 1, 1], [], []>} : vector<64x128xf32>, vector<128x128xf32>, vector<64x128xf32> -> vector<64x128xf32>
    %105 = arith.addf %74, %104 : vector<64x128xf32>
    %cst_305 = arith.constant 0.000000e+00 : f32
    %106 = vector.broadcast %cst_305 : f32 to vector<64x128xf32>
    %107 = arith.maximumf %105, %106 : vector<64x128xf32>
    %108 = vector.shape_cast %107 : vector<64x128xf32> to vector<1x8x8x128xf32>
    %c0_306 = arith.constant 0 : index
    %c1_307 = arith.constant 1 : index
    %c1_308 = arith.constant 1 : index
    %c0_309 = arith.constant 0 : index
    %109 = vector.load %arg13[%c0_306, %c1_307, %c1_308, %c0_309] : memref<1x10x16x128xf32, #tpu.memory_space<vmem>>, vector<1x8x8x128xf32>
    tpu.vector_store %arg13[%c0_306, %c1_307, %c1_308, %c0_309], %108 {strides = array<i32>} : memref<1x10x16x128xf32, #tpu.memory_space<vmem>>, vector<1x8x8x128xf32>,
    %c0_310 = arith.constant 0 : index
    %c0_311 = arith.constant 0 : index
    %c0_312 = arith.constant 0 : index
    %c0_313 = arith.constant 0 : index
    %110 = vector.load %arg13[%c0_310, %c0_311, %c0_312, %c0_313] : memref<1x10x16x128xf32, #tpu.memory_space<vmem>>, vector<1x8x8x128xf32>
    %c0_314 = arith.constant 0 : index
    %c0_315 = arith.constant 0 : index
    %c0_316 = arith.constant 0 : index
    %c0_317 = arith.constant 0 : index
    %111 = vector.load %arg15[%c0_314, %c0_315, %c0_316, %c0_317] : memref<1x8x8x1152xf32, #tpu.memory_space<vmem>>, vector<1x8x8x128xf32>
    tpu.vector_store %arg15[%c0_314, %c0_315, %c0_316, %c0_317], %110 {strides = array<i32>} : memref<1x8x8x1152xf32, #tpu.memory_space<vmem>>, vector<1x8x8x128xf32>,
    %c0_318 = arith.constant 0 : index
    %c0_319 = arith.constant 0 : index
    %c1_320 = arith.constant 1 : index
    %c0_321 = arith.constant 0 : index
    %112 = vector.load %arg13[%c0_318, %c0_319, %c1_320, %c0_321] : memref<1x10x16x128xf32, #tpu.memory_space<vmem>>, vector<1x8x8x128xf32>
    %c0_322 = arith.constant 0 : index
    %c0_323 = arith.constant 0 : index
    %c0_324 = arith.constant 0 : index
    %c128_325 = arith.constant 128 : index
    %113 = vector.load %arg15[%c0_322, %c0_323, %c0_324, %c128_325] : memref<1x8x8x1152xf32, #tpu.memory_space<vmem>>, vector<1x8x8x128xf32>
    tpu.vector_store %arg15[%c0_322, %c0_323, %c0_324, %c128_325], %112 {strides = array<i32>} : memref<1x8x8x1152xf32, #tpu.memory_space<vmem>>, vector<1x8x8x128xf32>,
    %c0_326 = arith.constant 0 : index
    %c0_327 = arith.constant 0 : index
    %c2_328 = arith.constant 2 : index
    %c0_329 = arith.constant 0 : index
    %114 = vector.load %arg13[%c0_326, %c0_327, %c2_328, %c0_329] : memref<1x10x16x128xf32, #tpu.memory_space<vmem>>, vector<1x8x8x128xf32>
    %c0_330 = arith.constant 0 : index
    %c0_331 = arith.constant 0 : index
    %c0_332 = arith.constant 0 : index
    %c256_333 = arith.constant 256 : index
    %115 = vector.load %arg15[%c0_330, %c0_331, %c0_332, %c256_333] : memref<1x8x8x1152xf32, #tpu.memory_space<vmem>>, vector<1x8x8x128xf32>
    tpu.vector_store %arg15[%c0_330, %c0_331, %c0_332, %c256_333], %114 {strides = array<i32>} : memref<1x8x8x1152xf32, #tpu.memory_space<vmem>>, vector<1x8x8x128xf32>,
    %c0_334 = arith.constant 0 : index
    %c1_335 = arith.constant 1 : index
    %c0_336 = arith.constant 0 : index
    %c0_337 = arith.constant 0 : index
    %116 = vector.load %arg13[%c0_334, %c1_335, %c0_336, %c0_337] : memref<1x10x16x128xf32, #tpu.memory_space<vmem>>, vector<1x8x8x128xf32>
    %c0_338 = arith.constant 0 : index
    %c0_339 = arith.constant 0 : index
    %c0_340 = arith.constant 0 : index
    %c384_341 = arith.constant 384 : index
    %117 = vector.load %arg15[%c0_338, %c0_339, %c0_340, %c384_341] : memref<1x8x8x1152xf32, #tpu.memory_space<vmem>>, vector<1x8x8x128xf32>
    tpu.vector_store %arg15[%c0_338, %c0_339, %c0_340, %c384_341], %116 {strides = array<i32>} : memref<1x8x8x1152xf32, #tpu.memory_space<vmem>>, vector<1x8x8x128xf32>,
    %c0_342 = arith.constant 0 : index
    %c1_343 = arith.constant 1 : index
    %c1_344 = arith.constant 1 : index
    %c0_345 = arith.constant 0 : index
    %118 = vector.load %arg13[%c0_342, %c1_343, %c1_344, %c0_345] : memref<1x10x16x128xf32, #tpu.memory_space<vmem>>, vector<1x8x8x128xf32>
    %c0_346 = arith.constant 0 : index
    %c0_347 = arith.constant 0 : index
    %c0_348 = arith.constant 0 : index
    %c512_349 = arith.constant 512 : index
    %119 = vector.load %arg15[%c0_346, %c0_347, %c0_348, %c512_349] : memref<1x8x8x1152xf32, #tpu.memory_space<vmem>>, vector<1x8x8x128xf32>
    tpu.vector_store %arg15[%c0_346, %c0_347, %c0_348, %c512_349], %118 {strides = array<i32>} : memref<1x8x8x1152xf32, #tpu.memory_space<vmem>>, vector<1x8x8x128xf32>,
    %c0_350 = arith.constant 0 : index
    %c1_351 = arith.constant 1 : index
    %c2_352 = arith.constant 2 : index
    %c0_353 = arith.constant 0 : index
    %120 = vector.load %arg13[%c0_350, %c1_351, %c2_352, %c0_353] : memref<1x10x16x128xf32, #tpu.memory_space<vmem>>, vector<1x8x8x128xf32>
    %c0_354 = arith.constant 0 : index
    %c0_355 = arith.constant 0 : index
    %c0_356 = arith.constant 0 : index
    %c640_357 = arith.constant 640 : index
    %121 = vector.load %arg15[%c0_354, %c0_355, %c0_356, %c640_357] : memref<1x8x8x1152xf32, #tpu.memory_space<vmem>>, vector<1x8x8x128xf32>
    tpu.vector_store %arg15[%c0_354, %c0_355, %c0_356, %c640_357], %120 {strides = array<i32>} : memref<1x8x8x1152xf32, #tpu.memory_space<vmem>>, vector<1x8x8x128xf32>,
    %c0_358 = arith.constant 0 : index
    %c2_359 = arith.constant 2 : index
    %c0_360 = arith.constant 0 : index
    %c0_361 = arith.constant 0 : index
    %122 = vector.load %arg13[%c0_358, %c2_359, %c0_360, %c0_361] : memref<1x10x16x128xf32, #tpu.memory_space<vmem>>, vector<1x8x8x128xf32>
    %c0_362 = arith.constant 0 : index
    %c0_363 = arith.constant 0 : index
    %c0_364 = arith.constant 0 : index
    %c768_365 = arith.constant 768 : index
    %123 = vector.load %arg15[%c0_362, %c0_363, %c0_364, %c768_365] : memref<1x8x8x1152xf32, #tpu.memory_space<vmem>>, vector<1x8x8x128xf32>
    tpu.vector_store %arg15[%c0_362, %c0_363, %c0_364, %c768_365], %122 {strides = array<i32>} : memref<1x8x8x1152xf32, #tpu.memory_space<vmem>>, vector<1x8x8x128xf32>,
    %c0_366 = arith.constant 0 : index
    %c2_367 = arith.constant 2 : index
    %c1_368 = arith.constant 1 : index
    %c0_369 = arith.constant 0 : index
    %124 = vector.load %arg13[%c0_366, %c2_367, %c1_368, %c0_369] : memref<1x10x16x128xf32, #tpu.memory_space<vmem>>, vector<1x8x8x128xf32>
    %c0_370 = arith.constant 0 : index
    %c0_371 = arith.constant 0 : index
    %c0_372 = arith.constant 0 : index
    %c896_373 = arith.constant 896 : index
    %125 = vector.load %arg15[%c0_370, %c0_371, %c0_372, %c896_373] : memref<1x8x8x1152xf32, #tpu.memory_space<vmem>>, vector<1x8x8x128xf32>
    tpu.vector_store %arg15[%c0_370, %c0_371, %c0_372, %c896_373], %124 {strides = array<i32>} : memref<1x8x8x1152xf32, #tpu.memory_space<vmem>>, vector<1x8x8x128xf32>,
    %c0_374 = arith.constant 0 : index
    %c2_375 = arith.constant 2 : index
    %c2_376 = arith.constant 2 : index
    %c0_377 = arith.constant 0 : index
    %126 = vector.load %arg13[%c0_374, %c2_375, %c2_376, %c0_377] : memref<1x10x16x128xf32, #tpu.memory_space<vmem>>, vector<1x8x8x128xf32>
    %c0_378 = arith.constant 0 : index
    %c0_379 = arith.constant 0 : index
    %c0_380 = arith.constant 0 : index
    %c1024_381 = arith.constant 1024 : index
    %127 = vector.load %arg15[%c0_378, %c0_379, %c0_380, %c1024_381] : memref<1x8x8x1152xf32, #tpu.memory_space<vmem>>, vector<1x8x8x128xf32>
    tpu.vector_store %arg15[%c0_378, %c0_379, %c0_380, %c1024_381], %126 {strides = array<i32>} : memref<1x8x8x1152xf32, #tpu.memory_space<vmem>>, vector<1x8x8x128xf32>,
    %c0_382 = arith.constant 0 : index
    %c0_383 = arith.constant 0 : index
    %c0_384 = arith.constant 0 : index
    %c0_385 = arith.constant 0 : index
    %128 = vector.load %arg15[%c0_382, %c0_383, %c0_384, %c0_385] : memref<1x8x8x1152xf32, #tpu.memory_space<vmem>>, vector<1x8x8x1152xf32>
    %129 = vector.shape_cast %128 : vector<1x8x8x1152xf32> to vector<64x1152xf32>
    %c0_386 = arith.constant 0 : index
    %c0_387 = arith.constant 0 : index
    %130 = vector.load %arg8[%c0_386, %c0_387] : memref<1152x512xf32, #tpu.memory_space<vmem>>, vector<1152x512xf32>
    %cst_388 = arith.constant dense<0.000000e+00> : vector<64x512xf32>
    %131 = tpu.matmul %129, %130, %cst_388 {dimension_numbers = #tpu.dot_dimension_numbers<[1], [0], [0], [1], [0, 0, 1, 1], [], []>} : vector<64x1152xf32>, vector<1152x512xf32>, vector<64x512xf32> -> vector<64x512xf32>
    %c0_389 = arith.constant 0 : index
    %c0_390 = arith.constant 0 : index
    %132 = vector.load %arg9[%c0_389, %c0_390] : memref<1x512xf32, #tpu.memory_space<vmem>>, vector<1x512xf32>
    %133 = vector.broadcast %132 : vector<1x512xf32> to vector<64x512xf32>
    %134 = arith.addf %131, %133 : vector<64x512xf32>
    %cst_391 = arith.constant 0.000000e+00 : f32
    %135 = vector.broadcast %cst_391 : f32 to vector<64x512xf32>
    %136 = arith.maximumf %134, %135 : vector<64x512xf32>
    %137 = vector.extract_strided_slice %136 {offsets = [0, 0], sizes = [64, 128], strides = [1, 1]} : vector<64x512xf32> to vector<64x128xf32>
    %138 = vector.shape_cast %137 : vector<64x128xf32> to vector<1x8x8x128xf32>
    %c0_392 = arith.constant 0 : index
    %c1_393 = arith.constant 1 : index
    %c1_394 = arith.constant 1 : index
    %c0_395 = arith.constant 0 : index
    %139 = vector.load %arg14[%c0_392, %c1_393, %c1_394, %c0_395] : memref<1x40x16x128xf32, #tpu.memory_space<vmem>>, vector<1x8x8x128xf32>
    tpu.vector_store %arg14[%c0_392, %c1_393, %c1_394, %c0_395], %138 {strides = array<i32>} : memref<1x40x16x128xf32, #tpu.memory_space<vmem>>, vector<1x8x8x128xf32>,
    %140 = vector.extract_strided_slice %136 {offsets = [0, 128], sizes = [64, 128], strides = [1, 1]} : vector<64x512xf32> to vector<64x128xf32>
    %141 = vector.shape_cast %140 : vector<64x128xf32> to vector<1x8x8x128xf32>
    %c0_396 = arith.constant 0 : index
    %c11 = arith.constant 11 : index
    %c1_397 = arith.constant 1 : index
    %c0_398 = arith.constant 0 : index
    %142 = vector.load %arg14[%c0_396, %c11, %c1_397, %c0_398] : memref<1x40x16x128xf32, #tpu.memory_space<vmem>>, vector<1x8x8x128xf32>
    tpu.vector_store %arg14[%c0_396, %c11, %c1_397, %c0_398], %141 {strides = array<i32>} : memref<1x40x16x128xf32, #tpu.memory_space<vmem>>, vector<1x8x8x128xf32>,
    %143 = vector.extract_strided_slice %136 {offsets = [0, 256], sizes = [64, 128], strides = [1, 1]} : vector<64x512xf32> to vector<64x128xf32>
    %144 = vector.shape_cast %143 : vector<64x128xf32> to vector<1x8x8x128xf32>
    %c0_399 = arith.constant 0 : index
    %c21 = arith.constant 21 : index
    %c1_400 = arith.constant 1 : index
    %c0_401 = arith.constant 0 : index
    %145 = vector.load %arg14[%c0_399, %c21, %c1_400, %c0_401] : memref<1x40x16x128xf32, #tpu.memory_space<vmem>>, vector<1x8x8x128xf32>
    tpu.vector_store %arg14[%c0_399, %c21, %c1_400, %c0_401], %144 {strides = array<i32>} : memref<1x40x16x128xf32, #tpu.memory_space<vmem>>, vector<1x8x8x128xf32>,
    %146 = vector.extract_strided_slice %136 {offsets = [0, 384], sizes = [64, 128], strides = [1, 1]} : vector<64x512xf32> to vector<64x128xf32>
    %147 = vector.shape_cast %146 : vector<64x128xf32> to vector<1x8x8x128xf32>
    %c0_402 = arith.constant 0 : index
    %c31 = arith.constant 31 : index
    %c1_403 = arith.constant 1 : index
    %c0_404 = arith.constant 0 : index
    %148 = vector.load %arg14[%c0_402, %c31, %c1_403, %c0_404] : memref<1x40x16x128xf32, #tpu.memory_space<vmem>>, vector<1x8x8x128xf32>
    tpu.vector_store %arg14[%c0_402, %c31, %c1_403, %c0_404], %147 {strides = array<i32>} : memref<1x40x16x128xf32, #tpu.memory_space<vmem>>, vector<1x8x8x128xf32>,
    %c0_405 = arith.constant 0 : index
    %c30_406 = arith.constant 30 : index
    %c0_407 = arith.constant 0 : index
    %c0_408 = arith.constant 0 : index
    %149 = vector.load %arg14[%c0_405, %c30_406, %c0_407, %c0_408] : memref<1x40x16x128xf32, #tpu.memory_space<vmem>>, vector<1x8x8x128xf32>
    %c0_409 = arith.constant 0 : index
    %c0_410 = arith.constant 0 : index
    %c0_411 = arith.constant 0 : index
    %c0_412 = arith.constant 0 : index
    %150 = vector.load %arg16[%c0_409, %c0_410, %c0_411, %c0_412] : memref<1x32x8x1152xf32, #tpu.memory_space<vmem>>, vector<1x8x8x128xf32>
    tpu.vector_store %arg16[%c0_409, %c0_410, %c0_411, %c0_412], %149 {strides = array<i32>} : memref<1x32x8x1152xf32, #tpu.memory_space<vmem>>, vector<1x8x8x128xf32>,
    %c0_413 = arith.constant 0 : index
    %c20_414 = arith.constant 20 : index
    %c1_415 = arith.constant 1 : index
    %c0_416 = arith.constant 0 : index
    %151 = vector.load %arg14[%c0_413, %c20_414, %c1_415, %c0_416] : memref<1x40x16x128xf32, #tpu.memory_space<vmem>>, vector<1x8x8x128xf32>
    %c0_417 = arith.constant 0 : index
    %c0_418 = arith.constant 0 : index
    %c0_419 = arith.constant 0 : index
    %c128_420 = arith.constant 128 : index
    %152 = vector.load %arg16[%c0_417, %c0_418, %c0_419, %c128_420] : memref<1x32x8x1152xf32, #tpu.memory_space<vmem>>, vector<1x8x8x128xf32>
    tpu.vector_store %arg16[%c0_417, %c0_418, %c0_419, %c128_420], %151 {strides = array<i32>} : memref<1x32x8x1152xf32, #tpu.memory_space<vmem>>, vector<1x8x8x128xf32>,
    %c0_421 = arith.constant 0 : index
    %c30_422 = arith.constant 30 : index
    %c1_423 = arith.constant 1 : index
    %c0_424 = arith.constant 0 : index
    %153 = vector.load %arg14[%c0_421, %c30_422, %c1_423, %c0_424] : memref<1x40x16x128xf32, #tpu.memory_space<vmem>>, vector<1x8x8x128xf32>
    %c0_425 = arith.constant 0 : index
    %c0_426 = arith.constant 0 : index
    %c0_427 = arith.constant 0 : index
    %c256_428 = arith.constant 256 : index
    %154 = vector.load %arg16[%c0_425, %c0_426, %c0_427, %c256_428] : memref<1x32x8x1152xf32, #tpu.memory_space<vmem>>, vector<1x8x8x128xf32>
    tpu.vector_store %arg16[%c0_425, %c0_426, %c0_427, %c256_428], %153 {strides = array<i32>} : memref<1x32x8x1152xf32, #tpu.memory_space<vmem>>, vector<1x8x8x128xf32>,
    %c0_429 = arith.constant 0 : index
    %c11_430 = arith.constant 11 : index
    %c0_431 = arith.constant 0 : index
    %c0_432 = arith.constant 0 : index
    %155 = vector.load %arg14[%c0_429, %c11_430, %c0_431, %c0_432] : memref<1x40x16x128xf32, #tpu.memory_space<vmem>>, vector<1x8x8x128xf32>
    %c0_433 = arith.constant 0 : index
    %c0_434 = arith.constant 0 : index
    %c0_435 = arith.constant 0 : index
    %c384_436 = arith.constant 384 : index
    %156 = vector.load %arg16[%c0_433, %c0_434, %c0_435, %c384_436] : memref<1x32x8x1152xf32, #tpu.memory_space<vmem>>, vector<1x8x8x128xf32>
    tpu.vector_store %arg16[%c0_433, %c0_434, %c0_435, %c384_436], %155 {strides = array<i32>} : memref<1x32x8x1152xf32, #tpu.memory_space<vmem>>, vector<1x8x8x128xf32>,
    %c0_437 = arith.constant 0 : index
    %c1_438 = arith.constant 1 : index
    %c1_439 = arith.constant 1 : index
    %c0_440 = arith.constant 0 : index
    %157 = vector.load %arg14[%c0_437, %c1_438, %c1_439, %c0_440] : memref<1x40x16x128xf32, #tpu.memory_space<vmem>>, vector<1x8x8x128xf32>
    %c0_441 = arith.constant 0 : index
    %c0_442 = arith.constant 0 : index
    %c0_443 = arith.constant 0 : index
    %c512_444 = arith.constant 512 : index
    %158 = vector.load %arg16[%c0_441, %c0_442, %c0_443, %c512_444] : memref<1x32x8x1152xf32, #tpu.memory_space<vmem>>, vector<1x8x8x128xf32>
    tpu.vector_store %arg16[%c0_441, %c0_442, %c0_443, %c512_444], %157 {strides = array<i32>} : memref<1x32x8x1152xf32, #tpu.memory_space<vmem>>, vector<1x8x8x128xf32>,
    %c0_445 = arith.constant 0 : index
    %c11_446 = arith.constant 11 : index
    %c1_447 = arith.constant 1 : index
    %c0_448 = arith.constant 0 : index
    %159 = vector.load %arg14[%c0_445, %c11_446, %c1_447, %c0_448] : memref<1x40x16x128xf32, #tpu.memory_space<vmem>>, vector<1x8x8x128xf32>
    %c0_449 = arith.constant 0 : index
    %c0_450 = arith.constant 0 : index
    %c0_451 = arith.constant 0 : index
    %c640_452 = arith.constant 640 : index
    %160 = vector.load %arg16[%c0_449, %c0_450, %c0_451, %c640_452] : memref<1x32x8x1152xf32, #tpu.memory_space<vmem>>, vector<1x8x8x128xf32>
    tpu.vector_store %arg16[%c0_449, %c0_450, %c0_451, %c640_452], %159 {strides = array<i32>} : memref<1x32x8x1152xf32, #tpu.memory_space<vmem>>, vector<1x8x8x128xf32>,
    %c0_453 = arith.constant 0 : index
    %c31_454 = arith.constant 31 : index
    %c0_455 = arith.constant 0 : index
    %c0_456 = arith.constant 0 : index
    %161 = vector.load %arg14[%c0_453, %c31_454, %c0_455, %c0_456] : memref<1x40x16x128xf32, #tpu.memory_space<vmem>>, vector<1x8x8x128xf32>
    %c0_457 = arith.constant 0 : index
    %c0_458 = arith.constant 0 : index
    %c0_459 = arith.constant 0 : index
    %c768_460 = arith.constant 768 : index
    %162 = vector.load %arg16[%c0_457, %c0_458, %c0_459, %c768_460] : memref<1x32x8x1152xf32, #tpu.memory_space<vmem>>, vector<1x8x8x128xf32>
    tpu.vector_store %arg16[%c0_457, %c0_458, %c0_459, %c768_460], %161 {strides = array<i32>} : memref<1x32x8x1152xf32, #tpu.memory_space<vmem>>, vector<1x8x8x128xf32>,
    %c0_461 = arith.constant 0 : index
    %c21_462 = arith.constant 21 : index
    %c1_463 = arith.constant 1 : index
    %c0_464 = arith.constant 0 : index
    %163 = vector.load %arg14[%c0_461, %c21_462, %c1_463, %c0_464] : memref<1x40x16x128xf32, #tpu.memory_space<vmem>>, vector<1x8x8x128xf32>
    %c0_465 = arith.constant 0 : index
    %c0_466 = arith.constant 0 : index
    %c0_467 = arith.constant 0 : index
    %c896_468 = arith.constant 896 : index
    %164 = vector.load %arg16[%c0_465, %c0_466, %c0_467, %c896_468] : memref<1x32x8x1152xf32, #tpu.memory_space<vmem>>, vector<1x8x8x128xf32>
    tpu.vector_store %arg16[%c0_465, %c0_466, %c0_467, %c896_468], %163 {strides = array<i32>} : memref<1x32x8x1152xf32, #tpu.memory_space<vmem>>, vector<1x8x8x128xf32>,
    %c0_469 = arith.constant 0 : index
    %c31_470 = arith.constant 31 : index
    %c1_471 = arith.constant 1 : index
    %c0_472 = arith.constant 0 : index
    %165 = vector.load %arg14[%c0_469, %c31_470, %c1_471, %c0_472] : memref<1x40x16x128xf32, #tpu.memory_space<vmem>>, vector<1x8x8x128xf32>
    %c0_473 = arith.constant 0 : index
    %c0_474 = arith.constant 0 : index
    %c0_475 = arith.constant 0 : index
    %c1024_476 = arith.constant 1024 : index
    %166 = vector.load %arg16[%c0_473, %c0_474, %c0_475, %c1024_476] : memref<1x32x8x1152xf32, #tpu.memory_space<vmem>>, vector<1x8x8x128xf32>
    tpu.vector_store %arg16[%c0_473, %c0_474, %c0_475, %c1024_476], %165 {strides = array<i32>} : memref<1x32x8x1152xf32, #tpu.memory_space<vmem>>, vector<1x8x8x128xf32>,
    %c0_477 = arith.constant 0 : index
    %c20_478 = arith.constant 20 : index
    %c1_479 = arith.constant 1 : index
    %c0_480 = arith.constant 0 : index
    %167 = vector.load %arg14[%c0_477, %c20_478, %c1_479, %c0_480] : memref<1x40x16x128xf32, #tpu.memory_space<vmem>>, vector<1x8x8x128xf32>
    %c0_481 = arith.constant 0 : index
    %c8 = arith.constant 8 : index
    %c0_482 = arith.constant 0 : index
    %c0_483 = arith.constant 0 : index
    %168 = vector.load %arg16[%c0_481, %c8, %c0_482, %c0_483] : memref<1x32x8x1152xf32, #tpu.memory_space<vmem>>, vector<1x8x8x128xf32>
    tpu.vector_store %arg16[%c0_481, %c8, %c0_482, %c0_483], %167 {strides = array<i32>} : memref<1x32x8x1152xf32, #tpu.memory_space<vmem>>, vector<1x8x8x128xf32>,
    %c0_484 = arith.constant 0 : index
    %c30_485 = arith.constant 30 : index
    %c1_486 = arith.constant 1 : index
    %c0_487 = arith.constant 0 : index
    %169 = vector.load %arg14[%c0_484, %c30_485, %c1_486, %c0_487] : memref<1x40x16x128xf32, #tpu.memory_space<vmem>>, vector<1x8x8x128xf32>
    %c0_488 = arith.constant 0 : index
    %c8_489 = arith.constant 8 : index
    %c0_490 = arith.constant 0 : index
    %c128_491 = arith.constant 128 : index
    %170 = vector.load %arg16[%c0_488, %c8_489, %c0_490, %c128_491] : memref<1x32x8x1152xf32, #tpu.memory_space<vmem>>, vector<1x8x8x128xf32>
    tpu.vector_store %arg16[%c0_488, %c8_489, %c0_490, %c128_491], %169 {strides = array<i32>} : memref<1x32x8x1152xf32, #tpu.memory_space<vmem>>, vector<1x8x8x128xf32>,
    %c0_492 = arith.constant 0 : index
    %c20_493 = arith.constant 20 : index
    %c2_494 = arith.constant 2 : index
    %c0_495 = arith.constant 0 : index
    %171 = vector.load %arg14[%c0_492, %c20_493, %c2_494, %c0_495] : memref<1x40x16x128xf32, #tpu.memory_space<vmem>>, vector<1x8x8x128xf32>
    %c0_496 = arith.constant 0 : index
    %c8_497 = arith.constant 8 : index
    %c0_498 = arith.constant 0 : index
    %c256_499 = arith.constant 256 : index
    %172 = vector.load %arg16[%c0_496, %c8_497, %c0_498, %c256_499] : memref<1x32x8x1152xf32, #tpu.memory_space<vmem>>, vector<1x8x8x128xf32>
    tpu.vector_store %arg16[%c0_496, %c8_497, %c0_498, %c256_499], %171 {strides = array<i32>} : memref<1x32x8x1152xf32, #tpu.memory_space<vmem>>, vector<1x8x8x128xf32>,
    %c0_500 = arith.constant 0 : index
    %c1_501 = arith.constant 1 : index
    %c1_502 = arith.constant 1 : index
    %c0_503 = arith.constant 0 : index
    %173 = vector.load %arg14[%c0_500, %c1_501, %c1_502, %c0_503] : memref<1x40x16x128xf32, #tpu.memory_space<vmem>>, vector<1x8x8x128xf32>
    %c0_504 = arith.constant 0 : index
    %c8_505 = arith.constant 8 : index
    %c0_506 = arith.constant 0 : index
    %c384_507 = arith.constant 384 : index
    %174 = vector.load %arg16[%c0_504, %c8_505, %c0_506, %c384_507] : memref<1x32x8x1152xf32, #tpu.memory_space<vmem>>, vector<1x8x8x128xf32>
    tpu.vector_store %arg16[%c0_504, %c8_505, %c0_506, %c384_507], %173 {strides = array<i32>} : memref<1x32x8x1152xf32, #tpu.memory_space<vmem>>, vector<1x8x8x128xf32>,
    %c0_508 = arith.constant 0 : index
    %c11_509 = arith.constant 11 : index
    %c1_510 = arith.constant 1 : index
    %c0_511 = arith.constant 0 : index
    %175 = vector.load %arg14[%c0_508, %c11_509, %c1_510, %c0_511] : memref<1x40x16x128xf32, #tpu.memory_space<vmem>>, vector<1x8x8x128xf32>
    %c0_512 = arith.constant 0 : index
    %c8_513 = arith.constant 8 : index
    %c0_514 = arith.constant 0 : index
    %c512_515 = arith.constant 512 : index
    %176 = vector.load %arg16[%c0_512, %c8_513, %c0_514, %c512_515] : memref<1x32x8x1152xf32, #tpu.memory_space<vmem>>, vector<1x8x8x128xf32>
    tpu.vector_store %arg16[%c0_512, %c8_513, %c0_514, %c512_515], %175 {strides = array<i32>} : memref<1x32x8x1152xf32, #tpu.memory_space<vmem>>, vector<1x8x8x128xf32>,
    %c0_516 = arith.constant 0 : index
    %c1_517 = arith.constant 1 : index
    %c2_518 = arith.constant 2 : index
    %c0_519 = arith.constant 0 : index
    %177 = vector.load %arg14[%c0_516, %c1_517, %c2_518, %c0_519] : memref<1x40x16x128xf32, #tpu.memory_space<vmem>>, vector<1x8x8x128xf32>
    %c0_520 = arith.constant 0 : index
    %c8_521 = arith.constant 8 : index
    %c0_522 = arith.constant 0 : index
    %c640_523 = arith.constant 640 : index
    %178 = vector.load %arg16[%c0_520, %c8_521, %c0_522, %c640_523] : memref<1x32x8x1152xf32, #tpu.memory_space<vmem>>, vector<1x8x8x128xf32>
    tpu.vector_store %arg16[%c0_520, %c8_521, %c0_522, %c640_523], %177 {strides = array<i32>} : memref<1x32x8x1152xf32, #tpu.memory_space<vmem>>, vector<1x8x8x128xf32>,
    %c0_524 = arith.constant 0 : index
    %c21_525 = arith.constant 21 : index
    %c1_526 = arith.constant 1 : index
    %c0_527 = arith.constant 0 : index
    %179 = vector.load %arg14[%c0_524, %c21_525, %c1_526, %c0_527] : memref<1x40x16x128xf32, #tpu.memory_space<vmem>>, vector<1x8x8x128xf32>
    %c0_528 = arith.constant 0 : index
    %c8_529 = arith.constant 8 : index
    %c0_530 = arith.constant 0 : index
    %c768_531 = arith.constant 768 : index
    %180 = vector.load %arg16[%c0_528, %c8_529, %c0_530, %c768_531] : memref<1x32x8x1152xf32, #tpu.memory_space<vmem>>, vector<1x8x8x128xf32>
    tpu.vector_store %arg16[%c0_528, %c8_529, %c0_530, %c768_531], %179 {strides = array<i32>} : memref<1x32x8x1152xf32, #tpu.memory_space<vmem>>, vector<1x8x8x128xf32>,
    %c0_532 = arith.constant 0 : index
    %c31_533 = arith.constant 31 : index
    %c1_534 = arith.constant 1 : index
    %c0_535 = arith.constant 0 : index
    %181 = vector.load %arg14[%c0_532, %c31_533, %c1_534, %c0_535] : memref<1x40x16x128xf32, #tpu.memory_space<vmem>>, vector<1x8x8x128xf32>
    %c0_536 = arith.constant 0 : index
    %c8_537 = arith.constant 8 : index
    %c0_538 = arith.constant 0 : index
    %c896_539 = arith.constant 896 : index
    %182 = vector.load %arg16[%c0_536, %c8_537, %c0_538, %c896_539] : memref<1x32x8x1152xf32, #tpu.memory_space<vmem>>, vector<1x8x8x128xf32>
    tpu.vector_store %arg16[%c0_536, %c8_537, %c0_538, %c896_539], %181 {strides = array<i32>} : memref<1x32x8x1152xf32, #tpu.memory_space<vmem>>, vector<1x8x8x128xf32>,
    %c0_540 = arith.constant 0 : index
    %c21_541 = arith.constant 21 : index
    %c2_542 = arith.constant 2 : index
    %c0_543 = arith.constant 0 : index
    %183 = vector.load %arg14[%c0_540, %c21_541, %c2_542, %c0_543] : memref<1x40x16x128xf32, #tpu.memory_space<vmem>>, vector<1x8x8x128xf32>
    %c0_544 = arith.constant 0 : index
    %c8_545 = arith.constant 8 : index
    %c0_546 = arith.constant 0 : index
    %c1024_547 = arith.constant 1024 : index
    %184 = vector.load %arg16[%c0_544, %c8_545, %c0_546, %c1024_547] : memref<1x32x8x1152xf32, #tpu.memory_space<vmem>>, vector<1x8x8x128xf32>
    tpu.vector_store %arg16[%c0_544, %c8_545, %c0_546, %c1024_547], %183 {strides = array<i32>} : memref<1x32x8x1152xf32, #tpu.memory_space<vmem>>, vector<1x8x8x128xf32>,
    %c0_548 = arith.constant 0 : index
    %c11_549 = arith.constant 11 : index
    %c0_550 = arith.constant 0 : index
    %c0_551 = arith.constant 0 : index
    %185 = vector.load %arg14[%c0_548, %c11_549, %c0_550, %c0_551] : memref<1x40x16x128xf32, #tpu.memory_space<vmem>>, vector<1x8x8x128xf32>
    %c0_552 = arith.constant 0 : index
    %c16 = arith.constant 16 : index
    %c0_553 = arith.constant 0 : index
    %c0_554 = arith.constant 0 : index
    %186 = vector.load %arg16[%c0_552, %c16, %c0_553, %c0_554] : memref<1x32x8x1152xf32, #tpu.memory_space<vmem>>, vector<1x8x8x128xf32>
    tpu.vector_store %arg16[%c0_552, %c16, %c0_553, %c0_554], %185 {strides = array<i32>} : memref<1x32x8x1152xf32, #tpu.memory_space<vmem>>, vector<1x8x8x128xf32>,
    %c0_555 = arith.constant 0 : index
    %c1_556 = arith.constant 1 : index
    %c1_557 = arith.constant 1 : index
    %c0_558 = arith.constant 0 : index
    %187 = vector.load %arg14[%c0_555, %c1_556, %c1_557, %c0_558] : memref<1x40x16x128xf32, #tpu.memory_space<vmem>>, vector<1x8x8x128xf32>
    %c0_559 = arith.constant 0 : index
    %c16_560 = arith.constant 16 : index
    %c0_561 = arith.constant 0 : index
    %c128_562 = arith.constant 128 : index
    %188 = vector.load %arg16[%c0_559, %c16_560, %c0_561, %c128_562] : memref<1x32x8x1152xf32, #tpu.memory_space<vmem>>, vector<1x8x8x128xf32>
    tpu.vector_store %arg16[%c0_559, %c16_560, %c0_561, %c128_562], %187 {strides = array<i32>} : memref<1x32x8x1152xf32, #tpu.memory_space<vmem>>, vector<1x8x8x128xf32>,
    %c0_563 = arith.constant 0 : index
    %c11_564 = arith.constant 11 : index
    %c1_565 = arith.constant 1 : index
    %c0_566 = arith.constant 0 : index
    %189 = vector.load %arg14[%c0_563, %c11_564, %c1_565, %c0_566] : memref<1x40x16x128xf32, #tpu.memory_space<vmem>>, vector<1x8x8x128xf32>
    %c0_567 = arith.constant 0 : index
    %c16_568 = arith.constant 16 : index
    %c0_569 = arith.constant 0 : index
    %c256_570 = arith.constant 256 : index
    %190 = vector.load %arg16[%c0_567, %c16_568, %c0_569, %c256_570] : memref<1x32x8x1152xf32, #tpu.memory_space<vmem>>, vector<1x8x8x128xf32>
    tpu.vector_store %arg16[%c0_567, %c16_568, %c0_569, %c256_570], %189 {strides = array<i32>} : memref<1x32x8x1152xf32, #tpu.memory_space<vmem>>, vector<1x8x8x128xf32>,
    %c0_571 = arith.constant 0 : index
    %c31_572 = arith.constant 31 : index
    %c0_573 = arith.constant 0 : index
    %c0_574 = arith.constant 0 : index
    %191 = vector.load %arg14[%c0_571, %c31_572, %c0_573, %c0_574] : memref<1x40x16x128xf32, #tpu.memory_space<vmem>>, vector<1x8x8x128xf32>
    %c0_575 = arith.constant 0 : index
    %c16_576 = arith.constant 16 : index
    %c0_577 = arith.constant 0 : index
    %c384_578 = arith.constant 384 : index
    %192 = vector.load %arg16[%c0_575, %c16_576, %c0_577, %c384_578] : memref<1x32x8x1152xf32, #tpu.memory_space<vmem>>, vector<1x8x8x128xf32>
    tpu.vector_store %arg16[%c0_575, %c16_576, %c0_577, %c384_578], %191 {strides = array<i32>} : memref<1x32x8x1152xf32, #tpu.memory_space<vmem>>, vector<1x8x8x128xf32>,
    %c0_579 = arith.constant 0 : index
    %c21_580 = arith.constant 21 : index
    %c1_581 = arith.constant 1 : index
    %c0_582 = arith.constant 0 : index
    %193 = vector.load %arg14[%c0_579, %c21_580, %c1_581, %c0_582] : memref<1x40x16x128xf32, #tpu.memory_space<vmem>>, vector<1x8x8x128xf32>
    %c0_583 = arith.constant 0 : index
    %c16_584 = arith.constant 16 : index
    %c0_585 = arith.constant 0 : index
    %c512_586 = arith.constant 512 : index
    %194 = vector.load %arg16[%c0_583, %c16_584, %c0_585, %c512_586] : memref<1x32x8x1152xf32, #tpu.memory_space<vmem>>, vector<1x8x8x128xf32>
    tpu.vector_store %arg16[%c0_583, %c16_584, %c0_585, %c512_586], %193 {strides = array<i32>} : memref<1x32x8x1152xf32, #tpu.memory_space<vmem>>, vector<1x8x8x128xf32>,
    %c0_587 = arith.constant 0 : index
    %c31_588 = arith.constant 31 : index
    %c1_589 = arith.constant 1 : index
    %c0_590 = arith.constant 0 : index
    %195 = vector.load %arg14[%c0_587, %c31_588, %c1_589, %c0_590] : memref<1x40x16x128xf32, #tpu.memory_space<vmem>>, vector<1x8x8x128xf32>
    %c0_591 = arith.constant 0 : index
    %c16_592 = arith.constant 16 : index
    %c0_593 = arith.constant 0 : index
    %c640_594 = arith.constant 640 : index
    %196 = vector.load %arg16[%c0_591, %c16_592, %c0_593, %c640_594] : memref<1x32x8x1152xf32, #tpu.memory_space<vmem>>, vector<1x8x8x128xf32>
    tpu.vector_store %arg16[%c0_591, %c16_592, %c0_593, %c640_594], %195 {strides = array<i32>} : memref<1x32x8x1152xf32, #tpu.memory_space<vmem>>, vector<1x8x8x128xf32>,
    %c0_595 = arith.constant 0 : index
    %c12 = arith.constant 12 : index
    %c0_596 = arith.constant 0 : index
    %c0_597 = arith.constant 0 : index
    %197 = vector.load %arg14[%c0_595, %c12, %c0_596, %c0_597] : memref<1x40x16x128xf32, #tpu.memory_space<vmem>>, vector<1x8x8x128xf32>
    %c0_598 = arith.constant 0 : index
    %c16_599 = arith.constant 16 : index
    %c0_600 = arith.constant 0 : index
    %c768_601 = arith.constant 768 : index
    %198 = vector.load %arg16[%c0_598, %c16_599, %c0_600, %c768_601] : memref<1x32x8x1152xf32, #tpu.memory_space<vmem>>, vector<1x8x8x128xf32>
    tpu.vector_store %arg16[%c0_598, %c16_599, %c0_600, %c768_601], %197 {strides = array<i32>} : memref<1x32x8x1152xf32, #tpu.memory_space<vmem>>, vector<1x8x8x128xf32>,
    %c0_602 = arith.constant 0 : index
    %c2_603 = arith.constant 2 : index
    %c1_604 = arith.constant 1 : index
    %c0_605 = arith.constant 0 : index
    %199 = vector.load %arg14[%c0_602, %c2_603, %c1_604, %c0_605] : memref<1x40x16x128xf32, #tpu.memory_space<vmem>>, vector<1x8x8x128xf32>
    %c0_606 = arith.constant 0 : index
    %c16_607 = arith.constant 16 : index
    %c0_608 = arith.constant 0 : index
    %c896_609 = arith.constant 896 : index
    %200 = vector.load %arg16[%c0_606, %c16_607, %c0_608, %c896_609] : memref<1x32x8x1152xf32, #tpu.memory_space<vmem>>, vector<1x8x8x128xf32>
    tpu.vector_store %arg16[%c0_606, %c16_607, %c0_608, %c896_609], %199 {strides = array<i32>} : memref<1x32x8x1152xf32, #tpu.memory_space<vmem>>, vector<1x8x8x128xf32>,
    %c0_610 = arith.constant 0 : index
    %c12_611 = arith.constant 12 : index
    %c1_612 = arith.constant 1 : index
    %c0_613 = arith.constant 0 : index
    %201 = vector.load %arg14[%c0_610, %c12_611, %c1_612, %c0_613] : memref<1x40x16x128xf32, #tpu.memory_space<vmem>>, vector<1x8x8x128xf32>
    %c0_614 = arith.constant 0 : index
    %c16_615 = arith.constant 16 : index
    %c0_616 = arith.constant 0 : index
    %c1024_617 = arith.constant 1024 : index
    %202 = vector.load %arg16[%c0_614, %c16_615, %c0_616, %c1024_617] : memref<1x32x8x1152xf32, #tpu.memory_space<vmem>>, vector<1x8x8x128xf32>
    tpu.vector_store %arg16[%c0_614, %c16_615, %c0_616, %c1024_617], %201 {strides = array<i32>} : memref<1x32x8x1152xf32, #tpu.memory_space<vmem>>, vector<1x8x8x128xf32>,
    %c0_618 = arith.constant 0 : index
    %c1_619 = arith.constant 1 : index
    %c1_620 = arith.constant 1 : index
    %c0_621 = arith.constant 0 : index
    %203 = vector.load %arg14[%c0_618, %c1_619, %c1_620, %c0_621] : memref<1x40x16x128xf32, #tpu.memory_space<vmem>>, vector<1x8x8x128xf32>
    %c0_622 = arith.constant 0 : index
    %c24 = arith.constant 24 : index
    %c0_623 = arith.constant 0 : index
    %c0_624 = arith.constant 0 : index
    %204 = vector.load %arg16[%c0_622, %c24, %c0_623, %c0_624] : memref<1x32x8x1152xf32, #tpu.memory_space<vmem>>, vector<1x8x8x128xf32>
    tpu.vector_store %arg16[%c0_622, %c24, %c0_623, %c0_624], %203 {strides = array<i32>} : memref<1x32x8x1152xf32, #tpu.memory_space<vmem>>, vector<1x8x8x128xf32>,
    %c0_625 = arith.constant 0 : index
    %c11_626 = arith.constant 11 : index
    %c1_627 = arith.constant 1 : index
    %c0_628 = arith.constant 0 : index
    %205 = vector.load %arg14[%c0_625, %c11_626, %c1_627, %c0_628] : memref<1x40x16x128xf32, #tpu.memory_space<vmem>>, vector<1x8x8x128xf32>
    %c0_629 = arith.constant 0 : index
    %c24_630 = arith.constant 24 : index
    %c0_631 = arith.constant 0 : index
    %c128_632 = arith.constant 128 : index
    %206 = vector.load %arg16[%c0_629, %c24_630, %c0_631, %c128_632] : memref<1x32x8x1152xf32, #tpu.memory_space<vmem>>, vector<1x8x8x128xf32>
    tpu.vector_store %arg16[%c0_629, %c24_630, %c0_631, %c128_632], %205 {strides = array<i32>} : memref<1x32x8x1152xf32, #tpu.memory_space<vmem>>, vector<1x8x8x128xf32>,
    %c0_633 = arith.constant 0 : index
    %c1_634 = arith.constant 1 : index
    %c2_635 = arith.constant 2 : index
    %c0_636 = arith.constant 0 : index
    %207 = vector.load %arg14[%c0_633, %c1_634, %c2_635, %c0_636] : memref<1x40x16x128xf32, #tpu.memory_space<vmem>>, vector<1x8x8x128xf32>
    %c0_637 = arith.constant 0 : index
    %c24_638 = arith.constant 24 : index
    %c0_639 = arith.constant 0 : index
    %c256_640 = arith.constant 256 : index
    %208 = vector.load %arg16[%c0_637, %c24_638, %c0_639, %c256_640] : memref<1x32x8x1152xf32, #tpu.memory_space<vmem>>, vector<1x8x8x128xf32>
    tpu.vector_store %arg16[%c0_637, %c24_638, %c0_639, %c256_640], %207 {strides = array<i32>} : memref<1x32x8x1152xf32, #tpu.memory_space<vmem>>, vector<1x8x8x128xf32>,
    %c0_641 = arith.constant 0 : index
    %c21_642 = arith.constant 21 : index
    %c1_643 = arith.constant 1 : index
    %c0_644 = arith.constant 0 : index
    %209 = vector.load %arg14[%c0_641, %c21_642, %c1_643, %c0_644] : memref<1x40x16x128xf32, #tpu.memory_space<vmem>>, vector<1x8x8x128xf32>
    %c0_645 = arith.constant 0 : index
    %c24_646 = arith.constant 24 : index
    %c0_647 = arith.constant 0 : index
    %c384_648 = arith.constant 384 : index
    %210 = vector.load %arg16[%c0_645, %c24_646, %c0_647, %c384_648] : memref<1x32x8x1152xf32, #tpu.memory_space<vmem>>, vector<1x8x8x128xf32>
    tpu.vector_store %arg16[%c0_645, %c24_646, %c0_647, %c384_648], %209 {strides = array<i32>} : memref<1x32x8x1152xf32, #tpu.memory_space<vmem>>, vector<1x8x8x128xf32>,
    %c0_649 = arith.constant 0 : index
    %c31_650 = arith.constant 31 : index
    %c1_651 = arith.constant 1 : index
    %c0_652 = arith.constant 0 : index
    %211 = vector.load %arg14[%c0_649, %c31_650, %c1_651, %c0_652] : memref<1x40x16x128xf32, #tpu.memory_space<vmem>>, vector<1x8x8x128xf32>
    %c0_653 = arith.constant 0 : index
    %c24_654 = arith.constant 24 : index
    %c0_655 = arith.constant 0 : index
    %c512_656 = arith.constant 512 : index
    %212 = vector.load %arg16[%c0_653, %c24_654, %c0_655, %c512_656] : memref<1x32x8x1152xf32, #tpu.memory_space<vmem>>, vector<1x8x8x128xf32>
    tpu.vector_store %arg16[%c0_653, %c24_654, %c0_655, %c512_656], %211 {strides = array<i32>} : memref<1x32x8x1152xf32, #tpu.memory_space<vmem>>, vector<1x8x8x128xf32>,
    %c0_657 = arith.constant 0 : index
    %c21_658 = arith.constant 21 : index
    %c2_659 = arith.constant 2 : index
    %c0_660 = arith.constant 0 : index
    %213 = vector.load %arg14[%c0_657, %c21_658, %c2_659, %c0_660] : memref<1x40x16x128xf32, #tpu.memory_space<vmem>>, vector<1x8x8x128xf32>
    %c0_661 = arith.constant 0 : index
    %c24_662 = arith.constant 24 : index
    %c0_663 = arith.constant 0 : index
    %c640_664 = arith.constant 640 : index
    %214 = vector.load %arg16[%c0_661, %c24_662, %c0_663, %c640_664] : memref<1x32x8x1152xf32, #tpu.memory_space<vmem>>, vector<1x8x8x128xf32>
    tpu.vector_store %arg16[%c0_661, %c24_662, %c0_663, %c640_664], %213 {strides = array<i32>} : memref<1x32x8x1152xf32, #tpu.memory_space<vmem>>, vector<1x8x8x128xf32>,
    %c0_665 = arith.constant 0 : index
    %c2_666 = arith.constant 2 : index
    %c1_667 = arith.constant 1 : index
    %c0_668 = arith.constant 0 : index
    %215 = vector.load %arg14[%c0_665, %c2_666, %c1_667, %c0_668] : memref<1x40x16x128xf32, #tpu.memory_space<vmem>>, vector<1x8x8x128xf32>
    %c0_669 = arith.constant 0 : index
    %c24_670 = arith.constant 24 : index
    %c0_671 = arith.constant 0 : index
    %c768_672 = arith.constant 768 : index
    %216 = vector.load %arg16[%c0_669, %c24_670, %c0_671, %c768_672] : memref<1x32x8x1152xf32, #tpu.memory_space<vmem>>, vector<1x8x8x128xf32>
    tpu.vector_store %arg16[%c0_669, %c24_670, %c0_671, %c768_672], %215 {strides = array<i32>} : memref<1x32x8x1152xf32, #tpu.memory_space<vmem>>, vector<1x8x8x128xf32>,
    %c0_673 = arith.constant 0 : index
    %c12_674 = arith.constant 12 : index
    %c1_675 = arith.constant 1 : index
    %c0_676 = arith.constant 0 : index
    %217 = vector.load %arg14[%c0_673, %c12_674, %c1_675, %c0_676] : memref<1x40x16x128xf32, #tpu.memory_space<vmem>>, vector<1x8x8x128xf32>
    %c0_677 = arith.constant 0 : index
    %c24_678 = arith.constant 24 : index
    %c0_679 = arith.constant 0 : index
    %c896_680 = arith.constant 896 : index
    %218 = vector.load %arg16[%c0_677, %c24_678, %c0_679, %c896_680] : memref<1x32x8x1152xf32, #tpu.memory_space<vmem>>, vector<1x8x8x128xf32>
    tpu.vector_store %arg16[%c0_677, %c24_678, %c0_679, %c896_680], %217 {strides = array<i32>} : memref<1x32x8x1152xf32, #tpu.memory_space<vmem>>, vector<1x8x8x128xf32>,
    %c0_681 = arith.constant 0 : index
    %c2_682 = arith.constant 2 : index
    %c2_683 = arith.constant 2 : index
    %c0_684 = arith.constant 0 : index
    %219 = vector.load %arg14[%c0_681, %c2_682, %c2_683, %c0_684] : memref<1x40x16x128xf32, #tpu.memory_space<vmem>>, vector<1x8x8x128xf32>
    %c0_685 = arith.constant 0 : index
    %c24_686 = arith.constant 24 : index
    %c0_687 = arith.constant 0 : index
    %c1024_688 = arith.constant 1024 : index
    %220 = vector.load %arg16[%c0_685, %c24_686, %c0_687, %c1024_688] : memref<1x32x8x1152xf32, #tpu.memory_space<vmem>>, vector<1x8x8x128xf32>
    tpu.vector_store %arg16[%c0_685, %c24_686, %c0_687, %c1024_688], %219 {strides = array<i32>} : memref<1x32x8x1152xf32, #tpu.memory_space<vmem>>, vector<1x8x8x128xf32>,
    %c0_689 = arith.constant 0 : index
    %c0_690 = arith.constant 0 : index
    %c0_691 = arith.constant 0 : index
    %c0_692 = arith.constant 0 : index
    %221 = vector.load %arg16[%c0_689, %c0_690, %c0_691, %c0_692] : memref<1x32x8x1152xf32, #tpu.memory_space<vmem>>, vector<1x32x8x1152xf32>
    %222 = vector.shape_cast %221 : vector<1x32x8x1152xf32> to vector<256x1152xf32>
    %c0_693 = arith.constant 0 : index
    %c0_694 = arith.constant 0 : index
    %223 = vector.load %arg10[%c0_693, %c0_694] : memref<1152x128xf32, #tpu.memory_space<vmem>>, vector<1152x128xf32>
    %cst_695 = arith.constant dense<0.000000e+00> : vector<256x128xf32>
    %224 = tpu.matmul %222, %223, %cst_695 {dimension_numbers = #tpu.dot_dimension_numbers<[1], [0], [0], [1], [0, 0, 1, 1], [], []>} : vector<256x1152xf32>, vector<1152x128xf32>, vector<256x128xf32> -> vector<256x128xf32>
    %c0_696 = arith.constant 0 : index
    %c0_697 = arith.constant 0 : index
    %225 = vector.load %arg11[%c0_696, %c0_697] : memref<1x128xf32, #tpu.memory_space<vmem>>, vector<1x128xf32>
    %226 = vector.broadcast %225 : vector<1x128xf32> to vector<256x128xf32>
    %227 = arith.addf %224, %226 : vector<256x128xf32>
    %228 = vector.shape_cast %227 : vector<256x128xf32> to vector<1x256x128xf32>
    %c0_698 = arith.constant 0 : index
    %c0_699 = arith.constant 0 : index
    %c0_700 = arith.constant 0 : index
    %229 = vector.load %arg12[%c0_698, %c0_699, %c0_700] : memref<1x256x128xf32, #tpu.memory_space<vmem>>, vector<1x256x128xf32>
    tpu.vector_store %arg12[%c0_698, %c0_699, %c0_700], %228 {strides = array<i32>} : memref<1x256x128xf32, #tpu.memory_space<vmem>>, vector<1x256x128xf32>,
    return
  }
  func.func @transform_0(%arg0: i32) -> (i32, i32, i32, i32) {
    %c0_i32 = arith.constant 0 : i32
    %c0_i32_0 = arith.constant 0 : i32
    %c0_i32_1 = arith.constant 0 : i32
    %c0_i32_2 = arith.constant 0 : i32
    return %arg0, %c0_i32, %c0_i32_0, %c0_i32_1 : i32, i32, i32, i32
  }
  func.func @transform_1(%arg0: i32) -> (i32, i32) {
    %c0_i32 = arith.constant 0 : i32
    %c0_i32_0 = arith.constant 0 : i32
    %c0_i32_1 = arith.constant 0 : i32
    return %c0_i32, %c0_i32_0 : i32, i32
  }
  func.func @transform_2(%arg0: i32) -> (i32, i32) {
    %c0_i32 = arith.constant 0 : i32
    %c0_i32_0 = arith.constant 0 : i32
    %c0_i32_1 = arith.constant 0 : i32
    return %c0_i32, %c0_i32_0 : i32, i32
  }
  func.func @transform_3(%arg0: i32) -> (i32, i32) {
    %c0_i32 = arith.constant 0 : i32
    %c0_i32_0 = arith.constant 0 : i32
    %c0_i32_1 = arith.constant 0 : i32
    return %c0_i32, %c0_i32_0 : i32, i32
  }
  func.func @transform_4(%arg0: i32) -> (i32, i32) {
    %c0_i32 = arith.constant 0 : i32
    %c0_i32_0 = arith.constant 0 : i32
    %c0_i32_1 = arith.constant 0 : i32
    return %c0_i32, %c0_i32_0 : i32, i32
  }
  func.func @transform_5(%arg0: i32) -> (i32, i32) {
    %c0_i32 = arith.constant 0 : i32
    %c0_i32_0 = arith.constant 0 : i32
    %c0_i32_1 = arith.constant 0 : i32
    return %c0_i32, %c0_i32_0 : i32, i32
  }
  func.func @transform_6(%arg0: i32) -> (i32, i32) {
    %c0_i32 = arith.constant 0 : i32
    %c0_i32_0 = arith.constant 0 : i32
    %c0_i32_1 = arith.constant 0 : i32
    return %c0_i32, %c0_i32_0 : i32, i32
  }
  func.func @transform_7(%arg0: i32) -> (i32, i32) {
    %c0_i32 = arith.constant 0 : i32
    %c0_i32_0 = arith.constant 0 : i32
    %c0_i32_1 = arith.constant 0 : i32
    return %c0_i32, %c0_i32_0 : i32, i32
  }
  func.func @transform_8(%arg0: i32) -> (i32, i32) {
    %c0_i32 = arith.constant 0 : i32
    %c0_i32_0 = arith.constant 0 : i32
    %c0_i32_1 = arith.constant 0 : i32
    return %c0_i32, %c0_i32_0 : i32, i32
  }
  func.func @transform_9(%arg0: i32) -> (i32, i32) {
    %c0_i32 = arith.constant 0 : i32
    %c0_i32_0 = arith.constant 0 : i32
    %c0_i32_1 = arith.constant 0 : i32
    return %c0_i32, %c0_i32_0 : i32, i32
  }
  func.func @transform_10(%arg0: i32) -> (i32, i32) {
    %c0_i32 = arith.constant 0 : i32
    %c0_i32_0 = arith.constant 0 : i32
    %c0_i32_1 = arith.constant 0 : i32
    return %c0_i32, %c0_i32_0 : i32, i32
  }
  func.func @transform_11(%arg0: i32) -> (i32, i32, i32) {
    %c0_i32 = arith.constant 0 : i32
    %c0_i32_0 = arith.constant 0 : i32
    %c0_i32_1 = arith.constant 0 : i32
    return %arg0, %c0_i32, %c0_i32_0 : i32, i32, i32
  }
}

</mosaic_0001>

<llo_original>
// kernel: decoder_forward.1
$region0: #{decoder_forward.1}
  #allocation0 [shape = 'u32[]', space=smem, size = 0x4, offset = 0x4, fixed_abs, tag = 'smem constant byte address 0x4 - core index']
  #allocation1 [shape = 'u32[144,128]{1,0:T(1,128)}', space=vmem, size = 0x12000, scoped, tag = 'internal scratch']
  #allocation2 [shape = 'f32[1,10,16,128]{3,2,1,0:T(8,128)}', space=vmem, size = 0x14000, scoped, tag = 'scratch operand']
  #allocation3 [shape = 'f32[1,40,16,128]{3,2,1,0:T(8,128)}', space=vmem, size = 0x50000, scoped, tag = 'scratch operand']
  #allocation4 [shape = 'f32[1,8,8,1152]{3,2,1,0:T(8,128)}', space=vmem, size = 0x48000, scoped, tag = 'scratch operand']
  #allocation5 [shape = 'f32[1,32,8,1152]{3,2,1,0:T(8,128)}', space=vmem, size = 0x120000, scoped, tag = 'scratch operand']
  %s0 = inlined_call_operand.vmem [shape: f32[2,8,8,128], index: 0, kind: input, shape index: {}]
  %s1 = inlined_call_operand.hbm [shape: f32[1152,128], index: 1, kind: input, shape index: {}]
  %s2 = inlined_call_operand.hbm [shape: f32[1,128], index: 2, kind: input, shape index: {}]
  %s3 = inlined_call_operand.hbm [shape: f32[1152,128], index: 3, kind: input, shape index: {}]
  %s4 = inlined_call_operand.hbm [shape: f32[128,128], index: 4, kind: input, shape index: {}]
  %s5 = inlined_call_operand.hbm [shape: f32[1152,128], index: 5, kind: input, shape index: {}]
  %s6 = inlined_call_operand.hbm [shape: f32[128,128], index: 6, kind: input, shape index: {}]
  %s7 = inlined_call_operand.hbm [shape: f32[1152,512], index: 7, kind: input, shape index: {}]
  %s8 = inlined_call_operand.hbm [shape: f32[1,512], index: 8, kind: input, shape index: {}]
  %s9 = inlined_call_operand.hbm [shape: f32[1152,128], index: 9, kind: input, shape index: {}]
  %s10 = inlined_call_operand.hbm [shape: f32[1,128], index: 10, kind: input, shape index: {}]
  %s11 = inlined_call_operand.vmem [shape: f32[2,256,128], index: 11, kind: output, shape index: {}]
  %s12 = sld [smem:[#allocation0]]
  $region117: #{decoder_forward.1} parent=0
    _
  %s14 = ssub.s32 1, %s12
  %s15 = scalar_select 0, %s14, %s12
  $region1: #{decoder_forward.1} parent=0
    #allocation6 [shape = 'u8[589824]{0}', space=vmem, size = 0x90000, scoped, tag = 'input window, operand 1, single buffered']
    #allocation7 [shape = 's32[2]{0}', space=sflag, size = 0x8, scoped, tag = 'scoped memory for decoder_forward.1']
    #allocation8 [shape = 'u8[512]{0}', space=vmem, size = 0x400, scoped, tag = 'input window, operand 2, single buffered']
    #allocation9 [shape = 's32[1]{0}', space=sflag, size = 0x4, scoped, tag = 'scoped memory for decoder_forward.1']
    #allocation10 [shape = 'u8[589824]{0}', space=vmem, size = 0x90000, scoped, tag = 'input window, operand 3, single buffered']
    #allocation11 [shape = 'u8[65536]{0}', space=vmem, size = 0x10000, scoped, tag = 'input window, operand 4, single buffered']
    #allocation12 [shape = 's32[1]{0}', space=sflag, size = 0x4, scoped, tag = 'scoped memory for decoder_forward.1']
    #allocation13 [shape = 'u8[589824]{0}', space=vmem, size = 0x90000, scoped, tag = 'input window, operand 5, single buffered']
    #allocation14 [shape = 'u8[65536]{0}', space=vmem, size = 0x10000, scoped, tag = 'input window, operand 6, single buffered']
    #allocation15 [shape = 's32[1]{0}', space=sflag, size = 0x4, scoped, tag = 'scoped memory for decoder_forward.1']
    #allocation16 [shape = 'u8[2359296]{0}', space=vmem, size = 0x240000, scoped, tag = 'input window, operand 7, single buffered']
    #allocation17 [shape = 'u8[2048]{0}', space=vmem, size = 0x800, scoped, tag = 'input window, operand 8, single buffered']
    #allocation18 [shape = 's32[1]{0}', space=sflag, size = 0x4, scoped, tag = 'scoped memory for decoder_forward.1']
    #allocation19 [shape = 'u8[589824]{0}', space=vmem, size = 0x90000, scoped, tag = 'input window, operand 9, single buffered']
    #allocation20 [shape = 'u8[512]{0}', space=vmem, size = 0x400, scoped, tag = 'input window, operand 10, single buffered']
    #allocation21 [shape = 's32[1]{0}', space=sflag, size = 0x4, scoped, tag = 'scoped memory for decoder_forward.1']
    %16 = vsyncpa [#allocation7], 0
    %17 = vsyncpa [#allocation9], 0
    %18 = vsyncpa [#allocation12], 0
    %19 = vsyncpa [#allocation15], 0
    %20 = vsyncpa [#allocation18], 0
    %21 = vsyncpa [#allocation21], 0
    loop: start=0, step=1, limit=4
    $region2: #{decoder_forward.1} parent=1 // loop_pre_header
      _
    $region3: #{decoder_forward.1} parent=1 // loop_header
      %s23 = sphi 0, %s27
      %p24 = scmp.ge.s32.totalorder %s23, 4
      %s33 = sphi 0, %s35
      %s36 = sphi 0, %s33
      %s37 = sphi 0, %s36
      %s53 = sphi 0, %s37
      %s57 = sphi 0, %s57
      %s59 = sphi 0, %s57
      %s60 = sphi 0, %s59
      %s74 = sphi 0, %s60
      %s78 = sphi 0, %s78
      %s80 = sphi 0, %s78
      %s81 = sphi 0, %s80
      %s95 = sphi 0, %s81
      %s99 = sphi 0, %s99
      %s101 = sphi 0, %s99
      %s102 = sphi 0, %s101
      %s116 = sphi 0, %s102
      %s120 = sphi 0, %s120
      %s122 = sphi 0, %s120
      %s123 = sphi 0, %s122
      %s137 = sphi 0, %s123
      %s141 = sphi 0, %s141
      %s143 = sphi 0, %s141
      %s144 = sphi 0, %s143
      %s158 = sphi 0, %s144
      %s162 = sphi 0, %s162
      %s164 = sphi 0, %s162
      %s165 = sphi 0, %s164
      %s179 = sphi 0, %s165
      %s183 = sphi 0, %s183
      %s185 = sphi 0, %s183
      %s186 = sphi 0, %s185
      %s200 = sphi 0, %s186
      %s204 = sphi 0, %s204
      %s206 = sphi 0, %s204
      %s207 = sphi 0, %s206
      %s221 = sphi 0, %s207
      %s225 = sphi 0, %s225
      %s227 = sphi 0, %s225
      %s228 = sphi 0, %s227
      %s242 = sphi 0, %s228
      %s246 = sphi 0, %s246
      %s248 = sphi 0, %s246
      %s249 = sphi 0, %s248
      %s263 = sphi 0, %s249
      %s269 = sphi 0, %s271
      %s272 = sphi 0, %s269
      %s273 = sphi 0, %s272
      %s289 = sphi 0, %s273
    $region4: #{decoder_forward.1} parent=1 // loop_header_branch
      %26 = sbr.rel (%p24) target = $region8
    $region5: #{decoder_forward.1} parent=1 // loop_body
      %s28 = ssub.s32 %s23, 1
      %s29 = ssub.s32 %s23, 2
      %s30 = sadd.s32 %s23, 1
      %s31 = ssub.s32 %s23, %s30
      %p32 = scmp.eq.s32.totalorder %s31, 0
      %s34 = sadd.s32 %s33, 1
      %s35 = scalar_select %p32, %s33, %s34
      %p38 = pneg %p32
      %p39 = scmp.eq.s32.totalorder %s23, 1
      %p40 = por %p38, %p39
      %p41 = scmp.ne.s32.totalorder %s33, %s36
      %p42 = scmp.eq.s32.totalorder %s23, 0
      %p43 = por %p41, %p42
      %p44 = scmp.ne.s32.totalorder %s33, %s36
      %p45 = scmp.eq.s32.totalorder %s28, 1
      %p46 = por %p44, %p45
      %p47 = scmp.ne.s32.totalorder %s36, %s37
      %p48 = scmp.eq.s32.totalorder %s28, 0
      %p49 = por %p47, %p48
      %p50 = scmp.ne.s32.totalorder %s36, %s37
      %p51 = scmp.eq.s32.totalorder %s29, 1
      %p52 = por %p50, %p51
      %p54 = scmp.ne.s32.totalorder %s37, %s53
      %p55 = scmp.eq.s32.totalorder %s29, 0
      %p56 = por %p54, %p55
      %s58 = sadd.s32 %s57, 1
      %p61 = scmp.eq.s32.totalorder %s23, 1
      %p62 = scmp.ne.s32.totalorder %s57, %s59
      %p63 = scmp.eq.s32.totalorder %s23, 0
      %p64 = por %p62, %p63
      %p65 = scmp.ne.s32.totalorder %s57, %s59
      %p66 = scmp.eq.s32.totalorder %s28, 1
      %p67 = por %p65, %p66
      %p68 = scmp.ne.s32.totalorder %s59, %s60
      %p69 = scmp.eq.s32.totalorder %s28, 0
      %p70 = por %p68, %p69
      %p71 = scmp.ne.s32.totalorder %s59, %s60
      %p72 = scmp.eq.s32.totalorder %s29, 1
      %p73 = por %p71, %p72
      %p75 = scmp.ne.s32.totalorder %s60, %s74
      %p76 = scmp.eq.s32.totalorder %s29, 0
      %p77 = por %p75, %p76
      %s79 = sadd.s32 %s78, 1
      %p82 = scmp.eq.s32.totalorder %s23, 1
      %p83 = scmp.ne.s32.totalorder %s78, %s80
      %p84 = scmp.eq.s32.totalorder %s23, 0
      %p85 = por %p83, %p84
      %p86 = scmp.ne.s32.totalorder %s78, %s80
      %p87 = scmp.eq.s32.totalorder %s28, 1
      %p88 = por %p86, %p87
      %p89 = scmp.ne.s32.totalorder %s80, %s81
      %p90 = scmp.eq.s32.totalorder %s28, 0
      %p91 = por %p89, %p90
      %p92 = scmp.ne.s32.totalorder %s80, %s81
      %p93 = scmp.eq.s32.totalorder %s29, 1
      %p94 = por %p92, %p93
      %p96 = scmp.ne.s32.totalorder %s81, %s95
      %p97 = scmp.eq.s32.totalorder %s29, 0
      %p98 = por %p96, %p97
      %s100 = sadd.s32 %s99, 1
      %p103 = scmp.eq.s32.totalorder %s23, 1
      %p104 = scmp.ne.s32.totalorder %s99, %s101
      %p105 = scmp.eq.s32.totalorder %s23, 0
      %p106 = por %p104, %p105
      %p107 = scmp.ne.s32.totalorder %s99, %s101
      %p108 = scmp.eq.s32.totalorder %s28, 1
      %p109 = por %p107, %p108
      %p110 = scmp.ne.s32.totalorder %s101, %s102
      %p111 = scmp.eq.s32.totalorder %s28, 0
      %p112 = por %p110, %p111
      %p113 = scmp.ne.s32.totalorder %s101, %s102
      %p114 = scmp.eq.s32.totalorder %s29, 1
      %p115 = por %p113, %p114
      %p117 = scmp.ne.s32.totalorder %s102, %s116
      %p118 = scmp.eq.s32.totalorder %s29, 0
      %p119 = por %p117, %p118
      %s121 = sadd.s32 %s120, 1
      %p124 = scmp.eq.s32.totalorder %s23, 1
      %p125 = scmp.ne.s32.totalorder %s120, %s122
      %p126 = scmp.eq.s32.totalorder %s23, 0
      %p127 = por %p125, %p126
      %p128 = scmp.ne.s32.totalorder %s120, %s122
      %p129 = scmp.eq.s32.totalorder %s28, 1
      %p130 = por %p128, %p129
      %p131 = scmp.ne.s32.totalorder %s122, %s123
      %p132 = scmp.eq.s32.totalorder %s28, 0
      %p133 = por %p131, %p132
      %p134 = scmp.ne.s32.totalorder %s122, %s123
      %p135 = scmp.eq.s32.totalorder %s29, 1
      %p136 = por %p134, %p135
      %p138 = scmp.ne.s32.totalorder %s123, %s137
      %p139 = scmp.eq.s32.totalorder %s29, 0
      %p140 = por %p138, %p139
      %s142 = sadd.s32 %s141, 1
      %p145 = scmp.eq.s32.totalorder %s23, 1
      %p146 = scmp.ne.s32.totalorder %s141, %s143
      %p147 = scmp.eq.s32.totalorder %s23, 0
      %p148 = por %p146, %p147
      %p149 = scmp.ne.s32.totalorder %s141, %s143
      %p150 = scmp.eq.s32.totalorder %s28, 1
      %p151 = por %p149, %p150
      %p152 = scmp.ne.s32.totalorder %s143, %s144
      %p153 = scmp.eq.s32.totalorder %s28, 0
      %p154 = por %p152, %p153
      %p155 = scmp.ne.s32.totalorder %s143, %s144
      %p156 = scmp.eq.s32.totalorder %s29, 1
      %p157 = por %p155, %p156
      %p159 = scmp.ne.s32.totalorder %s144, %s158
      %p160 = scmp.eq.s32.totalorder %s29, 0
      %p161 = por %p159, %p160
      %s163 = sadd.s32 %s162, 1
      %p166 = scmp.eq.s32.totalorder %s23, 1
      %p167 = scmp.ne.s32.totalorder %s162, %s164
      %p168 = scmp.eq.s32.totalorder %s23, 0
      %p169 = por %p167, %p168
      %p170 = scmp.ne.s32.totalorder %s162, %s164
      %p171 = scmp.eq.s32.totalorder %s28, 1
      %p172 = por %p170, %p171
      %p173 = scmp.ne.s32.totalorder %s164, %s165
      %p174 = scmp.eq.s32.totalorder %s28, 0
      %p175 = por %p173, %p174
      %p176 = scmp.ne.s32.totalorder %s164, %s165
      %p177 = scmp.eq.s32.totalorder %s29, 1
      %p178 = por %p176, %p177
      %p180 = scmp.ne.s32.totalorder %s165, %s179
      %p181 = scmp.eq.s32.totalorder %s29, 0
      %p182 = por %p180, %p181
      %s184 = sadd.s32 %s183, 1
      %p187 = scmp.eq.s32.totalorder %s23, 1
      %p188 = scmp.ne.s32.totalorder %s183, %s185
      %p189 = scmp.eq.s32.totalorder %s23, 0
      %p190 = por %p188, %p189
      %p191 = scmp.ne.s32.totalorder %s183, %s185
      %p192 = scmp.eq.s32.totalorder %s28, 1
      %p193 = por %p191, %p192
      %p194 = scmp.ne.s32.totalorder %s185, %s186
      %p195 = scmp.eq.s32.totalorder %s28, 0
      %p196 = por %p194, %p195
      %p197 = scmp.ne.s32.totalorder %s185, %s186
      %p198 = scmp.eq.s32.totalorder %s29, 1
      %p199 = por %p197, %p198
      %p201 = scmp.ne.s32.totalorder %s186, %s200
      %p202 = scmp.eq.s32.totalorder %s29, 0
      %p203 = por %p201, %p202
      %s205 = sadd.s32 %s204, 1
      %p208 = scmp.eq.s32.totalorder %s23, 1
      %p209 = scmp.ne.s32.totalorder %s204, %s206
      %p210 = scmp.eq.s32.totalorder %s23, 0
      %p211 = por %p209, %p210
      %p212 = scmp.ne.s32.totalorder %s204, %s206
      %p213 = scmp.eq.s32.totalorder %s28, 1
      %p214 = por %p212, %p213
      %p215 = scmp.ne.s32.totalorder %s206, %s207
      %p216 = scmp.eq.s32.totalorder %s28, 0
      %p217 = por %p215, %p216
      %p218 = scmp.ne.s32.totalorder %s206, %s207
      %p219 = scmp.eq.s32.totalorder %s29, 1
      %p220 = por %p218, %p219
      %p222 = scmp.ne.s32.totalorder %s207, %s221
      %p223 = scmp.eq.s32.totalorder %s29, 0
      %p224 = por %p222, %p223
      %s226 = sadd.s32 %s225, 1
      %p229 = scmp.eq.s32.totalorder %s23, 1
      %p230 = scmp.ne.s32.totalorder %s225, %s227
      %p231 = scmp.eq.s32.totalorder %s23, 0
      %p232 = por %p230, %p231
      %p233 = scmp.ne.s32.totalorder %s225, %s227
      %p234 = scmp.eq.s32.totalorder %s28, 1
      %p235 = por %p233, %p234
      %p236 = scmp.ne.s32.totalorder %s227, %s228
      %p237 = scmp.eq.s32.totalorder %s28, 0
      %p238 = por %p236, %p237
      %p239 = scmp.ne.s32.totalorder %s227, %s228
      %p240 = scmp.eq.s32.totalorder %s29, 1
      %p241 = por %p239, %p240
      %p243 = scmp.ne.s32.totalorder %s228, %s242
      %p244 = scmp.eq.s32.totalorder %s29, 0
      %p245 = por %p243, %p244
      %s247 = sadd.s32 %s246, 1
      %p250 = scmp.eq.s32.totalorder %s23, 1
      %p251 = scmp.ne.s32.totalorder %s246, %s248
      %p252 = scmp.eq.s32.totalorder %s23, 0
      %p253 = por %p251, %p252
      %p254 = scmp.ne.s32.totalorder %s246, %s248
      %p255 = scmp.eq.s32.totalorder %s28, 1
      %p256 = por %p254, %p255
      %p257 = scmp.ne.s32.totalorder %s248, %s249
      %p258 = scmp.eq.s32.totalorder %s28, 0
      %p259 = por %p257, %p258
      %p260 = scmp.ne.s32.totalorder %s248, %s249
      %p261 = scmp.eq.s32.totalorder %s29, 1
      %p262 = por %p260, %p261
      %p264 = scmp.ne.s32.totalorder %s249, %s263
      %p265 = scmp.eq.s32.totalorder %s29, 0
      %p266 = por %p264, %p265
      %s267 = ssub.s32 %s23, %s30
      %p268 = scmp.eq.s32.totalorder %s267, 0
      %s270 = sadd.s32 %s269, 1
      %s271 = scalar_select %p268, %s269, %s270
      %p274 = pneg %p268
      %p275 = scmp.eq.s32.totalorder %s23, 1
      %p276 = por %p274, %p275
      %p277 = scmp.ne.s32.totalorder %s269, %s272
      %p278 = scmp.eq.s32.totalorder %s23, 0
      %p279 = por %p277, %p278
      %p280 = scmp.ne.s32.totalorder %s269, %s272
      %p281 = scmp.eq.s32.totalorder %s28, 1
      %p282 = por %p280, %p281
      %p283 = scmp.ne.s32.totalorder %s272, %s273
      %p284 = scmp.eq.s32.totalorder %s28, 0
      %p285 = por %p283, %p284
      %p286 = scmp.ne.s32.totalorder %s272, %s273
      %p287 = scmp.eq.s32.totalorder %s29, 1
      %p288 = por %p286, %p287
      %p290 = scmp.ne.s32.totalorder %s273, %s289
      %p291 = scmp.eq.s32.totalorder %s29, 0
      %p292 = por %p290, %p291
      %p293 = scmp.le.s32.totalorder 1, %s23
      %p294 = scmp.lt.s32.totalorder %s23, 3
      %p295 = pnand %p293, %p294
      %p296 = pneg %p295
      // Predicated region
      $region9: #{decoder_forward.1} parent=5 // pred_check
        _
      $region10: #{decoder_forward.1} parent=5 // pred_check_branch
        %298 = sbr.rel (%p295) target = $region12
      $region11: #{decoder_forward.1} parent=5 // pred_region
        %s299 = ssub.s32 %s23, 1
        // Predicated region
        $region13: #{decoder_forward.1} parent=11 // pred_check
          %p300 = pneg %p70
        $region14: #{decoder_forward.1} parent=11 // pred_check_branch
          %302 = sbr.rel (%p300) target = $region16
        $region15: #{decoder_forward.1} parent=11 // pred_region
          %s304 = ssub.s32 18432, 18432
          %305 = vsyncadd [#allocation7], %s304
          %s306 = sshll.u32 [#allocation6], 4
          %s307 = int_to_ptr.vmem [resolvable:$true] %s306
          %312 = dma.hbm_to_vmem [thread:$0]  %s1, 18432, %s307, [#allocation7], 128, 128, 8
        $region16: #{decoder_forward.1} parent=11 // pred_fallthru
          _
        // Predicated region
        $region17: #{decoder_forward.1} parent=11 // pred_check
          %p313 = pneg %p91
        $region18: #{decoder_forward.1} parent=11 // pred_check_branch
          %315 = sbr.rel (%p313) target = $region20
        $region19: #{decoder_forward.1} parent=11 // pred_region
          %s317 = ssub.s32 16, 16
          %318 = vsyncadd [#allocation9], %s317
          %s320 = sshll.u32 [#allocation8], 4
          %s321 = int_to_ptr.vmem [resolvable:$true] %s320
          %323 = dma.hbm_to_vmem [thread:$0]  %s2, 16, %s321, [#allocation9]
        $region20: #{decoder_forward.1} parent=11 // pred_fallthru
          _
        // Predicated region
        $region21: #{decoder_forward.1} parent=11 // pred_check
          %p324 = pneg %p112
        $region22: #{decoder_forward.1} parent=11 // pred_check_branch
          %326 = sbr.rel (%p324) target = $region24
        $region23: #{decoder_forward.1} parent=11 // pred_region
          %s328 = ssub.s32 18432, 18432
          %329 = vsyncadd [#allocation9], %s328
          %s330 = sshll.u32 [#allocation10], 4
          %s331 = int_to_ptr.vmem [resolvable:$true] %s330
          %336 = dma.hbm_to_vmem [thread:$0]  %s3, 18432, %s331, [#allocation9], 128, 128, 8
        $region24: #{decoder_forward.1} parent=11 // pred_fallthru
          _
        // Predicated region
        $region25: #{decoder_forward.1} parent=11 // pred_check
          %p337 = pneg %p133
        $region26: #{decoder_forward.1} parent=11 // pred_check_branch
          %339 = sbr.rel (%p337) target = $region28
        $region27: #{decoder_forward.1} parent=11 // pred_region
          %s341 = ssub.s32 2048, 2048
          %342 = vsyncadd [#allocation12], %s341
          %s343 = sshll.u32 [#allocation11], 4
          %s344 = int_to_ptr.vmem [resolvable:$true] %s343
          %349 = dma.hbm_to_vmem [thread:$0]  %s4, 2048, %s344, [#allocation12], 128, 128, 8
        $region28: #{decoder_forward.1} parent=11 // pred_fallthru
          _
        // Predicated region
        $region29: #{decoder_forward.1} parent=11 // pred_check
          %p350 = pneg %p154
        $region30: #{decoder_forward.1} parent=11 // pred_check_branch
          %352 = sbr.rel (%p350) target = $region32
        $region31: #{decoder_forward.1} parent=11 // pred_region
          %s354 = ssub.s32 18432, 18432
          %355 = vsyncadd [#allocation12], %s354
          %s356 = sshll.u32 [#allocation13], 4
          %s357 = int_to_ptr.vmem [resolvable:$true] %s356
          %362 = dma.hbm_to_vmem [thread:$0]  %s5, 18432, %s357, [#allocation12], 128, 128, 8
        $region32: #{decoder_forward.1} parent=11 // pred_fallthru
          _
        // Predicated region
        $region33: #{decoder_forward.1} parent=11 // pred_check
          %p363 = pneg %p175
        $region34: #{decoder_forward.1} parent=11 // pred_check_branch
          %365 = sbr.rel (%p363) target = $region36
        $region35: #{decoder_forward.1} parent=11 // pred_region
          %s367 = ssub.s32 2048, 2048
          %368 = vsyncadd [#allocation15], %s367
          %s369 = sshll.u32 [#allocation14], 4
          %s370 = int_to_ptr.vmem [resolvable:$true] %s369
          %375 = dma.hbm_to_vmem [thread:$0]  %s6, 2048, %s370, [#allocation15], 128, 128, 8
        $region36: #{decoder_forward.1} parent=11 // pred_fallthru
          _
        // Predicated region
        $region37: #{decoder_forward.1} parent=11 // pred_check
          %p376 = pneg %p196
        $region38: #{decoder_forward.1} parent=11 // pred_check_branch
          %378 = sbr.rel (%p376) target = $region40
        $region39: #{decoder_forward.1} parent=11 // pred_region
          %s380 = ssub.s32 73728, 73728
          %381 = vsyncadd [#allocation15], %s380
          %s382 = sshll.u32 [#allocation16], 4
          %s383 = int_to_ptr.vmem [resolvable:$true] %s382
          %388 = dma.hbm_to_vmem [thread:$0]  %s7, 73728, %s383, [#allocation15], 512, 512, 32
        $region40: #{decoder_forward.1} parent=11 // pred_fallthru
          _
        // Predicated region
        $region41: #{decoder_forward.1} parent=11 // pred_check
          %p389 = pneg %p217
        $region42: #{decoder_forward.1} parent=11 // pred_check_branch
          %391 = sbr.rel (%p389) target = $region44
        $region43: #{decoder_forward.1} parent=11 // pred_region
          %s393 = ssub.s32 64, 64
          %394 = vsyncadd [#allocation18], %s393
          %s396 = sshll.u32 [#allocation17], 4
          %s397 = int_to_ptr.vmem [resolvable:$true] %s396
          %399 = dma.hbm_to_vmem [thread:$0]  %s8, 64, %s397, [#allocation18]
        $region44: #{decoder_forward.1} parent=11 // pred_fallthru
          _
        // Predicated region
        $region45: #{decoder_forward.1} parent=11 // pred_check
          %p400 = pneg %p238
        $region46: #{decoder_forward.1} parent=11 // pred_check_branch
          %402 = sbr.rel (%p400) target = $region48
        $region47: #{decoder_forward.1} parent=11 // pred_region
          %s404 = ssub.s32 18432, 18432
          %405 = vsyncadd [#allocation18], %s404
          %s406 = sshll.u32 [#allocation19], 4
          %s407 = int_to_ptr.vmem [resolvable:$true] %s406
          %412 = dma.hbm_to_vmem [thread:$0]  %s9, 18432, %s407, [#allocation18], 128, 128, 8
        $region48: #{decoder_forward.1} parent=11 // pred_fallthru
          _
        // Predicated region
        $region49: #{decoder_forward.1} parent=11 // pred_check
          %p413 = pneg %p259
        $region50: #{decoder_forward.1} parent=11 // pred_check_branch
          %415 = sbr.rel (%p413) target = $region52
        $region51: #{decoder_forward.1} parent=11 // pred_region
          %s417 = ssub.s32 16, 16
          %418 = vsyncadd [#allocation21], %s417
          %s420 = sshll.u32 [#allocation20], 4
          %s421 = int_to_ptr.vmem [resolvable:$true] %s420
          %423 = dma.hbm_to_vmem [thread:$0]  %s10, 16, %s421, [#allocation21]
        $region52: #{decoder_forward.1} parent=11 // pred_fallthru
          _
      $region12: #{decoder_forward.1} parent=5 // pred_fallthru
        _
      %p424 = scmp.lt.s32.totalorder %s23, 2
      // Predicated region
      $region53: #{decoder_forward.1} parent=5 // pred_check
        %p425 = pneg %p424
      $region54: #{decoder_forward.1} parent=5 // pred_check_branch
        %427 = sbr.rel (%p425) target = $region56
      $region55: #{decoder_forward.1} parent=5 // pred_region
        // Predicated region
        $region57: #{decoder_forward.1} parent=55 // pred_check
          %p428 = pneg %p43
        $region58: #{decoder_forward.1} parent=55 // pred_check_branch
          %430 = sbr.rel (%p428) target = $region60
        $region59: #{decoder_forward.1} parent=55 // pred_region
          %p431 = scmp.lt.s32.totalorder %s23, 1
          %s432 = scalar_select %p431, %s23, 1
          %s433 = smul.addr %s432, 8
          %s434 = smul.addr %s433, 8
          %s435 = scalar_lea.vmem %s0, %s434
        $region60: #{decoder_forward.1} parent=55 // pred_fallthru
          _
      $region56: #{decoder_forward.1} parent=5 // pred_fallthru
        _
      %p436 = scmp.le.s32.totalorder 1, %s23
      %p437 = scmp.lt.s32.totalorder %s23, 3
      %p438 = pnand %p436, %p437
      %p439 = pneg %p438
      // Predicated region
      $region61: #{decoder_forward.1} parent=5 // pred_check
        _
      $region62: #{decoder_forward.1} parent=5 // pred_check_branch
        %441 = sbr.rel (%p438) target = $region64
      $region63: #{decoder_forward.1} parent=5 // pred_region
        %s442 = ssub.s32 %s23, 1
        // Predicated region
        $region65: #{decoder_forward.1} parent=63 // pred_check
          %p443 = pneg %p70
        $region66: #{decoder_forward.1} parent=63 // pred_check_branch
          %445 = sbr.rel (%p443) target = $region68
        $region67: #{decoder_forward.1} parent=63 // pred_region
          %446 = dma.done [#allocation7], 18432
        $region68: #{decoder_forward.1} parent=63 // pred_fallthru
          _
        // Predicated region
        $region69: #{decoder_forward.1} parent=63 // pred_check
          %p447 = pneg %p91
        $region70: #{decoder_forward.1} parent=63 // pred_check_branch
          %449 = sbr.rel (%p447) target = $region72
        $region71: #{decoder_forward.1} parent=63 // pred_region
          %450 = dma.done [#allocation9], 16
        $region72: #{decoder_forward.1} parent=63 // pred_fallthru
          _
        // Predicated region
        $region73: #{decoder_forward.1} parent=63 // pred_check
          %p451 = pneg %p112
        $region74: #{decoder_forward.1} parent=63 // pred_check_branch
          %453 = sbr.rel (%p451) target = $region76
        $region75: #{decoder_forward.1} parent=63 // pred_region
          %454 = dma.done [#allocation9], 18432
        $region76: #{decoder_forward.1} parent=63 // pred_fallthru
          _
        // Predicated region
        $region77: #{decoder_forward.1} parent=63 // pred_check
          %p455 = pneg %p133
        $region78: #{decoder_forward.1} parent=63 // pred_check_branch
          %457 = sbr.rel (%p455) target = $region80
        $region79: #{decoder_forward.1} parent=63 // pred_region
          %458 = dma.done [#allocation12], 2048
        $region80: #{decoder_forward.1} parent=63 // pred_fallthru
          _
        // Predicated region
        $region81: #{decoder_forward.1} parent=63 // pred_check
          %p459 = pneg %p154
        $region82: #{decoder_forward.1} parent=63 // pred_check_branch
          %461 = sbr.rel (%p459) target = $region84
        $region83: #{decoder_forward.1} parent=63 // pred_region
          %462 = dma.done [#allocation12], 18432
        $region84: #{decoder_forward.1} parent=63 // pred_fallthru
          _
        // Predicated region
        $region85: #{decoder_forward.1} parent=63 // pred_check
          %p463 = pneg %p175
        $region86: #{decoder_forward.1} parent=63 // pred_check_branch
          %465 = sbr.rel (%p463) target = $region88
        $region87: #{decoder_forward.1} parent=63 // pred_region
          %466 = dma.done [#allocation15], 2048
        $region88: #{decoder_forward.1} parent=63 // pred_fallthru
          _
        // Predicated region
        $region89: #{decoder_forward.1} parent=63 // pred_check
          %p467 = pneg %p196
        $region90: #{decoder_forward.1} parent=63 // pred_check_branch
          %469 = sbr.rel (%p467) target = $region92
        $region91: #{decoder_forward.1} parent=63 // pred_region
          %470 = dma.done [#allocation15], 73728
        $region92: #{decoder_forward.1} parent=63 // pred_fallthru
          _
        // Predicated region
        $region93: #{decoder_forward.1} parent=63 // pred_check
          %p471 = pneg %p217
        $region94: #{decoder_forward.1} parent=63 // pred_check_branch
          %473 = sbr.rel (%p471) target = $region96
        $region95: #{decoder_forward.1} parent=63 // pred_region
          %474 = dma.done [#allocation18], 64
        $region96: #{decoder_forward.1} parent=63 // pred_fallthru
          _
        // Predicated region
        $region97: #{decoder_forward.1} parent=63 // pred_check
          %p475 = pneg %p238
        $region98: #{decoder_forward.1} parent=63 // pred_check_branch
          %477 = sbr.rel (%p475) target = $region100
        $region99: #{decoder_forward.1} parent=63 // pred_region
          %478 = dma.done [#allocation18], 18432
        $region100: #{decoder_forward.1} parent=63 // pred_fallthru
          _
        // Predicated region
        $region101: #{decoder_forward.1} parent=63 // pred_check
          %p479 = pneg %p259
        $region102: #{decoder_forward.1} parent=63 // pred_check_branch
          %481 = sbr.rel (%p479) target = $region104
        $region103: #{decoder_forward.1} parent=63 // pred_region
          %482 = dma.done [#allocation21], 16
        $region104: #{decoder_forward.1} parent=63 // pred_fallthru
          _
        %p483 = scmp.lt.s32.totalorder %s28, 1
        %s484 = scalar_select %p483, %s28, 1
        %s485 = smul.addr %s484, 8
        %s486 = smul.addr %s485, 8
        %s487 = scalar_lea.vmem %s0, %s486
        %p488 = pneg %p49
        %p489 = pneg %p46
        %p490 = pneg %p70
        %p491 = pneg %p67
        %p492 = pneg %p91
        %p493 = pneg %p88
        %p494 = pneg %p112
        %p495 = pneg %p109
        %p496 = pneg %p133
        %p497 = pneg %p130
        %p498 = pneg %p154
        %p499 = pneg %p151
        %p500 = pneg %p175
        %p501 = pneg %p172
        %p502 = pneg %p196
        %p503 = pneg %p193
        %p504 = pneg %p217
        %p505 = pneg %p214
        %p506 = pneg %p238
        %p507 = pneg %p235
        %p508 = pneg %p259
        %p509 = pneg %p256
        %p510 = pneg %p285
        %p511 = pneg %p282
        %p512 = scmp.lt.s32.totalorder %s28, 1
        %s513 = scalar_select %p512, %s28, 1
        %s514 = smul.addr %s513, 32
        %s515 = smul.addr %s514, 8
        %s516 = scalar_lea.vmem %s11, %s515
        %p517 = scmp.lt.s32.totalorder %s28, 1
        %s518 = scalar_select %p517, %s28, 1
        %s519 = smul.addr %s518, 8
        %s520 = smul.addr %s519, 8
        %s521 = scalar_lea.vmem %s0, %s520
        %p522 = scmp.lt.s32.totalorder %s28, 1
        %s523 = scalar_select %p522, %s28, 1
        %s524 = smul.addr %s523, 32
        %s525 = smul.addr %s524, 8
        %s526 = scalar_lea.vmem %s11, %s525
        %527 = vst [vmem:[#allocation2] sm:$0xff] 0.0
        %528 = vst [vmem:[#allocation2 + $0x8] sm:$0xff] 0.0
        %s529 = scalar_lea.vmem [#allocation2], 144
        %530 = vst [vmem:[%s529] sm:$0xff] 0.0
        %531 = vst [vmem:[%s529 + $0x8] sm:$0xff] 0.0
        %532 = vst [vmem:[#allocation2] sm:$0x1] 0.0
        %533 = vst [vmem:[#allocation2 + $0x10] sm:$0x1] 0.0
        %534 = vst [vmem:[#allocation2 + $0x20] sm:$0x1] 0.0
        %535 = vst [vmem:[#allocation2 + $0x30] sm:$0x1] 0.0
        %536 = vst [vmem:[#allocation2 + $0x40] sm:$0x1] 0.0
        %537 = vst [vmem:[#allocation2 + $0x50] sm:$0x1] 0.0
        %538 = vst [vmem:[#allocation2 + $0x60] sm:$0x1] 0.0
        %539 = vst [vmem:[#allocation2 + $0x70] sm:$0x1] 0.0
        %540 = vst [vmem:[#allocation2 + $0x80] sm:$0x1] 0.0
        %541 = vst [vmem:[#allocation2 + $0x90] sm:$0x1] 0.0
        %542 = vst [vmem:[#allocation2 + $0x9] sm:$0x1] 0.0
        %543 = vst [vmem:[#allocation2 + $0x19] sm:$0x1] 0.0
        %544 = vst [vmem:[#allocation2 + $0x29] sm:$0x1] 0.0
        %545 = vst [vmem:[#allocation2 + $0x39] sm:$0x1] 0.0
        %546 = vst [vmem:[#allocation2 + $0x49] sm:$0x1] 0.0
        %547 = vst [vmem:[#allocation2 + $0x59] sm:$0x1] 0.0
        %548 = vst [vmem:[#allocation2 + $0x69] sm:$0x1] 0.0
        %549 = vst [vmem:[#allocation2 + $0x79] sm:$0x1] 0.0
        %550 = vst [vmem:[#allocation2 + $0x89] sm:$0x1] 0.0
        %551 = vst [vmem:[#allocation2 + $0x99] sm:$0x1] 0.0
        %552 = vst [vmem:[#allocation3] sm:$0xff] 0.0
        %553 = vst [vmem:[#allocation3 + $0x8] sm:$0xff] 0.0
        %s554 = scalar_lea.vmem [#allocation3], 144
        %555 = vst [vmem:[%s554] sm:$0xff] 0.0
        %556 = vst [vmem:[%s554 + $0x8] sm:$0xff] 0.0
        %s557 = scalar_lea.vmem [#allocation3], 160
        %558 = vst [vmem:[%s557] sm:$0xff] 0.0
        %559 = vst [vmem:[%s557 + $0x8] sm:$0xff] 0.0
        %s560 = scalar_lea.vmem [#allocation3], 304
        %561 = vst [vmem:[%s560] sm:$0xff] 0.0
        %562 = vst [vmem:[%s560 + $0x8] sm:$0xff] 0.0
        %s563 = scalar_lea.vmem [#allocation3], 320
        %564 = vst [vmem:[%s563] sm:$0xff] 0.0
        %565 = vst [vmem:[%s563 + $0x8] sm:$0xff] 0.0
        %s566 = scalar_lea.vmem [#allocation3], 464
        %567 = vst [vmem:[%s566] sm:$0xff] 0.0
        %568 = vst [vmem:[%s566 + $0x8] sm:$0xff] 0.0
        %s569 = scalar_lea.vmem [#allocation3], 480
        %570 = vst [vmem:[%s569] sm:$0xff] 0.0
        %571 = vst [vmem:[%s569 + $0x8] sm:$0xff] 0.0
        %s572 = scalar_lea.vmem [#allocation3], 624
        %573 = vst [vmem:[%s572] sm:$0xff] 0.0
        %574 = vst [vmem:[%s572 + $0x8] sm:$0xff] 0.0
        %575 = vst [vmem:[#allocation3] sm:$0x1] 0.0
        %576 = vst [vmem:[#allocation3 + $0x10] sm:$0x1] 0.0
        %577 = vst [vmem:[#allocation3 + $0x20] sm:$0x1] 0.0
        %578 = vst [vmem:[#allocation3 + $0x30] sm:$0x1] 0.0
        %579 = vst [vmem:[#allocation3 + $0x40] sm:$0x1] 0.0
        %580 = vst [vmem:[#allocation3 + $0x50] sm:$0x1] 0.0
        %581 = vst [vmem:[#allocation3 + $0x60] sm:$0x1] 0.0
        %582 = vst [vmem:[#allocation3 + $0x70] sm:$0x1] 0.0
        %583 = vst [vmem:[#allocation3 + $0x80] sm:$0x1] 0.0
        %584 = vst [vmem:[#allocation3 + $0x90] sm:$0x1] 0.0
        %585 = vst [vmem:[#allocation3 + $0xa0] sm:$0x1] 0.0
        %586 = vst [vmem:[#allocation3 + $0xb0] sm:$0x1] 0.0
        %587 = vst [vmem:[#allocation3 + $0xc0] sm:$0x1] 0.0
        %588 = vst [vmem:[#allocation3 + $0xd0] sm:$0x1] 0.0
        %589 = vst [vmem:[#allocation3 + $0xe0] sm:$0x1] 0.0
        %590 = vst [vmem:[#allocation3 + $0xf0] sm:$0x1] 0.0
        %591 = vst [vmem:[#allocation3 + $0x100] sm:$0x1] 0.0
        %592 = vst [vmem:[#allocation3 + $0x110] sm:$0x1] 0.0
        %593 = vst [vmem:[#allocation3 + $0x120] sm:$0x1] 0.0
        %594 = vst [vmem:[#allocation3 + $0x130] sm:$0x1] 0.0
        %595 = vst [vmem:[#allocation3 + $0x140] sm:$0x1] 0.0
        %596 = vst [vmem:[#allocation3 + $0x150] sm:$0x1] 0.0
        %597 = vst [vmem:[#allocation3 + $0x160] sm:$0x1] 0.0
        %598 = vst [vmem:[#allocation3 + $0x170] sm:$0x1] 0.0
        %599 = vst [vmem:[#allocation3 + $0x180] sm:$0x1] 0.0
        %600 = vst [vmem:[#allocation3 + $0x190] sm:$0x1] 0.0
        %601 = vst [vmem:[#allocation3 + $0x1a0] sm:$0x1] 0.0
        %602 = vst [vmem:[#allocation3 + $0x1b0] sm:$0x1] 0.0
        %603 = vst [vmem:[#allocation3 + $0x1c0] sm:$0x1] 0.0
        %604 = vst [vmem:[#allocation3 + $0x1d0] sm:$0x1] 0.0
        %605 = vst [vmem:[#allocation3 + $0x1e0] sm:$0x1] 0.0
        %606 = vst [vmem:[#allocation3 + $0x1f0] sm:$0x1] 0.0
        %607 = vst [vmem:[#allocation3 + $0x200] sm:$0x1] 0.0
        %608 = vst [vmem:[#allocation3 + $0x210] sm:$0x1] 0.0
        %609 = vst [vmem:[#allocation3 + $0x220] sm:$0x1] 0.0
        %610 = vst [vmem:[#allocation3 + $0x230] sm:$0x1] 0.0
        %611 = vst [vmem:[#allocation3 + $0x240] sm:$0x1] 0.0
        %612 = vst [vmem:[#allocation3 + $0x250] sm:$0x1] 0.0
        %613 = vst [vmem:[#allocation3 + $0x260] sm:$0x1] 0.0
        %614 = vst [vmem:[#allocation3 + $0x270] sm:$0x1] 0.0
        %615 = vst [vmem:[#allocation3 + $0x9] sm:$0x1] 0.0
        %616 = vst [vmem:[#allocation3 + $0x19] sm:$0x1] 0.0
        %617 = vst [vmem:[#allocation3 + $0x29] sm:$0x1] 0.0
        %618 = vst [vmem:[#allocation3 + $0x39] sm:$0x1] 0.0
        %619 = vst [vmem:[#allocation3 + $0x49] sm:$0x1] 0.0
        %620 = vst [vmem:[#allocation3 + $0x59] sm:$0x1] 0.0
        %621 = vst [vmem:[#allocation3 + $0x69] sm:$0x1] 0.0
        %622 = vst [vmem:[#allocation3 + $0x79] sm:$0x1] 0.0
        %623 = vst [vmem:[#allocation3 + $0x89] sm:$0x1] 0.0
        %624 = vst [vmem:[#allocation3 + $0x99] sm:$0x1] 0.0
        %625 = vst [vmem:[#allocation3 + $0xa9] sm:$0x1] 0.0
        %626 = vst [vmem:[#allocation3 + $0xb9] sm:$0x1] 0.0
        %627 = vst [vmem:[#allocation3 + $0xc9] sm:$0x1] 0.0
        %628 = vst [vmem:[#allocation3 + $0xd9] sm:$0x1] 0.0
        %629 = vst [vmem:[#allocation3 + $0xe9] sm:$0x1] 0.0
        %630 = vst [vmem:[#allocation3 + $0xf9] sm:$0x1] 0.0
        %631 = vst [vmem:[#allocation3 + $0x109] sm:$0x1] 0.0
        %632 = vst [vmem:[#allocation3 + $0x119] sm:$0x1] 0.0
        %633 = vst [vmem:[#allocation3 + $0x129] sm:$0x1] 0.0
        %634 = vst [vmem:[#allocation3 + $0x139] sm:$0x1] 0.0
        %635 = vst [vmem:[#allocation3 + $0x149] sm:$0x1] 0.0
        %636 = vst [vmem:[#allocation3 + $0x159] sm:$0x1] 0.0
        %637 = vst [vmem:[#allocation3 + $0x169] sm:$0x1] 0.0
        %638 = vst [vmem:[#allocation3 + $0x179] sm:$0x1] 0.0
        %639 = vst [vmem:[#allocation3 + $0x189] sm:$0x1] 0.0
        %640 = vst [vmem:[#allocation3 + $0x199] sm:$0x1] 0.0
        %641 = vst [vmem:[#allocation3 + $0x1a9] sm:$0x1] 0.0
        %642 = vst [vmem:[#allocation3 + $0x1b9] sm:$0x1] 0.0
        %643 = vst [vmem:[#allocation3 + $0x1c9] sm:$0x1] 0.0
        %644 = vst [vmem:[#allocation3 + $0x1d9] sm:$0x1] 0.0
        %645 = vst [vmem:[#allocation3 + $0x1e9] sm:$0x1] 0.0
        %646 = vst [vmem:[#allocation3 + $0x1f9] sm:$0x1] 0.0
        %647 = vst [vmem:[#allocation3 + $0x209] sm:$0x1] 0.0
        %648 = vst [vmem:[#allocation3 + $0x219] sm:$0x1] 0.0
        %649 = vst [vmem:[#allocation3 + $0x229] sm:$0x1] 0.0
        %650 = vst [vmem:[#allocation3 + $0x239] sm:$0x1] 0.0
        %651 = vst [vmem:[#allocation3 + $0x249] sm:$0x1] 0.0
        %652 = vst [vmem:[#allocation3 + $0x259] sm:$0x1] 0.0
        %653 = vst [vmem:[#allocation3 + $0x269] sm:$0x1] 0.0
        %654 = vst [vmem:[#allocation3 + $0x279] sm:$0x1] 0.0
        %v655 = vld [vmem:[%s521] sm:$0xff]
        %v656 = vld [vmem:[%s521 + $0x8] sm:$0xff]
        %v657 = vld [vmem:[%s521 + $0x10] sm:$0xff]
        %v658 = vld [vmem:[%s521 + $0x18] sm:$0xff]
        %v659 = vld [vmem:[%s521 + $0x20] sm:$0xff]
        %v660 = vld [vmem:[%s521 + $0x28] sm:$0xff]
        %v661 = vld [vmem:[%s521 + $0x30] sm:$0xff]
        %v662 = vld [vmem:[%s521 + $0x38] sm:$0xff]
        %s663 = scalar_lea.vmem [#allocation2], 16
        %664 = vst [vmem:[%s663 + $0x1] sm:$0xff] %v655
        %665 = vst [vmem:[%s663 + $0x11] sm:$0xff] %v656
        %666 = vst [vmem:[%s663 + $0x21] sm:$0xff] %v657
        %667 = vst [vmem:[%s663 + $0x31] sm:$0xff] %v658
        %668 = vst [vmem:[%s663 + $0x41] sm:$0xff] %v659
        %669 = vst [vmem:[%s663 + $0x51] sm:$0xff] %v660
        %670 = vst [vmem:[%s663 + $0x61] sm:$0xff] %v661
        %671 = vst [vmem:[%s663 + $0x71] sm:$0xff] %v662
        %v672 = vld [vmem:[#allocation2] sm:$0xff]
        %v673 = vld [vmem:[#allocation2 + $0x10] sm:$0xff]
        %v674 = vld [vmem:[#allocation2 + $0x20] sm:$0xff]
        %v675 = vld [vmem:[#allocation2 + $0x30] sm:$0xff]
        %v676 = vld [vmem:[#allocation2 + $0x40] sm:$0xff]
        %v677 = vld [vmem:[#allocation2 + $0x50] sm:$0xff]
        %v678 = vld [vmem:[#allocation2 + $0x60] sm:$0xff]
        %v679 = vld [vmem:[#allocation2 + $0x70] sm:$0xff]
        %680 = vst [vmem:[#allocation4] sm:$0xff] %v672
        %681 = vst [vmem:[#allocation4 + $0x48] sm:$0xff] %v673
        %682 = vst [vmem:[#allocation4 + $0x90] sm:$0xff] %v674
        %683 = vst [vmem:[#allocation4 + $0xd8] sm:$0xff] %v675
        %684 = vst [vmem:[#allocation4 + $0x120] sm:$0xff] %v676
        %685 = vst [vmem:[#allocation4 + $0x168] sm:$0xff] %v677
        %686 = vst [vmem:[#allocation4 + $0x1b0] sm:$0xff] %v678
        %687 = vst [vmem:[#allocation4 + $0x1f8] sm:$0xff] %v679
        %v688 = vld [vmem:[#allocation2 + $0x1] sm:$0xff]
        %v689 = vld [vmem:[#allocation2 + $0x11] sm:$0xff]
        %v690 = vld [vmem:[#allocation2 + $0x21] sm:$0xff]
        %v691 = vld [vmem:[#allocation2 + $0x31] sm:$0xff]
        %v692 = vld [vmem:[#allocation2 + $0x41] sm:$0xff]
        %v693 = vld [vmem:[#allocation2 + $0x51] sm:$0xff]
        %v694 = vld [vmem:[#allocation2 + $0x61] sm:$0xff]
        %v695 = vld [vmem:[#allocation2 + $0x71] sm:$0xff]
        %696 = vst [vmem:[#allocation4 + $0x8] sm:$0xff] %v688
        %697 = vst [vmem:[#allocation4 + $0x50] sm:$0xff] %v689
        %698 = vst [vmem:[#allocation4 + $0x98] sm:$0xff] %v690
        %699 = vst [vmem:[#allocation4 + $0xe0] sm:$0xff] %v691
        %700 = vst [vmem:[#allocation4 + $0x128] sm:$0xff] %v692
        %701 = vst [vmem:[#allocation4 + $0x170] sm:$0xff] %v693
        %702 = vst [vmem:[#allocation4 + $0x1b8] sm:$0xff] %v694
        %703 = vst [vmem:[#allocation4 + $0x200] sm:$0xff] %v695
        %v704 = vld [vmem:[#allocation2 + $0x2] sm:$0xff]
        %v705 = vld [vmem:[#allocation2 + $0x12] sm:$0xff]
        %v706 = vld [vmem:[#allocation2 + $0x22] sm:$0xff]
        %v707 = vld [vmem:[#allocation2 + $0x32] sm:$0xff]
        %v708 = vld [vmem:[#allocation2 + $0x42] sm:$0xff]
        %v709 = vld [vmem:[#allocation2 + $0x52] sm:$0xff]
        %v710 = vld [vmem:[#allocation2 + $0x62] sm:$0xff]
        %v711 = vld [vmem:[#allocation2 + $0x72] sm:$0xff]
        %712 = vst [vmem:[#allocation4 + $0x10] sm:$0xff] %v704
        %713 = vst [vmem:[#allocation4 + $0x58] sm:$0xff] %v705
        %714 = vst [vmem:[#allocation4 + $0xa0] sm:$0xff] %v706
        %715 = vst [vmem:[#allocation4 + $0xe8] sm:$0xff] %v707
        %716 = vst [vmem:[#allocation4 + $0x130] sm:$0xff] %v708
        %717 = vst [vmem:[#allocation4 + $0x178] sm:$0xff] %v709
        %718 = vst [vmem:[#allocation4 + $0x1c0] sm:$0xff] %v710
        %719 = vst [vmem:[#allocation4 + $0x208] sm:$0xff] %v711
        %v720 = vld [vmem:[%s663] sm:$0xff]
        %v721 = vld [vmem:[%s663 + $0x10] sm:$0xff]
        %v722 = vld [vmem:[%s663 + $0x20] sm:$0xff]
        %v723 = vld [vmem:[%s663 + $0x30] sm:$0xff]
        %v724 = vld [vmem:[%s663 + $0x40] sm:$0xff]
        %v725 = vld [vmem:[%s663 + $0x50] sm:$0xff]
        %v726 = vld [vmem:[%s663 + $0x60] sm:$0xff]
        %v727 = vld [vmem:[%s663 + $0x70] sm:$0xff]
        %728 = vst [vmem:[#allocation4 + $0x18] sm:$0xff] %v720
        %729 = vst [vmem:[#allocation4 + $0x60] sm:$0xff] %v721
        %730 = vst [vmem:[#allocation4 + $0xa8] sm:$0xff] %v722
        %731 = vst [vmem:[#allocation4 + $0xf0] sm:$0xff] %v723
        %732 = vst [vmem:[#allocation4 + $0x138] sm:$0xff] %v724
        %733 = vst [vmem:[#allocation4 + $0x180] sm:$0xff] %v725
        %734 = vst [vmem:[#allocation4 + $0x1c8] sm:$0xff] %v726
        %735 = vst [vmem:[#allocation4 + $0x210] sm:$0xff] %v727
        %v736 = vld [vmem:[%s663 + $0x1] sm:$0xff]
        %v737 = vld [vmem:[%s663 + $0x11] sm:$0xff]
        %v738 = vld [vmem:[%s663 + $0x21] sm:$0xff]
        %v739 = vld [vmem:[%s663 + $0x31] sm:$0xff]
        %v740 = vld [vmem:[%s663 + $0x41] sm:$0xff]
        %v741 = vld [vmem:[%s663 + $0x51] sm:$0xff]
        %v742 = vld [vmem:[%s663 + $0x61] sm:$0xff]
        %v743 = vld [vmem:[%s663 + $0x71] sm:$0xff]
        %744 = vst [vmem:[#allocation4 + $0x20] sm:$0xff] %v736
        %745 = vst [vmem:[#allocation4 + $0x68] sm:$0xff] %v737
        %746 = vst [vmem:[#allocation4 + $0xb0] sm:$0xff] %v738
        %747 = vst [vmem:[#allocation4 + $0xf8] sm:$0xff] %v739
        %748 = vst [vmem:[#allocation4 + $0x140] sm:$0xff] %v740
        %749 = vst [vmem:[#allocation4 + $0x188] sm:$0xff] %v741
        %750 = vst [vmem:[#allocation4 + $0x1d0] sm:$0xff] %v742
        %751 = vst [vmem:[#allocation4 + $0x218] sm:$0xff] %v743
        %v752 = vld [vmem:[%s663 + $0x2] sm:$0xff]
        %v753 = vld [vmem:[%s663 + $0x12] sm:$0xff]
        %v754 = vld [vmem:[%s663 + $0x22] sm:$0xff]
        %v755 = vld [vmem:[%s663 + $0x32] sm:$0xff]
        %v756 = vld [vmem:[%s663 + $0x42] sm:$0xff]
        %v757 = vld [vmem:[%s663 + $0x52] sm:$0xff]
        %v758 = vld [vmem:[%s663 + $0x62] sm:$0xff]
        %v759 = vld [vmem:[%s663 + $0x72] sm:$0xff]
        %760 = vst [vmem:[#allocation4 + $0x28] sm:$0xff] %v752
        %761 = vst [vmem:[#allocation4 + $0x70] sm:$0xff] %v753
        %762 = vst [vmem:[#allocation4 + $0xb8] sm:$0xff] %v754
        %763 = vst [vmem:[#allocation4 + $0x100] sm:$0xff] %v755
        %764 = vst [vmem:[#allocation4 + $0x148] sm:$0xff] %v756
        %765 = vst [vmem:[#allocation4 + $0x190] sm:$0xff] %v757
        %766 = vst [vmem:[#allocation4 + $0x1d8] sm:$0xff] %v758
        %767 = vst [vmem:[#allocation4 + $0x220] sm:$0xff] %v759
        %s768 = scalar_lea.vmem [#allocation2], 32
        %v769 = vld [vmem:[%s768] sm:$0xff]
        %v770 = vld [vmem:[%s768 + $0x10] sm:$0xff]
        %v771 = vld [vmem:[%s768 + $0x20] sm:$0xff]
        %v772 = vld [vmem:[%s768 + $0x30] sm:$0xff]
        %v773 = vld [vmem:[%s768 + $0x40] sm:$0xff]
        %v774 = vld [vmem:[%s768 + $0x50] sm:$0xff]
        %v775 = vld [vmem:[%s768 + $0x60] sm:$0xff]
        %v776 = vld [vmem:[%s768 + $0x70] sm:$0xff]
        %777 = vst [vmem:[#allocation4 + $0x30] sm:$0xff] %v769
        %778 = vst [vmem:[#allocation4 + $0x78] sm:$0xff] %v770
        %779 = vst [vmem:[#allocation4 + $0xc0] sm:$0xff] %v771
        %780 = vst [vmem:[#allocation4 + $0x108] sm:$0xff] %v772
        %781 = vst [vmem:[#allocation4 + $0x150] sm:$0xff] %v773
        %782 = vst [vmem:[#allocation4 + $0x198] sm:$0xff] %v774
        %783 = vst [vmem:[#allocation4 + $0x1e0] sm:$0xff] %v775
        %784 = vst [vmem:[#allocation4 + $0x228] sm:$0xff] %v776
        %v785 = vld [vmem:[%s768 + $0x1] sm:$0xff]
        %v786 = vld [vmem:[%s768 + $0x11] sm:$0xff]
        %v787 = vld [vmem:[%s768 + $0x21] sm:$0xff]
        %v788 = vld [vmem:[%s768 + $0x31] sm:$0xff]
        %v789 = vld [vmem:[%s768 + $0x41] sm:$0xff]
        %v790 = vld [vmem:[%s768 + $0x51] sm:$0xff]
        %v791 = vld [vmem:[%s768 + $0x61] sm:$0xff]
        %v792 = vld [vmem:[%s768 + $0x71] sm:$0xff]
        %793 = vst [vmem:[#allocation4 + $0x38] sm:$0xff] %v785
        %794 = vst [vmem:[#allocation4 + $0x80] sm:$0xff] %v786
        %795 = vst [vmem:[#allocation4 + $0xc8] sm:$0xff] %v787
        %796 = vst [vmem:[#allocation4 + $0x110] sm:$0xff] %v788
        %797 = vst [vmem:[#allocation4 + $0x158] sm:$0xff] %v789
        %798 = vst [vmem:[#allocation4 + $0x1a0] sm:$0xff] %v790
        %799 = vst [vmem:[#allocation4 + $0x1e8] sm:$0xff] %v791
        %800 = vst [vmem:[#allocation4 + $0x230] sm:$0xff] %v792
        %v801 = vld [vmem:[%s768 + $0x2] sm:$0xff]
        %v802 = vld [vmem:[%s768 + $0x12] sm:$0xff]
        %v803 = vld [vmem:[%s768 + $0x22] sm:$0xff]
        %v804 = vld [vmem:[%s768 + $0x32] sm:$0xff]
        %v805 = vld [vmem:[%s768 + $0x42] sm:$0xff]
        %v806 = vld [vmem:[%s768 + $0x52] sm:$0xff]
        %v807 = vld [vmem:[%s768 + $0x62] sm:$0xff]
        %v808 = vld [vmem:[%s768 + $0x72] sm:$0xff]
        %809 = vst [vmem:[#allocation4 + $0x40] sm:$0xff] %v801
        %810 = vst [vmem:[#allocation4 + $0x88] sm:$0xff] %v802
        %811 = vst [vmem:[#allocation4 + $0xd0] sm:$0xff] %v803
        %812 = vst [vmem:[#allocation4 + $0x118] sm:$0xff] %v804
        %813 = vst [vmem:[#allocation4 + $0x160] sm:$0xff] %v805
        %814 = vst [vmem:[#allocation4 + $0x1a8] sm:$0xff] %v806
        %815 = vst [vmem:[#allocation4 + $0x1f0] sm:$0xff] %v807
        %816 = vst [vmem:[#allocation4 + $0x238] sm:$0xff] %v808
        %v817 = vld [vmem:[#allocation4] sm:$0xff]
        %v818 = vld [vmem:[#allocation4 + $0x8] sm:$0xff]
        %v819 = vld [vmem:[#allocation4 + $0x10] sm:$0xff]
        %v820 = vld [vmem:[#allocation4 + $0x18] sm:$0xff]
        %v821 = vld [vmem:[#allocation4 + $0x20] sm:$0xff]
        %v822 = vld [vmem:[#allocation4 + $0x28] sm:$0xff]
        %v823 = vld [vmem:[#allocation4 + $0x30] sm:$0xff]
        %v824 = vld [vmem:[#allocation4 + $0x38] sm:$0xff]
        %v825 = vld [vmem:[#allocation4 + $0x40] sm:$0xff]
        %v826 = vld [vmem:[#allocation4 + $0x48] sm:$0xff]
        %v827 = vld [vmem:[#allocation4 + $0x50] sm:$0xff]
        %v828 = vld [vmem:[#allocation4 + $0x58] sm:$0xff]
        %v829 = vld [vmem:[#allocation4 + $0x60] sm:$0xff]
        %v830 = vld [vmem:[#allocation4 + $0x68] sm:$0xff]
        %v831 = vld [vmem:[#allocation4 + $0x70] sm:$0xff]
        %v832 = vld [vmem:[#allocation4 + $0x78] sm:$0xff]
        %v833 = vld [vmem:[#allocation4 + $0x80] sm:$0xff]
        %v834 = vld [vmem:[#allocation4 + $0x88] sm:$0xff]
        %v835 = vld [vmem:[#allocation4 + $0x90] sm:$0xff]
        %v836 = vld [vmem:[#allocation4 + $0x98] sm:$0xff]
        %v837 = vld [vmem:[#allocation4 + $0xa0] sm:$0xff]
        %v838 = vld [vmem:[#allocation4 + $0xa8] sm:$0xff]
        %v839 = vld [vmem:[#allocation4 + $0xb0] sm:$0xff]
        %v840 = vld [vmem:[#allocation4 + $0xb8] sm:$0xff]
        %v841 = vld [vmem:[#allocation4 + $0xc0] sm:$0xff]
        %v842 = vld [vmem:[#allocation4 + $0xc8] sm:$0xff]
        %v843 = vld [vmem:[#allocation4 + $0xd0] sm:$0xff]
        %v844 = vld [vmem:[#allocation4 + $0xd8] sm:$0xff]
        %v845 = vld [vmem:[#allocation4 + $0xe0] sm:$0xff]
        %v846 = vld [vmem:[#allocation4 + $0xe8] sm:$0xff]
        %v847 = vld [vmem:[#allocation4 + $0xf0] sm:$0xff]
        %v848 = vld [vmem:[#allocation4 + $0xf8] sm:$0xff]
        %v849 = vld [vmem:[#allocation4 + $0x100] sm:$0xff]
        %v850 = vld [vmem:[#allocation4 + $0x108] sm:$0xff]
        %v851 = vld [vmem:[#allocation4 + $0x110] sm:$0xff]
        %v852 = vld [vmem:[#allocation4 + $0x118] sm:$0xff]
        %v853 = vld [vmem:[#allocation4 + $0x120] sm:$0xff]
        %v854 = vld [vmem:[#allocation4 + $0x128] sm:$0xff]
        %v855 = vld [vmem:[#allocation4 + $0x130] sm:$0xff]
        %v856 = vld [vmem:[#allocation4 + $0x138] sm:$0xff]
        %v857 = vld [vmem:[#allocation4 + $0x140] sm:$0xff]
        %v858 = vld [vmem:[#allocation4 + $0x148] sm:$0xff]
        %v859 = vld [vmem:[#allocation4 + $0x150] sm:$0xff]
        %v860 = vld [vmem:[#allocation4 + $0x158] sm:$0xff]
        %v861 = vld [vmem:[#allocation4 + $0x160] sm:$0xff]
        %v862 = vld [vmem:[#allocation4 + $0x168] sm:$0xff]
        %v863 = vld [vmem:[#allocation4 + $0x170] sm:$0xff]
        %v864 = vld [vmem:[#allocation4 + $0x178] sm:$0xff]
        %v865 = vld [vmem:[#allocation4 + $0x180] sm:$0xff]
        %v866 = vld [vmem:[#allocation4 + $0x188] sm:$0xff]
        %v867 = vld [vmem:[#allocation4 + $0x190] sm:$0xff]
        %v868 = vld [vmem:[#allocation4 + $0x198] sm:$0xff]
        %v869 = vld [vmem:[#allocation4 + $0x1a0] sm:$0xff]
        %v870 = vld [vmem:[#allocation4 + $0x1a8] sm:$0xff]
        %v871 = vld [vmem:[#allocation4 + $0x1b0] sm:$0xff]
        %v872 = vld [vmem:[#allocation4 + $0x1b8] sm:$0xff]
        %v873 = vld [vmem:[#allocation4 + $0x1c0] sm:$0xff]
        %v874 = vld [vmem:[#allocation4 + $0x1c8] sm:$0xff]
        %v875 = vld [vmem:[#allocation4 + $0x1d0] sm:$0xff]
        %v876 = vld [vmem:[#allocation4 + $0x1d8] sm:$0xff]
        %v877 = vld [vmem:[#allocation4 + $0x1e0] sm:$0xff]
        %v878 = vld [vmem:[#allocation4 + $0x1e8] sm:$0xff]
        %v879 = vld [vmem:[#allocation4 + $0x1f0] sm:$0xff]
        %v880 = vld [vmem:[#allocation4 + $0x1f8] sm:$0xff]
        %v881 = vld [vmem:[#allocation4 + $0x200] sm:$0xff]
        %v882 = vld [vmem:[#allocation4 + $0x208] sm:$0xff]
        %v883 = vld [vmem:[#allocation4 + $0x210] sm:$0xff]
        %v884 = vld [vmem:[#allocation4 + $0x218] sm:$0xff]
        %v885 = vld [vmem:[#allocation4 + $0x220] sm:$0xff]
        %v886 = vld [vmem:[#allocation4 + $0x228] sm:$0xff]
        %v887 = vld [vmem:[#allocation4 + $0x230] sm:$0xff]
        %v888 = vld [vmem:[#allocation4 + $0x238] sm:$0xff]
        %v889 = vld [vmem:[#allocation6] sm:$0xff]
        %v890 = vld [vmem:[#allocation6 + $0x8] sm:$0xff]
        %v891 = vld [vmem:[#allocation6 + $0x10] sm:$0xff]
        %v892 = vld [vmem:[#allocation6 + $0x18] sm:$0xff]
        %v893 = vld [vmem:[#allocation6 + $0x20] sm:$0xff]
        %v894 = vld [vmem:[#allocation6 + $0x28] sm:$0xff]
        %v895 = vld [vmem:[#allocation6 + $0x30] sm:$0xff]
        %v896 = vld [vmem:[#allocation6 + $0x38] sm:$0xff]
        %v897 = vld [vmem:[#allocation6 + $0x40] sm:$0xff]
        %v898 = vld [vmem:[#allocation6 + $0x48] sm:$0xff]
        %v899 = vld [vmem:[#allocation6 + $0x50] sm:$0xff]
        %v900 = vld [vmem:[#allocation6 + $0x58] sm:$0xff]
        %v901 = vld [vmem:[#allocation6 + $0x60] sm:$0xff]
        %v902 = vld [vmem:[#allocation6 + $0x68] sm:$0xff]
        %v903 = vld [vmem:[#allocation6 + $0x70] sm:$0xff]
        %v904 = vld [vmem:[#allocation6 + $0x78] sm:$0xff]
        %v905 = vld [vmem:[#allocation6 + $0x80] sm:$0xff]
        %v906 = vld [vmem:[#allocation6 + $0x88] sm:$0xff]
        %v907 = vld [vmem:[#allocation6 + $0x90] sm:$0xff]
        %v908 = vld [vmem:[#allocation6 + $0x98] sm:$0xff]
        %v909 = vld [vmem:[#allocation6 + $0xa0] sm:$0xff]
        %v910 = vld [vmem:[#allocation6 + $0xa8] sm:$0xff]
        %v911 = vld [vmem:[#allocation6 + $0xb0] sm:$0xff]
        %v912 = vld [vmem:[#allocation6 + $0xb8] sm:$0xff]
        %v913 = vld [vmem:[#allocation6 + $0xc0] sm:$0xff]
        %v914 = vld [vmem:[#allocation6 + $0xc8] sm:$0xff]
        %v915 = vld [vmem:[#allocation6 + $0xd0] sm:$0xff]
        %v916 = vld [vmem:[#allocation6 + $0xd8] sm:$0xff]
        %v917 = vld [vmem:[#allocation6 + $0xe0] sm:$0xff]
        %v918 = vld [vmem:[#allocation6 + $0xe8] sm:$0xff]
        %v919 = vld [vmem:[#allocation6 + $0xf0] sm:$0xff]
        %v920 = vld [vmem:[#allocation6 + $0xf8] sm:$0xff]
        %v921 = vld [vmem:[#allocation6 + $0x100] sm:$0xff]
        %v922 = vld [vmem:[#allocation6 + $0x108] sm:$0xff]
        %v923 = vld [vmem:[#allocation6 + $0x110] sm:$0xff]
        %v924 = vld [vmem:[#allocation6 + $0x118] sm:$0xff]
        %v925 = vld [vmem:[#allocation6 + $0x120] sm:$0xff]
        %v926 = vld [vmem:[#allocation6 + $0x128] sm:$0xff]
        %v927 = vld [vmem:[#allocation6 + $0x130] sm:$0xff]
        %v928 = vld [vmem:[#allocation6 + $0x138] sm:$0xff]
        %v929 = vld [vmem:[#allocation6 + $0x140] sm:$0xff]
        %v930 = vld [vmem:[#allocation6 + $0x148] sm:$0xff]
        %v931 = vld [vmem:[#allocation6 + $0x150] sm:$0xff]
        %v932 = vld [vmem:[#allocation6 + $0x158] sm:$0xff]
        %v933 = vld [vmem:[#allocation6 + $0x160] sm:$0xff]
        %v934 = vld [vmem:[#allocation6 + $0x168] sm:$0xff]
        %v935 = vld [vmem:[#allocation6 + $0x170] sm:$0xff]
        %v936 = vld [vmem:[#allocation6 + $0x178] sm:$0xff]
        %v937 = vld [vmem:[#allocation6 + $0x180] sm:$0xff]
        %v938 = vld [vmem:[#allocation6 + $0x188] sm:$0xff]
        %v939 = vld [vmem:[#allocation6 + $0x190] sm:$0xff]
        %v940 = vld [vmem:[#allocation6 + $0x198] sm:$0xff]
        %v941 = vld [vmem:[#allocation6 + $0x1a0] sm:$0xff]
        %v942 = vld [vmem:[#allocation6 + $0x1a8] sm:$0xff]
        %v943 = vld [vmem:[#allocation6 + $0x1b0] sm:$0xff]
        %v944 = vld [vmem:[#allocation6 + $0x1b8] sm:$0xff]
        %v945 = vld [vmem:[#allocation6 + $0x1c0] sm:$0xff]
        %v946 = vld [vmem:[#allocation6 + $0x1c8] sm:$0xff]
        %v947 = vld [vmem:[#allocation6 + $0x1d0] sm:$0xff]
        %v948 = vld [vmem:[#allocation6 + $0x1d8] sm:$0xff]
        %v949 = vld [vmem:[#allocation6 + $0x1e0] sm:$0xff]
        %v950 = vld [vmem:[#allocation6 + $0x1e8] sm:$0xff]
        %v951 = vld [vmem:[#allocation6 + $0x1f0] sm:$0xff]
        %v952 = vld [vmem:[#allocation6 + $0x1f8] sm:$0xff]
        %v953 = vld [vmem:[#allocation6 + $0x200] sm:$0xff]
        %v954 = vld [vmem:[#allocation6 + $0x208] sm:$0xff]
        %v955 = vld [vmem:[#allocation6 + $0x210] sm:$0xff]
        %v956 = vld [vmem:[#allocation6 + $0x218] sm:$0xff]
        %v957 = vld [vmem:[#allocation6 + $0x220] sm:$0xff]
        %v958 = vld [vmem:[#allocation6 + $0x228] sm:$0xff]
        %v959 = vld [vmem:[#allocation6 + $0x230] sm:$0xff]
        %v960 = vld [vmem:[#allocation6 + $0x238] sm:$0xff]
        %v961 = vld [vmem:[#allocation6 + $0x240] sm:$0xff]
        %v962 = vld [vmem:[#allocation6 + $0x248] sm:$0xff]
        %v963 = vld [vmem:[#allocation6 + $0x250] sm:$0xff]
        %v964 = vld [vmem:[#allocation6 + $0x258] sm:$0xff]
        %v965 = vld [vmem:[#allocation6 + $0x260] sm:$0xff]
        %v966 = vld [vmem:[#allocation6 + $0x268] sm:$0xff]
        %v967 = vld [vmem:[#allocation6 + $0x270] sm:$0xff]
        %v968 = vld [vmem:[#allocation6 + $0x278] sm:$0xff]
        %v969 = vld [vmem:[#allocation6 + $0x280] sm:$0xff]
        %v970 = vld [vmem:[#allocation6 + $0x288] sm:$0xff]
        %v971 = vld [vmem:[#allocation6 + $0x290] sm:$0xff]
        %v972 = vld [vmem:[#allocation6 + $0x298] sm:$0xff]
        %v973 = vld [vmem:[#allocation6 + $0x2a0] sm:$0xff]
        %v974 = vld [vmem:[#allocation6 + $0x2a8] sm:$0xff]
        %v975 = vld [vmem:[#allocation6 + $0x2b0] sm:$0xff]
        %v976 = vld [vmem:[#allocation6 + $0x2b8] sm:$0xff]
        %v977 = vld [vmem:[#allocation6 + $0x2c0] sm:$0xff]
        %v978 = vld [vmem:[#allocation6 + $0x2c8] sm:$0xff]
        %v979 = vld [vmem:[#allocation6 + $0x2d0] sm:$0xff]
        %v980 = vld [vmem:[#allocation6 + $0x2d8] sm:$0xff]
        %v981 = vld [vmem:[#allocation6 + $0x2e0] sm:$0xff]
        %v982 = vld [vmem:[#allocation6 + $0x2e8] sm:$0xff]
        %v983 = vld [vmem:[#allocation6 + $0x2f0] sm:$0xff]
        %v984 = vld [vmem:[#allocation6 + $0x2f8] sm:$0xff]
        %v985 = vld [vmem:[#allocation6 + $0x300] sm:$0xff]
        %v986 = vld [vmem:[#allocation6 + $0x308] sm:$0xff]
        %v987 = vld [vmem:[#allocation6 + $0x310] sm:$0xff]
        %v988 = vld [vmem:[#allocation6 + $0x318] sm:$0xff]
        %v989 = vld [vmem:[#allocation6 + $0x320] sm:$0xff]
        %v990 = vld [vmem:[#allocation6 + $0x328] sm:$0xff]
        %v991 = vld [vmem:[#allocation6 + $0x330] sm:$0xff]
        %v992 = vld [vmem:[#allocation6 + $0x338] sm:$0xff]
        %v993 = vld [vmem:[#allocation6 + $0x340] sm:$0xff]
        %v994 = vld [vmem:[#allocation6 + $0x348] sm:$0xff]
        %v995 = vld [vmem:[#allocation6 + $0x350] sm:$0xff]
        %v996 = vld [vmem:[#allocation6 + $0x358] sm:$0xff]
        %v997 = vld [vmem:[#allocation6 + $0x360] sm:$0xff]
        %v998 = vld [vmem:[#allocation6 + $0x368] sm:$0xff]
        %v999 = vld [vmem:[#allocation6 + $0x370] sm:$0xff]
        %v1000 = vld [vmem:[#allocation6 + $0x378] sm:$0xff]
        %v1001 = vld [vmem:[#allocation6 + $0x380] sm:$0xff]
        %v1002 = vld [vmem:[#allocation6 + $0x388] sm:$0xff]
        %v1003 = vld [vmem:[#allocation6 + $0x390] sm:$0xff]
        %v1004 = vld [vmem:[#allocation6 + $0x398] sm:$0xff]
        %v1005 = vld [vmem:[#allocation6 + $0x3a0] sm:$0xff]
        %v1006 = vld [vmem:[#allocation6 + $0x3a8] sm:$0xff]
        %v1007 = vld [vmem:[#allocation6 + $0x3b0] sm:$0xff]
        %v1008 = vld [vmem:[#allocation6 + $0x3b8] sm:$0xff]
        %v1009 = vld [vmem:[#allocation6 + $0x3c0] sm:$0xff]
        %v1010 = vld [vmem:[#allocation6 + $0x3c8] sm:$0xff]
        %v1011 = vld [vmem:[#allocation6 + $0x3d0] sm:$0xff]
        %v1012 = vld [vmem:[#allocation6 + $0x3d8] sm:$0xff]
        %v1013 = vld [vmem:[#allocation6 + $0x3e0] sm:$0xff]
        %v1014 = vld [vmem:[#allocation6 + $0x3e8] sm:$0xff]
        %v1015 = vld [vmem:[#allocation6 + $0x3f0] sm:$0xff]
        %v1016 = vld [vmem:[#allocation6 + $0x3f8] sm:$0xff]
        %v1017 = vld [vmem:[#allocation6 + $0x400] sm:$0xff]
        %v1018 = vld [vmem:[#allocation6 + $0x408] sm:$0xff]
        %v1019 = vld [vmem:[#allocation6 + $0x410] sm:$0xff]
        %v1020 = vld [vmem:[#allocation6 + $0x418] sm:$0xff]
        %v1021 = vld [vmem:[#allocation6 + $0x420] sm:$0xff]
        %v1022 = vld [vmem:[#allocation6 + $0x428] sm:$0xff]
        %v1023 = vld [vmem:[#allocation6 + $0x430] sm:$0xff]
        %v1024 = vld [vmem:[#allocation6 + $0x438] sm:$0xff]
        %v1025 = vld [vmem:[#allocation6 + $0x440] sm:$0xff]
        %v1026 = vld [vmem:[#allocation6 + $0x448] sm:$0xff]
        %v1027 = vld [vmem:[#allocation6 + $0x450] sm:$0xff]
        %v1028 = vld [vmem:[#allocation6 + $0x458] sm:$0xff]
        %v1029 = vld [vmem:[#allocation6 + $0x460] sm:$0xff]
        %v1030 = vld [vmem:[#allocation6 + $0x468] sm:$0xff]
        %v1031 = vld [vmem:[#allocation6 + $0x470] sm:$0xff]
        %v1032 = vld [vmem:[#allocation6 + $0x478] sm:$0xff]
        %v1033 = vld [vmem:[#allocation8] sm:$0x1]
        %v1035 = vlaneseq
        %v1036 = vshrl.u32 %v1035, 7
        %v1037 = vsub.s32 0, %v1036
        %v1038 = vrot.slane %v1033, %v1037
        %1040 = vmatprep.subr.mxu0 0.0
        %1041 = vmatpush1.msra.mxu0 %v889
        %1042 = vmatprep.subr.mxu0 0.0
        %1043 = vmatpush1.msra.mxu0 %v890
        %1044 = vmatprep.subr.mxu0 0.0
        %1045 = vmatpush1.msra.mxu0 %v891
        %1046 = vmatprep.subr.mxu0 0.0
        %1047 = vmatpush1.msra.mxu0 %v892
        %1048 = vmatprep.subr.mxu0 0.0
        %1049 = vmatpush1.msra.mxu0 %v893
        %1050 = vmatprep.subr.mxu0 0.0
        %1051 = vmatpush1.msra.mxu0 %v894
        %1052 = vmatprep.subr.mxu0 0.0
        %1053 = vmatpush1.msra.mxu0 %v895
        %1054 = vmatprep.subr.mxu0 0.0
        %1055 = vmatpush1.msra.mxu0 %v896
        %1056 = vmatprep.subr.mxu0 0.0
        %1057 = vmatpush1.msra.mxu0 %v897
        %1058 = vmatprep.subr.mxu0 0.0
        %1059 = vmatpush1.msra.mxu0 %v898
        %1060 = vmatprep.subr.mxu0 0.0
        %1061 = vmatpush1.msra.mxu0 %v899
        %1062 = vmatprep.subr.mxu0 0.0
        %1063 = vmatpush1.msra.mxu0 %v900
        %1064 = vmatprep.subr.mxu0 0.0
        %1065 = vmatpush1.msra.mxu0 %v901
        %1066 = vmatprep.subr.mxu0 0.0
        %1067 = vmatpush1.msra.mxu0 %v902
        %1068 = vmatprep.subr.mxu0 0.0
        %1069 = vmatpush1.msra.mxu0 %v903
        %1070 = vmatprep.subr.mxu0 0.0
        %1071 = vmatpush1.msra.mxu0 %v904
        %1072 = vmatprep.subr.mxu0 0.0
        %1073 = vmatpush1.msra.mxu0 %v905
        %1074 = vmatprep.subr.mxu0 0.0
        %1075 = vmatpush1.msra.mxu0 %v906
        %1076 = vmatprep.subr.mxu0 0.0
        %1077 = vmatpush1.msra.mxu0 %v907
        %1078 = vmatprep.subr.mxu0 0.0
        %1079 = vmatpush1.msra.mxu0 %v908
        %1080 = vmatprep.subr.mxu0 0.0
        %1081 = vmatpush1.msra.mxu0 %v909
        %1082 = vmatprep.subr.mxu0 0.0
        %1083 = vmatpush1.msra.mxu0 %v910
        %1084 = vmatprep.subr.mxu0 0.0
        %1085 = vmatpush1.msra.mxu0 %v911
        %1086 = vmatprep.subr.mxu0 0.0
        %1087 = vmatpush1.msra.mxu0 %v912
        %1088 = vmatprep.subr.mxu0 0.0
        %1089 = vmatpush1.msra.mxu0 %v913
        %1090 = vmatprep.subr.mxu0 0.0
        %1091 = vmatpush1.msra.mxu0 %v914
        %1092 = vmatprep.subr.mxu0 0.0
        %1093 = vmatpush1.msra.mxu0 %v915
        %1094 = vmatprep.subr.mxu0 0.0
        %1095 = vmatpush1.msra.mxu0 %v916
        %1096 = vmatprep.subr.mxu0 0.0
        %1097 = vmatpush1.msra.mxu0 %v917
        %1098 = vmatprep.subr.mxu0 0.0
        %1099 = vmatpush1.msra.mxu0 %v918
        %1100 = vmatprep.subr.mxu0 0.0
        %1101 = vmatpush1.msra.mxu0 %v919
        %1102 = vmatprep.subr.mxu0 0.0
        %1103 = vmatpush1.msra.mxu0 %v920
        %1104 = vmatprep.mubr.f32.mxu0 %v818
        %1105 = vmatmul.mubr.f32.gmra.mrb[0].mxu0 %v817
        %v1106 = vpop.f32.mrb[0].mxu0
        %v1107 = vadd.f32 %v1038, %v1106
        %v1108 = vpop.f32.mrb[0].mxu0
        %1109 = vmatprep.mubr.f32.mxu0 %v827
        %1110 = vmatmul.mubr.f32.gmra.mrb[0].mxu0 %v826
        %v1111 = vpop.f32.mrb[0].mxu0
        %v1112 = vadd.f32 %v1038, %v1111
        %v1113 = vpop.f32.mrb[0].mxu0
        %1114 = vmatprep.mubr.f32.mxu0 %v836
        %1115 = vmatmul.mubr.f32.gmra.mrb[0].mxu0 %v835
        %v1116 = vpop.f32.mrb[0].mxu0
        %v1117 = vadd.f32 %v1038, %v1116
        %v1118 = vpop.f32.mrb[0].mxu0
        %1119 = vmatprep.mubr.f32.mxu0 %v845
        %1120 = vmatmul.mubr.f32.gmra.mrb[0].mxu0 %v844
        %v1121 = vpop.f32.mrb[0].mxu0
        %v1122 = vadd.f32 %v1038, %v1121
        %v1123 = vpop.f32.mrb[0].mxu0
        %1124 = vmatprep.mubr.f32.mxu0 %v854
        %1125 = vmatmul.mubr.f32.gmra.mrb[0].mxu0 %v853
        %v1126 = vpop.f32.mrb[0].mxu0
        %v1127 = vadd.f32 %v1038, %v1126
        %v1128 = vpop.f32.mrb[0].mxu0
        %1129 = vmatprep.mubr.f32.mxu0 %v863
        %1130 = vmatmul.mubr.f32.gmra.mrb[0].mxu0 %v862
        %v1131 = vpop.f32.mrb[0].mxu0
        %v1132 = vadd.f32 %v1038, %v1131
        %v1133 = vpop.f32.mrb[0].mxu0
        %1134 = vmatprep.mubr.f32.mxu0 %v872
        %1135 = vmatmul.mubr.f32.gmra.mrb[0].mxu0 %v871
        %v1136 = vpop.f32.mrb[0].mxu0
        %v1137 = vadd.f32 %v1038, %v1136
        %v1138 = vpop.f32.mrb[0].mxu0
        %1139 = vmatprep.mubr.f32.mxu0 %v881
        %1140 = vmatmul.mubr.f32.gmra.mrb[0].mxu0 %v880
        %v1141 = vpop.f32.mrb[0].mxu0
        %v1142 = vadd.f32 %v1038, %v1141
        %v1143 = vpop.f32.mrb[0].mxu0
        %1144 = vdwg.mxu0
        %1145 = vmatprep.subr.mxu0 0.0
        %1146 = vmatpush1.msra.mxu0 %v921
        %1147 = vmatprep.subr.mxu0 0.0
        %1148 = vmatpush1.msra.mxu0 %v922
        %1149 = vmatprep.subr.mxu0 0.0
        %1150 = vmatpush1.msra.mxu0 %v923
        %1151 = vmatprep.subr.mxu0 0.0
        %1152 = vmatpush1.msra.mxu0 %v924
        %1153 = vmatprep.subr.mxu0 0.0
        %1154 = vmatpush1.msra.mxu0 %v925
        %1155 = vmatprep.subr.mxu0 0.0
        %1156 = vmatpush1.msra.mxu0 %v926
        %1157 = vmatprep.subr.mxu0 0.0
        %1158 = vmatpush1.msra.mxu0 %v927
        %1159 = vmatprep.subr.mxu0 0.0
        %1160 = vmatpush1.msra.mxu0 %v928
        %1161 = vmatprep.subr.mxu0 0.0
        %1162 = vmatpush1.msra.mxu0 %v929
        %1163 = vmatprep.subr.mxu0 0.0
        %1164 = vmatpush1.msra.mxu0 %v930
        %1165 = vmatprep.subr.mxu0 0.0
        %1166 = vmatpush1.msra.mxu0 %v931
        %1167 = vmatprep.subr.mxu0 0.0
        %1168 = vmatpush1.msra.mxu0 %v932
        %1169 = vmatprep.subr.mxu0 0.0
        %1170 = vmatpush1.msra.mxu0 %v933
        %1171 = vmatprep.subr.mxu0 0.0
        %1172 = vmatpush1.msra.mxu0 %v934
        %1173 = vmatprep.subr.mxu0 0.0
        %1174 = vmatpush1.msra.mxu0 %v935
        %1175 = vmatprep.subr.mxu0 0.0
        %1176 = vmatpush1.msra.mxu0 %v936
        %1177 = vmatprep.subr.mxu0 0.0
        %1178 = vmatpush1.msra.mxu0 %v937
        %1179 = vmatprep.subr.mxu0 0.0
        %1180 = vmatpush1.msra.mxu0 %v938
        %1181 = vmatprep.subr.mxu0 0.0
        %1182 = vmatpush1.msra.mxu0 %v939
        %1183 = vmatprep.subr.mxu0 0.0
        %1184 = vmatpush1.msra.mxu0 %v940
        %1185 = vmatprep.subr.mxu0 0.0
        %1186 = vmatpush1.msra.mxu0 %v941
        %1187 = vmatprep.subr.mxu0 0.0
        %1188 = vmatpush1.msra.mxu0 %v942
        %1189 = vmatprep.subr.mxu0 0.0
        %1190 = vmatpush1.msra.mxu0 %v943
        %1191 = vmatprep.subr.mxu0 0.0
        %1192 = vmatpush1.msra.mxu0 %v944
        %1193 = vmatprep.subr.mxu0 0.0
        %1194 = vmatpush1.msra.mxu0 %v945
        %1195 = vmatprep.subr.mxu0 0.0
        %1196 = vmatpush1.msra.mxu0 %v946
        %1197 = vmatprep.subr.mxu0 0.0
        %1198 = vmatpush1.msra.mxu0 %v947
        %1199 = vmatprep.subr.mxu0 0.0
        %1200 = vmatpush1.msra.mxu0 %v948
        %1201 = vmatprep.subr.mxu0 0.0
        %1202 = vmatpush1.msra.mxu0 %v949
        %1203 = vmatprep.subr.mxu0 0.0
        %1204 = vmatpush1.msra.mxu0 %v950
        %1205 = vmatprep.subr.mxu0 0.0
        %1206 = vmatpush1.msra.mxu0 %v951
        %1207 = vmatprep.subr.mxu0 0.0
        %1208 = vmatpush1.msra.mxu0 %v952
        %1209 = vmatprep.mubr.f32.mxu0 %v820
        %1210 = vmatmul.mubr.f32.gmra.mrb[0].mxu0 %v819
        %v1211 = vpop.f32.mrb[0].mxu0
        %v1212 = vadd.f32 %v1107, %v1211
        %v1213 = vpop.f32.mrb[0].mxu0
        %1214 = vmatprep.mubr.f32.mxu0 %v829
        %1215 = vmatmul.mubr.f32.gmra.mrb[0].mxu0 %v828
        %v1216 = vpop.f32.mrb[0].mxu0
        %v1217 = vadd.f32 %v1112, %v1216
        %v1218 = vpop.f32.mrb[0].mxu0
        %1219 = vmatprep.mubr.f32.mxu0 %v838
        %1220 = vmatmul.mubr.f32.gmra.mrb[0].mxu0 %v837
        %v1221 = vpop.f32.mrb[0].mxu0
        %v1222 = vadd.f32 %v1117, %v1221
        %v1223 = vpop.f32.mrb[0].mxu0
        %1224 = vmatprep.mubr.f32.mxu0 %v847
        %1225 = vmatmul.mubr.f32.gmra.mrb[0].mxu0 %v846
        %v1226 = vpop.f32.mrb[0].mxu0
        %v1227 = vadd.f32 %v1122, %v1226
        %v1228 = vpop.f32.mrb[0].mxu0
        %1229 = vmatprep.mubr.f32.mxu0 %v856
        %1230 = vmatmul.mubr.f32.gmra.mrb[0].mxu0 %v855
        %v1231 = vpop.f32.mrb[0].mxu0
        %v1232 = vadd.f32 %v1127, %v1231
        %v1233 = vpop.f32.mrb[0].mxu0
        %1234 = vmatprep.mubr.f32.mxu0 %v865
        %1235 = vmatmul.mubr.f32.gmra.mrb[0].mxu0 %v864
        %v1236 = vpop.f32.mrb[0].mxu0
        %v1237 = vadd.f32 %v1132, %v1236
        %v1238 = vpop.f32.mrb[0].mxu0
        %1239 = vmatprep.mubr.f32.mxu0 %v874
        %1240 = vmatmul.mubr.f32.gmra.mrb[0].mxu0 %v873
        %v1241 = vpop.f32.mrb[0].mxu0
        %v1242 = vadd.f32 %v1137, %v1241
        %v1243 = vpop.f32.mrb[0].mxu0
        %1244 = vmatprep.mubr.f32.mxu0 %v883
        %1245 = vmatmul.mubr.f32.gmra.mrb[0].mxu0 %v882
        %v1246 = vpop.f32.mrb[0].mxu0
        %v1247 = vadd.f32 %v1142, %v1246
        %v1248 = vpop.f32.mrb[0].mxu0
        %1249 = vdwg.mxu0
        %1250 = vmatprep.subr.mxu0 0.0
        %1251 = vmatpush1.msra.mxu0 %v953
        %1252 = vmatprep.subr.mxu0 0.0
        %1253 = vmatpush1.msra.mxu0 %v954
        %1254 = vmatprep.subr.mxu0 0.0
        %1255 = vmatpush1.msra.mxu0 %v955
        %1256 = vmatprep.subr.mxu0 0.0
        %1257 = vmatpush1.msra.mxu0 %v956
        %1258 = vmatprep.subr.mxu0 0.0
        %1259 = vmatpush1.msra.mxu0 %v957
        %1260 = vmatprep.subr.mxu0 0.0
        %1261 = vmatpush1.msra.mxu0 %v958
        %1262 = vmatprep.subr.mxu0 0.0
        %1263 = vmatpush1.msra.mxu0 %v959
        %1264 = vmatprep.subr.mxu0 0.0
        %1265 = vmatpush1.msra.mxu0 %v960
        %1266 = vmatprep.subr.mxu0 0.0
        %1267 = vmatpush1.msra.mxu0 %v961
        %1268 = vmatprep.subr.mxu0 0.0
        %1269 = vmatpush1.msra.mxu0 %v962
        %1270 = vmatprep.subr.mxu0 0.0
        %1271 = vmatpush1.msra.mxu0 %v963
        %1272 = vmatprep.subr.mxu0 0.0
        %1273 = vmatpush1.msra.mxu0 %v964
        %1274 = vmatprep.subr.mxu0 0.0
        %1275 = vmatpush1.msra.mxu0 %v965
        %1276 = vmatprep.subr.mxu0 0.0
        %1277 = vmatpush1.msra.mxu0 %v966
        %1278 = vmatprep.subr.mxu0 0.0
        %1279 = vmatpush1.msra.mxu0 %v967
        %1280 = vmatprep.subr.mxu0 0.0
        %1281 = vmatpush1.msra.mxu0 %v968
        %1282 = vmatprep.subr.mxu0 0.0
        %1283 = vmatpush1.msra.mxu0 %v969
        %1284 = vmatprep.subr.mxu0 0.0
        %1285 = vmatpush1.msra.mxu0 %v970
        %1286 = vmatprep.subr.mxu0 0.0
        %1287 = vmatpush1.msra.mxu0 %v971
        %1288 = vmatprep.subr.mxu0 0.0
        %1289 = vmatpush1.msra.mxu0 %v972
        %1290 = vmatprep.subr.mxu0 0.0
        %1291 = vmatpush1.msra.mxu0 %v973
        %1292 = vmatprep.subr.mxu0 0.0
        %1293 = vmatpush1.msra.mxu0 %v974
        %1294 = vmatprep.subr.mxu0 0.0
        %1295 = vmatpush1.msra.mxu0 %v975
        %1296 = vmatprep.subr.mxu0 0.0
        %1297 = vmatpush1.msra.mxu0 %v976
        %1298 = vmatprep.subr.mxu0 0.0
        %1299 = vmatpush1.msra.mxu0 %v977
        %1300 = vmatprep.subr.mxu0 0.0
        %1301 = vmatpush1.msra.mxu0 %v978
        %1302 = vmatprep.subr.mxu0 0.0
        %1303 = vmatpush1.msra.mxu0 %v979
        %1304 = vmatprep.subr.mxu0 0.0
        %1305 = vmatpush1.msra.mxu0 %v980
        %1306 = vmatprep.subr.mxu0 0.0
        %1307 = vmatpush1.msra.mxu0 %v981
        %1308 = vmatprep.subr.mxu0 0.0
        %1309 = vmatpush1.msra.mxu0 %v982
        %1310 = vmatprep.subr.mxu0 0.0
        %1311 = vmatpush1.msra.mxu0 %v983
        %1312 = vmatprep.subr.mxu0 0.0
        %1313 = vmatpush1.msra.mxu0 %v984
        %1314 = vmatprep.mubr.f32.mxu0 %v822
        %1315 = vmatmul.mubr.f32.gmra.mrb[0].mxu0 %v821
        %v1316 = vpop.f32.mrb[0].mxu0
        %v1317 = vadd.f32 %v1212, %v1316
        %v1318 = vpop.f32.mrb[0].mxu0
        %1319 = vmatprep.mubr.f32.mxu0 %v831
        %1320 = vmatmul.mubr.f32.gmra.mrb[0].mxu0 %v830
        %v1321 = vpop.f32.mrb[0].mxu0
        %v1322 = vadd.f32 %v1217, %v1321
        %v1323 = vpop.f32.mrb[0].mxu0
        %1324 = vmatprep.mubr.f32.mxu0 %v840
        %1325 = vmatmul.mubr.f32.gmra.mrb[0].mxu0 %v839
        %v1326 = vpop.f32.mrb[0].mxu0
        %v1327 = vadd.f32 %v1222, %v1326
        %v1328 = vpop.f32.mrb[0].mxu0
        %1329 = vmatprep.mubr.f32.mxu0 %v849
        %1330 = vmatmul.mubr.f32.gmra.mrb[0].mxu0 %v848
        %v1331 = vpop.f32.mrb[0].mxu0
        %v1332 = vadd.f32 %v1227, %v1331
        %v1333 = vpop.f32.mrb[0].mxu0
        %1334 = vmatprep.mubr.f32.mxu0 %v858
        %1335 = vmatmul.mubr.f32.gmra.mrb[0].mxu0 %v857
        %v1336 = vpop.f32.mrb[0].mxu0
        %v1337 = vadd.f32 %v1232, %v1336
        %v1338 = vpop.f32.mrb[0].mxu0
        %1339 = vmatprep.mubr.f32.mxu0 %v867
        %1340 = vmatmul.mubr.f32.gmra.mrb[0].mxu0 %v866
        %v1341 = vpop.f32.mrb[0].mxu0
        %v1342 = vadd.f32 %v1237, %v1341
        %v1343 = vpop.f32.mrb[0].mxu0
        %1344 = vmatprep.mubr.f32.mxu0 %v876
        %1345 = vmatmul.mubr.f32.gmra.mrb[0].mxu0 %v875
        %v1346 = vpop.f32.mrb[0].mxu0
        %v1347 = vadd.f32 %v1242, %v1346
        %v1348 = vpop.f32.mrb[0].mxu0
        %1349 = vmatprep.mubr.f32.mxu0 %v885
        %1350 = vmatmul.mubr.f32.gmra.mrb[0].mxu0 %v884
        %v1351 = vpop.f32.mrb[0].mxu0
        %v1352 = vadd.f32 %v1247, %v1351
        %v1353 = vpop.f32.mrb[0].mxu0
        %1354 = vdwg.mxu0
        %1355 = vmatprep.subr.mxu0 0.0
        %1356 = vmatpush1.msra.mxu0 %v985
        %1357 = vmatprep.subr.mxu0 0.0
        %1358 = vmatpush1.msra.mxu0 %v986
        %1359 = vmatprep.subr.mxu0 0.0
        %1360 = vmatpush1.msra.mxu0 %v987
        %1361 = vmatprep.subr.mxu0 0.0
        %1362 = vmatpush1.msra.mxu0 %v988
        %1363 = vmatprep.subr.mxu0 0.0
        %1364 = vmatpush1.msra.mxu0 %v989
        %1365 = vmatprep.subr.mxu0 0.0
        %1366 = vmatpush1.msra.mxu0 %v990
        %1367 = vmatprep.subr.mxu0 0.0
        %1368 = vmatpush1.msra.mxu0 %v991
        %1369 = vmatprep.subr.mxu0 0.0
        %1370 = vmatpush1.msra.mxu0 %v992
        %1371 = vmatprep.subr.mxu0 0.0
        %1372 = vmatpush1.msra.mxu0 %v993
        %1373 = vmatprep.subr.mxu0 0.0
        %1374 = vmatpush1.msra.mxu0 %v994
        %1375 = vmatprep.subr.mxu0 0.0
        %1376 = vmatpush1.msra.mxu0 %v995
        %1377 = vmatprep.subr.mxu0 0.0
        %1378 = vmatpush1.msra.mxu0 %v996
        %1379 = vmatprep.subr.mxu0 0.0
        %1380 = vmatpush1.msra.mxu0 %v997
        %1381 = vmatprep.subr.mxu0 0.0
        %1382 = vmatpush1.msra.mxu0 %v998
        %1383 = vmatprep.subr.mxu0 0.0
        %1384 = vmatpush1.msra.mxu0 %v999
        %1385 = vmatprep.subr.mxu0 0.0
        %1386 = vmatpush1.msra.mxu0 %v1000
        %1387 = vmatprep.subr.mxu0 0.0
        %1388 = vmatpush1.msra.mxu0 %v1001
        %1389 = vmatprep.subr.mxu0 0.0
        %1390 = vmatpush1.msra.mxu0 %v1002
        %1391 = vmatprep.subr.mxu0 0.0
        %1392 = vmatpush1.msra.mxu0 %v1003
        %1393 = vmatprep.subr.mxu0 0.0
        %1394 = vmatpush1.msra.mxu0 %v1004
        %1395 = vmatprep.subr.mxu0 0.0
        %1396 = vmatpush1.msra.mxu0 %v1005
        %1397 = vmatprep.subr.mxu0 0.0
        %1398 = vmatpush1.msra.mxu0 %v1006
        %1399 = vmatprep.subr.mxu0 0.0
        %1400 = vmatpush1.msra.mxu0 %v1007
        %1401 = vmatprep.subr.mxu0 0.0
        %1402 = vmatpush1.msra.mxu0 %v1008
        %1403 = vmatprep.subr.mxu0 0.0
        %1404 = vmatpush1.msra.mxu0 %v1009
        %1405 = vmatprep.subr.mxu0 0.0
        %1406 = vmatpush1.msra.mxu0 %v1010
        %1407 = vmatprep.subr.mxu0 0.0
        %1408 = vmatpush1.msra.mxu0 %v1011
        %1409 = vmatprep.subr.mxu0 0.0
        %1410 = vmatpush1.msra.mxu0 %v1012
        %1411 = vmatprep.subr.mxu0 0.0
        %1412 = vmatpush1.msra.mxu0 %v1013
        %1413 = vmatprep.subr.mxu0 0.0
        %1414 = vmatpush1.msra.mxu0 %v1014
        %1415 = vmatprep.subr.mxu0 0.0
        %1416 = vmatpush1.msra.mxu0 %v1015
        %1417 = vmatprep.subr.mxu0 0.0
        %1418 = vmatpush1.msra.mxu0 %v1016
        %1419 = vmatprep.mubr.f32.mxu0 %v824
        %1420 = vmatmul.mubr.f32.gmra.mrb[0].mxu0 %v823
        %v1421 = vpop.f32.mrb[0].mxu0
        %v1422 = vadd.f32 %v1317, %v1421
        %v1423 = vpop.f32.mrb[0].mxu0
        %1424 = vmatprep.mubr.f32.mxu0 %v833
        %1425 = vmatmul.mubr.f32.gmra.mrb[0].mxu0 %v832
        %v1426 = vpop.f32.mrb[0].mxu0
        %v1427 = vadd.f32 %v1322, %v1426
        %v1428 = vpop.f32.mrb[0].mxu0
        %1429 = vmatprep.mubr.f32.mxu0 %v842
        %1430 = vmatmul.mubr.f32.gmra.mrb[0].mxu0 %v841
        %v1431 = vpop.f32.mrb[0].mxu0
        %v1432 = vadd.f32 %v1327, %v1431
        %v1433 = vpop.f32.mrb[0].mxu0
        %1434 = vmatprep.mubr.f32.mxu0 %v851
        %1435 = vmatmul.mubr.f32.gmra.mrb[0].mxu0 %v850
        %v1436 = vpop.f32.mrb[0].mxu0
        %v1437 = vadd.f32 %v1332, %v1436
        %v1438 = vpop.f32.mrb[0].mxu0
        %1439 = vmatprep.mubr.f32.mxu0 %v860
        %1440 = vmatmul.mubr.f32.gmra.mrb[0].mxu0 %v859
        %v1441 = vpop.f32.mrb[0].mxu0
        %v1442 = vadd.f32 %v1337, %v1441
        %v1443 = vpop.f32.mrb[0].mxu0
        %1444 = vmatprep.mubr.f32.mxu0 %v869
        %1445 = vmatmul.mubr.f32.gmra.mrb[0].mxu0 %v868
        %v1446 = vpop.f32.mrb[0].mxu0
        %v1447 = vadd.f32 %v1342, %v1446
        %v1448 = vpop.f32.mrb[0].mxu0
        %1449 = vmatprep.mubr.f32.mxu0 %v878
        %1450 = vmatmul.mubr.f32.gmra.mrb[0].mxu0 %v877
        %v1451 = vpop.f32.mrb[0].mxu0
        %v1452 = vadd.f32 %v1347, %v1451
        %v1453 = vpop.f32.mrb[0].mxu0
        %1454 = vmatprep.mubr.f32.mxu0 %v887
        %1455 = vmatmul.mubr.f32.gmra.mrb[0].mxu0 %v886
        %v1456 = vpop.f32.mrb[0].mxu0
        %v1457 = vadd.f32 %v1352, %v1456
        %v1458 = vpop.f32.mrb[0].mxu0
        %1459 = vdwg.mxu0
        %1460 = vmatprep.subr.mxu0 0.0
        %1461 = vmatpush1.msra.mxu0 %v1017
        %1462 = vmatprep.subr.mxu0 0.0
        %1463 = vmatpush1.msra.mxu0 %v1018
        %1464 = vmatprep.subr.mxu0 0.0
        %1465 = vmatpush1.msra.mxu0 %v1019
        %1466 = vmatprep.subr.mxu0 0.0
        %1467 = vmatpush1.msra.mxu0 %v1020
        %1468 = vmatprep.subr.mxu0 0.0
        %1469 = vmatpush1.msra.mxu0 %v1021
        %1470 = vmatprep.subr.mxu0 0.0
        %1471 = vmatpush1.msra.mxu0 %v1022
        %1472 = vmatprep.subr.mxu0 0.0
        %1473 = vmatpush1.msra.mxu0 %v1023
        %1474 = vmatprep.subr.mxu0 0.0
        %1475 = vmatpush1.msra.mxu0 %v1024
        %1476 = vmatprep.subr.mxu0 0.0
        %1477 = vmatpush1.msra.mxu0 %v1025
        %1478 = vmatprep.subr.mxu0 0.0
        %1479 = vmatpush1.msra.mxu0 %v1026
        %1480 = vmatprep.subr.mxu0 0.0
        %1481 = vmatpush1.msra.mxu0 %v1027
        %1482 = vmatprep.subr.mxu0 0.0
        %1483 = vmatpush1.msra.mxu0 %v1028
        %1484 = vmatprep.subr.mxu0 0.0
        %1485 = vmatpush1.msra.mxu0 %v1029
        %1486 = vmatprep.subr.mxu0 0.0
        %1487 = vmatpush1.msra.mxu0 %v1030
        %1488 = vmatprep.subr.mxu0 0.0
        %1489 = vmatpush1.msra.mxu0 %v1031
        %1490 = vmatprep.subr.mxu0 0.0
        %1491 = vmatpush1.msra.mxu0 %v1032
        %1492 = vmatprep.subr.mxu0 0.0
        %1493 = vmatpush1.msra.mxu0 0.0
        %1494 = vmatprep.subr.mxu0 0.0
        %1495 = vmatpush1.msra.mxu0 0.0
        %1496 = vmatprep.subr.mxu0 0.0
        %1497 = vmatpush1.msra.mxu0 0.0
        %1498 = vmatprep.subr.mxu0 0.0
        %1499 = vmatpush1.msra.mxu0 0.0
        %1500 = vmatprep.subr.mxu0 0.0
        %1501 = vmatpush1.msra.mxu0 0.0
        %1502 = vmatprep.subr.mxu0 0.0
        %1503 = vmatpush1.msra.mxu0 0.0
        %1504 = vmatprep.subr.mxu0 0.0
        %1505 = vmatpush1.msra.mxu0 0.0
        %1506 = vmatprep.subr.mxu0 0.0
        %1507 = vmatpush1.msra.mxu0 0.0
        %1508 = vmatprep.subr.mxu0 0.0
        %1509 = vmatpush1.msra.mxu0 0.0
        %1510 = vmatprep.subr.mxu0 0.0
        %1511 = vmatpush1.msra.mxu0 0.0
        %1512 = vmatprep.subr.mxu0 0.0
        %1513 = vmatpush1.msra.mxu0 0.0
        %1514 = vmatprep.subr.mxu0 0.0
        %1515 = vmatpush1.msra.mxu0 0.0
        %1516 = vmatprep.subr.mxu0 0.0
        %1517 = vmatpush1.msra.mxu0 0.0
        %1518 = vmatprep.subr.mxu0 0.0
        %1519 = vmatpush1.msra.mxu0 0.0
        %1520 = vmatprep.subr.mxu0 0.0
        %1521 = vmatpush1.msra.mxu0 0.0
        %1522 = vmatprep.subr.mxu0 0.0
        %1523 = vmatpush1.msra.mxu0 0.0
        %1524 = vmatprep.mubr.f32.mxu0 0.0
        %1525 = vmatmul.mubr.f32.gmra.mrb[0].mxu0 %v825
        %v1526 = vpop.f32.mrb[0].mxu0
        %v1527 = vadd.f32 %v1422, %v1526
        %v1528 = vpop.f32.mrb[0].mxu0
        %1529 = vmatprep.mubr.f32.mxu0 0.0
        %1530 = vmatmul.mubr.f32.gmra.mrb[0].mxu0 %v834
        %v1531 = vpop.f32.mrb[0].mxu0
        %v1532 = vadd.f32 %v1427, %v1531
        %v1533 = vpop.f32.mrb[0].mxu0
        %1534 = vmatprep.mubr.f32.mxu0 0.0
        %1535 = vmatmul.mubr.f32.gmra.mrb[0].mxu0 %v843
        %v1536 = vpop.f32.mrb[0].mxu0
        %v1537 = vadd.f32 %v1432, %v1536
        %v1538 = vpop.f32.mrb[0].mxu0
        %1539 = vmatprep.mubr.f32.mxu0 0.0
        %1540 = vmatmul.mubr.f32.gmra.mrb[0].mxu0 %v852
        %v1541 = vpop.f32.mrb[0].mxu0
        %v1542 = vadd.f32 %v1437, %v1541
        %v1543 = vpop.f32.mrb[0].mxu0
        %1544 = vmatprep.mubr.f32.mxu0 0.0
        %1545 = vmatmul.mubr.f32.gmra.mrb[0].mxu0 %v861
        %v1546 = vpop.f32.mrb[0].mxu0
        %v1547 = vadd.f32 %v1442, %v1546
        %v1548 = vpop.f32.mrb[0].mxu0
        %1549 = vmatprep.mubr.f32.mxu0 0.0
        %1550 = vmatmul.mubr.f32.gmra.mrb[0].mxu0 %v870
        %v1551 = vpop.f32.mrb[0].mxu0
        %v1552 = vadd.f32 %v1447, %v1551
        %v1553 = vpop.f32.mrb[0].mxu0
        %1554 = vmatprep.mubr.f32.mxu0 0.0
        %1555 = vmatmul.mubr.f32.gmra.mrb[0].mxu0 %v879
        %v1556 = vpop.f32.mrb[0].mxu0
        %v1557 = vadd.f32 %v1452, %v1556
        %v1558 = vpop.f32.mrb[0].mxu0
        %1559 = vmatprep.mubr.f32.mxu0 0.0
        %1560 = vmatmul.mubr.f32.gmra.mrb[0].mxu0 %v888
        %v1561 = vpop.f32.mrb[0].mxu0
        %v1562 = vadd.f32 %v1457, %v1561
        %v1563 = vpop.f32.mrb[0].mxu0
        %1564 = vdwg.mxu0
        %v1565 = vmax.f32 %v1527, 0.0
        %v1566 = vmax.f32 %v1532, 0.0
        %v1567 = vmax.f32 %v1537, 0.0
        %v1568 = vmax.f32 %v1542, 0.0
        %v1569 = vmax.f32 %v1547, 0.0
        %v1570 = vmax.f32 %v1552, 0.0
        %v1571 = vmax.f32 %v1557, 0.0
        %v1572 = vmax.f32 %v1562, 0.0
        %1573 = vst [vmem:[%s663 + $0x1] sm:$0xff] %v1565
        %1574 = vst [vmem:[%s663 + $0x11] sm:$0xff] %v1566
        %1575 = vst [vmem:[%s663 + $0x21] sm:$0xff] %v1567
        %1576 = vst [vmem:[%s663 + $0x31] sm:$0xff] %v1568
        %1577 = vst [vmem:[%s663 + $0x41] sm:$0xff] %v1569
        %1578 = vst [vmem:[%s663 + $0x51] sm:$0xff] %v1570
        %1579 = vst [vmem:[%s663 + $0x61] sm:$0xff] %v1571
        %1580 = vst [vmem:[%s663 + $0x71] sm:$0xff] %v1572
        %v1581 = vld [vmem:[#allocation2] sm:$0xff]
        %v1582 = vld [vmem:[#allocation2 + $0x10] sm:$0xff]
        %v1583 = vld [vmem:[#allocation2 + $0x20] sm:$0xff]
        %v1584 = vld [vmem:[#allocation2 + $0x30] sm:$0xff]
        %v1585 = vld [vmem:[#allocation2 + $0x40] sm:$0xff]
        %v1586 = vld [vmem:[#allocation2 + $0x50] sm:$0xff]
        %v1587 = vld [vmem:[#allocation2 + $0x60] sm:$0xff]
        %v1588 = vld [vmem:[#allocation2 + $0x70] sm:$0xff]
        %1589 = vst [vmem:[#allocation4] sm:$0xff] %v1581
        %1590 = vst [vmem:[#allocation4 + $0x48] sm:$0xff] %v1582
        %1591 = vst [vmem:[#allocation4 + $0x90] sm:$0xff] %v1583
        %1592 = vst [vmem:[#allocation4 + $0xd8] sm:$0xff] %v1584
        %1593 = vst [vmem:[#allocation4 + $0x120] sm:$0xff] %v1585
        %1594 = vst [vmem:[#allocation4 + $0x168] sm:$0xff] %v1586
        %1595 = vst [vmem:[#allocation4 + $0x1b0] sm:$0xff] %v1587
        %1596 = vst [vmem:[#allocation4 + $0x1f8] sm:$0xff] %v1588
        %v1597 = vld [vmem:[#allocation2 + $0x1] sm:$0xff]
        %v1598 = vld [vmem:[#allocation2 + $0x11] sm:$0xff]
        %v1599 = vld [vmem:[#allocation2 + $0x21] sm:$0xff]
        %v1600 = vld [vmem:[#allocation2 + $0x31] sm:$0xff]
        %v1601 = vld [vmem:[#allocation2 + $0x41] sm:$0xff]
        %v1602 = vld [vmem:[#allocation2 + $0x51] sm:$0xff]
        %v1603 = vld [vmem:[#allocation2 + $0x61] sm:$0xff]
        %v1604 = vld [vmem:[#allocation2 + $0x71] sm:$0xff]
        %1605 = vst [vmem:[#allocation4 + $0x8] sm:$0xff] %v1597
        %1606 = vst [vmem:[#allocation4 + $0x50] sm:$0xff] %v1598
        %1607 = vst [vmem:[#allocation4 + $0x98] sm:$0xff] %v1599
        %1608 = vst [vmem:[#allocation4 + $0xe0] sm:$0xff] %v1600
        %1609 = vst [vmem:[#allocation4 + $0x128] sm:$0xff] %v1601
        %1610 = vst [vmem:[#allocation4 + $0x170] sm:$0xff] %v1602
        %1611 = vst [vmem:[#allocation4 + $0x1b8] sm:$0xff] %v1603
        %1612 = vst [vmem:[#allocation4 + $0x200] sm:$0xff] %v1604
        %v1613 = vld [vmem:[#allocation2 + $0x2] sm:$0xff]
        %v1614 = vld [vmem:[#allocation2 + $0x12] sm:$0xff]
        %v1615 = vld [vmem:[#allocation2 + $0x22] sm:$0xff]
        %v1616 = vld [vmem:[#allocation2 + $0x32] sm:$0xff]
        %v1617 = vld [vmem:[#allocation2 + $0x42] sm:$0xff]
        %v1618 = vld [vmem:[#allocation2 + $0x52] sm:$0xff]
        %v1619 = vld [vmem:[#allocation2 + $0x62] sm:$0xff]
        %v1620 = vld [vmem:[#allocation2 + $0x72] sm:$0xff]
        %1621 = vst [vmem:[#allocation4 + $0x10] sm:$0xff] %v1613
        %1622 = vst [vmem:[#allocation4 + $0x58] sm:$0xff] %v1614
        %1623 = vst [vmem:[#allocation4 + $0xa0] sm:$0xff] %v1615
        %1624 = vst [vmem:[#allocation4 + $0xe8] sm:$0xff] %v1616
        %1625 = vst [vmem:[#allocation4 + $0x130] sm:$0xff] %v1617
        %1626 = vst [vmem:[#allocation4 + $0x178] sm:$0xff] %v1618
        %1627 = vst [vmem:[#allocation4 + $0x1c0] sm:$0xff] %v1619
        %1628 = vst [vmem:[#allocation4 + $0x208] sm:$0xff] %v1620
        %v1629 = vld [vmem:[%s663] sm:$0xff]
        %v1630 = vld [vmem:[%s663 + $0x10] sm:$0xff]
        %v1631 = vld [vmem:[%s663 + $0x20] sm:$0xff]
        %v1632 = vld [vmem:[%s663 + $0x30] sm:$0xff]
        %v1633 = vld [vmem:[%s663 + $0x40] sm:$0xff]
        %v1634 = vld [vmem:[%s663 + $0x50] sm:$0xff]
        %v1635 = vld [vmem:[%s663 + $0x60] sm:$0xff]
        %v1636 = vld [vmem:[%s663 + $0x70] sm:$0xff]
        %1637 = vst [vmem:[#allocation4 + $0x18] sm:$0xff] %v1629
        %1638 = vst [vmem:[#allocation4 + $0x60] sm:$0xff] %v1630
        %1639 = vst [vmem:[#allocation4 + $0xa8] sm:$0xff] %v1631
        %1640 = vst [vmem:[#allocation4 + $0xf0] sm:$0xff] %v1632
        %1641 = vst [vmem:[#allocation4 + $0x138] sm:$0xff] %v1633
        %1642 = vst [vmem:[#allocation4 + $0x180] sm:$0xff] %v1634
        %1643 = vst [vmem:[#allocation4 + $0x1c8] sm:$0xff] %v1635
        %1644 = vst [vmem:[#allocation4 + $0x210] sm:$0xff] %v1636
        %v1645 = vld [vmem:[%s663 + $0x1] sm:$0xff]
        %v1646 = vld [vmem:[%s663 + $0x11] sm:$0xff]
        %v1647 = vld [vmem:[%s663 + $0x21] sm:$0xff]
        %v1648 = vld [vmem:[%s663 + $0x31] sm:$0xff]
        %v1649 = vld [vmem:[%s663 + $0x41] sm:$0xff]
        %v1650 = vld [vmem:[%s663 + $0x51] sm:$0xff]
        %v1651 = vld [vmem:[%s663 + $0x61] sm:$0xff]
        %v1652 = vld [vmem:[%s663 + $0x71] sm:$0xff]
        %1653 = vst [vmem:[#allocation4 + $0x20] sm:$0xff] %v1645
        %1654 = vst [vmem:[#allocation4 + $0x68] sm:$0xff] %v1646
        %1655 = vst [vmem:[#allocation4 + $0xb0] sm:$0xff] %v1647
        %1656 = vst [vmem:[#allocation4 + $0xf8] sm:$0xff] %v1648
        %1657 = vst [vmem:[#allocation4 + $0x140] sm:$0xff] %v1649
        %1658 = vst [vmem:[#allocation4 + $0x188] sm:$0xff] %v1650
        %1659 = vst [vmem:[#allocation4 + $0x1d0] sm:$0xff] %v1651
        %1660 = vst [vmem:[#allocation4 + $0x218] sm:$0xff] %v1652
        %v1661 = vld [vmem:[%s663 + $0x2] sm:$0xff]
        %v1662 = vld [vmem:[%s663 + $0x12] sm:$0xff]
        %v1663 = vld [vmem:[%s663 + $0x22] sm:$0xff]
        %v1664 = vld [vmem:[%s663 + $0x32] sm:$0xff]
        %v1665 = vld [vmem:[%s663 + $0x42] sm:$0xff]
        %v1666 = vld [vmem:[%s663 + $0x52] sm:$0xff]
        %v1667 = vld [vmem:[%s663 + $0x62] sm:$0xff]
        %v1668 = vld [vmem:[%s663 + $0x72] sm:$0xff]
        %1669 = vst [vmem:[#allocation4 + $0x28] sm:$0xff] %v1661
        %1670 = vst [vmem:[#allocation4 + $0x70] sm:$0xff] %v1662
        %1671 = vst [vmem:[#allocation4 + $0xb8] sm:$0xff] %v1663
        %1672 = vst [vmem:[#allocation4 + $0x100] sm:$0xff] %v1664
        %1673 = vst [vmem:[#allocation4 + $0x148] sm:$0xff] %v1665
        %1674 = vst [vmem:[#allocation4 + $0x190] sm:$0xff] %v1666
        %1675 = vst [vmem:[#allocation4 + $0x1d8] sm:$0xff] %v1667
        %1676 = vst [vmem:[#allocation4 + $0x220] sm:$0xff] %v1668
        %v1677 = vld [vmem:[%s768] sm:$0xff]
        %v1678 = vld [vmem:[%s768 + $0x10] sm:$0xff]
        %v1679 = vld [vmem:[%s768 + $0x20] sm:$0xff]
        %v1680 = vld [vmem:[%s768 + $0x30] sm:$0xff]
        %v1681 = vld [vmem:[%s768 + $0x40] sm:$0xff]
        %v1682 = vld [vmem:[%s768 + $0x50] sm:$0xff]
        %v1683 = vld [vmem:[%s768 + $0x60] sm:$0xff]
        %v1684 = vld [vmem:[%s768 + $0x70] sm:$0xff]
        %1685 = vst [vmem:[#allocation4 + $0x30] sm:$0xff] %v1677
        %1686 = vst [vmem:[#allocation4 + $0x78] sm:$0xff] %v1678
        %1687 = vst [vmem:[#allocation4 + $0xc0] sm:$0xff] %v1679
        %1688 = vst [vmem:[#allocation4 + $0x108] sm:$0xff] %v1680
        %1689 = vst [vmem:[#allocation4 + $0x150] sm:$0xff] %v1681
        %1690 = vst [vmem:[#allocation4 + $0x198] sm:$0xff] %v1682
        %1691 = vst [vmem:[#allocation4 + $0x1e0] sm:$0xff] %v1683
        %1692 = vst [vmem:[#allocation4 + $0x228] sm:$0xff] %v1684
        %v1693 = vld [vmem:[%s768 + $0x1] sm:$0xff]
        %v1694 = vld [vmem:[%s768 + $0x11] sm:$0xff]
        %v1695 = vld [vmem:[%s768 + $0x21] sm:$0xff]
        %v1696 = vld [vmem:[%s768 + $0x31] sm:$0xff]
        %v1697 = vld [vmem:[%s768 + $0x41] sm:$0xff]
        %v1698 = vld [vmem:[%s768 + $0x51] sm:$0xff]
        %v1699 = vld [vmem:[%s768 + $0x61] sm:$0xff]
        %v1700 = vld [vmem:[%s768 + $0x71] sm:$0xff]
        %1701 = vst [vmem:[#allocation4 + $0x38] sm:$0xff] %v1693
        %1702 = vst [vmem:[#allocation4 + $0x80] sm:$0xff] %v1694
        %1703 = vst [vmem:[#allocation4 + $0xc8] sm:$0xff] %v1695
        %1704 = vst [vmem:[#allocation4 + $0x110] sm:$0xff] %v1696
        %1705 = vst [vmem:[#allocation4 + $0x158] sm:$0xff] %v1697
        %1706 = vst [vmem:[#allocation4 + $0x1a0] sm:$0xff] %v1698
        %1707 = vst [vmem:[#allocation4 + $0x1e8] sm:$0xff] %v1699
        %1708 = vst [vmem:[#allocation4 + $0x230] sm:$0xff] %v1700
        %v1709 = vld [vmem:[%s768 + $0x2] sm:$0xff]
        %v1710 = vld [vmem:[%s768 + $0x12] sm:$0xff]
        %v1711 = vld [vmem:[%s768 + $0x22] sm:$0xff]
        %v1712 = vld [vmem:[%s768 + $0x32] sm:$0xff]
        %v1713 = vld [vmem:[%s768 + $0x42] sm:$0xff]
        %v1714 = vld [vmem:[%s768 + $0x52] sm:$0xff]
        %v1715 = vld [vmem:[%s768 + $0x62] sm:$0xff]
        %v1716 = vld [vmem:[%s768 + $0x72] sm:$0xff]
        %1717 = vst [vmem:[#allocation4 + $0x40] sm:$0xff] %v1709
        %1718 = vst [vmem:[#allocation4 + $0x88] sm:$0xff] %v1710
        %1719 = vst [vmem:[#allocation4 + $0xd0] sm:$0xff] %v1711
        %1720 = vst [vmem:[#allocation4 + $0x118] sm:$0xff] %v1712
        %1721 = vst [vmem:[#allocation4 + $0x160] sm:$0xff] %v1713
        %1722 = vst [vmem:[#allocation4 + $0x1a8] sm:$0xff] %v1714
        %1723 = vst [vmem:[#allocation4 + $0x1f0] sm:$0xff] %v1715
        %1724 = vst [vmem:[#allocation4 + $0x238] sm:$0xff] %v1716
        %v1725 = vld [vmem:[#allocation4] sm:$0xff]
        %v1726 = vld [vmem:[#allocation4 + $0x8] sm:$0xff]
        %v1727 = vld [vmem:[#allocation4 + $0x10] sm:$0xff]
        %v1728 = vld [vmem:[#allocation4 + $0x18] sm:$0xff]
        %v1729 = vld [vmem:[#allocation4 + $0x20] sm:$0xff]
        %v1730 = vld [vmem:[#allocation4 + $0x28] sm:$0xff]
        %v1731 = vld [vmem:[#allocation4 + $0x30] sm:$0xff]
        %v1732 = vld [vmem:[#allocation4 + $0x38] sm:$0xff]
        %v1733 = vld [vmem:[#allocation4 + $0x40] sm:$0xff]
        %v1734 = vld [vmem:[#allocation4 + $0x48] sm:$0xff]
        %v1735 = vld [vmem:[#allocation4 + $0x50] sm:$0xff]
        %v1736 = vld [vmem:[#allocation4 + $0x58] sm:$0xff]
        %v1737 = vld [vmem:[#allocation4 + $0x60] sm:$0xff]
        %v1738 = vld [vmem:[#allocation4 + $0x68] sm:$0xff]
        %v1739 = vld [vmem:[#allocation4 + $0x70] sm:$0xff]
        %v1740 = vld [vmem:[#allocation4 + $0x78] sm:$0xff]
        %v1741 = vld [vmem:[#allocation4 + $0x80] sm:$0xff]
        %v1742 = vld [vmem:[#allocation4 + $0x88] sm:$0xff]
        %v1743 = vld [vmem:[#allocation4 + $0x90] sm:$0xff]
        %v1744 = vld [vmem:[#allocation4 + $0x98] sm:$0xff]
        %v1745 = vld [vmem:[#allocation4 + $0xa0] sm:$0xff]
        %v1746 = vld [vmem:[#allocation4 + $0xa8] sm:$0xff]
        %v1747 = vld [vmem:[#allocation4 + $0xb0] sm:$0xff]
        %v1748 = vld [vmem:[#allocation4 + $0xb8] sm:$0xff]
        %v1749 = vld [vmem:[#allocation4 + $0xc0] sm:$0xff]
        %v1750 = vld [vmem:[#allocation4 + $0xc8] sm:$0xff]
        %v1751 = vld [vmem:[#allocation4 + $0xd0] sm:$0xff]
        %v1752 = vld [vmem:[#allocation4 + $0xd8] sm:$0xff]
        %v1753 = vld [vmem:[#allocation4 + $0xe0] sm:$0xff]
        %v1754 = vld [vmem:[#allocation4 + $0xe8] sm:$0xff]
        %v1755 = vld [vmem:[#allocation4 + $0xf0] sm:$0xff]
        %v1756 = vld [vmem:[#allocation4 + $0xf8] sm:$0xff]
        %v1757 = vld [vmem:[#allocation4 + $0x100] sm:$0xff]
        %v1758 = vld [vmem:[#allocation4 + $0x108] sm:$0xff]
        %v1759 = vld [vmem:[#allocation4 + $0x110] sm:$0xff]
        %v1760 = vld [vmem:[#allocation4 + $0x118] sm:$0xff]
        %v1761 = vld [vmem:[#allocation4 + $0x120] sm:$0xff]
        %v1762 = vld [vmem:[#allocation4 + $0x128] sm:$0xff]
        %v1763 = vld [vmem:[#allocation4 + $0x130] sm:$0xff]
        %v1764 = vld [vmem:[#allocation4 + $0x138] sm:$0xff]
        %v1765 = vld [vmem:[#allocation4 + $0x140] sm:$0xff]
        %v1766 = vld [vmem:[#allocation4 + $0x148] sm:$0xff]
        %v1767 = vld [vmem:[#allocation4 + $0x150] sm:$0xff]
        %v1768 = vld [vmem:[#allocation4 + $0x158] sm:$0xff]
        %v1769 = vld [vmem:[#allocation4 + $0x160] sm:$0xff]
        %v1770 = vld [vmem:[#allocation4 + $0x168] sm:$0xff]
        %v1771 = vld [vmem:[#allocation4 + $0x170] sm:$0xff]
        %v1772 = vld [vmem:[#allocation4 + $0x178] sm:$0xff]
        %v1773 = vld [vmem:[#allocation4 + $0x180] sm:$0xff]
        %v1774 = vld [vmem:[#allocation4 + $0x188] sm:$0xff]
        %v1775 = vld [vmem:[#allocation4 + $0x190] sm:$0xff]
        %v1776 = vld [vmem:[#allocation4 + $0x198] sm:$0xff]
        %v1777 = vld [vmem:[#allocation4 + $0x1a0] sm:$0xff]
        %v1778 = vld [vmem:[#allocation4 + $0x1a8] sm:$0xff]
        %v1779 = vld [vmem:[#allocation4 + $0x1b0] sm:$0xff]
        %v1780 = vld [vmem:[#allocation4 + $0x1b8] sm:$0xff]
        %v1781 = vld [vmem:[#allocation4 + $0x1c0] sm:$0xff]
        %v1782 = vld [vmem:[#allocation4 + $0x1c8] sm:$0xff]
        %v1783 = vld [vmem:[#allocation4 + $0x1d0] sm:$0xff]
        %v1784 = vld [vmem:[#allocation4 + $0x1d8] sm:$0xff]
        %v1785 = vld [vmem:[#allocation4 + $0x1e0] sm:$0xff]
        %v1786 = vld [vmem:[#allocation4 + $0x1e8] sm:$0xff]
        %v1787 = vld [vmem:[#allocation4 + $0x1f0] sm:$0xff]
        %v1788 = vld [vmem:[#allocation4 + $0x1f8] sm:$0xff]
        %v1789 = vld [vmem:[#allocation4 + $0x200] sm:$0xff]
        %v1790 = vld [vmem:[#allocation4 + $0x208] sm:$0xff]
        %v1791 = vld [vmem:[#allocation4 + $0x210] sm:$0xff]
        %v1792 = vld [vmem:[#allocation4 + $0x218] sm:$0xff]
        %v1793 = vld [vmem:[#allocation4 + $0x220] sm:$0xff]
        %v1794 = vld [vmem:[#allocation4 + $0x228] sm:$0xff]
        %v1795 = vld [vmem:[#allocation4 + $0x230] sm:$0xff]
        %v1796 = vld [vmem:[#allocation4 + $0x238] sm:$0xff]
        %v1797 = vld [vmem:[#allocation10] sm:$0xff]
        %v1798 = vld [vmem:[#allocation10 + $0x8] sm:$0xff]
        %v1799 = vld [vmem:[#allocation10 + $0x10] sm:$0xff]
        %v1800 = vld [vmem:[#allocation10 + $0x18] sm:$0xff]
        %v1801 = vld [vmem:[#allocation10 + $0x20] sm:$0xff]
        %v1802 = vld [vmem:[#allocation10 + $0x28] sm:$0xff]
        %v1803 = vld [vmem:[#allocation10 + $0x30] sm:$0xff]
        %v1804 = vld [vmem:[#allocation10 + $0x38] sm:$0xff]
        %v1805 = vld [vmem:[#allocation10 + $0x40] sm:$0xff]
        %v1806 = vld [vmem:[#allocation10 + $0x48] sm:$0xff]
        %v1807 = vld [vmem:[#allocation10 + $0x50] sm:$0xff]
        %v1808 = vld [vmem:[#allocation10 + $0x58] sm:$0xff]
        %v1809 = vld [vmem:[#allocation10 + $0x60] sm:$0xff]
        %v1810 = vld [vmem:[#allocation10 + $0x68] sm:$0xff]
        %v1811 = vld [vmem:[#allocation10 + $0x70] sm:$0xff]
        %v1812 = vld [vmem:[#allocation10 + $0x78] sm:$0xff]
        %v1813 = vld [vmem:[#allocation10 + $0x80] sm:$0xff]
        %v1814 = vld [vmem:[#allocation10 + $0x88] sm:$0xff]
        %v1815 = vld [vmem:[#allocation10 + $0x90] sm:$0xff]
        %v1816 = vld [vmem:[#allocation10 + $0x98] sm:$0xff]
        %v1817 = vld [vmem:[#allocation10 + $0xa0] sm:$0xff]
        %v1818 = vld [vmem:[#allocation10 + $0xa8] sm:$0xff]
        %v1819 = vld [vmem:[#allocation10 + $0xb0] sm:$0xff]
        %v1820 = vld [vmem:[#allocation10 + $0xb8] sm:$0xff]
        %v1821 = vld [vmem:[#allocation10 + $0xc0] sm:$0xff]
        %v1822 = vld [vmem:[#allocation10 + $0xc8] sm:$0xff]
        %v1823 = vld [vmem:[#allocation10 + $0xd0] sm:$0xff]
        %v1824 = vld [vmem:[#allocation10 + $0xd8] sm:$0xff]
        %v1825 = vld [vmem:[#allocation10 + $0xe0] sm:$0xff]
        %v1826 = vld [vmem:[#allocation10 + $0xe8] sm:$0xff]
        %v1827 = vld [vmem:[#allocation10 + $0xf0] sm:$0xff]
        %v1828 = vld [vmem:[#allocation10 + $0xf8] sm:$0xff]
        %v1829 = vld [vmem:[#allocation10 + $0x100] sm:$0xff]
        %v1830 = vld [vmem:[#allocation10 + $0x108] sm:$0xff]
        %v1831 = vld [vmem:[#allocation10 + $0x110] sm:$0xff]
        %v1832 = vld [vmem:[#allocation10 + $0x118] sm:$0xff]
        %v1833 = vld [vmem:[#allocation10 + $0x120] sm:$0xff]
        %v1834 = vld [vmem:[#allocation10 + $0x128] sm:$0xff]
        %v1835 = vld [vmem:[#allocation10 + $0x130] sm:$0xff]
        %v1836 = vld [vmem:[#allocation10 + $0x138] sm:$0xff]
        %v1837 = vld [vmem:[#allocation10 + $0x140] sm:$0xff]
        %v1838 = vld [vmem:[#allocation10 + $0x148] sm:$0xff]
        %v1839 = vld [vmem:[#allocation10 + $0x150] sm:$0xff]
        %v1840 = vld [vmem:[#allocation10 + $0x158] sm:$0xff]
        %v1841 = vld [vmem:[#allocation10 + $0x160] sm:$0xff]
        %v1842 = vld [vmem:[#allocation10 + $0x168] sm:$0xff]
        %v1843 = vld [vmem:[#allocation10 + $0x170] sm:$0xff]
        %v1844 = vld [vmem:[#allocation10 + $0x178] sm:$0xff]
        %v1845 = vld [vmem:[#allocation10 + $0x180] sm:$0xff]
        %v1846 = vld [vmem:[#allocation10 + $0x188] sm:$0xff]
        %v1847 = vld [vmem:[#allocation10 + $0x190] sm:$0xff]
        %v1848 = vld [vmem:[#allocation10 + $0x198] sm:$0xff]
        %v1849 = vld [vmem:[#allocation10 + $0x1a0] sm:$0xff]
        %v1850 = vld [vmem:[#allocation10 + $0x1a8] sm:$0xff]
        %v1851 = vld [vmem:[#allocation10 + $0x1b0] sm:$0xff]
        %v1852 = vld [vmem:[#allocation10 + $0x1b8] sm:$0xff]
        %v1853 = vld [vmem:[#allocation10 + $0x1c0] sm:$0xff]
        %v1854 = vld [vmem:[#allocation10 + $0x1c8] sm:$0xff]
        %v1855 = vld [vmem:[#allocation10 + $0x1d0] sm:$0xff]
        %v1856 = vld [vmem:[#allocation10 + $0x1d8] sm:$0xff]
        %v1857 = vld [vmem:[#allocation10 + $0x1e0] sm:$0xff]
        %v1858 = vld [vmem:[#allocation10 + $0x1e8] sm:$0xff]
        %v1859 = vld [vmem:[#allocation10 + $0x1f0] sm:$0xff]
        %v1860 = vld [vmem:[#allocation10 + $0x1f8] sm:$0xff]
        %v1861 = vld [vmem:[#allocation10 + $0x200] sm:$0xff]
        %v1862 = vld [vmem:[#allocation10 + $0x208] sm:$0xff]
        %v1863 = vld [vmem:[#allocation10 + $0x210] sm:$0xff]
        %v1864 = vld [vmem:[#allocation10 + $0x218] sm:$0xff]
        %v1865 = vld [vmem:[#allocation10 + $0x220] sm:$0xff]
        %v1866 = vld [vmem:[#allocation10 + $0x228] sm:$0xff]
        %v1867 = vld [vmem:[#allocation10 + $0x230] sm:$0xff]
        %v1868 = vld [vmem:[#allocation10 + $0x238] sm:$0xff]
        %v1869 = vld [vmem:[#allocation10 + $0x240] sm:$0xff]
        %v1870 = vld [vmem:[#allocation10 + $0x248] sm:$0xff]
        %v1871 = vld [vmem:[#allocation10 + $0x250] sm:$0xff]
        %v1872 = vld [vmem:[#allocation10 + $0x258] sm:$0xff]
        %v1873 = vld [vmem:[#allocation10 + $0x260] sm:$0xff]
        %v1874 = vld [vmem:[#allocation10 + $0x268] sm:$0xff]
        %v1875 = vld [vmem:[#allocation10 + $0x270] sm:$0xff]
        %v1876 = vld [vmem:[#allocation10 + $0x278] sm:$0xff]
        %v1877 = vld [vmem:[#allocation10 + $0x280] sm:$0xff]
        %v1878 = vld [vmem:[#allocation10 + $0x288] sm:$0xff]
        %v1879 = vld [vmem:[#allocation10 + $0x290] sm:$0xff]
        %v1880 = vld [vmem:[#allocation10 + $0x298] sm:$0xff]
        %v1881 = vld [vmem:[#allocation10 + $0x2a0] sm:$0xff]
        %v1882 = vld [vmem:[#allocation10 + $0x2a8] sm:$0xff]
        %v1883 = vld [vmem:[#allocation10 + $0x2b0] sm:$0xff]
        %v1884 = vld [vmem:[#allocation10 + $0x2b8] sm:$0xff]
        %v1885 = vld [vmem:[#allocation10 + $0x2c0] sm:$0xff]
        %v1886 = vld [vmem:[#allocation10 + $0x2c8] sm:$0xff]
        %v1887 = vld [vmem:[#allocation10 + $0x2d0] sm:$0xff]
        %v1888 = vld [vmem:[#allocation10 + $0x2d8] sm:$0xff]
        %v1889 = vld [vmem:[#allocation10 + $0x2e0] sm:$0xff]
        %v1890 = vld [vmem:[#allocation10 + $0x2e8] sm:$0xff]
        %v1891 = vld [vmem:[#allocation10 + $0x2f0] sm:$0xff]
        %v1892 = vld [vmem:[#allocation10 + $0x2f8] sm:$0xff]
        %v1893 = vld [vmem:[#allocation10 + $0x300] sm:$0xff]
        %v1894 = vld [vmem:[#allocation10 + $0x308] sm:$0xff]
        %v1895 = vld [vmem:[#allocation10 + $0x310] sm:$0xff]
        %v1896 = vld [vmem:[#allocation10 + $0x318] sm:$0xff]
        %v1897 = vld [vmem:[#allocation10 + $0x320] sm:$0xff]
        %v1898 = vld [vmem:[#allocation10 + $0x328] sm:$0xff]
        %v1899 = vld [vmem:[#allocation10 + $0x330] sm:$0xff]
        %v1900 = vld [vmem:[#allocation10 + $0x338] sm:$0xff]
        %v1901 = vld [vmem:[#allocation10 + $0x340] sm:$0xff]
        %v1902 = vld [vmem:[#allocation10 + $0x348] sm:$0xff]
        %v1903 = vld [vmem:[#allocation10 + $0x350] sm:$0xff]
        %v1904 = vld [vmem:[#allocation10 + $0x358] sm:$0xff]
        %v1905 = vld [vmem:[#allocation10 + $0x360] sm:$0xff]
        %v1906 = vld [vmem:[#allocation10 + $0x368] sm:$0xff]
        %v1907 = vld [vmem:[#allocation10 + $0x370] sm:$0xff]
        %v1908 = vld [vmem:[#allocation10 + $0x378] sm:$0xff]
        %v1909 = vld [vmem:[#allocation10 + $0x380] sm:$0xff]
        %v1910 = vld [vmem:[#allocation10 + $0x388] sm:$0xff]
        %v1911 = vld [vmem:[#allocation10 + $0x390] sm:$0xff]
        %v1912 = vld [vmem:[#allocation10 + $0x398] sm:$0xff]
        %v1913 = vld [vmem:[#allocation10 + $0x3a0] sm:$0xff]
        %v1914 = vld [vmem:[#allocation10 + $0x3a8] sm:$0xff]
        %v1915 = vld [vmem:[#allocation10 + $0x3b0] sm:$0xff]
        %v1916 = vld [vmem:[#allocation10 + $0x3b8] sm:$0xff]
        %v1917 = vld [vmem:[#allocation10 + $0x3c0] sm:$0xff]
        %v1918 = vld [vmem:[#allocation10 + $0x3c8] sm:$0xff]
        %v1919 = vld [vmem:[#allocation10 + $0x3d0] sm:$0xff]
        %v1920 = vld [vmem:[#allocation10 + $0x3d8] sm:$0xff]
        %v1921 = vld [vmem:[#allocation10 + $0x3e0] sm:$0xff]
        %v1922 = vld [vmem:[#allocation10 + $0x3e8] sm:$0xff]
        %v1923 = vld [vmem:[#allocation10 + $0x3f0] sm:$0xff]
        %v1924 = vld [vmem:[#allocation10 + $0x3f8] sm:$0xff]
        %v1925 = vld [vmem:[#allocation10 + $0x400] sm:$0xff]
        %v1926 = vld [vmem:[#allocation10 + $0x408] sm:$0xff]
        %v1927 = vld [vmem:[#allocation10 + $0x410] sm:$0xff]
        %v1928 = vld [vmem:[#allocation10 + $0x418] sm:$0xff]
        %v1929 = vld [vmem:[#allocation10 + $0x420] sm:$0xff]
        %v1930 = vld [vmem:[#allocation10 + $0x428] sm:$0xff]
        %v1931 = vld [vmem:[#allocation10 + $0x430] sm:$0xff]
        %v1932 = vld [vmem:[#allocation10 + $0x438] sm:$0xff]
        %v1933 = vld [vmem:[#allocation10 + $0x440] sm:$0xff]
        %v1934 = vld [vmem:[#allocation10 + $0x448] sm:$0xff]
        %v1935 = vld [vmem:[#allocation10 + $0x450] sm:$0xff]
        %v1936 = vld [vmem:[#allocation10 + $0x458] sm:$0xff]
        %v1937 = vld [vmem:[#allocation10 + $0x460] sm:$0xff]
        %v1938 = vld [vmem:[#allocation10 + $0x468] sm:$0xff]
        %v1939 = vld [vmem:[#allocation10 + $0x470] sm:$0xff]
        %v1940 = vld [vmem:[#allocation10 + $0x478] sm:$0xff]
        %1941 = vmatprep.subr.mxu0 0.0
        %1942 = vmatpush1.msra.mxu0 %v1797
        %1943 = vmatprep.subr.mxu0 0.0
        %1944 = vmatpush1.msra.mxu0 %v1798
        %1945 = vmatprep.subr.mxu0 0.0
        %1946 = vmatpush1.msra.mxu0 %v1799
        %1947 = vmatprep.subr.mxu0 0.0
        %1948 = vmatpush1.msra.mxu0 %v1800
        %1949 = vmatprep.subr.mxu0 0.0
        %1950 = vmatpush1.msra.mxu0 %v1801
        %1951 = vmatprep.subr.mxu0 0.0
        %1952 = vmatpush1.msra.mxu0 %v1802
        %1953 = vmatprep.subr.mxu0 0.0
        %1954 = vmatpush1.msra.mxu0 %v1803
        %1955 = vmatprep.subr.mxu0 0.0
        %1956 = vmatpush1.msra.mxu0 %v1804
        %1957 = vmatprep.subr.mxu0 0.0
        %1958 = vmatpush1.msra.mxu0 %v1805
        %1959 = vmatprep.subr.mxu0 0.0
        %1960 = vmatpush1.msra.mxu0 %v1806
        %1961 = vmatprep.subr.mxu0 0.0
        %1962 = vmatpush1.msra.mxu0 %v1807
        %1963 = vmatprep.subr.mxu0 0.0
        %1964 = vmatpush1.msra.mxu0 %v1808
        %1965 = vmatprep.subr.mxu0 0.0
        %1966 = vmatpush1.msra.mxu0 %v1809
        %1967 = vmatprep.subr.mxu0 0.0
        %1968 = vmatpush1.msra.mxu0 %v1810
        %1969 = vmatprep.subr.mxu0 0.0
        %1970 = vmatpush1.msra.mxu0 %v1811
        %1971 = vmatprep.subr.mxu0 0.0
        %1972 = vmatpush1.msra.mxu0 %v1812
        %1973 = vmatprep.subr.mxu0 0.0
        %1974 = vmatpush1.msra.mxu0 %v1813
        %1975 = vmatprep.subr.mxu0 0.0
        %1976 = vmatpush1.msra.mxu0 %v1814
        %1977 = vmatprep.subr.mxu0 0.0
        %1978 = vmatpush1.msra.mxu0 %v1815
        %1979 = vmatprep.subr.mxu0 0.0
        %1980 = vmatpush1.msra.mxu0 %v1816
        %1981 = vmatprep.subr.mxu0 0.0
        %1982 = vmatpush1.msra.mxu0 %v1817
        %1983 = vmatprep.subr.mxu0 0.0
        %1984 = vmatpush1.msra.mxu0 %v1818
        %1985 = vmatprep.subr.mxu0 0.0
        %1986 = vmatpush1.msra.mxu0 %v1819
        %1987 = vmatprep.subr.mxu0 0.0
        %1988 = vmatpush1.msra.mxu0 %v1820
        %1989 = vmatprep.subr.mxu0 0.0
        %1990 = vmatpush1.msra.mxu0 %v1821
        %1991 = vmatprep.subr.mxu0 0.0
        %1992 = vmatpush1.msra.mxu0 %v1822
        %1993 = vmatprep.subr.mxu0 0.0
        %1994 = vmatpush1.msra.mxu0 %v1823
        %1995 = vmatprep.subr.mxu0 0.0
        %1996 = vmatpush1.msra.mxu0 %v1824
        %1997 = vmatprep.subr.mxu0 0.0
        %1998 = vmatpush1.msra.mxu0 %v1825
        %1999 = vmatprep.subr.mxu0 0.0
        %2000 = vmatpush1.msra.mxu0 %v1826
        %2001 = vmatprep.subr.mxu0 0.0
        %2002 = vmatpush1.msra.mxu0 %v1827
        %2003 = vmatprep.subr.mxu0 0.0
        %2004 = vmatpush1.msra.mxu0 %v1828
        %2005 = vmatprep.mubr.f32.mxu0 %v1726
        %2006 = vmatmul.mubr.f32.gmra.mrb[0].mxu0 %v1725
        %v2007 = vpop.f32.mrb[0].mxu0
        %v2008 = vadd.f32 0.0, %v2007
        %v2009 = vpop.f32.mrb[0].mxu0
        %2010 = vmatprep.mubr.f32.mxu0 %v1735
        %2011 = vmatmul.mubr.f32.gmra.mrb[0].mxu0 %v1734
        %v2012 = vpop.f32.mrb[0].mxu0
        %v2013 = vadd.f32 0.0, %v2012
        %v2014 = vpop.f32.mrb[0].mxu0
        %2015 = vmatprep.mubr.f32.mxu0 %v1744
        %2016 = vmatmul.mubr.f32.gmra.mrb[0].mxu0 %v1743
        %v2017 = vpop.f32.mrb[0].mxu0
        %v2018 = vadd.f32 0.0, %v2017
        %v2019 = vpop.f32.mrb[0].mxu0
        %2020 = vmatprep.mubr.f32.mxu0 %v1753
        %2021 = vmatmul.mubr.f32.gmra.mrb[0].mxu0 %v1752
        %v2022 = vpop.f32.mrb[0].mxu0
        %v2023 = vadd.f32 0.0, %v2022
        %v2024 = vpop.f32.mrb[0].mxu0
        %2025 = vmatprep.mubr.f32.mxu0 %v1762
        %2026 = vmatmul.mubr.f32.gmra.mrb[0].mxu0 %v1761
        %v2027 = vpop.f32.mrb[0].mxu0
        %v2028 = vadd.f32 0.0, %v2027
        %v2029 = vpop.f32.mrb[0].mxu0
        %2030 = vmatprep.mubr.f32.mxu0 %v1771
        %2031 = vmatmul.mubr.f32.gmra.mrb[0].mxu0 %v1770
        %v2032 = vpop.f32.mrb[0].mxu0
        %v2033 = vadd.f32 0.0, %v2032
        %v2034 = vpop.f32.mrb[0].mxu0
        %2035 = vmatprep.mubr.f32.mxu0 %v1780
        %2036 = vmatmul.mubr.f32.gmra.mrb[0].mxu0 %v1779
        %v2037 = vpop.f32.mrb[0].mxu0
        %v2038 = vadd.f32 0.0, %v2037
        %v2039 = vpop.f32.mrb[0].mxu0
        %2040 = vmatprep.mubr.f32.mxu0 %v1789
        %2041 = vmatmul.mubr.f32.gmra.mrb[0].mxu0 %v1788
        %v2042 = vpop.f32.mrb[0].mxu0
        %v2043 = vadd.f32 0.0, %v2042
        %v2044 = vpop.f32.mrb[0].mxu0
        %2045 = vdwg.mxu0
        %2046 = vmatprep.subr.mxu0 0.0
        %2047 = vmatpush1.msra.mxu0 %v1829
        %2048 = vmatprep.subr.mxu0 0.0
        %2049 = vmatpush1.msra.mxu0 %v1830
        %2050 = vmatprep.subr.mxu0 0.0
        %2051 = vmatpush1.msra.mxu0 %v1831
        %2052 = vmatprep.subr.mxu0 0.0
        %2053 = vmatpush1.msra.mxu0 %v1832
        %2054 = vmatprep.subr.mxu0 0.0
        %2055 = vmatpush1.msra.mxu0 %v1833
        %2056 = vmatprep.subr.mxu0 0.0
        %2057 = vmatpush1.msra.mxu0 %v1834
        %2058 = vmatprep.subr.mxu0 0.0
        %2059 = vmatpush1.msra.mxu0 %v1835
        %2060 = vmatprep.subr.mxu0 0.0
        %2061 = vmatpush1.msra.mxu0 %v1836
        %2062 = vmatprep.subr.mxu0 0.0
        %2063 = vmatpush1.msra.mxu0 %v1837
        %2064 = vmatprep.subr.mxu0 0.0
        %2065 = vmatpush1.msra.mxu0 %v1838
        %2066 = vmatprep.subr.mxu0 0.0
        %2067 = vmatpush1.msra.mxu0 %v1839
        %2068 = vmatprep.subr.mxu0 0.0
        %2069 = vmatpush1.msra.mxu0 %v1840
        %2070 = vmatprep.subr.mxu0 0.0
        %2071 = vmatpush1.msra.mxu0 %v1841
        %2072 = vmatprep.subr.mxu0 0.0
        %2073 = vmatpush1.msra.mxu0 %v1842
        %2074 = vmatprep.subr.mxu0 0.0
        %2075 = vmatpush1.msra.mxu0 %v1843
        %2076 = vmatprep.subr.mxu0 0.0
        %2077 = vmatpush1.msra.mxu0 %v1844
        %2078 = vmatprep.subr.mxu0 0.0
        %2079 = vmatpush1.msra.mxu0 %v1845
        %2080 = vmatprep.subr.mxu0 0.0
        %2081 = vmatpush1.msra.mxu0 %v1846
        %2082 = vmatprep.subr.mxu0 0.0
        %2083 = vmatpush1.msra.mxu0 %v1847
        %2084 = vmatprep.subr.mxu0 0.0
        %2085 = vmatpush1.msra.mxu0 %v1848
        %2086 = vmatprep.subr.mxu0 0.0
        %2087 = vmatpush1.msra.mxu0 %v1849
        %2088 = vmatprep.subr.mxu0 0.0
        %2089 = vmatpush1.msra.mxu0 %v1850
        %2090 = vmatprep.subr.mxu0 0.0
        %2091 = vmatpush1.msra.mxu0 %v1851
        %2092 = vmatprep.subr.mxu0 0.0
        %2093 = vmatpush1.msra.mxu0 %v1852
        %2094 = vmatprep.subr.mxu0 0.0
        %2095 = vmatpush1.msra.mxu0 %v1853
        %2096 = vmatprep.subr.mxu0 0.0
        %2097 = vmatpush1.msra.mxu0 %v1854
        %2098 = vmatprep.subr.mxu0 0.0
        %2099 = vmatpush1.msra.mxu0 %v1855
        %2100 = vmatprep.subr.mxu0 0.0
        %2101 = vmatpush1.msra.mxu0 %v1856
        %2102 = vmatprep.subr.mxu0 0.0
        %2103 = vmatpush1.msra.mxu0 %v1857
        %2104 = vmatprep.subr.mxu0 0.0
        %2105 = vmatpush1.msra.mxu0 %v1858
        %2106 = vmatprep.subr.mxu0 0.0
        %2107 = vmatpush1.msra.mxu0 %v1859
        %2108 = vmatprep.subr.mxu0 0.0
        %2109 = vmatpush1.msra.mxu0 %v1860
        %2110 = vmatprep.mubr.f32.mxu0 %v1728
        %2111 = vmatmul.mubr.f32.gmra.mrb[0].mxu0 %v1727
        %v2112 = vpop.f32.mrb[0].mxu0
        %v2113 = vadd.f32 %v2008, %v2112
        %v2114 = vpop.f32.mrb[0].mxu0
        %2115 = vmatprep.mubr.f32.mxu0 %v1737
        %2116 = vmatmul.mubr.f32.gmra.mrb[0].mxu0 %v1736
        %v2117 = vpop.f32.mrb[0].mxu0
        %v2118 = vadd.f32 %v2013, %v2117
        %v2119 = vpop.f32.mrb[0].mxu0
        %2120 = vmatprep.mubr.f32.mxu0 %v1746
        %2121 = vmatmul.mubr.f32.gmra.mrb[0].mxu0 %v1745
        %v2122 = vpop.f32.mrb[0].mxu0
        %v2123 = vadd.f32 %v2018, %v2122
        %v2124 = vpop.f32.mrb[0].mxu0
        %2125 = vmatprep.mubr.f32.mxu0 %v1755
        %2126 = vmatmul.mubr.f32.gmra.mrb[0].mxu0 %v1754
        %v2127 = vpop.f32.mrb[0].mxu0
        %v2128 = vadd.f32 %v2023, %v2127
        %v2129 = vpop.f32.mrb[0].mxu0
        %2130 = vmatprep.mubr.f32.mxu0 %v1764
        %2131 = vmatmul.mubr.f32.gmra.mrb[0].mxu0 %v1763
        %v2132 = vpop.f32.mrb[0].mxu0
        %v2133 = vadd.f32 %v2028, %v2132
        %v2134 = vpop.f32.mrb[0].mxu0
        %2135 = vmatprep.mubr.f32.mxu0 %v1773
        %2136 = vmatmul.mubr.f32.gmra.mrb[0].mxu0 %v1772
        %v2137 = vpop.f32.mrb[0].mxu0
        %v2138 = vadd.f32 %v2033, %v2137
        %v2139 = vpop.f32.mrb[0].mxu0
        %2140 = vmatprep.mubr.f32.mxu0 %v1782
        %2141 = vmatmul.mubr.f32.gmra.mrb[0].mxu0 %v1781
        %v2142 = vpop.f32.mrb[0].mxu0
        %v2143 = vadd.f32 %v2038, %v2142
        %v2144 = vpop.f32.mrb[0].mxu0
        %2145 = vmatprep.mubr.f32.mxu0 %v1791
        %2146 = vmatmul.mubr.f32.gmra.mrb[0].mxu0 %v1790
        %v2147 = vpop.f32.mrb[0].mxu0
        %v2148 = vadd.f32 %v2043, %v2147
        %v2149 = vpop.f32.mrb[0].mxu0
        %2150 = vdwg.mxu0
        %2151 = vmatprep.subr.mxu0 0.0
        %2152 = vmatpush1.msra.mxu0 %v1861
        %2153 = vmatprep.subr.mxu0 0.0
        %2154 = vmatpush1.msra.mxu0 %v1862
        %2155 = vmatprep.subr.mxu0 0.0
        %2156 = vmatpush1.msra.mxu0 %v1863
        %2157 = vmatprep.subr.mxu0 0.0
        %2158 = vmatpush1.msra.mxu0 %v1864
        %2159 = vmatprep.subr.mxu0 0.0
        %2160 = vmatpush1.msra.mxu0 %v1865
        %2161 = vmatprep.subr.mxu0 0.0
        %2162 = vmatpush1.msra.mxu0 %v1866
        %2163 = vmatprep.subr.mxu0 0.0
        %2164 = vmatpush1.msra.mxu0 %v1867
        %2165 = vmatprep.subr.mxu0 0.0
        %2166 = vmatpush1.msra.mxu0 %v1868
        %2167 = vmatprep.subr.mxu0 0.0
        %2168 = vmatpush1.msra.mxu0 %v1869
        %2169 = vmatprep.subr.mxu0 0.0
        %2170 = vmatpush1.msra.mxu0 %v1870
        %2171 = vmatprep.subr.mxu0 0.0
        %2172 = vmatpush1.msra.mxu0 %v1871
        %2173 = vmatprep.subr.mxu0 0.0
        %2174 = vmatpush1.msra.mxu0 %v1872
        %2175 = vmatprep.subr.mxu0 0.0
        %2176 = vmatpush1.msra.mxu0 %v1873
        %2177 = vmatprep.subr.mxu0 0.0
        %2178 = vmatpush1.msra.mxu0 %v1874
        %2179 = vmatprep.subr.mxu0 0.0
        %2180 = vmatpush1.msra.mxu0 %v1875
        %2181 = vmatprep.subr.mxu0 0.0
        %2182 = vmatpush1.msra.mxu0 %v1876
        %2183 = vmatprep.subr.mxu0 0.0
        %2184 = vmatpush1.msra.mxu0 %v1877
        %2185 = vmatprep.subr.mxu0 0.0
        %2186 = vmatpush1.msra.mxu0 %v1878
        %2187 = vmatprep.subr.mxu0 0.0
        %2188 = vmatpush1.msra.mxu0 %v1879
        %2189 = vmatprep.subr.mxu0 0.0
        %2190 = vmatpush1.msra.mxu0 %v1880
        %2191 = vmatprep.subr.mxu0 0.0
        %2192 = vmatpush1.msra.mxu0 %v1881
        %2193 = vmatprep.subr.mxu0 0.0
        %2194 = vmatpush1.msra.mxu0 %v1882
        %2195 = vmatprep.subr.mxu0 0.0
        %2196 = vmatpush1.msra.mxu0 %v1883
        %2197 = vmatprep.subr.mxu0 0.0
        %2198 = vmatpush1.msra.mxu0 %v1884
        %2199 = vmatprep.subr.mxu0 0.0
        %2200 = vmatpush1.msra.mxu0 %v1885
        %2201 = vmatprep.subr.mxu0 0.0
        %2202 = vmatpush1.msra.mxu0 %v1886
        %2203 = vmatprep.subr.mxu0 0.0
        %2204 = vmatpush1.msra.mxu0 %v1887
        %2205 = vmatprep.subr.mxu0 0.0
        %2206 = vmatpush1.msra.mxu0 %v1888
        %2207 = vmatprep.subr.mxu0 0.0
        %2208 = vmatpush1.msra.mxu0 %v1889
        %2209 = vmatprep.subr.mxu0 0.0
        %2210 = vmatpush1.msra.mxu0 %v1890
        %2211 = vmatprep.subr.mxu0 0.0
        %2212 = vmatpush1.msra.mxu0 %v1891
        %2213 = vmatprep.subr.mxu0 0.0
        %2214 = vmatpush1.msra.mxu0 %v1892
        %2215 = vmatprep.mubr.f32.mxu0 %v1730
        %2216 = vmatmul.mubr.f32.gmra.mrb[0].mxu0 %v1729
        %v2217 = vpop.f32.mrb[0].mxu0
        %v2218 = vadd.f32 %v2113, %v2217
        %v2219 = vpop.f32.mrb[0].mxu0
        %2220 = vmatprep.mubr.f32.mxu0 %v1739
        %2221 = vmatmul.mubr.f32.gmra.mrb[0].mxu0 %v1738
        %v2222 = vpop.f32.mrb[0].mxu0
        %v2223 = vadd.f32 %v2118, %v2222
        %v2224 = vpop.f32.mrb[0].mxu0
        %2225 = vmatprep.mubr.f32.mxu0 %v1748
        %2226 = vmatmul.mubr.f32.gmra.mrb[0].mxu0 %v1747
        %v2227 = vpop.f32.mrb[0].mxu0
        %v2228 = vadd.f32 %v2123, %v2227
        %v2229 = vpop.f32.mrb[0].mxu0
        %2230 = vmatprep.mubr.f32.mxu0 %v1757
        %2231 = vmatmul.mubr.f32.gmra.mrb[0].mxu0 %v1756
        %v2232 = vpop.f32.mrb[0].mxu0
        %v2233 = vadd.f32 %v2128, %v2232
        %v2234 = vpop.f32.mrb[0].mxu0
        %2235 = vmatprep.mubr.f32.mxu0 %v1766
        %2236 = vmatmul.mubr.f32.gmra.mrb[0].mxu0 %v1765
        %v2237 = vpop.f32.mrb[0].mxu0
        %v2238 = vadd.f32 %v2133, %v2237
        %v2239 = vpop.f32.mrb[0].mxu0
        %2240 = vmatprep.mubr.f32.mxu0 %v1775
        %2241 = vmatmul.mubr.f32.gmra.mrb[0].mxu0 %v1774
        %v2242 = vpop.f32.mrb[0].mxu0
        %v2243 = vadd.f32 %v2138, %v2242
        %v2244 = vpop.f32.mrb[0].mxu0
        %2245 = vmatprep.mubr.f32.mxu0 %v1784
        %2246 = vmatmul.mubr.f32.gmra.mrb[0].mxu0 %v1783
        %v2247 = vpop.f32.mrb[0].mxu0
        %v2248 = vadd.f32 %v2143, %v2247
        %v2249 = vpop.f32.mrb[0].mxu0
        %2250 = vmatprep.mubr.f32.mxu0 %v1793
        %2251 = vmatmul.mubr.f32.gmra.mrb[0].mxu0 %v1792
        %v2252 = vpop.f32.mrb[0].mxu0
        %v2253 = vadd.f32 %v2148, %v2252
        %v2254 = vpop.f32.mrb[0].mxu0
        %2255 = vdwg.mxu0
        %2256 = vmatprep.subr.mxu0 0.0
        %2257 = vmatpush1.msra.mxu0 %v1893
        %2258 = vmatprep.subr.mxu0 0.0
        %2259 = vmatpush1.msra.mxu0 %v1894
        %2260 = vmatprep.subr.mxu0 0.0
        %2261 = vmatpush1.msra.mxu0 %v1895
        %2262 = vmatprep.subr.mxu0 0.0
        %2263 = vmatpush1.msra.mxu0 %v1896
        %2264 = vmatprep.subr.mxu0 0.0
        %2265 = vmatpush1.msra.mxu0 %v1897
        %2266 = vmatprep.subr.mxu0 0.0
        %2267 = vmatpush1.msra.mxu0 %v1898
        %2268 = vmatprep.subr.mxu0 0.0
        %2269 = vmatpush1.msra.mxu0 %v1899
        %2270 = vmatprep.subr.mxu0 0.0
        %2271 = vmatpush1.msra.mxu0 %v1900
        %2272 = vmatprep.subr.mxu0 0.0
        %2273 = vmatpush1.msra.mxu0 %v1901
        %2274 = vmatprep.subr.mxu0 0.0
        %2275 = vmatpush1.msra.mxu0 %v1902
        %2276 = vmatprep.subr.mxu0 0.0
        %2277 = vmatpush1.msra.mxu0 %v1903
        %2278 = vmatprep.subr.mxu0 0.0
        %2279 = vmatpush1.msra.mxu0 %v1904
        %2280 = vmatprep.subr.mxu0 0.0
        %2281 = vmatpush1.msra.mxu0 %v1905
        %2282 = vmatprep.subr.mxu0 0.0
        %2283 = vmatpush1.msra.mxu0 %v1906
        %2284 = vmatprep.subr.mxu0 0.0
        %2285 = vmatpush1.msra.mxu0 %v1907
        %2286 = vmatprep.subr.mxu0 0.0
        %2287 = vmatpush1.msra.mxu0 %v1908
        %2288 = vmatprep.subr.mxu0 0.0
        %2289 = vmatpush1.msra.mxu0 %v1909
        %2290 = vmatprep.subr.mxu0 0.0
        %2291 = vmatpush1.msra.mxu0 %v1910
        %2292 = vmatprep.subr.mxu0 0.0
        %2293 = vmatpush1.msra.mxu0 %v1911
        %2294 = vmatprep.subr.mxu0 0.0
        %2295 = vmatpush1.msra.mxu0 %v1912
        %2296 = vmatprep.subr.mxu0 0.0
        %2297 = vmatpush1.msra.mxu0 %v1913
        %2298 = vmatprep.subr.mxu0 0.0
        %2299 = vmatpush1.msra.mxu0 %v1914
        %2300 = vmatprep.subr.mxu0 0.0
        %2301 = vmatpush1.msra.mxu0 %v1915
        %2302 = vmatprep.subr.mxu0 0.0
        %2303 = vmatpush1.msra.mxu0 %v1916
        %2304 = vmatprep.subr.mxu0 0.0
        %2305 = vmatpush1.msra.mxu0 %v1917
        %2306 = vmatprep.subr.mxu0 0.0
        %2307 = vmatpush1.msra.mxu0 %v1918
        %2308 = vmatprep.subr.mxu0 0.0
        %2309 = vmatpush1.msra.mxu0 %v1919
        %2310 = vmatprep.subr.mxu0 0.0
        %2311 = vmatpush1.msra.mxu0 %v1920
        %2312 = vmatprep.subr.mxu0 0.0
        %2313 = vmatpush1.msra.mxu0 %v1921
        %2314 = vmatprep.subr.mxu0 0.0
        %2315 = vmatpush1.msra.mxu0 %v1922
        %2316 = vmatprep.subr.mxu0 0.0
        %2317 = vmatpush1.msra.mxu0 %v1923
        %2318 = vmatprep.subr.mxu0 0.0
        %2319 = vmatpush1.msra.mxu0 %v1924
        %2320 = vmatprep.mubr.f32.mxu0 %v1732
        %2321 = vmatmul.mubr.f32.gmra.mrb[0].mxu0 %v1731
        %v2322 = vpop.f32.mrb[0].mxu0
        %v2323 = vadd.f32 %v2218, %v2322
        %v2324 = vpop.f32.mrb[0].mxu0
        %2325 = vmatprep.mubr.f32.mxu0 %v1741
        %2326 = vmatmul.mubr.f32.gmra.mrb[0].mxu0 %v1740
        %v2327 = vpop.f32.mrb[0].mxu0
        %v2328 = vadd.f32 %v2223, %v2327
        %v2329 = vpop.f32.mrb[0].mxu0
        %2330 = vmatprep.mubr.f32.mxu0 %v1750
        %2331 = vmatmul.mubr.f32.gmra.mrb[0].mxu0 %v1749
        %v2332 = vpop.f32.mrb[0].mxu0
        %v2333 = vadd.f32 %v2228, %v2332
        %v2334 = vpop.f32.mrb[0].mxu0
        %2335 = vmatprep.mubr.f32.mxu0 %v1759
        %2336 = vmatmul.mubr.f32.gmra.mrb[0].mxu0 %v1758
        %v2337 = vpop.f32.mrb[0].mxu0
        %v2338 = vadd.f32 %v2233, %v2337
        %v2339 = vpop.f32.mrb[0].mxu0
        %2340 = vmatprep.mubr.f32.mxu0 %v1768
        %2341 = vmatmul.mubr.f32.gmra.mrb[0].mxu0 %v1767
        %v2342 = vpop.f32.mrb[0].mxu0
        %v2343 = vadd.f32 %v2238, %v2342
        %v2344 = vpop.f32.mrb[0].mxu0
        %2345 = vmatprep.mubr.f32.mxu0 %v1777
        %2346 = vmatmul.mubr.f32.gmra.mrb[0].mxu0 %v1776
        %v2347 = vpop.f32.mrb[0].mxu0
        %v2348 = vadd.f32 %v2243, %v2347
        %v2349 = vpop.f32.mrb[0].mxu0
        %2350 = vmatprep.mubr.f32.mxu0 %v1786
        %2351 = vmatmul.mubr.f32.gmra.mrb[0].mxu0 %v1785
        %v2352 = vpop.f32.mrb[0].mxu0
        %v2353 = vadd.f32 %v2248, %v2352
        %v2354 = vpop.f32.mrb[0].mxu0
        %2355 = vmatprep.mubr.f32.mxu0 %v1795
        %2356 = vmatmul.mubr.f32.gmra.mrb[0].mxu0 %v1794
        %v2357 = vpop.f32.mrb[0].mxu0
        %v2358 = vadd.f32 %v2253, %v2357
        %v2359 = vpop.f32.mrb[0].mxu0
        %2360 = vdwg.mxu0
        %2361 = vmatprep.subr.mxu0 0.0
        %2362 = vmatpush1.msra.mxu0 %v1925
        %2363 = vmatprep.subr.mxu0 0.0
        %2364 = vmatpush1.msra.mxu0 %v1926
        %2365 = vmatprep.subr.mxu0 0.0
        %2366 = vmatpush1.msra.mxu0 %v1927
        %2367 = vmatprep.subr.mxu0 0.0
        %2368 = vmatpush1.msra.mxu0 %v1928
        %2369 = vmatprep.subr.mxu0 0.0
        %2370 = vmatpush1.msra.mxu0 %v1929
        %2371 = vmatprep.subr.mxu0 0.0
        %2372 = vmatpush1.msra.mxu0 %v1930
        %2373 = vmatprep.subr.mxu0 0.0
        %2374 = vmatpush1.msra.mxu0 %v1931
        %2375 = vmatprep.subr.mxu0 0.0
        %2376 = vmatpush1.msra.mxu0 %v1932
        %2377 = vmatprep.subr.mxu0 0.0
        %2378 = vmatpush1.msra.mxu0 %v1933
        %2379 = vmatprep.subr.mxu0 0.0
        %2380 = vmatpush1.msra.mxu0 %v1934
        %2381 = vmatprep.subr.mxu0 0.0
        %2382 = vmatpush1.msra.mxu0 %v1935
        %2383 = vmatprep.subr.mxu0 0.0
        %2384 = vmatpush1.msra.mxu0 %v1936
        %2385 = vmatprep.subr.mxu0 0.0
        %2386 = vmatpush1.msra.mxu0 %v1937
        %2387 = vmatprep.subr.mxu0 0.0
        %2388 = vmatpush1.msra.mxu0 %v1938
        %2389 = vmatprep.subr.mxu0 0.0
        %2390 = vmatpush1.msra.mxu0 %v1939
        %2391 = vmatprep.subr.mxu0 0.0
        %2392 = vmatpush1.msra.mxu0 %v1940
        %2393 = vmatprep.subr.mxu0 0.0
        %2394 = vmatpush1.msra.mxu0 0.0
        %2395 = vmatprep.subr.mxu0 0.0
        %2396 = vmatpush1.msra.mxu0 0.0
        %2397 = vmatprep.subr.mxu0 0.0
        %2398 = vmatpush1.msra.mxu0 0.0
        %2399 = vmatprep.subr.mxu0 0.0
        %2400 = vmatpush1.msra.mxu0 0.0
        %2401 = vmatprep.subr.mxu0 0.0
        %2402 = vmatpush1.msra.mxu0 0.0
        %2403 = vmatprep.subr.mxu0 0.0
        %2404 = vmatpush1.msra.mxu0 0.0
        %2405 = vmatprep.subr.mxu0 0.0
        %2406 = vmatpush1.msra.mxu0 0.0
        %2407 = vmatprep.subr.mxu0 0.0
        %2408 = vmatpush1.msra.mxu0 0.0
        %2409 = vmatprep.subr.mxu0 0.0
        %2410 = vmatpush1.msra.mxu0 0.0
        %2411 = vmatprep.subr.mxu0 0.0
        %2412 = vmatpush1.msra.mxu0 0.0
        %2413 = vmatprep.subr.mxu0 0.0
        %2414 = vmatpush1.msra.mxu0 0.0
        %2415 = vmatprep.subr.mxu0 0.0
        %2416 = vmatpush1.msra.mxu0 0.0
        %2417 = vmatprep.subr.mxu0 0.0
        %2418 = vmatpush1.msra.mxu0 0.0
        %2419 = vmatprep.subr.mxu0 0.0
        %2420 = vmatpush1.msra.mxu0 0.0
        %2421 = vmatprep.subr.mxu0 0.0
        %2422 = vmatpush1.msra.mxu0 0.0
        %2423 = vmatprep.subr.mxu0 0.0
        %2424 = vmatpush1.msra.mxu0 0.0
        %2425 = vmatprep.mubr.f32.mxu0 0.0
        %2426 = vmatmul.mubr.f32.gmra.mrb[0].mxu0 %v1733
        %v2427 = vpop.f32.mrb[0].mxu0
        %v2428 = vadd.f32 %v2323, %v2427
        %v2429 = vpop.f32.mrb[0].mxu0
        %2430 = vmatprep.mubr.f32.mxu0 0.0
        %2431 = vmatmul.mubr.f32.gmra.mrb[0].mxu0 %v1742
        %v2432 = vpop.f32.mrb[0].mxu0
        %v2433 = vadd.f32 %v2328, %v2432
        %v2434 = vpop.f32.mrb[0].mxu0
        %2435 = vmatprep.mubr.f32.mxu0 0.0
        %2436 = vmatmul.mubr.f32.gmra.mrb[0].mxu0 %v1751
        %v2437 = vpop.f32.mrb[0].mxu0
        %v2438 = vadd.f32 %v2333, %v2437
        %v2439 = vpop.f32.mrb[0].mxu0
        %2440 = vmatprep.mubr.f32.mxu0 0.0
        %2441 = vmatmul.mubr.f32.gmra.mrb[0].mxu0 %v1760
        %v2442 = vpop.f32.mrb[0].mxu0
        %v2443 = vadd.f32 %v2338, %v2442
        %v2444 = vpop.f32.mrb[0].mxu0
        %2445 = vmatprep.mubr.f32.mxu0 0.0
        %2446 = vmatmul.mubr.f32.gmra.mrb[0].mxu0 %v1769
        %v2447 = vpop.f32.mrb[0].mxu0
        %v2448 = vadd.f32 %v2343, %v2447
        %v2449 = vpop.f32.mrb[0].mxu0
        %2450 = vmatprep.mubr.f32.mxu0 0.0
        %2451 = vmatmul.mubr.f32.gmra.mrb[0].mxu0 %v1778
        %v2452 = vpop.f32.mrb[0].mxu0
        %v2453 = vadd.f32 %v2348, %v2452
        %v2454 = vpop.f32.mrb[0].mxu0
        %2455 = vmatprep.mubr.f32.mxu0 0.0
        %2456 = vmatmul.mubr.f32.gmra.mrb[0].mxu0 %v1787
        %v2457 = vpop.f32.mrb[0].mxu0
        %v2458 = vadd.f32 %v2353, %v2457
        %v2459 = vpop.f32.mrb[0].mxu0
        %2460 = vmatprep.mubr.f32.mxu0 0.0
        %2461 = vmatmul.mubr.f32.gmra.mrb[0].mxu0 %v1796
        %v2462 = vpop.f32.mrb[0].mxu0
        %v2463 = vadd.f32 %v2358, %v2462
        %v2464 = vpop.f32.mrb[0].mxu0
        %2465 = vdwg.mxu0
        %v2466 = vmax.f32 %v2428, 0.0
        %v2467 = vmax.f32 %v2433, 0.0
        %v2468 = vmax.f32 %v2438, 0.0
        %v2469 = vmax.f32 %v2443, 0.0
        %v2470 = vmax.f32 %v2448, 0.0
        %v2471 = vmax.f32 %v2453, 0.0
        %v2472 = vmax.f32 %v2458, 0.0
        %v2473 = vmax.f32 %v2463, 0.0
        %v2474 = vld [vmem:[#allocation11] sm:$0xff]
        %v2475 = vld [vmem:[#allocation11 + $0x8] sm:$0xff]
        %v2476 = vld [vmem:[#allocation11 + $0x10] sm:$0xff]
        %v2477 = vld [vmem:[#allocation11 + $0x18] sm:$0xff]
        %v2478 = vld [vmem:[#allocation11 + $0x20] sm:$0xff]
        %v2479 = vld [vmem:[#allocation11 + $0x28] sm:$0xff]
        %v2480 = vld [vmem:[#allocation11 + $0x30] sm:$0xff]
        %v2481 = vld [vmem:[#allocation11 + $0x38] sm:$0xff]
        %v2482 = vld [vmem:[#allocation11 + $0x40] sm:$0xff]
        %v2483 = vld [vmem:[#allocation11 + $0x48] sm:$0xff]
        %v2484 = vld [vmem:[#allocation11 + $0x50] sm:$0xff]
        %v2485 = vld [vmem:[#allocation11 + $0x58] sm:$0xff]
        %v2486 = vld [vmem:[#allocation11 + $0x60] sm:$0xff]
        %v2487 = vld [vmem:[#allocation11 + $0x68] sm:$0xff]
        %v2488 = vld [vmem:[#allocation11 + $0x70] sm:$0xff]
        %v2489 = vld [vmem:[#allocation11 + $0x78] sm:$0xff]
        %2490 = vmatprep.subr.mxu0 0.0
        %2491 = vmatpush1.msra.mxu0 %v2474
        %2492 = vmatprep.subr.mxu0 0.0
        %2493 = vmatpush1.msra.mxu0 %v2475
        %2494 = vmatprep.subr.mxu0 0.0
        %2495 = vmatpush1.msra.mxu0 %v2476
        %2496 = vmatprep.subr.mxu0 0.0
        %2497 = vmatpush1.msra.mxu0 %v2477
        %2498 = vmatprep.subr.mxu0 0.0
        %2499 = vmatpush1.msra.mxu0 %v2478
        %2500 = vmatprep.subr.mxu0 0.0
        %2501 = vmatpush1.msra.mxu0 %v2479
        %2502 = vmatprep.subr.mxu0 0.0
        %2503 = vmatpush1.msra.mxu0 %v2480
        %2504 = vmatprep.subr.mxu0 0.0
        %2505 = vmatpush1.msra.mxu0 %v2481
        %2506 = vmatprep.subr.mxu0 0.0
        %2507 = vmatpush1.msra.mxu0 %v2482
        %2508 = vmatprep.subr.mxu0 0.0
        %2509 = vmatpush1.msra.mxu0 %v2483
        %2510 = vmatprep.subr.mxu0 0.0
        %2511 = vmatpush1.msra.mxu0 %v2484
        %2512 = vmatprep.subr.mxu0 0.0
        %2513 = vmatpush1.msra.mxu0 %v2485
        %2514 = vmatprep.subr.mxu0 0.0
        %2515 = vmatpush1.msra.mxu0 %v2486
        %2516 = vmatprep.subr.mxu0 0.0
        %2517 = vmatpush1.msra.mxu0 %v2487
        %2518 = vmatprep.subr.mxu0 0.0
        %2519 = vmatpush1.msra.mxu0 %v2488
        %2520 = vmatprep.subr.mxu0 0.0
        %2521 = vmatpush1.msra.mxu0 %v2489
        %2522 = vmatprep.subr.mxu0 0.0
        %2523 = vmatpush1.msra.mxu0 0.0
        %2524 = vmatprep.subr.mxu0 0.0
        %2525 = vmatpush1.msra.mxu0 0.0
        %2526 = vmatprep.subr.mxu0 0.0
        %2527 = vmatpush1.msra.mxu0 0.0
        %2528 = vmatprep.subr.mxu0 0.0
        %2529 = vmatpush1.msra.mxu0 0.0
        %2530 = vmatprep.subr.mxu0 0.0
        %2531 = vmatpush1.msra.mxu0 0.0
        %2532 = vmatprep.subr.mxu0 0.0
        %2533 = vmatpush1.msra.mxu0 0.0
        %2534 = vmatprep.subr.mxu0 0.0
        %2535 = vmatpush1.msra.mxu0 0.0
        %2536 = vmatprep.subr.mxu0 0.0
        %2537 = vmatpush1.msra.mxu0 0.0
        %2538 = vmatprep.subr.mxu0 0.0
        %2539 = vmatpush1.msra.mxu0 0.0
        %2540 = vmatprep.subr.mxu0 0.0
        %2541 = vmatpush1.msra.mxu0 0.0
        %2542 = vmatprep.subr.mxu0 0.0
        %2543 = vmatpush1.msra.mxu0 0.0
        %2544 = vmatprep.subr.mxu0 0.0
        %2545 = vmatpush1.msra.mxu0 0.0
        %2546 = vmatprep.subr.mxu0 0.0
        %2547 = vmatpush1.msra.mxu0 0.0
        %2548 = vmatprep.subr.mxu0 0.0
        %2549 = vmatpush1.msra.mxu0 0.0
        %2550 = vmatprep.subr.mxu0 0.0
        %2551 = vmatpush1.msra.mxu0 0.0
        %2552 = vmatprep.subr.mxu0 0.0
        %2553 = vmatpush1.msra.mxu0 0.0
        %2554 = vmatprep.mubr.f32.mxu0 0.0
        %2555 = vmatmul.mubr.f32.gmra.mrb[0].mxu0 %v2466
        %v2556 = vpop.f32.mrb[0].mxu0
        %v2557 = vadd.f32 0.0, %v2556
        %v2558 = vpop.f32.mrb[0].mxu0
        %2559 = vmatprep.mubr.f32.mxu0 0.0
        %2560 = vmatmul.mubr.f32.gmra.mrb[0].mxu0 %v2467
        %v2561 = vpop.f32.mrb[0].mxu0
        %v2562 = vadd.f32 0.0, %v2561
        %v2563 = vpop.f32.mrb[0].mxu0
        %2564 = vmatprep.mubr.f32.mxu0 0.0
        %2565 = vmatmul.mubr.f32.gmra.mrb[0].mxu0 %v2468
        %v2566 = vpop.f32.mrb[0].mxu0
        %v2567 = vadd.f32 0.0, %v2566
        %v2568 = vpop.f32.mrb[0].mxu0
        %2569 = vmatprep.mubr.f32.mxu0 0.0
        %2570 = vmatmul.mubr.f32.gmra.mrb[0].mxu0 %v2469
        %v2571 = vpop.f32.mrb[0].mxu0
        %v2572 = vadd.f32 0.0, %v2571
        %v2573 = vpop.f32.mrb[0].mxu0
        %2574 = vmatprep.mubr.f32.mxu0 0.0
        %2575 = vmatmul.mubr.f32.gmra.mrb[0].mxu0 %v2470
        %v2576 = vpop.f32.mrb[0].mxu0
        %v2577 = vadd.f32 0.0, %v2576
        %v2578 = vpop.f32.mrb[0].mxu0
        %2579 = vmatprep.mubr.f32.mxu0 0.0
        %2580 = vmatmul.mubr.f32.gmra.mrb[0].mxu0 %v2471
        %v2581 = vpop.f32.mrb[0].mxu0
        %v2582 = vadd.f32 0.0, %v2581
        %v2583 = vpop.f32.mrb[0].mxu0
        %2584 = vmatprep.mubr.f32.mxu0 0.0
        %2585 = vmatmul.mubr.f32.gmra.mrb[0].mxu0 %v2472
        %v2586 = vpop.f32.mrb[0].mxu0
        %v2587 = vadd.f32 0.0, %v2586
        %v2588 = vpop.f32.mrb[0].mxu0
        %2589 = vmatprep.mubr.f32.mxu0 0.0
        %2590 = vmatmul.mubr.f32.gmra.mrb[0].mxu0 %v2473
        %v2591 = vpop.f32.mrb[0].mxu0
        %v2592 = vadd.f32 0.0, %v2591
        %v2593 = vpop.f32.mrb[0].mxu0
        %2594 = vdwg.mxu0
        %v2595 = vadd.f32 %v1527, %v2557
        %v2596 = vadd.f32 %v1532, %v2562
        %v2597 = vadd.f32 %v1537, %v2567
        %v2598 = vadd.f32 %v1542, %v2572
        %v2599 = vadd.f32 %v1547, %v2577
        %v2600 = vadd.f32 %v1552, %v2582
        %v2601 = vadd.f32 %v1557, %v2587
        %v2602 = vadd.f32 %v1562, %v2592
        %v2603 = vmax.f32 %v2595, 0.0
        %v2604 = vmax.f32 %v2596, 0.0
        %v2605 = vmax.f32 %v2597, 0.0
        %v2606 = vmax.f32 %v2598, 0.0
        %v2607 = vmax.f32 %v2599, 0.0
        %v2608 = vmax.f32 %v2600, 0.0
        %v2609 = vmax.f32 %v2601, 0.0
        %v2610 = vmax.f32 %v2602, 0.0
        %2611 = vst [vmem:[%s663 + $0x1] sm:$0xff] %v2603
        %2612 = vst [vmem:[%s663 + $0x11] sm:$0xff] %v2604
        %2613 = vst [vmem:[%s663 + $0x21] sm:$0xff] %v2605
        %2614 = vst [vmem:[%s663 + $0x31] sm:$0xff] %v2606
        %2615 = vst [vmem:[%s663 + $0x41] sm:$0xff] %v2607
        %2616 = vst [vmem:[%s663 + $0x51] sm:$0xff] %v2608
        %2617 = vst [vmem:[%s663 + $0x61] sm:$0xff] %v2609
        %2618 = vst [vmem:[%s663 + $0x71] sm:$0xff] %v2610
        %v2619 = vld [vmem:[#allocation2] sm:$0xff]
        %v2620 = vld [vmem:[#allocation2 + $0x10] sm:$0xff]
        %v2621 = vld [vmem:[#allocation2 + $0x20] sm:$0xff]
        %v2622 = vld [vmem:[#allocation2 + $0x30] sm:$0xff]
        %v2623 = vld [vmem:[#allocation2 + $0x40] sm:$0xff]
        %v2624 = vld [vmem:[#allocation2 + $0x50] sm:$0xff]
        %v2625 = vld [vmem:[#allocation2 + $0x60] sm:$0xff]
        %v2626 = vld [vmem:[#allocation2 + $0x70] sm:$0xff]
        %2627 = vst [vmem:[#allocation4] sm:$0xff] %v2619
        %2628 = vst [vmem:[#allocation4 + $0x48] sm:$0xff] %v2620
        %2629 = vst [vmem:[#allocation4 + $0x90] sm:$0xff] %v2621
        %2630 = vst [vmem:[#allocation4 + $0xd8] sm:$0xff] %v2622
        %2631 = vst [vmem:[#allocation4 + $0x120] sm:$0xff] %v2623
        %2632 = vst [vmem:[#allocation4 + $0x168] sm:$0xff] %v2624
        %2633 = vst [vmem:[#allocation4 + $0x1b0] sm:$0xff] %v2625
        %2634 = vst [vmem:[#allocation4 + $0x1f8] sm:$0xff] %v2626
        %v2635 = vld [vmem:[#allocation2 + $0x1] sm:$0xff]
        %v2636 = vld [vmem:[#allocation2 + $0x11] sm:$0xff]
        %v2637 = vld [vmem:[#allocation2 + $0x21] sm:$0xff]
        %v2638 = vld [vmem:[#allocation2 + $0x31] sm:$0xff]
        %v2639 = vld [vmem:[#allocation2 + $0x41] sm:$0xff]
        %v2640 = vld [vmem:[#allocation2 + $0x51] sm:$0xff]
        %v2641 = vld [vmem:[#allocation2 + $0x61] sm:$0xff]
        %v2642 = vld [vmem:[#allocation2 + $0x71] sm:$0xff]
        %2643 = vst [vmem:[#allocation4 + $0x8] sm:$0xff] %v2635
        %2644 = vst [vmem:[#allocation4 + $0x50] sm:$0xff] %v2636
        %2645 = vst [vmem:[#allocation4 + $0x98] sm:$0xff] %v2637
        %2646 = vst [vmem:[#allocation4 + $0xe0] sm:$0xff] %v2638
        %2647 = vst [vmem:[#allocation4 + $0x128] sm:$0xff] %v2639
        %2648 = vst [vmem:[#allocation4 + $0x170] sm:$0xff] %v2640
        %2649 = vst [vmem:[#allocation4 + $0x1b8] sm:$0xff] %v2641
        %2650 = vst [vmem:[#allocation4 + $0x200] sm:$0xff] %v2642
        %v2651 = vld [vmem:[#allocation2 + $0x2] sm:$0xff]
        %v2652 = vld [vmem:[#allocation2 + $0x12] sm:$0xff]
        %v2653 = vld [vmem:[#allocation2 + $0x22] sm:$0xff]
        %v2654 = vld [vmem:[#allocation2 + $0x32] sm:$0xff]
        %v2655 = vld [vmem:[#allocation2 + $0x42] sm:$0xff]
        %v2656 = vld [vmem:[#allocation2 + $0x52] sm:$0xff]
        %v2657 = vld [vmem:[#allocation2 + $0x62] sm:$0xff]
        %v2658 = vld [vmem:[#allocation2 + $0x72] sm:$0xff]
        %2659 = vst [vmem:[#allocation4 + $0x10] sm:$0xff] %v2651
        %2660 = vst [vmem:[#allocation4 + $0x58] sm:$0xff] %v2652
        %2661 = vst [vmem:[#allocation4 + $0xa0] sm:$0xff] %v2653
        %2662 = vst [vmem:[#allocation4 + $0xe8] sm:$0xff] %v2654
        %2663 = vst [vmem:[#allocation4 + $0x130] sm:$0xff] %v2655
        %2664 = vst [vmem:[#allocation4 + $0x178] sm:$0xff] %v2656
        %2665 = vst [vmem:[#allocation4 + $0x1c0] sm:$0xff] %v2657
        %2666 = vst [vmem:[#allocation4 + $0x208] sm:$0xff] %v2658
        %v2667 = vld [vmem:[%s663] sm:$0xff]
        %v2668 = vld [vmem:[%s663 + $0x10] sm:$0xff]
        %v2669 = vld [vmem:[%s663 + $0x20] sm:$0xff]
        %v2670 = vld [vmem:[%s663 + $0x30] sm:$0xff]
        %v2671 = vld [vmem:[%s663 + $0x40] sm:$0xff]
        %v2672 = vld [vmem:[%s663 + $0x50] sm:$0xff]
        %v2673 = vld [vmem:[%s663 + $0x60] sm:$0xff]
        %v2674 = vld [vmem:[%s663 + $0x70] sm:$0xff]
        %2675 = vst [vmem:[#allocation4 + $0x18] sm:$0xff] %v2667
        %2676 = vst [vmem:[#allocation4 + $0x60] sm:$0xff] %v2668
        %2677 = vst [vmem:[#allocation4 + $0xa8] sm:$0xff] %v2669
        %2678 = vst [vmem:[#allocation4 + $0xf0] sm:$0xff] %v2670
        %2679 = vst [vmem:[#allocation4 + $0x138] sm:$0xff] %v2671
        %2680 = vst [vmem:[#allocation4 + $0x180] sm:$0xff] %v2672
        %2681 = vst [vmem:[#allocation4 + $0x1c8] sm:$0xff] %v2673
        %2682 = vst [vmem:[#allocation4 + $0x210] sm:$0xff] %v2674
        %v2683 = vld [vmem:[%s663 + $0x1] sm:$0xff]
        %v2684 = vld [vmem:[%s663 + $0x11] sm:$0xff]
        %v2685 = vld [vmem:[%s663 + $0x21] sm:$0xff]
        %v2686 = vld [vmem:[%s663 + $0x31] sm:$0xff]
        %v2687 = vld [vmem:[%s663 + $0x41] sm:$0xff]
        %v2688 = vld [vmem:[%s663 + $0x51] sm:$0xff]
        %v2689 = vld [vmem:[%s663 + $0x61] sm:$0xff]
        %v2690 = vld [vmem:[%s663 + $0x71] sm:$0xff]
        %2691 = vst [vmem:[#allocation4 + $0x20] sm:$0xff] %v2683
        %2692 = vst [vmem:[#allocation4 + $0x68] sm:$0xff] %v2684
        %2693 = vst [vmem:[#allocation4 + $0xb0] sm:$0xff] %v2685
        %2694 = vst [vmem:[#allocation4 + $0xf8] sm:$0xff] %v2686
        %2695 = vst [vmem:[#allocation4 + $0x140] sm:$0xff] %v2687
        %2696 = vst [vmem:[#allocation4 + $0x188] sm:$0xff] %v2688
        %2697 = vst [vmem:[#allocation4 + $0x1d0] sm:$0xff] %v2689
        %2698 = vst [vmem:[#allocation4 + $0x218] sm:$0xff] %v2690
        %v2699 = vld [vmem:[%s663 + $0x2] sm:$0xff]
        %v2700 = vld [vmem:[%s663 + $0x12] sm:$0xff]
        %v2701 = vld [vmem:[%s663 + $0x22] sm:$0xff]
        %v2702 = vld [vmem:[%s663 + $0x32] sm:$0xff]
        %v2703 = vld [vmem:[%s663 + $0x42] sm:$0xff]
        %v2704 = vld [vmem:[%s663 + $0x52] sm:$0xff]
        %v2705 = vld [vmem:[%s663 + $0x62] sm:$0xff]
        %v2706 = vld [vmem:[%s663 + $0x72] sm:$0xff]
        %2707 = vst [vmem:[#allocation4 + $0x28] sm:$0xff] %v2699
        %2708 = vst [vmem:[#allocation4 + $0x70] sm:$0xff] %v2700
        %2709 = vst [vmem:[#allocation4 + $0xb8] sm:$0xff] %v2701
        %2710 = vst [vmem:[#allocation4 + $0x100] sm:$0xff] %v2702
        %2711 = vst [vmem:[#allocation4 + $0x148] sm:$0xff] %v2703
        %2712 = vst [vmem:[#allocation4 + $0x190] sm:$0xff] %v2704
        %2713 = vst [vmem:[#allocation4 + $0x1d8] sm:$0xff] %v2705
        %2714 = vst [vmem:[#allocation4 + $0x220] sm:$0xff] %v2706
        %v2715 = vld [vmem:[%s768] sm:$0xff]
        %v2716 = vld [vmem:[%s768 + $0x10] sm:$0xff]
        %v2717 = vld [vmem:[%s768 + $0x20] sm:$0xff]
        %v2718 = vld [vmem:[%s768 + $0x30] sm:$0xff]
        %v2719 = vld [vmem:[%s768 + $0x40] sm:$0xff]
        %v2720 = vld [vmem:[%s768 + $0x50] sm:$0xff]
        %v2721 = vld [vmem:[%s768 + $0x60] sm:$0xff]
        %v2722 = vld [vmem:[%s768 + $0x70] sm:$0xff]
        %2723 = vst [vmem:[#allocation4 + $0x30] sm:$0xff] %v2715
        %2724 = vst [vmem:[#allocation4 + $0x78] sm:$0xff] %v2716
        %2725 = vst [vmem:[#allocation4 + $0xc0] sm:$0xff] %v2717
        %2726 = vst [vmem:[#allocation4 + $0x108] sm:$0xff] %v2718
        %2727 = vst [vmem:[#allocation4 + $0x150] sm:$0xff] %v2719
        %2728 = vst [vmem:[#allocation4 + $0x198] sm:$0xff] %v2720
        %2729 = vst [vmem:[#allocation4 + $0x1e0] sm:$0xff] %v2721
        %2730 = vst [vmem:[#allocation4 + $0x228] sm:$0xff] %v2722
        %v2731 = vld [vmem:[%s768 + $0x1] sm:$0xff]
        %v2732 = vld [vmem:[%s768 + $0x11] sm:$0xff]
        %v2733 = vld [vmem:[%s768 + $0x21] sm:$0xff]
        %v2734 = vld [vmem:[%s768 + $0x31] sm:$0xff]
        %v2735 = vld [vmem:[%s768 + $0x41] sm:$0xff]
        %v2736 = vld [vmem:[%s768 + $0x51] sm:$0xff]
        %v2737 = vld [vmem:[%s768 + $0x61] sm:$0xff]
        %v2738 = vld [vmem:[%s768 + $0x71] sm:$0xff]
        %2739 = vst [vmem:[#allocation4 + $0x38] sm:$0xff] %v2731
        %2740 = vst [vmem:[#allocation4 + $0x80] sm:$0xff] %v2732
        %2741 = vst [vmem:[#allocation4 + $0xc8] sm:$0xff] %v2733
        %2742 = vst [vmem:[#allocation4 + $0x110] sm:$0xff] %v2734
        %2743 = vst [vmem:[#allocation4 + $0x158] sm:$0xff] %v2735
        %2744 = vst [vmem:[#allocation4 + $0x1a0] sm:$0xff] %v2736
        %2745 = vst [vmem:[#allocation4 + $0x1e8] sm:$0xff] %v2737
        %2746 = vst [vmem:[#allocation4 + $0x230] sm:$0xff] %v2738
        %v2747 = vld [vmem:[%s768 + $0x2] sm:$0xff]
        %v2748 = vld [vmem:[%s768 + $0x12] sm:$0xff]
        %v2749 = vld [vmem:[%s768 + $0x22] sm:$0xff]
        %v2750 = vld [vmem:[%s768 + $0x32] sm:$0xff]
        %v2751 = vld [vmem:[%s768 + $0x42] sm:$0xff]
        %v2752 = vld [vmem:[%s768 + $0x52] sm:$0xff]
        %v2753 = vld [vmem:[%s768 + $0x62] sm:$0xff]
        %v2754 = vld [vmem:[%s768 + $0x72] sm:$0xff]
        %2755 = vst [vmem:[#allocation4 + $0x40] sm:$0xff] %v2747
        %2756 = vst [vmem:[#allocation4 + $0x88] sm:$0xff] %v2748
        %2757 = vst [vmem:[#allocation4 + $0xd0] sm:$0xff] %v2749
        %2758 = vst [vmem:[#allocation4 + $0x118] sm:$0xff] %v2750
        %2759 = vst [vmem:[#allocation4 + $0x160] sm:$0xff] %v2751
        %2760 = vst [vmem:[#allocation4 + $0x1a8] sm:$0xff] %v2752
        %2761 = vst [vmem:[#allocation4 + $0x1f0] sm:$0xff] %v2753
        %2762 = vst [vmem:[#allocation4 + $0x238] sm:$0xff] %v2754
        %v2763 = vld [vmem:[#allocation4] sm:$0xff]
        %v2764 = vld [vmem:[#allocation4 + $0x8] sm:$0xff]
        %v2765 = vld [vmem:[#allocation4 + $0x10] sm:$0xff]
        %v2766 = vld [vmem:[#allocation4 + $0x18] sm:$0xff]
        %v2767 = vld [vmem:[#allocation4 + $0x20] sm:$0xff]
        %v2768 = vld [vmem:[#allocation4 + $0x28] sm:$0xff]
        %v2769 = vld [vmem:[#allocation4 + $0x30] sm:$0xff]
        %v2770 = vld [vmem:[#allocation4 + $0x38] sm:$0xff]
        %v2771 = vld [vmem:[#allocation4 + $0x40] sm:$0xff]
        %v2772 = vld [vmem:[#allocation4 + $0x48] sm:$0xff]
        %v2773 = vld [vmem:[#allocation4 + $0x50] sm:$0xff]
        %v2774 = vld [vmem:[#allocation4 + $0x58] sm:$0xff]
        %v2775 = vld [vmem:[#allocation4 + $0x60] sm:$0xff]
        %v2776 = vld [vmem:[#allocation4 + $0x68] sm:$0xff]
        %v2777 = vld [vmem:[#allocation4 + $0x70] sm:$0xff]
        %v2778 = vld [vmem:[#allocation4 + $0x78] sm:$0xff]
        %v2779 = vld [vmem:[#allocation4 + $0x80] sm:$0xff]
        %v2780 = vld [vmem:[#allocation4 + $0x88] sm:$0xff]
        %v2781 = vld [vmem:[#allocation4 + $0x90] sm:$0xff]
        %v2782 = vld [vmem:[#allocation4 + $0x98] sm:$0xff]
        %v2783 = vld [vmem:[#allocation4 + $0xa0] sm:$0xff]
        %v2784 = vld [vmem:[#allocation4 + $0xa8] sm:$0xff]
        %v2785 = vld [vmem:[#allocation4 + $0xb0] sm:$0xff]
        %v2786 = vld [vmem:[#allocation4 + $0xb8] sm:$0xff]
        %v2787 = vld [vmem:[#allocation4 + $0xc0] sm:$0xff]
        %v2788 = vld [vmem:[#allocation4 + $0xc8] sm:$0xff]
        %v2789 = vld [vmem:[#allocation4 + $0xd0] sm:$0xff]
        %v2790 = vld [vmem:[#allocation4 + $0xd8] sm:$0xff]
        %v2791 = vld [vmem:[#allocation4 + $0xe0] sm:$0xff]
        %v2792 = vld [vmem:[#allocation4 + $0xe8] sm:$0xff]
        %v2793 = vld [vmem:[#allocation4 + $0xf0] sm:$0xff]
        %v2794 = vld [vmem:[#allocation4 + $0xf8] sm:$0xff]
        %v2795 = vld [vmem:[#allocation4 + $0x100] sm:$0xff]
        %v2796 = vld [vmem:[#allocation4 + $0x108] sm:$0xff]
        %v2797 = vld [vmem:[#allocation4 + $0x110] sm:$0xff]
        %v2798 = vld [vmem:[#allocation4 + $0x118] sm:$0xff]
        %v2799 = vld [vmem:[#allocation4 + $0x120] sm:$0xff]
        %v2800 = vld [vmem:[#allocation4 + $0x128] sm:$0xff]
        %v2801 = vld [vmem:[#allocation4 + $0x130] sm:$0xff]
        %v2802 = vld [vmem:[#allocation4 + $0x138] sm:$0xff]
        %v2803 = vld [vmem:[#allocation4 + $0x140] sm:$0xff]
        %v2804 = vld [vmem:[#allocation4 + $0x148] sm:$0xff]
        %v2805 = vld [vmem:[#allocation4 + $0x150] sm:$0xff]
        %v2806 = vld [vmem:[#allocation4 + $0x158] sm:$0xff]
        %v2807 = vld [vmem:[#allocation4 + $0x160] sm:$0xff]
        %v2808 = vld [vmem:[#allocation4 + $0x168] sm:$0xff]
        %v2809 = vld [vmem:[#allocation4 + $0x170] sm:$0xff]
        %v2810 = vld [vmem:[#allocation4 + $0x178] sm:$0xff]
        %v2811 = vld [vmem:[#allocation4 + $0x180] sm:$0xff]
        %v2812 = vld [vmem:[#allocation4 + $0x188] sm:$0xff]
        %v2813 = vld [vmem:[#allocation4 + $0x190] sm:$0xff]
        %v2814 = vld [vmem:[#allocation4 + $0x198] sm:$0xff]
        %v2815 = vld [vmem:[#allocation4 + $0x1a0] sm:$0xff]
        %v2816 = vld [vmem:[#allocation4 + $0x1a8] sm:$0xff]
        %v2817 = vld [vmem:[#allocation4 + $0x1b0] sm:$0xff]
        %v2818 = vld [vmem:[#allocation4 + $0x1b8] sm:$0xff]
        %v2819 = vld [vmem:[#allocation4 + $0x1c0] sm:$0xff]
        %v2820 = vld [vmem:[#allocation4 + $0x1c8] sm:$0xff]
        %v2821 = vld [vmem:[#allocation4 + $0x1d0] sm:$0xff]
        %v2822 = vld [vmem:[#allocation4 + $0x1d8] sm:$0xff]
        %v2823 = vld [vmem:[#allocation4 + $0x1e0] sm:$0xff]
        %v2824 = vld [vmem:[#allocation4 + $0x1e8] sm:$0xff]
        %v2825 = vld [vmem:[#allocation4 + $0x1f0] sm:$0xff]
        %v2826 = vld [vmem:[#allocation4 + $0x1f8] sm:$0xff]
        %v2827 = vld [vmem:[#allocation4 + $0x200] sm:$0xff]
        %v2828 = vld [vmem:[#allocation4 + $0x208] sm:$0xff]
        %v2829 = vld [vmem:[#allocation4 + $0x210] sm:$0xff]
        %v2830 = vld [vmem:[#allocation4 + $0x218] sm:$0xff]
        %v2831 = vld [vmem:[#allocation4 + $0x220] sm:$0xff]
        %v2832 = vld [vmem:[#allocation4 + $0x228] sm:$0xff]
        %v2833 = vld [vmem:[#allocation4 + $0x230] sm:$0xff]
        %v2834 = vld [vmem:[#allocation4 + $0x238] sm:$0xff]
        %v2835 = vld [vmem:[#allocation13] sm:$0xff]
        %v2836 = vld [vmem:[#allocation13 + $0x8] sm:$0xff]
        %v2837 = vld [vmem:[#allocation13 + $0x10] sm:$0xff]
        %v2838 = vld [vmem:[#allocation13 + $0x18] sm:$0xff]
        %v2839 = vld [vmem:[#allocation13 + $0x20] sm:$0xff]
        %v2840 = vld [vmem:[#allocation13 + $0x28] sm:$0xff]
        %v2841 = vld [vmem:[#allocation13 + $0x30] sm:$0xff]
        %v2842 = vld [vmem:[#allocation13 + $0x38] sm:$0xff]
        %v2843 = vld [vmem:[#allocation13 + $0x40] sm:$0xff]
        %v2844 = vld [vmem:[#allocation13 + $0x48] sm:$0xff]
        %v2845 = vld [vmem:[#allocation13 + $0x50] sm:$0xff]
        %v2846 = vld [vmem:[#allocation13 + $0x58] sm:$0xff]
        %v2847 = vld [vmem:[#allocation13 + $0x60] sm:$0xff]
        %v2848 = vld [vmem:[#allocation13 + $0x68] sm:$0xff]
        %v2849 = vld [vmem:[#allocation13 + $0x70] sm:$0xff]
        %v2850 = vld [vmem:[#allocation13 + $0x78] sm:$0xff]
        %v2851 = vld [vmem:[#allocation13 + $0x80] sm:$0xff]
        %v2852 = vld [vmem:[#allocation13 + $0x88] sm:$0xff]
        %v2853 = vld [vmem:[#allocation13 + $0x90] sm:$0xff]
        %v2854 = vld [vmem:[#allocation13 + $0x98] sm:$0xff]
        %v2855 = vld [vmem:[#allocation13 + $0xa0] sm:$0xff]
        %v2856 = vld [vmem:[#allocation13 + $0xa8] sm:$0xff]
        %v2857 = vld [vmem:[#allocation13 + $0xb0] sm:$0xff]
        %v2858 = vld [vmem:[#allocation13 + $0xb8] sm:$0xff]
        %v2859 = vld [vmem:[#allocation13 + $0xc0] sm:$0xff]
        %v2860 = vld [vmem:[#allocation13 + $0xc8] sm:$0xff]
        %v2861 = vld [vmem:[#allocation13 + $0xd0] sm:$0xff]
        %v2862 = vld [vmem:[#allocation13 + $0xd8] sm:$0xff]
        %v2863 = vld [vmem:[#allocation13 + $0xe0] sm:$0xff]
        %v2864 = vld [vmem:[#allocation13 + $0xe8] sm:$0xff]
        %v2865 = vld [vmem:[#allocation13 + $0xf0] sm:$0xff]
        %v2866 = vld [vmem:[#allocation13 + $0xf8] sm:$0xff]
        %v2867 = vld [vmem:[#allocation13 + $0x100] sm:$0xff]
        %v2868 = vld [vmem:[#allocation13 + $0x108] sm:$0xff]
        %v2869 = vld [vmem:[#allocation13 + $0x110] sm:$0xff]
        %v2870 = vld [vmem:[#allocation13 + $0x118] sm:$0xff]
        %v2871 = vld [vmem:[#allocation13 + $0x120] sm:$0xff]
        %v2872 = vld [vmem:[#allocation13 + $0x128] sm:$0xff]
        %v2873 = vld [vmem:[#allocation13 + $0x130] sm:$0xff]
        %v2874 = vld [vmem:[#allocation13 + $0x138] sm:$0xff]
        %v2875 = vld [vmem:[#allocation13 + $0x140] sm:$0xff]
        %v2876 = vld [vmem:[#allocation13 + $0x148] sm:$0xff]
        %v2877 = vld [vmem:[#allocation13 + $0x150] sm:$0xff]
        %v2878 = vld [vmem:[#allocation13 + $0x158] sm:$0xff]
        %v2879 = vld [vmem:[#allocation13 + $0x160] sm:$0xff]
        %v2880 = vld [vmem:[#allocation13 + $0x168] sm:$0xff]
        %v2881 = vld [vmem:[#allocation13 + $0x170] sm:$0xff]
        %v2882 = vld [vmem:[#allocation13 + $0x178] sm:$0xff]
        %v2883 = vld [vmem:[#allocation13 + $0x180] sm:$0xff]
        %v2884 = vld [vmem:[#allocation13 + $0x188] sm:$0xff]
        %v2885 = vld [vmem:[#allocation13 + $0x190] sm:$0xff]
        %v2886 = vld [vmem:[#allocation13 + $0x198] sm:$0xff]
        %v2887 = vld [vmem:[#allocation13 + $0x1a0] sm:$0xff]
        %v2888 = vld [vmem:[#allocation13 + $0x1a8] sm:$0xff]
        %v2889 = vld [vmem:[#allocation13 + $0x1b0] sm:$0xff]
        %v2890 = vld [vmem:[#allocation13 + $0x1b8] sm:$0xff]
        %v2891 = vld [vmem:[#allocation13 + $0x1c0] sm:$0xff]
        %v2892 = vld [vmem:[#allocation13 + $0x1c8] sm:$0xff]
        %v2893 = vld [vmem:[#allocation13 + $0x1d0] sm:$0xff]
        %v2894 = vld [vmem:[#allocation13 + $0x1d8] sm:$0xff]
        %v2895 = vld [vmem:[#allocation13 + $0x1e0] sm:$0xff]
        %v2896 = vld [vmem:[#allocation13 + $0x1e8] sm:$0xff]
        %v2897 = vld [vmem:[#allocation13 + $0x1f0] sm:$0xff]
        %v2898 = vld [vmem:[#allocation13 + $0x1f8] sm:$0xff]
        %v2899 = vld [vmem:[#allocation13 + $0x200] sm:$0xff]
        %v2900 = vld [vmem:[#allocation13 + $0x208] sm:$0xff]
        %v2901 = vld [vmem:[#allocation13 + $0x210] sm:$0xff]
        %v2902 = vld [vmem:[#allocation13 + $0x218] sm:$0xff]
        %v2903 = vld [vmem:[#allocation13 + $0x220] sm:$0xff]
        %v2904 = vld [vmem:[#allocation13 + $0x228] sm:$0xff]
        %v2905 = vld [vmem:[#allocation13 + $0x230] sm:$0xff]
        %v2906 = vld [vmem:[#allocation13 + $0x238] sm:$0xff]
        %v2907 = vld [vmem:[#allocation13 + $0x240] sm:$0xff]
        %v2908 = vld [vmem:[#allocation13 + $0x248] sm:$0xff]
        %v2909 = vld [vmem:[#allocation13 + $0x250] sm:$0xff]
        %v2910 = vld [vmem:[#allocation13 + $0x258] sm:$0xff]
        %v2911 = vld [vmem:[#allocation13 + $0x260] sm:$0xff]
        %v2912 = vld [vmem:[#allocation13 + $0x268] sm:$0xff]
        %v2913 = vld [vmem:[#allocation13 + $0x270] sm:$0xff]
        %v2914 = vld [vmem:[#allocation13 + $0x278] sm:$0xff]
        %v2915 = vld [vmem:[#allocation13 + $0x280] sm:$0xff]
        %v2916 = vld [vmem:[#allocation13 + $0x288] sm:$0xff]
        %v2917 = vld [vmem:[#allocation13 + $0x290] sm:$0xff]
        %v2918 = vld [vmem:[#allocation13 + $0x298] sm:$0xff]
        %v2919 = vld [vmem:[#allocation13 + $0x2a0] sm:$0xff]
        %v2920 = vld [vmem:[#allocation13 + $0x2a8] sm:$0xff]
        %v2921 = vld [vmem:[#allocation13 + $0x2b0] sm:$0xff]
        %v2922 = vld [vmem:[#allocation13 + $0x2b8] sm:$0xff]
        %v2923 = vld [vmem:[#allocation13 + $0x2c0] sm:$0xff]
        %v2924 = vld [vmem:[#allocation13 + $0x2c8] sm:$0xff]
        %v2925 = vld [vmem:[#allocation13 + $0x2d0] sm:$0xff]
        %v2926 = vld [vmem:[#allocation13 + $0x2d8] sm:$0xff]
        %v2927 = vld [vmem:[#allocation13 + $0x2e0] sm:$0xff]
        %v2928 = vld [vmem:[#allocation13 + $0x2e8] sm:$0xff]
        %v2929 = vld [vmem:[#allocation13 + $0x2f0] sm:$0xff]
        %v2930 = vld [vmem:[#allocation13 + $0x2f8] sm:$0xff]
        %v2931 = vld [vmem:[#allocation13 + $0x300] sm:$0xff]
        %v2932 = vld [vmem:[#allocation13 + $0x308] sm:$0xff]
        %v2933 = vld [vmem:[#allocation13 + $0x310] sm:$0xff]
        %v2934 = vld [vmem:[#allocation13 + $0x318] sm:$0xff]
        %v2935 = vld [vmem:[#allocation13 + $0x320] sm:$0xff]
        %v2936 = vld [vmem:[#allocation13 + $0x328] sm:$0xff]
        %v2937 = vld [vmem:[#allocation13 + $0x330] sm:$0xff]
        %v2938 = vld [vmem:[#allocation13 + $0x338] sm:$0xff]
        %v2939 = vld [vmem:[#allocation13 + $0x340] sm:$0xff]
        %v2940 = vld [vmem:[#allocation13 + $0x348] sm:$0xff]
        %v2941 = vld [vmem:[#allocation13 + $0x350] sm:$0xff]
        %v2942 = vld [vmem:[#allocation13 + $0x358] sm:$0xff]
        %v2943 = vld [vmem:[#allocation13 + $0x360] sm:$0xff]
        %v2944 = vld [vmem:[#allocation13 + $0x368] sm:$0xff]
        %v2945 = vld [vmem:[#allocation13 + $0x370] sm:$0xff]
        %v2946 = vld [vmem:[#allocation13 + $0x378] sm:$0xff]
        %v2947 = vld [vmem:[#allocation13 + $0x380] sm:$0xff]
        %v2948 = vld [vmem:[#allocation13 + $0x388] sm:$0xff]
        %v2949 = vld [vmem:[#allocation13 + $0x390] sm:$0xff]
        %v2950 = vld [vmem:[#allocation13 + $0x398] sm:$0xff]
        %v2951 = vld [vmem:[#allocation13 + $0x3a0] sm:$0xff]
        %v2952 = vld [vmem:[#allocation13 + $0x3a8] sm:$0xff]
        %v2953 = vld [vmem:[#allocation13 + $0x3b0] sm:$0xff]
        %v2954 = vld [vmem:[#allocation13 + $0x3b8] sm:$0xff]
        %v2955 = vld [vmem:[#allocation13 + $0x3c0] sm:$0xff]
        %v2956 = vld [vmem:[#allocation13 + $0x3c8] sm:$0xff]
        %v2957 = vld [vmem:[#allocation13 + $0x3d0] sm:$0xff]
        %v2958 = vld [vmem:[#allocation13 + $0x3d8] sm:$0xff]
        %v2959 = vld [vmem:[#allocation13 + $0x3e0] sm:$0xff]
        %v2960 = vld [vmem:[#allocation13 + $0x3e8] sm:$0xff]
        %v2961 = vld [vmem:[#allocation13 + $0x3f0] sm:$0xff]
        %v2962 = vld [vmem:[#allocation13 + $0x3f8] sm:$0xff]
        %v2963 = vld [vmem:[#allocation13 + $0x400] sm:$0xff]
        %v2964 = vld [vmem:[#allocation13 + $0x408] sm:$0xff]
        %v2965 = vld [vmem:[#allocation13 + $0x410] sm:$0xff]
        %v2966 = vld [vmem:[#allocation13 + $0x418] sm:$0xff]
        %v2967 = vld [vmem:[#allocation13 + $0x420] sm:$0xff]
        %v2968 = vld [vmem:[#allocation13 + $0x428] sm:$0xff]
        %v2969 = vld [vmem:[#allocation13 + $0x430] sm:$0xff]
        %v2970 = vld [vmem:[#allocation13 + $0x438] sm:$0xff]
        %v2971 = vld [vmem:[#allocation13 + $0x440] sm:$0xff]
        %v2972 = vld [vmem:[#allocation13 + $0x448] sm:$0xff]
        %v2973 = vld [vmem:[#allocation13 + $0x450] sm:$0xff]
        %v2974 = vld [vmem:[#allocation13 + $0x458] sm:$0xff]
        %v2975 = vld [vmem:[#allocation13 + $0x460] sm:$0xff]
        %v2976 = vld [vmem:[#allocation13 + $0x468] sm:$0xff]
        %v2977 = vld [vmem:[#allocation13 + $0x470] sm:$0xff]
        %v2978 = vld [vmem:[#allocation13 + $0x478] sm:$0xff]
        %2979 = vmatprep.subr.mxu0 0.0
        %2980 = vmatpush1.msra.mxu0 %v2835
        %2981 = vmatprep.subr.mxu0 0.0
        %2982 = vmatpush1.msra.mxu0 %v2836
        %2983 = vmatprep.subr.mxu0 0.0
        %2984 = vmatpush1.msra.mxu0 %v2837
        %2985 = vmatprep.subr.mxu0 0.0
        %2986 = vmatpush1.msra.mxu0 %v2838
        %2987 = vmatprep.subr.mxu0 0.0
        %2988 = vmatpush1.msra.mxu0 %v2839
        %2989 = vmatprep.subr.mxu0 0.0
        %2990 = vmatpush1.msra.mxu0 %v2840
        %2991 = vmatprep.subr.mxu0 0.0
        %2992 = vmatpush1.msra.mxu0 %v2841
        %2993 = vmatprep.subr.mxu0 0.0
        %2994 = vmatpush1.msra.mxu0 %v2842
        %2995 = vmatprep.subr.mxu0 0.0
        %2996 = vmatpush1.msra.mxu0 %v2843
        %2997 = vmatprep.subr.mxu0 0.0
        %2998 = vmatpush1.msra.mxu0 %v2844
        %2999 = vmatprep.subr.mxu0 0.0
        %3000 = vmatpush1.msra.mxu0 %v2845
        %3001 = vmatprep.subr.mxu0 0.0
        %3002 = vmatpush1.msra.mxu0 %v2846
        %3003 = vmatprep.subr.mxu0 0.0
        %3004 = vmatpush1.msra.mxu0 %v2847
        %3005 = vmatprep.subr.mxu0 0.0
        %3006 = vmatpush1.msra.mxu0 %v2848
        %3007 = vmatprep.subr.mxu0 0.0
        %3008 = vmatpush1.msra.mxu0 %v2849
        %3009 = vmatprep.subr.mxu0 0.0
        %3010 = vmatpush1.msra.mxu0 %v2850
        %3011 = vmatprep.subr.mxu0 0.0
        %3012 = vmatpush1.msra.mxu0 %v2851
        %3013 = vmatprep.subr.mxu0 0.0
        %3014 = vmatpush1.msra.mxu0 %v2852
        %3015 = vmatprep.subr.mxu0 0.0
        %3016 = vmatpush1.msra.mxu0 %v2853
        %3017 = vmatprep.subr.mxu0 0.0
        %3018 = vmatpush1.msra.mxu0 %v2854
        %3019 = vmatprep.subr.mxu0 0.0
        %3020 = vmatpush1.msra.mxu0 %v2855
        %3021 = vmatprep.subr.mxu0 0.0
        %3022 = vmatpush1.msra.mxu0 %v2856
        %3023 = vmatprep.subr.mxu0 0.0
        %3024 = vmatpush1.msra.mxu0 %v2857
        %3025 = vmatprep.subr.mxu0 0.0
        %3026 = vmatpush1.msra.mxu0 %v2858
        %3027 = vmatprep.subr.mxu0 0.0
        %3028 = vmatpush1.msra.mxu0 %v2859
        %3029 = vmatprep.subr.mxu0 0.0
        %3030 = vmatpush1.msra.mxu0 %v2860
        %3031 = vmatprep.subr.mxu0 0.0
        %3032 = vmatpush1.msra.mxu0 %v2861
        %3033 = vmatprep.subr.mxu0 0.0
        %3034 = vmatpush1.msra.mxu0 %v2862
        %3035 = vmatprep.subr.mxu0 0.0
        %3036 = vmatpush1.msra.mxu0 %v2863
        %3037 = vmatprep.subr.mxu0 0.0
        %3038 = vmatpush1.msra.mxu0 %v2864
        %3039 = vmatprep.subr.mxu0 0.0
        %3040 = vmatpush1.msra.mxu0 %v2865
        %3041 = vmatprep.subr.mxu0 0.0
        %3042 = vmatpush1.msra.mxu0 %v2866
        %3043 = vmatprep.mubr.f32.mxu0 %v2764
        %3044 = vmatmul.mubr.f32.gmra.mrb[0].mxu0 %v2763
        %v3045 = vpop.f32.mrb[0].mxu0
        %v3046 = vadd.f32 0.0, %v3045
        %v3047 = vpop.f32.mrb[0].mxu0
        %3048 = vmatprep.mubr.f32.mxu0 %v2773
        %3049 = vmatmul.mubr.f32.gmra.mrb[0].mxu0 %v2772
        %v3050 = vpop.f32.mrb[0].mxu0
        %v3051 = vadd.f32 0.0, %v3050
        %v3052 = vpop.f32.mrb[0].mxu0
        %3053 = vmatprep.mubr.f32.mxu0 %v2782
        %3054 = vmatmul.mubr.f32.gmra.mrb[0].mxu0 %v2781
        %v3055 = vpop.f32.mrb[0].mxu0
        %v3056 = vadd.f32 0.0, %v3055
        %v3057 = vpop.f32.mrb[0].mxu0
        %3058 = vmatprep.mubr.f32.mxu0 %v2791
        %3059 = vmatmul.mubr.f32.gmra.mrb[0].mxu0 %v2790
        %v3060 = vpop.f32.mrb[0].mxu0
        %v3061 = vadd.f32 0.0, %v3060
        %v3062 = vpop.f32.mrb[0].mxu0
        %3063 = vmatprep.mubr.f32.mxu0 %v2800
        %3064 = vmatmul.mubr.f32.gmra.mrb[0].mxu0 %v2799
        %v3065 = vpop.f32.mrb[0].mxu0
        %v3066 = vadd.f32 0.0, %v3065
        %v3067 = vpop.f32.mrb[0].mxu0
        %3068 = vmatprep.mubr.f32.mxu0 %v2809
        %3069 = vmatmul.mubr.f32.gmra.mrb[0].mxu0 %v2808
        %v3070 = vpop.f32.mrb[0].mxu0
        %v3071 = vadd.f32 0.0, %v3070
        %v3072 = vpop.f32.mrb[0].mxu0
        %3073 = vmatprep.mubr.f32.mxu0 %v2818
        %3074 = vmatmul.mubr.f32.gmra.mrb[0].mxu0 %v2817
        %v3075 = vpop.f32.mrb[0].mxu0
        %v3076 = vadd.f32 0.0, %v3075
        %v3077 = vpop.f32.mrb[0].mxu0
        %3078 = vmatprep.mubr.f32.mxu0 %v2827
        %3079 = vmatmul.mubr.f32.gmra.mrb[0].mxu0 %v2826
        %v3080 = vpop.f32.mrb[0].mxu0
        %v3081 = vadd.f32 0.0, %v3080
        %v3082 = vpop.f32.mrb[0].mxu0
        %3083 = vdwg.mxu0
        %3084 = vmatprep.subr.mxu0 0.0
        %3085 = vmatpush1.msra.mxu0 %v2867
        %3086 = vmatprep.subr.mxu0 0.0
        %3087 = vmatpush1.msra.mxu0 %v2868
        %3088 = vmatprep.subr.mxu0 0.0
        %3089 = vmatpush1.msra.mxu0 %v2869
        %3090 = vmatprep.subr.mxu0 0.0
        %3091 = vmatpush1.msra.mxu0 %v2870
        %3092 = vmatprep.subr.mxu0 0.0
        %3093 = vmatpush1.msra.mxu0 %v2871
        %3094 = vmatprep.subr.mxu0 0.0
        %3095 = vmatpush1.msra.mxu0 %v2872
        %3096 = vmatprep.subr.mxu0 0.0
        %3097 = vmatpush1.msra.mxu0 %v2873
        %3098 = vmatprep.subr.mxu0 0.0
        %3099 = vmatpush1.msra.mxu0 %v2874
        %3100 = vmatprep.subr.mxu0 0.0
        %3101 = vmatpush1.msra.mxu0 %v2875
        %3102 = vmatprep.subr.mxu0 0.0
        %3103 = vmatpush1.msra.mxu0 %v2876
        %3104 = vmatprep.subr.mxu0 0.0
        %3105 = vmatpush1.msra.mxu0 %v2877
        %3106 = vmatprep.subr.mxu0 0.0
        %3107 = vmatpush1.msra.mxu0 %v2878
        %3108 = vmatprep.subr.mxu0 0.0
        %3109 = vmatpush1.msra.mxu0 %v2879
        %3110 = vmatprep.subr.mxu0 0.0
        %3111 = vmatpush1.msra.mxu0 %v2880
        %3112 = vmatprep.subr.mxu0 0.0
        %3113 = vmatpush1.msra.mxu0 %v2881
        %3114 = vmatprep.subr.mxu0 0.0
        %3115 = vmatpush1.msra.mxu0 %v2882
        %3116 = vmatprep.subr.mxu0 0.0
        %3117 = vmatpush1.msra.mxu0 %v2883
        %3118 = vmatprep.subr.mxu0 0.0
        %3119 = vmatpush1.msra.mxu0 %v2884
        %3120 = vmatprep.subr.mxu0 0.0
        %3121 = vmatpush1.msra.mxu0 %v2885
        %3122 = vmatprep.subr.mxu0 0.0
        %3123 = vmatpush1.msra.mxu0 %v2886
        %3124 = vmatprep.subr.mxu0 0.0
        %3125 = vmatpush1.msra.mxu0 %v2887
        %3126 = vmatprep.subr.mxu0 0.0
        %3127 = vmatpush1.msra.mxu0 %v2888
        %3128 = vmatprep.subr.mxu0 0.0
        %3129 = vmatpush1.msra.mxu0 %v2889
        %3130 = vmatprep.subr.mxu0 0.0
        %3131 = vmatpush1.msra.mxu0 %v2890
        %3132 = vmatprep.subr.mxu0 0.0
        %3133 = vmatpush1.msra.mxu0 %v2891
        %3134 = vmatprep.subr.mxu0 0.0
        %3135 = vmatpush1.msra.mxu0 %v2892
        %3136 = vmatprep.subr.mxu0 0.0
        %3137 = vmatpush1.msra.mxu0 %v2893
        %3138 = vmatprep.subr.mxu0 0.0
        %3139 = vmatpush1.msra.mxu0 %v2894
        %3140 = vmatprep.subr.mxu0 0.0
        %3141 = vmatpush1.msra.mxu0 %v2895
        %3142 = vmatprep.subr.mxu0 0.0
        %3143 = vmatpush1.msra.mxu0 %v2896
        %3144 = vmatprep.subr.mxu0 0.0
        %3145 = vmatpush1.msra.mxu0 %v2897
        %3146 = vmatprep.subr.mxu0 0.0
        %3147 = vmatpush1.msra.mxu0 %v2898
        %3148 = vmatprep.mubr.f32.mxu0 %v2766
        %3149 = vmatmul.mubr.f32.gmra.mrb[0].mxu0 %v2765
        %v3150 = vpop.f32.mrb[0].mxu0
        %v3151 = vadd.f32 %v3046, %v3150
        %v3152 = vpop.f32.mrb[0].mxu0
        %3153 = vmatprep.mubr.f32.mxu0 %v2775
        %3154 = vmatmul.mubr.f32.gmra.mrb[0].mxu0 %v2774
        %v3155 = vpop.f32.mrb[0].mxu0
        %v3156 = vadd.f32 %v3051, %v3155
        %v3157 = vpop.f32.mrb[0].mxu0
        %3158 = vmatprep.mubr.f32.mxu0 %v2784
        %3159 = vmatmul.mubr.f32.gmra.mrb[0].mxu0 %v2783
        %v3160 = vpop.f32.mrb[0].mxu0
        %v3161 = vadd.f32 %v3056, %v3160
        %v3162 = vpop.f32.mrb[0].mxu0
        %3163 = vmatprep.mubr.f32.mxu0 %v2793
        %3164 = vmatmul.mubr.f32.gmra.mrb[0].mxu0 %v2792
        %v3165 = vpop.f32.mrb[0].mxu0
        %v3166 = vadd.f32 %v3061, %v3165
        %v3167 = vpop.f32.mrb[0].mxu0
        %3168 = vmatprep.mubr.f32.mxu0 %v2802
        %3169 = vmatmul.mubr.f32.gmra.mrb[0].mxu0 %v2801
        %v3170 = vpop.f32.mrb[0].mxu0
        %v3171 = vadd.f32 %v3066, %v3170
        %v3172 = vpop.f32.mrb[0].mxu0
        %3173 = vmatprep.mubr.f32.mxu0 %v2811
        %3174 = vmatmul.mubr.f32.gmra.mrb[0].mxu0 %v2810
        %v3175 = vpop.f32.mrb[0].mxu0
        %v3176 = vadd.f32 %v3071, %v3175
        %v3177 = vpop.f32.mrb[0].mxu0
        %3178 = vmatprep.mubr.f32.mxu0 %v2820
        %3179 = vmatmul.mubr.f32.gmra.mrb[0].mxu0 %v2819
        %v3180 = vpop.f32.mrb[0].mxu0
        %v3181 = vadd.f32 %v3076, %v3180
        %v3182 = vpop.f32.mrb[0].mxu0
        %3183 = vmatprep.mubr.f32.mxu0 %v2829
        %3184 = vmatmul.mubr.f32.gmra.mrb[0].mxu0 %v2828
        %v3185 = vpop.f32.mrb[0].mxu0
        %v3186 = vadd.f32 %v3081, %v3185
        %v3187 = vpop.f32.mrb[0].mxu0
        %3188 = vdwg.mxu0
        %3189 = vmatprep.subr.mxu0 0.0
        %3190 = vmatpush1.msra.mxu0 %v2899
        %3191 = vmatprep.subr.mxu0 0.0
        %3192 = vmatpush1.msra.mxu0 %v2900
        %3193 = vmatprep.subr.mxu0 0.0
        %3194 = vmatpush1.msra.mxu0 %v2901
        %3195 = vmatprep.subr.mxu0 0.0
        %3196 = vmatpush1.msra.mxu0 %v2902
        %3197 = vmatprep.subr.mxu0 0.0
        %3198 = vmatpush1.msra.mxu0 %v2903
        %3199 = vmatprep.subr.mxu0 0.0
        %3200 = vmatpush1.msra.mxu0 %v2904
        %3201 = vmatprep.subr.mxu0 0.0
        %3202 = vmatpush1.msra.mxu0 %v2905
        %3203 = vmatprep.subr.mxu0 0.0
        %3204 = vmatpush1.msra.mxu0 %v2906
        %3205 = vmatprep.subr.mxu0 0.0
        %3206 = vmatpush1.msra.mxu0 %v2907
        %3207 = vmatprep.subr.mxu0 0.0
        %3208 = vmatpush1.msra.mxu0 %v2908
        %3209 = vmatprep.subr.mxu0 0.0
        %3210 = vmatpush1.msra.mxu0 %v2909
        %3211 = vmatprep.subr.mxu0 0.0
        %3212 = vmatpush1.msra.mxu0 %v2910
        %3213 = vmatprep.subr.mxu0 0.0
        %3214 = vmatpush1.msra.mxu0 %v2911
        %3215 = vmatprep.subr.mxu0 0.0
        %3216 = vmatpush1.msra.mxu0 %v2912
        %3217 = vmatprep.subr.mxu0 0.0
        %3218 = vmatpush1.msra.mxu0 %v2913
        %3219 = vmatprep.subr.mxu0 0.0
        %3220 = vmatpush1.msra.mxu0 %v2914
        %3221 = vmatprep.subr.mxu0 0.0
        %3222 = vmatpush1.msra.mxu0 %v2915
        %3223 = vmatprep.subr.mxu0 0.0
        %3224 = vmatpush1.msra.mxu0 %v2916
        %3225 = vmatprep.subr.mxu0 0.0
        %3226 = vmatpush1.msra.mxu0 %v2917
        %3227 = vmatprep.subr.mxu0 0.0
        %3228 = vmatpush1.msra.mxu0 %v2918
        %3229 = vmatprep.subr.mxu0 0.0
        %3230 = vmatpush1.msra.mxu0 %v2919
        %3231 = vmatprep.subr.mxu0 0.0
        %3232 = vmatpush1.msra.mxu0 %v2920
        %3233 = vmatprep.subr.mxu0 0.0
        %3234 = vmatpush1.msra.mxu0 %v2921
        %3235 = vmatprep.subr.mxu0 0.0
        %3236 = vmatpush1.msra.mxu0 %v2922
        %3237 = vmatprep.subr.mxu0 0.0
        %3238 = vmatpush1.msra.mxu0 %v2923
        %3239 = vmatprep.subr.mxu0 0.0
        %3240 = vmatpush1.msra.mxu0 %v2924
        %3241 = vmatprep.subr.mxu0 0.0
        %3242 = vmatpush1.msra.mxu0 %v2925
        %3243 = vmatprep.subr.mxu0 0.0
        %3244 = vmatpush1.msra.mxu0 %v2926
        %3245 = vmatprep.subr.mxu0 0.0
        %3246 = vmatpush1.msra.mxu0 %v2927
        %3247 = vmatprep.subr.mxu0 0.0
        %3248 = vmatpush1.msra.mxu0 %v2928
        %3249 = vmatprep.subr.mxu0 0.0
        %3250 = vmatpush1.msra.mxu0 %v2929
        %3251 = vmatprep.subr.mxu0 0.0
        %3252 = vmatpush1.msra.mxu0 %v2930
        %3253 = vmatprep.mubr.f32.mxu0 %v2768
        %3254 = vmatmul.mubr.f32.gmra.mrb[0].mxu0 %v2767
        %v3255 = vpop.f32.mrb[0].mxu0
        %v3256 = vadd.f32 %v3151, %v3255
        %v3257 = vpop.f32.mrb[0].mxu0
        %3258 = vmatprep.mubr.f32.mxu0 %v2777
        %3259 = vmatmul.mubr.f32.gmra.mrb[0].mxu0 %v2776
        %v3260 = vpop.f32.mrb[0].mxu0
        %v3261 = vadd.f32 %v3156, %v3260
        %v3262 = vpop.f32.mrb[0].mxu0
        %3263 = vmatprep.mubr.f32.mxu0 %v2786
        %3264 = vmatmul.mubr.f32.gmra.mrb[0].mxu0 %v2785
        %v3265 = vpop.f32.mrb[0].mxu0
        %v3266 = vadd.f32 %v3161, %v3265
        %v3267 = vpop.f32.mrb[0].mxu0
        %3268 = vmatprep.mubr.f32.mxu0 %v2795
        %3269 = vmatmul.mubr.f32.gmra.mrb[0].mxu0 %v2794
        %v3270 = vpop.f32.mrb[0].mxu0
        %v3271 = vadd.f32 %v3166, %v3270
        %v3272 = vpop.f32.mrb[0].mxu0
        %3273 = vmatprep.mubr.f32.mxu0 %v2804
        %3274 = vmatmul.mubr.f32.gmra.mrb[0].mxu0 %v2803
        %v3275 = vpop.f32.mrb[0].mxu0
        %v3276 = vadd.f32 %v3171, %v3275
        %v3277 = vpop.f32.mrb[0].mxu0
        %3278 = vmatprep.mubr.f32.mxu0 %v2813
        %3279 = vmatmul.mubr.f32.gmra.mrb[0].mxu0 %v2812
        %v3280 = vpop.f32.mrb[0].mxu0
        %v3281 = vadd.f32 %v3176, %v3280
        %v3282 = vpop.f32.mrb[0].mxu0
        %3283 = vmatprep.mubr.f32.mxu0 %v2822
        %3284 = vmatmul.mubr.f32.gmra.mrb[0].mxu0 %v2821
        %v3285 = vpop.f32.mrb[0].mxu0
        %v3286 = vadd.f32 %v3181, %v3285
        %v3287 = vpop.f32.mrb[0].mxu0
        %3288 = vmatprep.mubr.f32.mxu0 %v2831
        %3289 = vmatmul.mubr.f32.gmra.mrb[0].mxu0 %v2830
        %v3290 = vpop.f32.mrb[0].mxu0
        %v3291 = vadd.f32 %v3186, %v3290
        %v3292 = vpop.f32.mrb[0].mxu0
        %3293 = vdwg.mxu0
        %3294 = vmatprep.subr.mxu0 0.0
        %3295 = vmatpush1.msra.mxu0 %v2931
        %3296 = vmatprep.subr.mxu0 0.0
        %3297 = vmatpush1.msra.mxu0 %v2932
        %3298 = vmatprep.subr.mxu0 0.0
        %3299 = vmatpush1.msra.mxu0 %v2933
        %3300 = vmatprep.subr.mxu0 0.0
        %3301 = vmatpush1.msra.mxu0 %v2934
        %3302 = vmatprep.subr.mxu0 0.0
        %3303 = vmatpush1.msra.mxu0 %v2935
        %3304 = vmatprep.subr.mxu0 0.0
        %3305 = vmatpush1.msra.mxu0 %v2936
        %3306 = vmatprep.subr.mxu0 0.0
        %3307 = vmatpush1.msra.mxu0 %v2937
        %3308 = vmatprep.subr.mxu0 0.0
        %3309 = vmatpush1.msra.mxu0 %v2938
        %3310 = vmatprep.subr.mxu0 0.0
        %3311 = vmatpush1.msra.mxu0 %v2939
        %3312 = vmatprep.subr.mxu0 0.0
        %3313 = vmatpush1.msra.mxu0 %v2940
        %3314 = vmatprep.subr.mxu0 0.0
        %3315 = vmatpush1.msra.mxu0 %v2941
        %3316 = vmatprep.subr.mxu0 0.0
        %3317 = vmatpush1.msra.mxu0 %v2942
        %3318 = vmatprep.subr.mxu0 0.0
        %3319 = vmatpush1.msra.mxu0 %v2943
        %3320 = vmatprep.subr.mxu0 0.0
        %3321 = vmatpush1.msra.mxu0 %v2944
        %3322 = vmatprep.subr.mxu0 0.0
        %3323 = vmatpush1.msra.mxu0 %v2945
        %3324 = vmatprep.subr.mxu0 0.0
        %3325 = vmatpush1.msra.mxu0 %v2946
        %3326 = vmatprep.subr.mxu0 0.0
        %3327 = vmatpush1.msra.mxu0 %v2947
        %3328 = vmatprep.subr.mxu0 0.0
        %3329 = vmatpush1.msra.mxu0 %v2948
        %3330 = vmatprep.subr.mxu0 0.0
        %3331 = vmatpush1.msra.mxu0 %v2949
        %3332 = vmatprep.subr.mxu0 0.0
        %3333 = vmatpush1.msra.mxu0 %v2950
        %3334 = vmatprep.subr.mxu0 0.0
        %3335 = vmatpush1.msra.mxu0 %v2951
        %3336 = vmatprep.subr.mxu0 0.0
        %3337 = vmatpush1.msra.mxu0 %v2952
        %3338 = vmatprep.subr.mxu0 0.0
        %3339 = vmatpush1.msra.mxu0 %v2953
        %3340 = vmatprep.subr.mxu0 0.0
        %3341 = vmatpush1.msra.mxu0 %v2954
        %3342 = vmatprep.subr.mxu0 0.0
        %3343 = vmatpush1.msra.mxu0 %v2955
        %3344 = vmatprep.subr.mxu0 0.0
        %3345 = vmatpush1.msra.mxu0 %v2956
        %3346 = vmatprep.subr.mxu0 0.0
        %3347 = vmatpush1.msra.mxu0 %v2957
        %3348 = vmatprep.subr.mxu0 0.0
        %3349 = vmatpush1.msra.mxu0 %v2958
        %3350 = vmatprep.subr.mxu0 0.0
        %3351 = vmatpush1.msra.mxu0 %v2959
        %3352 = vmatprep.subr.mxu0 0.0
        %3353 = vmatpush1.msra.mxu0 %v2960
        %3354 = vmatprep.subr.mxu0 0.0
        %3355 = vmatpush1.msra.mxu0 %v2961
        %3356 = vmatprep.subr.mxu0 0.0
        %3357 = vmatpush1.msra.mxu0 %v2962
        %3358 = vmatprep.mubr.f32.mxu0 %v2770
        %3359 = vmatmul.mubr.f32.gmra.mrb[0].mxu0 %v2769
        %v3360 = vpop.f32.mrb[0].mxu0
        %v3361 = vadd.f32 %v3256, %v3360
        %v3362 = vpop.f32.mrb[0].mxu0
        %3363 = vmatprep.mubr.f32.mxu0 %v2779
        %3364 = vmatmul.mubr.f32.gmra.mrb[0].mxu0 %v2778
        %v3365 = vpop.f32.mrb[0].mxu0
        %v3366 = vadd.f32 %v3261, %v3365
        %v3367 = vpop.f32.mrb[0].mxu0
        %3368 = vmatprep.mubr.f32.mxu0 %v2788
        %3369 = vmatmul.mubr.f32.gmra.mrb[0].mxu0 %v2787
        %v3370 = vpop.f32.mrb[0].mxu0
        %v3371 = vadd.f32 %v3266, %v3370
        %v3372 = vpop.f32.mrb[0].mxu0
        %3373 = vmatprep.mubr.f32.mxu0 %v2797
        %3374 = vmatmul.mubr.f32.gmra.mrb[0].mxu0 %v2796
        %v3375 = vpop.f32.mrb[0].mxu0
        %v3376 = vadd.f32 %v3271, %v3375
        %v3377 = vpop.f32.mrb[0].mxu0
        %3378 = vmatprep.mubr.f32.mxu0 %v2806
        %3379 = vmatmul.mubr.f32.gmra.mrb[0].mxu0 %v2805
        %v3380 = vpop.f32.mrb[0].mxu0
        %v3381 = vadd.f32 %v3276, %v3380
        %v3382 = vpop.f32.mrb[0].mxu0
        %3383 = vmatprep.mubr.f32.mxu0 %v2815
        %3384 = vmatmul.mubr.f32.gmra.mrb[0].mxu0 %v2814
        %v3385 = vpop.f32.mrb[0].mxu0
        %v3386 = vadd.f32 %v3281, %v3385
        %v3387 = vpop.f32.mrb[0].mxu0
        %3388 = vmatprep.mubr.f32.mxu0 %v2824
        %3389 = vmatmul.mubr.f32.gmra.mrb[0].mxu0 %v2823
        %v3390 = vpop.f32.mrb[0].mxu0
        %v3391 = vadd.f32 %v3286, %v3390
        %v3392 = vpop.f32.mrb[0].mxu0
        %3393 = vmatprep.mubr.f32.mxu0 %v2833
        %3394 = vmatmul.mubr.f32.gmra.mrb[0].mxu0 %v2832
        %v3395 = vpop.f32.mrb[0].mxu0
        %v3396 = vadd.f32 %v3291, %v3395
        %v3397 = vpop.f32.mrb[0].mxu0
        %3398 = vdwg.mxu0
        %3399 = vmatprep.subr.mxu0 0.0
        %3400 = vmatpush1.msra.mxu0 %v2963
        %3401 = vmatprep.subr.mxu0 0.0
        %3402 = vmatpush1.msra.mxu0 %v2964
        %3403 = vmatprep.subr.mxu0 0.0
        %3404 = vmatpush1.msra.mxu0 %v2965
        %3405 = vmatprep.subr.mxu0 0.0
        %3406 = vmatpush1.msra.mxu0 %v2966
        %3407 = vmatprep.subr.mxu0 0.0
        %3408 = vmatpush1.msra.mxu0 %v2967
        %3409 = vmatprep.subr.mxu0 0.0
        %3410 = vmatpush1.msra.mxu0 %v2968
        %3411 = vmatprep.subr.mxu0 0.0
        %3412 = vmatpush1.msra.mxu0 %v2969
        %3413 = vmatprep.subr.mxu0 0.0
        %3414 = vmatpush1.msra.mxu0 %v2970
        %3415 = vmatprep.subr.mxu0 0.0
        %3416 = vmatpush1.msra.mxu0 %v2971
        %3417 = vmatprep.subr.mxu0 0.0
        %3418 = vmatpush1.msra.mxu0 %v2972
        %3419 = vmatprep.subr.mxu0 0.0
        %3420 = vmatpush1.msra.mxu0 %v2973
        %3421 = vmatprep.subr.mxu0 0.0
        %3422 = vmatpush1.msra.mxu0 %v2974
        %3423 = vmatprep.subr.mxu0 0.0
        %3424 = vmatpush1.msra.mxu0 %v2975
        %3425 = vmatprep.subr.mxu0 0.0
        %3426 = vmatpush1.msra.mxu0 %v2976
        %3427 = vmatprep.subr.mxu0 0.0
        %3428 = vmatpush1.msra.mxu0 %v2977
        %3429 = vmatprep.subr.mxu0 0.0
        %3430 = vmatpush1.msra.mxu0 %v2978
        %3431 = vmatprep.subr.mxu0 0.0
        %3432 = vmatpush1.msra.mxu0 0.0
        %3433 = vmatprep.subr.mxu0 0.0
        %3434 = vmatpush1.msra.mxu0 0.0
        %3435 = vmatprep.subr.mxu0 0.0
        %3436 = vmatpush1.msra.mxu0 0.0
        %3437 = vmatprep.subr.mxu0 0.0
        %3438 = vmatpush1.msra.mxu0 0.0
        %3439 = vmatprep.subr.mxu0 0.0
        %3440 = vmatpush1.msra.mxu0 0.0
        %3441 = vmatprep.subr.mxu0 0.0
        %3442 = vmatpush1.msra.mxu0 0.0
        %3443 = vmatprep.subr.mxu0 0.0
        %3444 = vmatpush1.msra.mxu0 0.0
        %3445 = vmatprep.subr.mxu0 0.0
        %3446 = vmatpush1.msra.mxu0 0.0
        %3447 = vmatprep.subr.mxu0 0.0
        %3448 = vmatpush1.msra.mxu0 0.0
        %3449 = vmatprep.subr.mxu0 0.0
        %3450 = vmatpush1.msra.mxu0 0.0
        %3451 = vmatprep.subr.mxu0 0.0
        %3452 = vmatpush1.msra.mxu0 0.0
        %3453 = vmatprep.subr.mxu0 0.0
        %3454 = vmatpush1.msra.mxu0 0.0
        %3455 = vmatprep.subr.mxu0 0.0
        %3456 = vmatpush1.msra.mxu0 0.0
        %3457 = vmatprep.subr.mxu0 0.0
        %3458 = vmatpush1.msra.mxu0 0.0
        %3459 = vmatprep.subr.mxu0 0.0
        %3460 = vmatpush1.msra.mxu0 0.0
        %3461 = vmatprep.subr.mxu0 0.0
        %3462 = vmatpush1.msra.mxu0 0.0
        %3463 = vmatprep.mubr.f32.mxu0 0.0
        %3464 = vmatmul.mubr.f32.gmra.mrb[0].mxu0 %v2771
        %v3465 = vpop.f32.mrb[0].mxu0
        %v3466 = vadd.f32 %v3361, %v3465
        %v3467 = vpop.f32.mrb[0].mxu0
        %3468 = vmatprep.mubr.f32.mxu0 0.0
        %3469 = vmatmul.mubr.f32.gmra.mrb[0].mxu0 %v2780
        %v3470 = vpop.f32.mrb[0].mxu0
        %v3471 = vadd.f32 %v3366, %v3470
        %v3472 = vpop.f32.mrb[0].mxu0
        %3473 = vmatprep.mubr.f32.mxu0 0.0
        %3474 = vmatmul.mubr.f32.gmra.mrb[0].mxu0 %v2789
        %v3475 = vpop.f32.mrb[0].mxu0
        %v3476 = vadd.f32 %v3371, %v3475
        %v3477 = vpop.f32.mrb[0].mxu0
        %3478 = vmatprep.mubr.f32.mxu0 0.0
        %3479 = vmatmul.mubr.f32.gmra.mrb[0].mxu0 %v2798
        %v3480 = vpop.f32.mrb[0].mxu0
        %v3481 = vadd.f32 %v3376, %v3480
        %v3482 = vpop.f32.mrb[0].mxu0
        %3483 = vmatprep.mubr.f32.mxu0 0.0
        %3484 = vmatmul.mubr.f32.gmra.mrb[0].mxu0 %v2807
        %v3485 = vpop.f32.mrb[0].mxu0
        %v3486 = vadd.f32 %v3381, %v3485
        %v3487 = vpop.f32.mrb[0].mxu0
        %3488 = vmatprep.mubr.f32.mxu0 0.0
        %3489 = vmatmul.mubr.f32.gmra.mrb[0].mxu0 %v2816
        %v3490 = vpop.f32.mrb[0].mxu0
        %v3491 = vadd.f32 %v3386, %v3490
        %v3492 = vpop.f32.mrb[0].mxu0
        %3493 = vmatprep.mubr.f32.mxu0 0.0
        %3494 = vmatmul.mubr.f32.gmra.mrb[0].mxu0 %v2825
        %v3495 = vpop.f32.mrb[0].mxu0
        %v3496 = vadd.f32 %v3391, %v3495
        %v3497 = vpop.f32.mrb[0].mxu0
        %3498 = vmatprep.mubr.f32.mxu0 0.0
        %3499 = vmatmul.mubr.f32.gmra.mrb[0].mxu0 %v2834
        %v3500 = vpop.f32.mrb[0].mxu0
        %v3501 = vadd.f32 %v3396, %v3500
        %v3502 = vpop.f32.mrb[0].mxu0
        %3503 = vdwg.mxu0
        %v3504 = vmax.f32 %v3466, 0.0
        %v3505 = vmax.f32 %v3471, 0.0
        %v3506 = vmax.f32 %v3476, 0.0
        %v3507 = vmax.f32 %v3481, 0.0
        %v3508 = vmax.f32 %v3486, 0.0
        %v3509 = vmax.f32 %v3491, 0.0
        %v3510 = vmax.f32 %v3496, 0.0
        %v3511 = vmax.f32 %v3501, 0.0
        %v3512 = vld [vmem:[#allocation14] sm:$0xff]
        %v3513 = vld [vmem:[#allocation14 + $0x8] sm:$0xff]
        %v3514 = vld [vmem:[#allocation14 + $0x10] sm:$0xff]
        %v3515 = vld [vmem:[#allocation14 + $0x18] sm:$0xff]
        %v3516 = vld [vmem:[#allocation14 + $0x20] sm:$0xff]
        %v3517 = vld [vmem:[#allocation14 + $0x28] sm:$0xff]
        %v3518 = vld [vmem:[#allocation14 + $0x30] sm:$0xff]
        %v3519 = vld [vmem:[#allocation14 + $0x38] sm:$0xff]
        %v3520 = vld [vmem:[#allocation14 + $0x40] sm:$0xff]
        %v3521 = vld [vmem:[#allocation14 + $0x48] sm:$0xff]
        %v3522 = vld [vmem:[#allocation14 + $0x50] sm:$0xff]
        %v3523 = vld [vmem:[#allocation14 + $0x58] sm:$0xff]
        %v3524 = vld [vmem:[#allocation14 + $0x60] sm:$0xff]
        %v3525 = vld [vmem:[#allocation14 + $0x68] sm:$0xff]
        %v3526 = vld [vmem:[#allocation14 + $0x70] sm:$0xff]
        %v3527 = vld [vmem:[#allocation14 + $0x78] sm:$0xff]
        %3528 = vmatprep.subr.mxu0 0.0
        %3529 = vmatpush1.msra.mxu0 %v3512
        %3530 = vmatprep.subr.mxu0 0.0
        %3531 = vmatpush1.msra.mxu0 %v3513
        %3532 = vmatprep.subr.mxu0 0.0
        %3533 = vmatpush1.msra.mxu0 %v3514
        %3534 = vmatprep.subr.mxu0 0.0
        %3535 = vmatpush1.msra.mxu0 %v3515
        %3536 = vmatprep.subr.mxu0 0.0
        %3537 = vmatpush1.msra.mxu0 %v3516
        %3538 = vmatprep.subr.mxu0 0.0
        %3539 = vmatpush1.msra.mxu0 %v3517
        %3540 = vmatprep.subr.mxu0 0.0
        %3541 = vmatpush1.msra.mxu0 %v3518
        %3542 = vmatprep.subr.mxu0 0.0
        %3543 = vmatpush1.msra.mxu0 %v3519
        %3544 = vmatprep.subr.mxu0 0.0
        %3545 = vmatpush1.msra.mxu0 %v3520
        %3546 = vmatprep.subr.mxu0 0.0
        %3547 = vmatpush1.msra.mxu0 %v3521
        %3548 = vmatprep.subr.mxu0 0.0
        %3549 = vmatpush1.msra.mxu0 %v3522
        %3550 = vmatprep.subr.mxu0 0.0
        %3551 = vmatpush1.msra.mxu0 %v3523
        %3552 = vmatprep.subr.mxu0 0.0
        %3553 = vmatpush1.msra.mxu0 %v3524
        %3554 = vmatprep.subr.mxu0 0.0
        %3555 = vmatpush1.msra.mxu0 %v3525
        %3556 = vmatprep.subr.mxu0 0.0
        %3557 = vmatpush1.msra.mxu0 %v3526
        %3558 = vmatprep.subr.mxu0 0.0
        %3559 = vmatpush1.msra.mxu0 %v3527
        %3560 = vmatprep.subr.mxu0 0.0
        %3561 = vmatpush1.msra.mxu0 0.0
        %3562 = vmatprep.subr.mxu0 0.0
        %3563 = vmatpush1.msra.mxu0 0.0
        %3564 = vmatprep.subr.mxu0 0.0
        %3565 = vmatpush1.msra.mxu0 0.0
        %3566 = vmatprep.subr.mxu0 0.0
        %3567 = vmatpush1.msra.mxu0 0.0
        %3568 = vmatprep.subr.mxu0 0.0
        %3569 = vmatpush1.msra.mxu0 0.0
        %3570 = vmatprep.subr.mxu0 0.0
        %3571 = vmatpush1.msra.mxu0 0.0
        %3572 = vmatprep.subr.mxu0 0.0
        %3573 = vmatpush1.msra.mxu0 0.0
        %3574 = vmatprep.subr.mxu0 0.0
        %3575 = vmatpush1.msra.mxu0 0.0
        %3576 = vmatprep.subr.mxu0 0.0
        %3577 = vmatpush1.msra.mxu0 0.0
        %3578 = vmatprep.subr.mxu0 0.0
        %3579 = vmatpush1.msra.mxu0 0.0
        %3580 = vmatprep.subr.mxu0 0.0
        %3581 = vmatpush1.msra.mxu0 0.0
        %3582 = vmatprep.subr.mxu0 0.0
        %3583 = vmatpush1.msra.mxu0 0.0
        %3584 = vmatprep.subr.mxu0 0.0
        %3585 = vmatpush1.msra.mxu0 0.0
        %3586 = vmatprep.subr.mxu0 0.0
        %3587 = vmatpush1.msra.mxu0 0.0
        %3588 = vmatprep.subr.mxu0 0.0
        %3589 = vmatpush1.msra.mxu0 0.0
        %3590 = vmatprep.subr.mxu0 0.0
        %3591 = vmatpush1.msra.mxu0 0.0
        %3592 = vmatprep.mubr.f32.mxu0 0.0
        %3593 = vmatmul.mubr.f32.gmra.mrb[0].mxu0 %v3504
        %v3594 = vpop.f32.mrb[0].mxu0
        %v3595 = vadd.f32 0.0, %v3594
        %v3596 = vpop.f32.mrb[0].mxu0
        %3597 = vmatprep.mubr.f32.mxu0 0.0
        %3598 = vmatmul.mubr.f32.gmra.mrb[0].mxu0 %v3505
        %v3599 = vpop.f32.mrb[0].mxu0
        %v3600 = vadd.f32 0.0, %v3599
        %v3601 = vpop.f32.mrb[0].mxu0
        %3602 = vmatprep.mubr.f32.mxu0 0.0
        %3603 = vmatmul.mubr.f32.gmra.mrb[0].mxu0 %v3506
        %v3604 = vpop.f32.mrb[0].mxu0
        %v3605 = vadd.f32 0.0, %v3604
        %v3606 = vpop.f32.mrb[0].mxu0
        %3607 = vmatprep.mubr.f32.mxu0 0.0
        %3608 = vmatmul.mubr.f32.gmra.mrb[0].mxu0 %v3507
        %v3609 = vpop.f32.mrb[0].mxu0
        %v3610 = vadd.f32 0.0, %v3609
        %v3611 = vpop.f32.mrb[0].mxu0
        %3612 = vmatprep.mubr.f32.mxu0 0.0
        %3613 = vmatmul.mubr.f32.gmra.mrb[0].mxu0 %v3508
        %v3614 = vpop.f32.mrb[0].mxu0
        %v3615 = vadd.f32 0.0, %v3614
        %v3616 = vpop.f32.mrb[0].mxu0
        %3617 = vmatprep.mubr.f32.mxu0 0.0
        %3618 = vmatmul.mubr.f32.gmra.mrb[0].mxu0 %v3509
        %v3619 = vpop.f32.mrb[0].mxu0
        %v3620 = vadd.f32 0.0, %v3619
        %v3621 = vpop.f32.mrb[0].mxu0
        %3622 = vmatprep.mubr.f32.mxu0 0.0
        %3623 = vmatmul.mubr.f32.gmra.mrb[0].mxu0 %v3510
        %v3624 = vpop.f32.mrb[0].mxu0
        %v3625 = vadd.f32 0.0, %v3624
        %v3626 = vpop.f32.mrb[0].mxu0
        %3627 = vmatprep.mubr.f32.mxu0 0.0
        %3628 = vmatmul.mubr.f32.gmra.mrb[0].mxu0 %v3511
        %v3629 = vpop.f32.mrb[0].mxu0
        %v3630 = vadd.f32 0.0, %v3629
        %v3631 = vpop.f32.mrb[0].mxu0
        %3632 = vdwg.mxu0
        %v3633 = vadd.f32 %v2595, %v3595
        %v3634 = vadd.f32 %v2596, %v3600
        %v3635 = vadd.f32 %v2597, %v3605
        %v3636 = vadd.f32 %v2598, %v3610
        %v3637 = vadd.f32 %v2599, %v3615
        %v3638 = vadd.f32 %v2600, %v3620
        %v3639 = vadd.f32 %v2601, %v3625
        %v3640 = vadd.f32 %v2602, %v3630
        %v3641 = vmax.f32 %v3633, 0.0
        %v3642 = vmax.f32 %v3634, 0.0
        %v3643 = vmax.f32 %v3635, 0.0
        %v3644 = vmax.f32 %v3636, 0.0
        %v3645 = vmax.f32 %v3637, 0.0
        %v3646 = vmax.f32 %v3638, 0.0
        %v3647 = vmax.f32 %v3639, 0.0
        %v3648 = vmax.f32 %v3640, 0.0
        %3649 = vst [vmem:[%s663 + $0x1] sm:$0xff] %v3641
        %3650 = vst [vmem:[%s663 + $0x11] sm:$0xff] %v3642
        %3651 = vst [vmem:[%s663 + $0x21] sm:$0xff] %v3643
        %3652 = vst [vmem:[%s663 + $0x31] sm:$0xff] %v3644
        %3653 = vst [vmem:[%s663 + $0x41] sm:$0xff] %v3645
        %3654 = vst [vmem:[%s663 + $0x51] sm:$0xff] %v3646
        %3655 = vst [vmem:[%s663 + $0x61] sm:$0xff] %v3647
        %3656 = vst [vmem:[%s663 + $0x71] sm:$0xff] %v3648
        %v3657 = vld [vmem:[#allocation2] sm:$0xff]
        %v3658 = vld [vmem:[#allocation2 + $0x10] sm:$0xff]
        %v3659 = vld [vmem:[#allocation2 + $0x20] sm:$0xff]
        %v3660 = vld [vmem:[#allocation2 + $0x30] sm:$0xff]
        %v3661 = vld [vmem:[#allocation2 + $0x40] sm:$0xff]
        %v3662 = vld [vmem:[#allocation2 + $0x50] sm:$0xff]
        %v3663 = vld [vmem:[#allocation2 + $0x60] sm:$0xff]
        %v3664 = vld [vmem:[#allocation2 + $0x70] sm:$0xff]
        %3665 = vst [vmem:[#allocation4] sm:$0xff] %v3657
        %3666 = vst [vmem:[#allocation4 + $0x48] sm:$0xff] %v3658
        %3667 = vst [vmem:[#allocation4 + $0x90] sm:$0xff] %v3659
        %3668 = vst [vmem:[#allocation4 + $0xd8] sm:$0xff] %v3660
        %3669 = vst [vmem:[#allocation4 + $0x120] sm:$0xff] %v3661
        %3670 = vst [vmem:[#allocation4 + $0x168] sm:$0xff] %v3662
        %3671 = vst [vmem:[#allocation4 + $0x1b0] sm:$0xff] %v3663
        %3672 = vst [vmem:[#allocation4 + $0x1f8] sm:$0xff] %v3664
        %v3673 = vld [vmem:[#allocation2 + $0x1] sm:$0xff]
        %v3674 = vld [vmem:[#allocation2 + $0x11] sm:$0xff]
        %v3675 = vld [vmem:[#allocation2 + $0x21] sm:$0xff]
        %v3676 = vld [vmem:[#allocation2 + $0x31] sm:$0xff]
        %v3677 = vld [vmem:[#allocation2 + $0x41] sm:$0xff]
        %v3678 = vld [vmem:[#allocation2 + $0x51] sm:$0xff]
        %v3679 = vld [vmem:[#allocation2 + $0x61] sm:$0xff]
        %v3680 = vld [vmem:[#allocation2 + $0x71] sm:$0xff]
        %3681 = vst [vmem:[#allocation4 + $0x8] sm:$0xff] %v3673
        %3682 = vst [vmem:[#allocation4 + $0x50] sm:$0xff] %v3674
        %3683 = vst [vmem:[#allocation4 + $0x98] sm:$0xff] %v3675
        %3684 = vst [vmem:[#allocation4 + $0xe0] sm:$0xff] %v3676
        %3685 = vst [vmem:[#allocation4 + $0x128] sm:$0xff] %v3677
        %3686 = vst [vmem:[#allocation4 + $0x170] sm:$0xff] %v3678
        %3687 = vst [vmem:[#allocation4 + $0x1b8] sm:$0xff] %v3679
        %3688 = vst [vmem:[#allocation4 + $0x200] sm:$0xff] %v3680
        %v3689 = vld [vmem:[#allocation2 + $0x2] sm:$0xff]
        %v3690 = vld [vmem:[#allocation2 + $0x12] sm:$0xff]
        %v3691 = vld [vmem:[#allocation2 + $0x22] sm:$0xff]
        %v3692 = vld [vmem:[#allocation2 + $0x32] sm:$0xff]
        %v3693 = vld [vmem:[#allocation2 + $0x42] sm:$0xff]
        %v3694 = vld [vmem:[#allocation2 + $0x52] sm:$0xff]
        %v3695 = vld [vmem:[#allocation2 + $0x62] sm:$0xff]
        %v3696 = vld [vmem:[#allocation2 + $0x72] sm:$0xff]
        %3697 = vst [vmem:[#allocation4 + $0x10] sm:$0xff] %v3689
        %3698 = vst [vmem:[#allocation4 + $0x58] sm:$0xff] %v3690
        %3699 = vst [vmem:[#allocation4 + $0xa0] sm:$0xff] %v3691
        %3700 = vst [vmem:[#allocation4 + $0xe8] sm:$0xff] %v3692
        %3701 = vst [vmem:[#allocation4 + $0x130] sm:$0xff] %v3693
        %3702 = vst [vmem:[#allocation4 + $0x178] sm:$0xff] %v3694
        %3703 = vst [vmem:[#allocation4 + $0x1c0] sm:$0xff] %v3695
        %3704 = vst [vmem:[#allocation4 + $0x208] sm:$0xff] %v3696
        %v3705 = vld [vmem:[%s663] sm:$0xff]
        %v3706 = vld [vmem:[%s663 + $0x10] sm:$0xff]
        %v3707 = vld [vmem:[%s663 + $0x20] sm:$0xff]
        %v3708 = vld [vmem:[%s663 + $0x30] sm:$0xff]
        %v3709 = vld [vmem:[%s663 + $0x40] sm:$0xff]
        %v3710 = vld [vmem:[%s663 + $0x50] sm:$0xff]
        %v3711 = vld [vmem:[%s663 + $0x60] sm:$0xff]
        %v3712 = vld [vmem:[%s663 + $0x70] sm:$0xff]
        %3713 = vst [vmem:[#allocation4 + $0x18] sm:$0xff] %v3705
        %3714 = vst [vmem:[#allocation4 + $0x60] sm:$0xff] %v3706
        %3715 = vst [vmem:[#allocation4 + $0xa8] sm:$0xff] %v3707
        %3716 = vst [vmem:[#allocation4 + $0xf0] sm:$0xff] %v3708
        %3717 = vst [vmem:[#allocation4 + $0x138] sm:$0xff] %v3709
        %3718 = vst [vmem:[#allocation4 + $0x180] sm:$0xff] %v3710
        %3719 = vst [vmem:[#allocation4 + $0x1c8] sm:$0xff] %v3711
        %3720 = vst [vmem:[#allocation4 + $0x210] sm:$0xff] %v3712
        %v3721 = vld [vmem:[%s663 + $0x1] sm:$0xff]
        %v3722 = vld [vmem:[%s663 + $0x11] sm:$0xff]
        %v3723 = vld [vmem:[%s663 + $0x21] sm:$0xff]
        %v3724 = vld [vmem:[%s663 + $0x31] sm:$0xff]
        %v3725 = vld [vmem:[%s663 + $0x41] sm:$0xff]
        %v3726 = vld [vmem:[%s663 + $0x51] sm:$0xff]
        %v3727 = vld [vmem:[%s663 + $0x61] sm:$0xff]
        %v3728 = vld [vmem:[%s663 + $0x71] sm:$0xff]
        %3729 = vst [vmem:[#allocation4 + $0x20] sm:$0xff] %v3721
        %3730 = vst [vmem:[#allocation4 + $0x68] sm:$0xff] %v3722
        %3731 = vst [vmem:[#allocation4 + $0xb0] sm:$0xff] %v3723
        %3732 = vst [vmem:[#allocation4 + $0xf8] sm:$0xff] %v3724
        %3733 = vst [vmem:[#allocation4 + $0x140] sm:$0xff] %v3725
        %3734 = vst [vmem:[#allocation4 + $0x188] sm:$0xff] %v3726
        %3735 = vst [vmem:[#allocation4 + $0x1d0] sm:$0xff] %v3727
        %3736 = vst [vmem:[#allocation4 + $0x218] sm:$0xff] %v3728
        %v3737 = vld [vmem:[%s663 + $0x2] sm:$0xff]
        %v3738 = vld [vmem:[%s663 + $0x12] sm:$0xff]
        %v3739 = vld [vmem:[%s663 + $0x22] sm:$0xff]
        %v3740 = vld [vmem:[%s663 + $0x32] sm:$0xff]
        %v3741 = vld [vmem:[%s663 + $0x42] sm:$0xff]
        %v3742 = vld [vmem:[%s663 + $0x52] sm:$0xff]
        %v3743 = vld [vmem:[%s663 + $0x62] sm:$0xff]
        %v3744 = vld [vmem:[%s663 + $0x72] sm:$0xff]
        %3745 = vst [vmem:[#allocation4 + $0x28] sm:$0xff] %v3737
        %3746 = vst [vmem:[#allocation4 + $0x70] sm:$0xff] %v3738
        %3747 = vst [vmem:[#allocation4 + $0xb8] sm:$0xff] %v3739
        %3748 = vst [vmem:[#allocation4 + $0x100] sm:$0xff] %v3740
        %3749 = vst [vmem:[#allocation4 + $0x148] sm:$0xff] %v3741
        %3750 = vst [vmem:[#allocation4 + $0x190] sm:$0xff] %v3742
        %3751 = vst [vmem:[#allocation4 + $0x1d8] sm:$0xff] %v3743
        %3752 = vst [vmem:[#allocation4 + $0x220] sm:$0xff] %v3744
        %v3753 = vld [vmem:[%s768] sm:$0xff]
        %v3754 = vld [vmem:[%s768 + $0x10] sm:$0xff]
        %v3755 = vld [vmem:[%s768 + $0x20] sm:$0xff]
        %v3756 = vld [vmem:[%s768 + $0x30] sm:$0xff]
        %v3757 = vld [vmem:[%s768 + $0x40] sm:$0xff]
        %v3758 = vld [vmem:[%s768 + $0x50] sm:$0xff]
        %v3759 = vld [vmem:[%s768 + $0x60] sm:$0xff]
        %v3760 = vld [vmem:[%s768 + $0x70] sm:$0xff]
        %3761 = vst [vmem:[#allocation4 + $0x30] sm:$0xff] %v3753
        %3762 = vst [vmem:[#allocation4 + $0x78] sm:$0xff] %v3754
        %3763 = vst [vmem:[#allocation4 + $0xc0] sm:$0xff] %v3755
        %3764 = vst [vmem:[#allocation4 + $0x108] sm:$0xff] %v3756
        %3765 = vst [vmem:[#allocation4 + $0x150] sm:$0xff] %v3757
        %3766 = vst [vmem:[#allocation4 + $0x198] sm:$0xff] %v3758
        %3767 = vst [vmem:[#allocation4 + $0x1e0] sm:$0xff] %v3759
        %3768 = vst [vmem:[#allocation4 + $0x228] sm:$0xff] %v3760
        %v3769 = vld [vmem:[%s768 + $0x1] sm:$0xff]
        %v3770 = vld [vmem:[%s768 + $0x11] sm:$0xff]
        %v3771 = vld [vmem:[%s768 + $0x21] sm:$0xff]
        %v3772 = vld [vmem:[%s768 + $0x31] sm:$0xff]
        %v3773 = vld [vmem:[%s768 + $0x41] sm:$0xff]
        %v3774 = vld [vmem:[%s768 + $0x51] sm:$0xff]
        %v3775 = vld [vmem:[%s768 + $0x61] sm:$0xff]
        %v3776 = vld [vmem:[%s768 + $0x71] sm:$0xff]
        %3777 = vst [vmem:[#allocation4 + $0x38] sm:$0xff] %v3769
        %3778 = vst [vmem:[#allocation4 + $0x80] sm:$0xff] %v3770
        %3779 = vst [vmem:[#allocation4 + $0xc8] sm:$0xff] %v3771
        %3780 = vst [vmem:[#allocation4 + $0x110] sm:$0xff] %v3772
        %3781 = vst [vmem:[#allocation4 + $0x158] sm:$0xff] %v3773
        %3782 = vst [vmem:[#allocation4 + $0x1a0] sm:$0xff] %v3774
        %3783 = vst [vmem:[#allocation4 + $0x1e8] sm:$0xff] %v3775
        %3784 = vst [vmem:[#allocation4 + $0x230] sm:$0xff] %v3776
        %v3785 = vld [vmem:[%s768 + $0x2] sm:$0xff]
        %v3786 = vld [vmem:[%s768 + $0x12] sm:$0xff]
        %v3787 = vld [vmem:[%s768 + $0x22] sm:$0xff]
        %v3788 = vld [vmem:[%s768 + $0x32] sm:$0xff]
        %v3789 = vld [vmem:[%s768 + $0x42] sm:$0xff]
        %v3790 = vld [vmem:[%s768 + $0x52] sm:$0xff]
        %v3791 = vld [vmem:[%s768 + $0x62] sm:$0xff]
        %v3792 = vld [vmem:[%s768 + $0x72] sm:$0xff]
        %3793 = vst [vmem:[#allocation4 + $0x40] sm:$0xff] %v3785
        %3794 = vst [vmem:[#allocation4 + $0x88] sm:$0xff] %v3786
        %3795 = vst [vmem:[#allocation4 + $0xd0] sm:$0xff] %v3787
        %3796 = vst [vmem:[#allocation4 + $0x118] sm:$0xff] %v3788
        %3797 = vst [vmem:[#allocation4 + $0x160] sm:$0xff] %v3789
        %3798 = vst [vmem:[#allocation4 + $0x1a8] sm:$0xff] %v3790
        %3799 = vst [vmem:[#allocation4 + $0x1f0] sm:$0xff] %v3791
        %3800 = vst [vmem:[#allocation4 + $0x238] sm:$0xff] %v3792
        %v3801 = vld [vmem:[#allocation4] sm:$0xff]
        %v3802 = vld [vmem:[#allocation4 + $0x8] sm:$0xff]
        %v3803 = vld [vmem:[#allocation4 + $0x10] sm:$0xff]
        %v3804 = vld [vmem:[#allocation4 + $0x18] sm:$0xff]
        %v3805 = vld [vmem:[#allocation4 + $0x20] sm:$0xff]
        %v3806 = vld [vmem:[#allocation4 + $0x28] sm:$0xff]
        %v3807 = vld [vmem:[#allocation4 + $0x30] sm:$0xff]
        %v3808 = vld [vmem:[#allocation4 + $0x38] sm:$0xff]
        %v3809 = vld [vmem:[#allocation4 + $0x40] sm:$0xff]
        %v3810 = vld [vmem:[#allocation4 + $0x48] sm:$0xff]
        %v3811 = vld [vmem:[#allocation4 + $0x50] sm:$0xff]
        %v3812 = vld [vmem:[#allocation4 + $0x58] sm:$0xff]
        %v3813 = vld [vmem:[#allocation4 + $0x60] sm:$0xff]
        %v3814 = vld [vmem:[#allocation4 + $0x68] sm:$0xff]
        %v3815 = vld [vmem:[#allocation4 + $0x70] sm:$0xff]
        %v3816 = vld [vmem:[#allocation4 + $0x78] sm:$0xff]
        %v3817 = vld [vmem:[#allocation4 + $0x80] sm:$0xff]
        %v3818 = vld [vmem:[#allocation4 + $0x88] sm:$0xff]
        %v3819 = vld [vmem:[#allocation4 + $0x90] sm:$0xff]
        %v3820 = vld [vmem:[#allocation4 + $0x98] sm:$0xff]
        %v3821 = vld [vmem:[#allocation4 + $0xa0] sm:$0xff]
        %v3822 = vld [vmem:[#allocation4 + $0xa8] sm:$0xff]
        %v3823 = vld [vmem:[#allocation4 + $0xb0] sm:$0xff]
        %v3824 = vld [vmem:[#allocation4 + $0xb8] sm:$0xff]
        %v3825 = vld [vmem:[#allocation4 + $0xc0] sm:$0xff]
        %v3826 = vld [vmem:[#allocation4 + $0xc8] sm:$0xff]
        %v3827 = vld [vmem:[#allocation4 + $0xd0] sm:$0xff]
        %v3828 = vld [vmem:[#allocation4 + $0xd8] sm:$0xff]
        %v3829 = vld [vmem:[#allocation4 + $0xe0] sm:$0xff]
        %v3830 = vld [vmem:[#allocation4 + $0xe8] sm:$0xff]
        %v3831 = vld [vmem:[#allocation4 + $0xf0] sm:$0xff]
        %v3832 = vld [vmem:[#allocation4 + $0xf8] sm:$0xff]
        %v3833 = vld [vmem:[#allocation4 + $0x100] sm:$0xff]
        %v3834 = vld [vmem:[#allocation4 + $0x108] sm:$0xff]
        %v3835 = vld [vmem:[#allocation4 + $0x110] sm:$0xff]
        %v3836 = vld [vmem:[#allocation4 + $0x118] sm:$0xff]
        %v3837 = vld [vmem:[#allocation4 + $0x120] sm:$0xff]
        %v3838 = vld [vmem:[#allocation4 + $0x128] sm:$0xff]
        %v3839 = vld [vmem:[#allocation4 + $0x130] sm:$0xff]
        %v3840 = vld [vmem:[#allocation4 + $0x138] sm:$0xff]
        %v3841 = vld [vmem:[#allocation4 + $0x140] sm:$0xff]
        %v3842 = vld [vmem:[#allocation4 + $0x148] sm:$0xff]
        %v3843 = vld [vmem:[#allocation4 + $0x150] sm:$0xff]
        %v3844 = vld [vmem:[#allocation4 + $0x158] sm:$0xff]
        %v3845 = vld [vmem:[#allocation4 + $0x160] sm:$0xff]
        %v3846 = vld [vmem:[#allocation4 + $0x168] sm:$0xff]
        %v3847 = vld [vmem:[#allocation4 + $0x170] sm:$0xff]
        %v3848 = vld [vmem:[#allocation4 + $0x178] sm:$0xff]
        %v3849 = vld [vmem:[#allocation4 + $0x180] sm:$0xff]
        %v3850 = vld [vmem:[#allocation4 + $0x188] sm:$0xff]
        %v3851 = vld [vmem:[#allocation4 + $0x190] sm:$0xff]
        %v3852 = vld [vmem:[#allocation4 + $0x198] sm:$0xff]
        %v3853 = vld [vmem:[#allocation4 + $0x1a0] sm:$0xff]
        %v3854 = vld [vmem:[#allocation4 + $0x1a8] sm:$0xff]
        %v3855 = vld [vmem:[#allocation4 + $0x1b0] sm:$0xff]
        %v3856 = vld [vmem:[#allocation4 + $0x1b8] sm:$0xff]
        %v3857 = vld [vmem:[#allocation4 + $0x1c0] sm:$0xff]
        %v3858 = vld [vmem:[#allocation4 + $0x1c8] sm:$0xff]
        %v3859 = vld [vmem:[#allocation4 + $0x1d0] sm:$0xff]
        %v3860 = vld [vmem:[#allocation4 + $0x1d8] sm:$0xff]
        %v3861 = vld [vmem:[#allocation4 + $0x1e0] sm:$0xff]
        %v3862 = vld [vmem:[#allocation4 + $0x1e8] sm:$0xff]
        %v3863 = vld [vmem:[#allocation4 + $0x1f0] sm:$0xff]
        %v3864 = vld [vmem:[#allocation4 + $0x1f8] sm:$0xff]
        %v3865 = vld [vmem:[#allocation4 + $0x200] sm:$0xff]
        %v3866 = vld [vmem:[#allocation4 + $0x208] sm:$0xff]
        %v3867 = vld [vmem:[#allocation4 + $0x210] sm:$0xff]
        %v3868 = vld [vmem:[#allocation4 + $0x218] sm:$0xff]
        %v3869 = vld [vmem:[#allocation4 + $0x220] sm:$0xff]
        %v3870 = vld [vmem:[#allocation4 + $0x228] sm:$0xff]
        %v3871 = vld [vmem:[#allocation4 + $0x230] sm:$0xff]
        %v3872 = vld [vmem:[#allocation4 + $0x238] sm:$0xff]
        %v3873 = vld [vmem:[#allocation16] sm:$0xff]
        %v3874 = vld [vmem:[#allocation16 + $0x8] sm:$0xff]
        %v3875 = vld [vmem:[#allocation16 + $0x10] sm:$0xff]
        %v3876 = vld [vmem:[#allocation16 + $0x18] sm:$0xff]
        %v3877 = vld [vmem:[#allocation16 + $0x20] sm:$0xff]
        %v3878 = vld [vmem:[#allocation16 + $0x28] sm:$0xff]
        %v3879 = vld [vmem:[#allocation16 + $0x30] sm:$0xff]
        %v3880 = vld [vmem:[#allocation16 + $0x38] sm:$0xff]
        %v3881 = vld [vmem:[#allocation16 + $0x40] sm:$0xff]
        %v3882 = vld [vmem:[#allocation16 + $0x48] sm:$0xff]
        %v3883 = vld [vmem:[#allocation16 + $0x50] sm:$0xff]
        %v3884 = vld [vmem:[#allocation16 + $0x58] sm:$0xff]
        %v3885 = vld [vmem:[#allocation16 + $0x60] sm:$0xff]
        %v3886 = vld [vmem:[#allocation16 + $0x68] sm:$0xff]
        %v3887 = vld [vmem:[#allocation16 + $0x70] sm:$0xff]
        %v3888 = vld [vmem:[#allocation16 + $0x78] sm:$0xff]
        %v3889 = vld [vmem:[#allocation16 + $0x80] sm:$0xff]
        %v3890 = vld [vmem:[#allocation16 + $0x88] sm:$0xff]
        %v3891 = vld [vmem:[#allocation16 + $0x90] sm:$0xff]
        %v3892 = vld [vmem:[#allocation16 + $0x98] sm:$0xff]
        %v3893 = vld [vmem:[#allocation16 + $0xa0] sm:$0xff]
        %v3894 = vld [vmem:[#allocation16 + $0xa8] sm:$0xff]
        %v3895 = vld [vmem:[#allocation16 + $0xb0] sm:$0xff]
        %v3896 = vld [vmem:[#allocation16 + $0xb8] sm:$0xff]
        %v3897 = vld [vmem:[#allocation16 + $0xc0] sm:$0xff]
        %v3898 = vld [vmem:[#allocation16 + $0xc8] sm:$0xff]
        %v3899 = vld [vmem:[#allocation16 + $0xd0] sm:$0xff]
        %v3900 = vld [vmem:[#allocation16 + $0xd8] sm:$0xff]
        %v3901 = vld [vmem:[#allocation16 + $0xe0] sm:$0xff]
        %v3902 = vld [vmem:[#allocation16 + $0xe8] sm:$0xff]
        %v3903 = vld [vmem:[#allocation16 + $0xf0] sm:$0xff]
        %v3904 = vld [vmem:[#allocation16 + $0xf8] sm:$0xff]
        %v3905 = vld [vmem:[#allocation16 + $0x100] sm:$0xff]
        %v3906 = vld [vmem:[#allocation16 + $0x108] sm:$0xff]
        %v3907 = vld [vmem:[#allocation16 + $0x110] sm:$0xff]
        %v3908 = vld [vmem:[#allocation16 + $0x118] sm:$0xff]
        %v3909 = vld [vmem:[#allocation16 + $0x120] sm:$0xff]
        %v3910 = vld [vmem:[#allocation16 + $0x128] sm:$0xff]
        %v3911 = vld [vmem:[#allocation16 + $0x130] sm:$0xff]
        %v3912 = vld [vmem:[#allocation16 + $0x138] sm:$0xff]
        %v3913 = vld [vmem:[#allocation16 + $0x140] sm:$0xff]
        %v3914 = vld [vmem:[#allocation16 + $0x148] sm:$0xff]
        %v3915 = vld [vmem:[#allocation16 + $0x150] sm:$0xff]
        %v3916 = vld [vmem:[#allocation16 + $0x158] sm:$0xff]
        %v3917 = vld [vmem:[#allocation16 + $0x160] sm:$0xff]
        %v3918 = vld [vmem:[#allocation16 + $0x168] sm:$0xff]
        %v3919 = vld [vmem:[#allocation16 + $0x170] sm:$0xff]
        %v3920 = vld [vmem:[#allocation16 + $0x178] sm:$0xff]
        %v3921 = vld [vmem:[#allocation16 + $0x180] sm:$0xff]
        %v3922 = vld [vmem:[#allocation16 + $0x188] sm:$0xff]
        %v3923 = vld [vmem:[#allocation16 + $0x190] sm:$0xff]
        %v3924 = vld [vmem:[#allocation16 + $0x198] sm:$0xff]
        %v3925 = vld [vmem:[#allocation16 + $0x1a0] sm:$0xff]
        %v3926 = vld [vmem:[#allocation16 + $0x1a8] sm:$0xff]
        %v3927 = vld [vmem:[#allocation16 + $0x1b0] sm:$0xff]
        %v3928 = vld [vmem:[#allocation16 + $0x1b8] sm:$0xff]
        %v3929 = vld [vmem:[#allocation16 + $0x1c0] sm:$0xff]
        %v3930 = vld [vmem:[#allocation16 + $0x1c8] sm:$0xff]
        %v3931 = vld [vmem:[#allocation16 + $0x1d0] sm:$0xff]
        %v3932 = vld [vmem:[#allocation16 + $0x1d8] sm:$0xff]
        %v3933 = vld [vmem:[#allocation16 + $0x1e0] sm:$0xff]
        %v3934 = vld [vmem:[#allocation16 + $0x1e8] sm:$0xff]
        %v3935 = vld [vmem:[#allocation16 + $0x1f0] sm:$0xff]
        %v3936 = vld [vmem:[#allocation16 + $0x1f8] sm:$0xff]
        %v3937 = vld [vmem:[#allocation16 + $0x200] sm:$0xff]
        %v3938 = vld [vmem:[#allocation16 + $0x208] sm:$0xff]
        %v3939 = vld [vmem:[#allocation16 + $0x210] sm:$0xff]
        %v3940 = vld [vmem:[#allocation16 + $0x218] sm:$0xff]
        %v3941 = vld [vmem:[#allocation16 + $0x220] sm:$0xff]
        %v3942 = vld [vmem:[#allocation16 + $0x228] sm:$0xff]
        %v3943 = vld [vmem:[#allocation16 + $0x230] sm:$0xff]
        %v3944 = vld [vmem:[#allocation16 + $0x238] sm:$0xff]
        %v3945 = vld [vmem:[#allocation16 + $0x240] sm:$0xff]
        %v3946 = vld [vmem:[#allocation16 + $0x248] sm:$0xff]
        %v3947 = vld [vmem:[#allocation16 + $0x250] sm:$0xff]
        %v3948 = vld [vmem:[#allocation16 + $0x258] sm:$0xff]
        %v3949 = vld [vmem:[#allocation16 + $0x260] sm:$0xff]
        %v3950 = vld [vmem:[#allocation16 + $0x268] sm:$0xff]
        %v3951 = vld [vmem:[#allocation16 + $0x270] sm:$0xff]
        %v3952 = vld [vmem:[#allocation16 + $0x278] sm:$0xff]
        %v3953 = vld [vmem:[#allocation16 + $0x280] sm:$0xff]
        %v3954 = vld [vmem:[#allocation16 + $0x288] sm:$0xff]
        %v3955 = vld [vmem:[#allocation16 + $0x290] sm:$0xff]
        %v3956 = vld [vmem:[#allocation16 + $0x298] sm:$0xff]
        %v3957 = vld [vmem:[#allocation16 + $0x2a0] sm:$0xff]
        %v3958 = vld [vmem:[#allocation16 + $0x2a8] sm:$0xff]
        %v3959 = vld [vmem:[#allocation16 + $0x2b0] sm:$0xff]
        %v3960 = vld [vmem:[#allocation16 + $0x2b8] sm:$0xff]
        %v3961 = vld [vmem:[#allocation16 + $0x2c0] sm:$0xff]
        %v3962 = vld [vmem:[#allocation16 + $0x2c8] sm:$0xff]
        %v3963 = vld [vmem:[#allocation16 + $0x2d0] sm:$0xff]
        %v3964 = vld [vmem:[#allocation16 + $0x2d8] sm:$0xff]
        %v3965 = vld [vmem:[#allocation16 + $0x2e0] sm:$0xff]
        %v3966 = vld [vmem:[#allocation16 + $0x2e8] sm:$0xff]
        %v3967 = vld [vmem:[#allocation16 + $0x2f0] sm:$0xff]
        %v3968 = vld [vmem:[#allocation16 + $0x2f8] sm:$0xff]
        %v3969 = vld [vmem:[#allocation16 + $0x300] sm:$0xff]
        %v3970 = vld [vmem:[#allocation16 + $0x308] sm:$0xff]
        %v3971 = vld [vmem:[#allocation16 + $0x310] sm:$0xff]
        %v3972 = vld [vmem:[#allocation16 + $0x318] sm:$0xff]
        %v3973 = vld [vmem:[#allocation16 + $0x320] sm:$0xff]
        %v3974 = vld [vmem:[#allocation16 + $0x328] sm:$0xff]
        %v3975 = vld [vmem:[#allocation16 + $0x330] sm:$0xff]
        %v3976 = vld [vmem:[#allocation16 + $0x338] sm:$0xff]
        %v3977 = vld [vmem:[#allocation16 + $0x340] sm:$0xff]
        %v3978 = vld [vmem:[#allocation16 + $0x348] sm:$0xff]
        %v3979 = vld [vmem:[#allocation16 + $0x350] sm:$0xff]
        %v3980 = vld [vmem:[#allocation16 + $0x358] sm:$0xff]
        %v3981 = vld [vmem:[#allocation16 + $0x360] sm:$0xff]
        %v3982 = vld [vmem:[#allocation16 + $0x368] sm:$0xff]
        %v3983 = vld [vmem:[#allocation16 + $0x370] sm:$0xff]
        %v3984 = vld [vmem:[#allocation16 + $0x378] sm:$0xff]
        %v3985 = vld [vmem:[#allocation16 + $0x380] sm:$0xff]
        %v3986 = vld [vmem:[#allocation16 + $0x388] sm:$0xff]
        %v3987 = vld [vmem:[#allocation16 + $0x390] sm:$0xff]
        %v3988 = vld [vmem:[#allocation16 + $0x398] sm:$0xff]
        %v3989 = vld [vmem:[#allocation16 + $0x3a0] sm:$0xff]
        %v3990 = vld [vmem:[#allocation16 + $0x3a8] sm:$0xff]
        %v3991 = vld [vmem:[#allocation16 + $0x3b0] sm:$0xff]
        %v3992 = vld [vmem:[#allocation16 + $0x3b8] sm:$0xff]
        %v3993 = vld [vmem:[#allocation16 + $0x3c0] sm:$0xff]
        %v3994 = vld [vmem:[#allocation16 + $0x3c8] sm:$0xff]
        %v3995 = vld [vmem:[#allocation16 + $0x3d0] sm:$0xff]
        %v3996 = vld [vmem:[#allocation16 + $0x3d8] sm:$0xff]
        %v3997 = vld [vmem:[#allocation16 + $0x3e0] sm:$0xff]
        %v3998 = vld [vmem:[#allocation16 + $0x3e8] sm:$0xff]
        %v3999 = vld [vmem:[#allocation16 + $0x3f0] sm:$0xff]
        %v4000 = vld [vmem:[#allocation16 + $0x3f8] sm:$0xff]
        %v4001 = vld [vmem:[#allocation16 + $0x400] sm:$0xff]
        %v4002 = vld [vmem:[#allocation16 + $0x408] sm:$0xff]
        %v4003 = vld [vmem:[#allocation16 + $0x410] sm:$0xff]
        %v4004 = vld [vmem:[#allocation16 + $0x418] sm:$0xff]
        %v4005 = vld [vmem:[#allocation16 + $0x420] sm:$0xff]
        %v4006 = vld [vmem:[#allocation16 + $0x428] sm:$0xff]
        %v4007 = vld [vmem:[#allocation16 + $0x430] sm:$0xff]
        %v4008 = vld [vmem:[#allocation16 + $0x438] sm:$0xff]
        %v4009 = vld [vmem:[#allocation16 + $0x440] sm:$0xff]
        %v4010 = vld [vmem:[#allocation16 + $0x448] sm:$0xff]
        %v4011 = vld [vmem:[#allocation16 + $0x450] sm:$0xff]
        %v4012 = vld [vmem:[#allocation16 + $0x458] sm:$0xff]
        %v4013 = vld [vmem:[#allocation16 + $0x460] sm:$0xff]
        %v4014 = vld [vmem:[#allocation16 + $0x468] sm:$0xff]
        %v4015 = vld [vmem:[#allocation16 + $0x470] sm:$0xff]
        %v4016 = vld [vmem:[#allocation16 + $0x478] sm:$0xff]
        %v4017 = vld [vmem:[#allocation16 + $0x480] sm:$0xff]
        %v4018 = vld [vmem:[#allocation16 + $0x488] sm:$0xff]
        %v4019 = vld [vmem:[#allocation16 + $0x490] sm:$0xff]
        %v4020 = vld [vmem:[#allocation16 + $0x498] sm:$0xff]
        %v4021 = vld [vmem:[#allocation16 + $0x4a0] sm:$0xff]
        %v4022 = vld [vmem:[#allocation16 + $0x4a8] sm:$0xff]
        %v4023 = vld [vmem:[#allocation16 + $0x4b0] sm:$0xff]
        %v4024 = vld [vmem:[#allocation16 + $0x4b8] sm:$0xff]
        %v4025 = vld [vmem:[#allocation16 + $0x4c0] sm:$0xff]
        %v4026 = vld [vmem:[#allocation16 + $0x4c8] sm:$0xff]
        %v4027 = vld [vmem:[#allocation16 + $0x4d0] sm:$0xff]
        %v4028 = vld [vmem:[#allocation16 + $0x4d8] sm:$0xff]
        %v4029 = vld [vmem:[#allocation16 + $0x4e0] sm:$0xff]
        %v4030 = vld [vmem:[#allocation16 + $0x4e8] sm:$0xff]
        %v4031 = vld [vmem:[#allocation16 + $0x4f0] sm:$0xff]
        %v4032 = vld [vmem:[#allocation16 + $0x4f8] sm:$0xff]
        %v4033 = vld [vmem:[#allocation16 + $0x500] sm:$0xff]
        %v4034 = vld [vmem:[#allocation16 + $0x508] sm:$0xff]
        %v4035 = vld [vmem:[#allocation16 + $0x510] sm:$0xff]
        %v4036 = vld [vmem:[#allocation16 + $0x518] sm:$0xff]
        %v4037 = vld [vmem:[#allocation16 + $0x520] sm:$0xff]
        %v4038 = vld [vmem:[#allocation16 + $0x528] sm:$0xff]
        %v4039 = vld [vmem:[#allocation16 + $0x530] sm:$0xff]
        %v4040 = vld [vmem:[#allocation16 + $0x538] sm:$0xff]
        %v4041 = vld [vmem:[#allocation16 + $0x540] sm:$0xff]
        %v4042 = vld [vmem:[#allocation16 + $0x548] sm:$0xff]
        %v4043 = vld [vmem:[#allocation16 + $0x550] sm:$0xff]
        %v4044 = vld [vmem:[#allocation16 + $0x558] sm:$0xff]
        %v4045 = vld [vmem:[#allocation16 + $0x560] sm:$0xff]
        %v4046 = vld [vmem:[#allocation16 + $0x568] sm:$0xff]
        %v4047 = vld [vmem:[#allocation16 + $0x570] sm:$0xff]
        %v4048 = vld [vmem:[#allocation16 + $0x578] sm:$0xff]
        %v4049 = vld [vmem:[#allocation16 + $0x580] sm:$0xff]
        %v4050 = vld [vmem:[#allocation16 + $0x588] sm:$0xff]
        %v4051 = vld [vmem:[#allocation16 + $0x590] sm:$0xff]
        %v4052 = vld [vmem:[#allocation16 + $0x598] sm:$0xff]
        %v4053 = vld [vmem:[#allocation16 + $0x5a0] sm:$0xff]
        %v4054 = vld [vmem:[#allocation16 + $0x5a8] sm:$0xff]
        %v4055 = vld [vmem:[#allocation16 + $0x5b0] sm:$0xff]
        %v4056 = vld [vmem:[#allocation16 + $0x5b8] sm:$0xff]
        %v4057 = vld [vmem:[#allocation16 + $0x5c0] sm:$0xff]
        %v4058 = vld [vmem:[#allocation16 + $0x5c8] sm:$0xff]
        %v4059 = vld [vmem:[#allocation16 + $0x5d0] sm:$0xff]
        %v4060 = vld [vmem:[#allocation16 + $0x5d8] sm:$0xff]
        %v4061 = vld [vmem:[#allocation16 + $0x5e0] sm:$0xff]
        %v4062 = vld [vmem:[#allocation16 + $0x5e8] sm:$0xff]
        %v4063 = vld [vmem:[#allocation16 + $0x5f0] sm:$0xff]
        %v4064 = vld [vmem:[#allocation16 + $0x5f8] sm:$0xff]
        %v4065 = vld [vmem:[#allocation16 + $0x600] sm:$0xff]
        %v4066 = vld [vmem:[#allocation16 + $0x608] sm:$0xff]
        %v4067 = vld [vmem:[#allocation16 + $0x610] sm:$0xff]
        %v4068 = vld [vmem:[#allocation16 + $0x618] sm:$0xff]
        %v4069 = vld [vmem:[#allocation16 + $0x620] sm:$0xff]
        %v4070 = vld [vmem:[#allocation16 + $0x628] sm:$0xff]
        %v4071 = vld [vmem:[#allocation16 + $0x630] sm:$0xff]
        %v4072 = vld [vmem:[#allocation16 + $0x638] sm:$0xff]
        %v4073 = vld [vmem:[#allocation16 + $0x640] sm:$0xff]
        %v4074 = vld [vmem:[#allocation16 + $0x648] sm:$0xff]
        %v4075 = vld [vmem:[#allocation16 + $0x650] sm:$0xff]
        %v4076 = vld [vmem:[#allocation16 + $0x658] sm:$0xff]
        %v4077 = vld [vmem:[#allocation16 + $0x660] sm:$0xff]
        %v4078 = vld [vmem:[#allocation16 + $0x668] sm:$0xff]
        %v4079 = vld [vmem:[#allocation16 + $0x670] sm:$0xff]
        %v4080 = vld [vmem:[#allocation16 + $0x678] sm:$0xff]
        %v4081 = vld [vmem:[#allocation16 + $0x680] sm:$0xff]
        %v4082 = vld [vmem:[#allocation16 + $0x688] sm:$0xff]
        %v4083 = vld [vmem:[#allocation16 + $0x690] sm:$0xff]
        %v4084 = vld [vmem:[#allocation16 + $0x698] sm:$0xff]
        %v4085 = vld [vmem:[#allocation16 + $0x6a0] sm:$0xff]
        %v4086 = vld [vmem:[#allocation16 + $0x6a8] sm:$0xff]
        %v4087 = vld [vmem:[#allocation16 + $0x6b0] sm:$0xff]
        %v4088 = vld [vmem:[#allocation16 + $0x6b8] sm:$0xff]
        %v4089 = vld [vmem:[#allocation16 + $0x6c0] sm:$0xff]
        %v4090 = vld [vmem:[#allocation16 + $0x6c8] sm:$0xff]
        %v4091 = vld [vmem:[#allocation16 + $0x6d0] sm:$0xff]
        %v4092 = vld [vmem:[#allocation16 + $0x6d8] sm:$0xff]
        %v4093 = vld [vmem:[#allocation16 + $0x6e0] sm:$0xff]
        %v4094 = vld [vmem:[#allocation16 + $0x6e8] sm:$0xff]
        %v4095 = vld [vmem:[#allocation16 + $0x6f0] sm:$0xff]
        %v4096 = vld [vmem:[#allocation16 + $0x6f8] sm:$0xff]
        %v4097 = vld [vmem:[#allocation16 + $0x700] sm:$0xff]
        %v4098 = vld [vmem:[#allocation16 + $0x708] sm:$0xff]
        %v4099 = vld [vmem:[#allocation16 + $0x710] sm:$0xff]
        %v4100 = vld [vmem:[#allocation16 + $0x718] sm:$0xff]
        %v4101 = vld [vmem:[#allocation16 + $0x720] sm:$0xff]
        %v4102 = vld [vmem:[#allocation16 + $0x728] sm:$0xff]
        %v4103 = vld [vmem:[#allocation16 + $0x730] sm:$0xff]
        %v4104 = vld [vmem:[#allocation16 + $0x738] sm:$0xff]
        %v4105 = vld [vmem:[#allocation16 + $0x740] sm:$0xff]
        %v4106 = vld [vmem:[#allocation16 + $0x748] sm:$0xff]
        %v4107 = vld [vmem:[#allocation16 + $0x750] sm:$0xff]
        %v4108 = vld [vmem:[#allocation16 + $0x758] sm:$0xff]
        %v4109 = vld [vmem:[#allocation16 + $0x760] sm:$0xff]
        %v4110 = vld [vmem:[#allocation16 + $0x768] sm:$0xff]
        %v4111 = vld [vmem:[#allocation16 + $0x770] sm:$0xff]
        %v4112 = vld [vmem:[#allocation16 + $0x778] sm:$0xff]
        %v4113 = vld [vmem:[#allocation16 + $0x780] sm:$0xff]
        %v4114 = vld [vmem:[#allocation16 + $0x788] sm:$0xff]
        %v4115 = vld [vmem:[#allocation16 + $0x790] sm:$0xff]
        %v4116 = vld [vmem:[#allocation16 + $0x798] sm:$0xff]
        %v4117 = vld [vmem:[#allocation16 + $0x7a0] sm:$0xff]
        %v4118 = vld [vmem:[#allocation16 + $0x7a8] sm:$0xff]
        %v4119 = vld [vmem:[#allocation16 + $0x7b0] sm:$0xff]
        %v4120 = vld [vmem:[#allocation16 + $0x7b8] sm:$0xff]
        %v4121 = vld [vmem:[#allocation16 + $0x7c0] sm:$0xff]
        %v4122 = vld [vmem:[#allocation16 + $0x7c8] sm:$0xff]
        %v4123 = vld [vmem:[#allocation16 + $0x7d0] sm:$0xff]
        %v4124 = vld [vmem:[#allocation16 + $0x7d8] sm:$0xff]
        %v4125 = vld [vmem:[#allocation16 + $0x7e0] sm:$0xff]
        %v4126 = vld [vmem:[#allocation16 + $0x7e8] sm:$0xff]
        %v4127 = vld [vmem:[#allocation16 + $0x7f0] sm:$0xff]
        %v4128 = vld [vmem:[#allocation16 + $0x7f8] sm:$0xff]
        %v4129 = vld [vmem:[#allocation16 + $0x800] sm:$0xff]
        %v4130 = vld [vmem:[#allocation16 + $0x808] sm:$0xff]
        %v4131 = vld [vmem:[#allocation16 + $0x810] sm:$0xff]
        %v4132 = vld [vmem:[#allocation16 + $0x818] sm:$0xff]
        %v4133 = vld [vmem:[#allocation16 + $0x820] sm:$0xff]
        %v4134 = vld [vmem:[#allocation16 + $0x828] sm:$0xff]
        %v4135 = vld [vmem:[#allocation16 + $0x830] sm:$0xff]
        %v4136 = vld [vmem:[#allocation16 + $0x838] sm:$0xff]
        %v4137 = vld [vmem:[#allocation16 + $0x840] sm:$0xff]
        %v4138 = vld [vmem:[#allocation16 + $0x848] sm:$0xff]
        %v4139 = vld [vmem:[#allocation16 + $0x850] sm:$0xff]
        %v4140 = vld [vmem:[#allocation16 + $0x858] sm:$0xff]
        %v4141 = vld [vmem:[#allocation16 + $0x860] sm:$0xff]
        %v4142 = vld [vmem:[#allocation16 + $0x868] sm:$0xff]
        %v4143 = vld [vmem:[#allocation16 + $0x870] sm:$0xff]
        %v4144 = vld [vmem:[#allocation16 + $0x878] sm:$0xff]
        %v4145 = vld [vmem:[#allocation16 + $0x880] sm:$0xff]
        %v4146 = vld [vmem:[#allocation16 + $0x888] sm:$0xff]
        %v4147 = vld [vmem:[#allocation16 + $0x890] sm:$0xff]
        %v4148 = vld [vmem:[#allocation16 + $0x898] sm:$0xff]
        %v4149 = vld [vmem:[#allocation16 + $0x8a0] sm:$0xff]
        %v4150 = vld [vmem:[#allocation16 + $0x8a8] sm:$0xff]
        %v4151 = vld [vmem:[#allocation16 + $0x8b0] sm:$0xff]
        %v4152 = vld [vmem:[#allocation16 + $0x8b8] sm:$0xff]
        %v4153 = vld [vmem:[#allocation16 + $0x8c0] sm:$0xff]
        %v4154 = vld [vmem:[#allocation16 + $0x8c8] sm:$0xff]
        %v4155 = vld [vmem:[#allocation16 + $0x8d0] sm:$0xff]
        %v4156 = vld [vmem:[#allocation16 + $0x8d8] sm:$0xff]
        %v4157 = vld [vmem:[#allocation16 + $0x8e0] sm:$0xff]
        %v4158 = vld [vmem:[#allocation16 + $0x8e8] sm:$0xff]
        %v4159 = vld [vmem:[#allocation16 + $0x8f0] sm:$0xff]
        %v4160 = vld [vmem:[#allocation16 + $0x8f8] sm:$0xff]
        %v4161 = vld [vmem:[#allocation16 + $0x900] sm:$0xff]
        %v4162 = vld [vmem:[#allocation16 + $0x908] sm:$0xff]
        %v4163 = vld [vmem:[#allocation16 + $0x910] sm:$0xff]
        %v4164 = vld [vmem:[#allocation16 + $0x918] sm:$0xff]
        %v4165 = vld [vmem:[#allocation16 + $0x920] sm:$0xff]
        %v4166 = vld [vmem:[#allocation16 + $0x928] sm:$0xff]
        %v4167 = vld [vmem:[#allocation16 + $0x930] sm:$0xff]
        %v4168 = vld [vmem:[#allocation16 + $0x938] sm:$0xff]
        %v4169 = vld [vmem:[#allocation16 + $0x940] sm:$0xff]
        %v4170 = vld [vmem:[#allocation16 + $0x948] sm:$0xff]
        %v4171 = vld [vmem:[#allocation16 + $0x950] sm:$0xff]
        %v4172 = vld [vmem:[#allocation16 + $0x958] sm:$0xff]
        %v4173 = vld [vmem:[#allocation16 + $0x960] sm:$0xff]
        %v4174 = vld [vmem:[#allocation16 + $0x968] sm:$0xff]
        %v4175 = vld [vmem:[#allocation16 + $0x970] sm:$0xff]
        %v4176 = vld [vmem:[#allocation16 + $0x978] sm:$0xff]
        %v4177 = vld [vmem:[#allocation16 + $0x980] sm:$0xff]
        %v4178 = vld [vmem:[#allocation16 + $0x988] sm:$0xff]
        %v4179 = vld [vmem:[#allocation16 + $0x990] sm:$0xff]
        %v4180 = vld [vmem:[#allocation16 + $0x998] sm:$0xff]
        %v4181 = vld [vmem:[#allocation16 + $0x9a0] sm:$0xff]
        %v4182 = vld [vmem:[#allocation16 + $0x9a8] sm:$0xff]
        %v4183 = vld [vmem:[#allocation16 + $0x9b0] sm:$0xff]
        %v4184 = vld [vmem:[#allocation16 + $0x9b8] sm:$0xff]
        %v4185 = vld [vmem:[#allocation16 + $0x9c0] sm:$0xff]
        %v4186 = vld [vmem:[#allocation16 + $0x9c8] sm:$0xff]
        %v4187 = vld [vmem:[#allocation16 + $0x9d0] sm:$0xff]
        %v4188 = vld [vmem:[#allocation16 + $0x9d8] sm:$0xff]
        %v4189 = vld [vmem:[#allocation16 + $0x9e0] sm:$0xff]
        %v4190 = vld [vmem:[#allocation16 + $0x9e8] sm:$0xff]
        %v4191 = vld [vmem:[#allocation16 + $0x9f0] sm:$0xff]
        %v4192 = vld [vmem:[#allocation16 + $0x9f8] sm:$0xff]
        %v4193 = vld [vmem:[#allocation16 + $0xa00] sm:$0xff]
        %v4194 = vld [vmem:[#allocation16 + $0xa08] sm:$0xff]
        %v4195 = vld [vmem:[#allocation16 + $0xa10] sm:$0xff]
        %v4196 = vld [vmem:[#allocation16 + $0xa18] sm:$0xff]
        %v4197 = vld [vmem:[#allocation16 + $0xa20] sm:$0xff]
        %v4198 = vld [vmem:[#allocation16 + $0xa28] sm:$0xff]
        %v4199 = vld [vmem:[#allocation16 + $0xa30] sm:$0xff]
        %v4200 = vld [vmem:[#allocation16 + $0xa38] sm:$0xff]
        %v4201 = vld [vmem:[#allocation16 + $0xa40] sm:$0xff]
        %v4202 = vld [vmem:[#allocation16 + $0xa48] sm:$0xff]
        %v4203 = vld [vmem:[#allocation16 + $0xa50] sm:$0xff]
        %v4204 = vld [vmem:[#allocation16 + $0xa58] sm:$0xff]
        %v4205 = vld [vmem:[#allocation16 + $0xa60] sm:$0xff]
        %v4206 = vld [vmem:[#allocation16 + $0xa68] sm:$0xff]
        %v4207 = vld [vmem:[#allocation16 + $0xa70] sm:$0xff]
        %v4208 = vld [vmem:[#allocation16 + $0xa78] sm:$0xff]
        %v4209 = vld [vmem:[#allocation16 + $0xa80] sm:$0xff]
        %v4210 = vld [vmem:[#allocation16 + $0xa88] sm:$0xff]
        %v4211 = vld [vmem:[#allocation16 + $0xa90] sm:$0xff]
        %v4212 = vld [vmem:[#allocation16 + $0xa98] sm:$0xff]
        %v4213 = vld [vmem:[#allocation16 + $0xaa0] sm:$0xff]
        %v4214 = vld [vmem:[#allocation16 + $0xaa8] sm:$0xff]
        %v4215 = vld [vmem:[#allocation16 + $0xab0] sm:$0xff]
        %v4216 = vld [vmem:[#allocation16 + $0xab8] sm:$0xff]
        %v4217 = vld [vmem:[#allocation16 + $0xac0] sm:$0xff]
        %v4218 = vld [vmem:[#allocation16 + $0xac8] sm:$0xff]
        %v4219 = vld [vmem:[#allocation16 + $0xad0] sm:$0xff]
        %v4220 = vld [vmem:[#allocation16 + $0xad8] sm:$0xff]
        %v4221 = vld [vmem:[#allocation16 + $0xae0] sm:$0xff]
        %v4222 = vld [vmem:[#allocation16 + $0xae8] sm:$0xff]
        %v4223 = vld [vmem:[#allocation16 + $0xaf0] sm:$0xff]
        %v4224 = vld [vmem:[#allocation16 + $0xaf8] sm:$0xff]
        %v4225 = vld [vmem:[#allocation16 + $0xb00] sm:$0xff]
        %v4226 = vld [vmem:[#allocation16 + $0xb08] sm:$0xff]
        %v4227 = vld [vmem:[#allocation16 + $0xb10] sm:$0xff]
        %v4228 = vld [vmem:[#allocation16 + $0xb18] sm:$0xff]
        %v4229 = vld [vmem:[#allocation16 + $0xb20] sm:$0xff]
        %v4230 = vld [vmem:[#allocation16 + $0xb28] sm:$0xff]
        %v4231 = vld [vmem:[#allocation16 + $0xb30] sm:$0xff]
        %v4232 = vld [vmem:[#allocation16 + $0xb38] sm:$0xff]
        %v4233 = vld [vmem:[#allocation16 + $0xb40] sm:$0xff]
        %v4234 = vld [vmem:[#allocation16 + $0xb48] sm:$0xff]
        %v4235 = vld [vmem:[#allocation16 + $0xb50] sm:$0xff]
        %v4236 = vld [vmem:[#allocation16 + $0xb58] sm:$0xff]
        %v4237 = vld [vmem:[#allocation16 + $0xb60] sm:$0xff]
        %v4238 = vld [vmem:[#allocation16 + $0xb68] sm:$0xff]
        %v4239 = vld [vmem:[#allocation16 + $0xb70] sm:$0xff]
        %v4240 = vld [vmem:[#allocation16 + $0xb78] sm:$0xff]
        %v4241 = vld [vmem:[#allocation16 + $0xb80] sm:$0xff]
        %v4242 = vld [vmem:[#allocation16 + $0xb88] sm:$0xff]
        %v4243 = vld [vmem:[#allocation16 + $0xb90] sm:$0xff]
        %v4244 = vld [vmem:[#allocation16 + $0xb98] sm:$0xff]
        %v4245 = vld [vmem:[#allocation16 + $0xba0] sm:$0xff]
        %v4246 = vld [vmem:[#allocation16 + $0xba8] sm:$0xff]
        %v4247 = vld [vmem:[#allocation16 + $0xbb0] sm:$0xff]
        %v4248 = vld [vmem:[#allocation16 + $0xbb8] sm:$0xff]
        %v4249 = vld [vmem:[#allocation16 + $0xbc0] sm:$0xff]
        %v4250 = vld [vmem:[#allocation16 + $0xbc8] sm:$0xff]
        %v4251 = vld [vmem:[#allocation16 + $0xbd0] sm:$0xff]
        %v4252 = vld [vmem:[#allocation16 + $0xbd8] sm:$0xff]
        %v4253 = vld [vmem:[#allocation16 + $0xbe0] sm:$0xff]
        %v4254 = vld [vmem:[#allocation16 + $0xbe8] sm:$0xff]
        %v4255 = vld [vmem:[#allocation16 + $0xbf0] sm:$0xff]
        %v4256 = vld [vmem:[#allocation16 + $0xbf8] sm:$0xff]
        %v4257 = vld [vmem:[#allocation16 + $0xc00] sm:$0xff]
        %v4258 = vld [vmem:[#allocation16 + $0xc08] sm:$0xff]
        %v4259 = vld [vmem:[#allocation16 + $0xc10] sm:$0xff]
        %v4260 = vld [vmem:[#allocation16 + $0xc18] sm:$0xff]
        %v4261 = vld [vmem:[#allocation16 + $0xc20] sm:$0xff]
        %v4262 = vld [vmem:[#allocation16 + $0xc28] sm:$0xff]
        %v4263 = vld [vmem:[#allocation16 + $0xc30] sm:$0xff]
        %v4264 = vld [vmem:[#allocation16 + $0xc38] sm:$0xff]
        %v4265 = vld [vmem:[#allocation16 + $0xc40] sm:$0xff]
        %v4266 = vld [vmem:[#allocation16 + $0xc48] sm:$0xff]
        %v4267 = vld [vmem:[#allocation16 + $0xc50] sm:$0xff]
        %v4268 = vld [vmem:[#allocation16 + $0xc58] sm:$0xff]
        %v4269 = vld [vmem:[#allocation16 + $0xc60] sm:$0xff]
        %v4270 = vld [vmem:[#allocation16 + $0xc68] sm:$0xff]
        %v4271 = vld [vmem:[#allocation16 + $0xc70] sm:$0xff]
        %v4272 = vld [vmem:[#allocation16 + $0xc78] sm:$0xff]
        %v4273 = vld [vmem:[#allocation16 + $0xc80] sm:$0xff]
        %v4274 = vld [vmem:[#allocation16 + $0xc88] sm:$0xff]
        %v4275 = vld [vmem:[#allocation16 + $0xc90] sm:$0xff]
        %v4276 = vld [vmem:[#allocation16 + $0xc98] sm:$0xff]
        %v4277 = vld [vmem:[#allocation16 + $0xca0] sm:$0xff]
        %v4278 = vld [vmem:[#allocation16 + $0xca8] sm:$0xff]
        %v4279 = vld [vmem:[#allocation16 + $0xcb0] sm:$0xff]
        %v4280 = vld [vmem:[#allocation16 + $0xcb8] sm:$0xff]
        %v4281 = vld [vmem:[#allocation16 + $0xcc0] sm:$0xff]
        %v4282 = vld [vmem:[#allocation16 + $0xcc8] sm:$0xff]
        %v4283 = vld [vmem:[#allocation16 + $0xcd0] sm:$0xff]
        %v4284 = vld [vmem:[#allocation16 + $0xcd8] sm:$0xff]
        %v4285 = vld [vmem:[#allocation16 + $0xce0] sm:$0xff]
        %v4286 = vld [vmem:[#allocation16 + $0xce8] sm:$0xff]
        %v4287 = vld [vmem:[#allocation16 + $0xcf0] sm:$0xff]
        %v4288 = vld [vmem:[#allocation16 + $0xcf8] sm:$0xff]
        %v4289 = vld [vmem:[#allocation16 + $0xd00] sm:$0xff]
        %v4290 = vld [vmem:[#allocation16 + $0xd08] sm:$0xff]
        %v4291 = vld [vmem:[#allocation16 + $0xd10] sm:$0xff]
        %v4292 = vld [vmem:[#allocation16 + $0xd18] sm:$0xff]
        %v4293 = vld [vmem:[#allocation16 + $0xd20] sm:$0xff]
        %v4294 = vld [vmem:[#allocation16 + $0xd28] sm:$0xff]
        %v4295 = vld [vmem:[#allocation16 + $0xd30] sm:$0xff]
        %v4296 = vld [vmem:[#allocation16 + $0xd38] sm:$0xff]
        %v4297 = vld [vmem:[#allocation16 + $0xd40] sm:$0xff]
        %v4298 = vld [vmem:[#allocation16 + $0xd48] sm:$0xff]
        %v4299 = vld [vmem:[#allocation16 + $0xd50] sm:$0xff]
        %v4300 = vld [vmem:[#allocation16 + $0xd58] sm:$0xff]
        %v4301 = vld [vmem:[#allocation16 + $0xd60] sm:$0xff]
        %v4302 = vld [vmem:[#allocation16 + $0xd68] sm:$0xff]
        %v4303 = vld [vmem:[#allocation16 + $0xd70] sm:$0xff]
        %v4304 = vld [vmem:[#allocation16 + $0xd78] sm:$0xff]
        %v4305 = vld [vmem:[#allocation16 + $0xd80] sm:$0xff]
        %v4306 = vld [vmem:[#allocation16 + $0xd88] sm:$0xff]
        %v4307 = vld [vmem:[#allocation16 + $0xd90] sm:$0xff]
        %v4308 = vld [vmem:[#allocation16 + $0xd98] sm:$0xff]
        %v4309 = vld [vmem:[#allocation16 + $0xda0] sm:$0xff]
        %v4310 = vld [vmem:[#allocation16 + $0xda8] sm:$0xff]
        %v4311 = vld [vmem:[#allocation16 + $0xdb0] sm:$0xff]
        %v4312 = vld [vmem:[#allocation16 + $0xdb8] sm:$0xff]
        %v4313 = vld [vmem:[#allocation16 + $0xdc0] sm:$0xff]
        %v4314 = vld [vmem:[#allocation16 + $0xdc8] sm:$0xff]
        %v4315 = vld [vmem:[#allocation16 + $0xdd0] sm:$0xff]
        %v4316 = vld [vmem:[#allocation16 + $0xdd8] sm:$0xff]
        %v4317 = vld [vmem:[#allocation16 + $0xde0] sm:$0xff]
        %v4318 = vld [vmem:[#allocation16 + $0xde8] sm:$0xff]
        %v4319 = vld [vmem:[#allocation16 + $0xdf0] sm:$0xff]
        %v4320 = vld [vmem:[#allocation16 + $0xdf8] sm:$0xff]
        %v4321 = vld [vmem:[#allocation16 + $0xe00] sm:$0xff]
        %v4322 = vld [vmem:[#allocation16 + $0xe08] sm:$0xff]
        %v4323 = vld [vmem:[#allocation16 + $0xe10] sm:$0xff]
        %v4324 = vld [vmem:[#allocation16 + $0xe18] sm:$0xff]
        %v4325 = vld [vmem:[#allocation16 + $0xe20] sm:$0xff]
        %v4326 = vld [vmem:[#allocation16 + $0xe28] sm:$0xff]
        %v4327 = vld [vmem:[#allocation16 + $0xe30] sm:$0xff]
        %v4328 = vld [vmem:[#allocation16 + $0xe38] sm:$0xff]
        %v4329 = vld [vmem:[#allocation16 + $0xe40] sm:$0xff]
        %v4330 = vld [vmem:[#allocation16 + $0xe48] sm:$0xff]
        %v4331 = vld [vmem:[#allocation16 + $0xe50] sm:$0xff]
        %v4332 = vld [vmem:[#allocation16 + $0xe58] sm:$0xff]
        %v4333 = vld [vmem:[#allocation16 + $0xe60] sm:$0xff]
        %v4334 = vld [vmem:[#allocation16 + $0xe68] sm:$0xff]
        %v4335 = vld [vmem:[#allocation16 + $0xe70] sm:$0xff]
        %v4336 = vld [vmem:[#allocation16 + $0xe78] sm:$0xff]
        %v4337 = vld [vmem:[#allocation16 + $0xe80] sm:$0xff]
        %v4338 = vld [vmem:[#allocation16 + $0xe88] sm:$0xff]
        %v4339 = vld [vmem:[#allocation16 + $0xe90] sm:$0xff]
        %v4340 = vld [vmem:[#allocation16 + $0xe98] sm:$0xff]
        %v4341 = vld [vmem:[#allocation16 + $0xea0] sm:$0xff]
        %v4342 = vld [vmem:[#allocation16 + $0xea8] sm:$0xff]
        %v4343 = vld [vmem:[#allocation16 + $0xeb0] sm:$0xff]
        %v4344 = vld [vmem:[#allocation16 + $0xeb8] sm:$0xff]
        %v4345 = vld [vmem:[#allocation16 + $0xec0] sm:$0xff]
        %v4346 = vld [vmem:[#allocation16 + $0xec8] sm:$0xff]
        %v4347 = vld [vmem:[#allocation16 + $0xed0] sm:$0xff]
        %v4348 = vld [vmem:[#allocation16 + $0xed8] sm:$0xff]
        %v4349 = vld [vmem:[#allocation16 + $0xee0] sm:$0xff]
        %v4350 = vld [vmem:[#allocation16 + $0xee8] sm:$0xff]
        %v4351 = vld [vmem:[#allocation16 + $0xef0] sm:$0xff]
        %v4352 = vld [vmem:[#allocation16 + $0xef8] sm:$0xff]
        %v4353 = vld [vmem:[#allocation16 + $0xf00] sm:$0xff]
        %v4354 = vld [vmem:[#allocation16 + $0xf08] sm:$0xff]
        %v4355 = vld [vmem:[#allocation16 + $0xf10] sm:$0xff]
        %v4356 = vld [vmem:[#allocation16 + $0xf18] sm:$0xff]
        %v4357 = vld [vmem:[#allocation16 + $0xf20] sm:$0xff]
        %v4358 = vld [vmem:[#allocation16 + $0xf28] sm:$0xff]
        %v4359 = vld [vmem:[#allocation16 + $0xf30] sm:$0xff]
        %v4360 = vld [vmem:[#allocation16 + $0xf38] sm:$0xff]
        %v4361 = vld [vmem:[#allocation16 + $0xf40] sm:$0xff]
        %v4362 = vld [vmem:[#allocation16 + $0xf48] sm:$0xff]
        %v4363 = vld [vmem:[#allocation16 + $0xf50] sm:$0xff]
        %v4364 = vld [vmem:[#allocation16 + $0xf58] sm:$0xff]
        %v4365 = vld [vmem:[#allocation16 + $0xf60] sm:$0xff]
        %v4366 = vld [vmem:[#allocation16 + $0xf68] sm:$0xff]
        %v4367 = vld [vmem:[#allocation16 + $0xf70] sm:$0xff]
        %v4368 = vld [vmem:[#allocation16 + $0xf78] sm:$0xff]
        %v4369 = vld [vmem:[#allocation16 + $0xf80] sm:$0xff]
        %v4370 = vld [vmem:[#allocation16 + $0xf88] sm:$0xff]
        %v4371 = vld [vmem:[#allocation16 + $0xf90] sm:$0xff]
        %v4372 = vld [vmem:[#allocation16 + $0xf98] sm:$0xff]
        %v4373 = vld [vmem:[#allocation16 + $0xfa0] sm:$0xff]
        %v4374 = vld [vmem:[#allocation16 + $0xfa8] sm:$0xff]
        %v4375 = vld [vmem:[#allocation16 + $0xfb0] sm:$0xff]
        %v4376 = vld [vmem:[#allocation16 + $0xfb8] sm:$0xff]
        %v4377 = vld [vmem:[#allocation16 + $0xfc0] sm:$0xff]
        %v4378 = vld [vmem:[#allocation16 + $0xfc8] sm:$0xff]
        %v4379 = vld [vmem:[#allocation16 + $0xfd0] sm:$0xff]
        %v4380 = vld [vmem:[#allocation16 + $0xfd8] sm:$0xff]
        %v4381 = vld [vmem:[#allocation16 + $0xfe0] sm:$0xff]
        %v4382 = vld [vmem:[#allocation16 + $0xfe8] sm:$0xff]
        %v4383 = vld [vmem:[#allocation16 + $0xff0] sm:$0xff]
        %v4384 = vld [vmem:[#allocation16 + $0xff8] sm:$0xff]
        %v4385 = vld [vmem:[#allocation16 + $0x1000] sm:$0xff]
        %v4386 = vld [vmem:[#allocation16 + $0x1008] sm:$0xff]
        %v4387 = vld [vmem:[#allocation16 + $0x1010] sm:$0xff]
        %v4388 = vld [vmem:[#allocation16 + $0x1018] sm:$0xff]
        %v4389 = vld [vmem:[#allocation16 + $0x1020] sm:$0xff]
        %v4390 = vld [vmem:[#allocation16 + $0x1028] sm:$0xff]
        %v4391 = vld [vmem:[#allocation16 + $0x1030] sm:$0xff]
        %v4392 = vld [vmem:[#allocation16 + $0x1038] sm:$0xff]
        %v4393 = vld [vmem:[#allocation16 + $0x1040] sm:$0xff]
        %v4394 = vld [vmem:[#allocation16 + $0x1048] sm:$0xff]
        %v4395 = vld [vmem:[#allocation16 + $0x1050] sm:$0xff]
        %v4396 = vld [vmem:[#allocation16 + $0x1058] sm:$0xff]
        %v4397 = vld [vmem:[#allocation16 + $0x1060] sm:$0xff]
        %v4398 = vld [vmem:[#allocation16 + $0x1068] sm:$0xff]
        %v4399 = vld [vmem:[#allocation16 + $0x1070] sm:$0xff]
        %v4400 = vld [vmem:[#allocation16 + $0x1078] sm:$0xff]
        %v4401 = vld [vmem:[#allocation16 + $0x1080] sm:$0xff]
        %v4402 = vld [vmem:[#allocation16 + $0x1088] sm:$0xff]
        %v4403 = vld [vmem:[#allocation16 + $0x1090] sm:$0xff]
        %v4404 = vld [vmem:[#allocation16 + $0x1098] sm:$0xff]
        %v4405 = vld [vmem:[#allocation16 + $0x10a0] sm:$0xff]
        %v4406 = vld [vmem:[#allocation16 + $0x10a8] sm:$0xff]
        %v4407 = vld [vmem:[#allocation16 + $0x10b0] sm:$0xff]
        %v4408 = vld [vmem:[#allocation16 + $0x10b8] sm:$0xff]
        %v4409 = vld [vmem:[#allocation16 + $0x10c0] sm:$0xff]
        %v4410 = vld [vmem:[#allocation16 + $0x10c8] sm:$0xff]
        %v4411 = vld [vmem:[#allocation16 + $0x10d0] sm:$0xff]
        %v4412 = vld [vmem:[#allocation16 + $0x10d8] sm:$0xff]
        %v4413 = vld [vmem:[#allocation16 + $0x10e0] sm:$0xff]
        %v4414 = vld [vmem:[#allocation16 + $0x10e8] sm:$0xff]
        %v4415 = vld [vmem:[#allocation16 + $0x10f0] sm:$0xff]
        %v4416 = vld [vmem:[#allocation16 + $0x10f8] sm:$0xff]
        %v4417 = vld [vmem:[#allocation16 + $0x1100] sm:$0xff]
        %v4418 = vld [vmem:[#allocation16 + $0x1108] sm:$0xff]
        %v4419 = vld [vmem:[#allocation16 + $0x1110] sm:$0xff]
        %v4420 = vld [vmem:[#allocation16 + $0x1118] sm:$0xff]
        %v4421 = vld [vmem:[#allocation16 + $0x1120] sm:$0xff]
        %v4422 = vld [vmem:[#allocation16 + $0x1128] sm:$0xff]
        %v4423 = vld [vmem:[#allocation16 + $0x1130] sm:$0xff]
        %v4424 = vld [vmem:[#allocation16 + $0x1138] sm:$0xff]
        %v4425 = vld [vmem:[#allocation16 + $0x1140] sm:$0xff]
        %v4426 = vld [vmem:[#allocation16 + $0x1148] sm:$0xff]
        %v4427 = vld [vmem:[#allocation16 + $0x1150] sm:$0xff]
        %v4428 = vld [vmem:[#allocation16 + $0x1158] sm:$0xff]
        %v4429 = vld [vmem:[#allocation16 + $0x1160] sm:$0xff]
        %v4430 = vld [vmem:[#allocation16 + $0x1168] sm:$0xff]
        %v4431 = vld [vmem:[#allocation16 + $0x1170] sm:$0xff]
        %v4432 = vld [vmem:[#allocation16 + $0x1178] sm:$0xff]
        %v4433 = vld [vmem:[#allocation16 + $0x1180] sm:$0xff]
        %v4434 = vld [vmem:[#allocation16 + $0x1188] sm:$0xff]
        %v4435 = vld [vmem:[#allocation16 + $0x1190] sm:$0xff]
        %v4436 = vld [vmem:[#allocation16 + $0x1198] sm:$0xff]
        %v4437 = vld [vmem:[#allocation16 + $0x11a0] sm:$0xff]
        %v4438 = vld [vmem:[#allocation16 + $0x11a8] sm:$0xff]
        %v4439 = vld [vmem:[#allocation16 + $0x11b0] sm:$0xff]
        %v4440 = vld [vmem:[#allocation16 + $0x11b8] sm:$0xff]
        %v4441 = vld [vmem:[#allocation16 + $0x11c0] sm:$0xff]
        %v4442 = vld [vmem:[#allocation16 + $0x11c8] sm:$0xff]
        %v4443 = vld [vmem:[#allocation16 + $0x11d0] sm:$0xff]
        %v4444 = vld [vmem:[#allocation16 + $0x11d8] sm:$0xff]
        %v4445 = vld [vmem:[#allocation16 + $0x11e0] sm:$0xff]
        %v4446 = vld [vmem:[#allocation16 + $0x11e8] sm:$0xff]
        %v4447 = vld [vmem:[#allocation16 + $0x11f0] sm:$0xff]
        %v4448 = vld [vmem:[#allocation16 + $0x11f8] sm:$0xff]
        %v4449 = vld [vmem:[#allocation17] sm:$0xf]
        %v4451 = vlaneseq
        %v4452 = vshrl.u32 %v4451, 7
        %v4453 = vsub.s32 0, %v4452
        %v4454 = vrot.slane %v4449, %v4453
        %v4455 = vlaneseq
        %v4456 = vshrl.u32 %v4455, 7
        %v4457 = vsub.s32 1, %v4456
        %v4458 = vrot.slane %v4449, %v4457
        %v4459 = vlaneseq
        %v4460 = vshrl.u32 %v4459, 7
        %v4461 = vsub.s32 2, %v4460
        %v4462 = vrot.slane %v4449, %v4461
        %v4463 = vlaneseq
        %v4464 = vshrl.u32 %v4463, 7
        %v4465 = vsub.s32 3, %v4464
        %v4466 = vrot.slane %v4449, %v4465
        %4471 = vmatprep.subr.mxu0 %v3874
        %4472 = vmatpush1.msra.mxu0 %v3873
        %4473 = vmatprep.subr.mxu0 %v3878
        %4474 = vmatpush1.msra.mxu0 %v3877
        %4475 = vmatprep.subr.mxu0 %v3882
        %4476 = vmatpush1.msra.mxu0 %v3881
        %4477 = vmatprep.subr.mxu0 %v3886
        %4478 = vmatpush1.msra.mxu0 %v3885
        %4479 = vmatprep.subr.mxu0 %v3890
        %4480 = vmatpush1.msra.mxu0 %v3889
        %4481 = vmatprep.subr.mxu0 %v3894
        %4482 = vmatpush1.msra.mxu0 %v3893
        %4483 = vmatprep.subr.mxu0 %v3898
        %4484 = vmatpush1.msra.mxu0 %v3897
        %4485 = vmatprep.subr.mxu0 %v3902
        %4486 = vmatpush1.msra.mxu0 %v3901
        %4487 = vmatprep.subr.mxu0 %v3906
        %4488 = vmatpush1.msra.mxu0 %v3905
        %4489 = vmatprep.subr.mxu0 %v3910
        %4490 = vmatpush1.msra.mxu0 %v3909
        %4491 = vmatprep.subr.mxu0 %v3914
        %4492 = vmatpush1.msra.mxu0 %v3913
        %4493 = vmatprep.subr.mxu0 %v3918
        %4494 = vmatpush1.msra.mxu0 %v3917
        %4495 = vmatprep.subr.mxu0 %v3922
        %4496 = vmatpush1.msra.mxu0 %v3921
        %4497 = vmatprep.subr.mxu0 %v3926
        %4498 = vmatpush1.msra.mxu0 %v3925
        %4499 = vmatprep.subr.mxu0 %v3930
        %4500 = vmatpush1.msra.mxu0 %v3929
        %4501 = vmatprep.subr.mxu0 %v3934
        %4502 = vmatpush1.msra.mxu0 %v3933
        %4503 = vmatprep.subr.mxu0 %v3938
        %4504 = vmatpush1.msra.mxu0 %v3937
        %4505 = vmatprep.subr.mxu0 %v3942
        %4506 = vmatpush1.msra.mxu0 %v3941
        %4507 = vmatprep.subr.mxu0 %v3946
        %4508 = vmatpush1.msra.mxu0 %v3945
        %4509 = vmatprep.subr.mxu0 %v3950
        %4510 = vmatpush1.msra.mxu0 %v3949
        %4511 = vmatprep.subr.mxu0 %v3954
        %4512 = vmatpush1.msra.mxu0 %v3953
        %4513 = vmatprep.subr.mxu0 %v3958
        %4514 = vmatpush1.msra.mxu0 %v3957
        %4515 = vmatprep.subr.mxu0 %v3962
        %4516 = vmatpush1.msra.mxu0 %v3961
        %4517 = vmatprep.subr.mxu0 %v3966
        %4518 = vmatpush1.msra.mxu0 %v3965
        %4519 = vmatprep.subr.mxu0 %v3970
        %4520 = vmatpush1.msra.mxu0 %v3969
        %4521 = vmatprep.subr.mxu0 %v3974
        %4522 = vmatpush1.msra.mxu0 %v3973
        %4523 = vmatprep.subr.mxu0 %v3978
        %4524 = vmatpush1.msra.mxu0 %v3977
        %4525 = vmatprep.subr.mxu0 %v3982
        %4526 = vmatpush1.msra.mxu0 %v3981
        %4527 = vmatprep.subr.mxu0 %v3986
        %4528 = vmatpush1.msra.mxu0 %v3985
        %4529 = vmatprep.subr.mxu0 %v3990
        %4530 = vmatpush1.msra.mxu0 %v3989
        %4531 = vmatprep.subr.mxu0 %v3994
        %4532 = vmatpush1.msra.mxu0 %v3993
        %4533 = vmatprep.subr.mxu0 %v3998
        %4534 = vmatpush1.msra.mxu0 %v3997
        %4535 = vmatprep.mubr.f32.mxu0 %v3802
        %4536 = vmatmul.mubr.f32.gmra.mrb[0].mxu0 %v3801
        %v4537 = vpop.f32.mrb[0].mxu0
        %v4538 = vadd.f32 %v4454, %v4537
        %v4539 = vpop.f32.mrb[0].mxu0
        %v4540 = vadd.f32 %v4458, %v4539
        %4541 = vmatprep.mubr.f32.mxu0 %v3811
        %4542 = vmatmul.mubr.f32.gmra.mrb[0].mxu0 %v3810
        %v4543 = vpop.f32.mrb[0].mxu0
        %v4544 = vadd.f32 %v4454, %v4543
        %v4545 = vpop.f32.mrb[0].mxu0
        %v4546 = vadd.f32 %v4458, %v4545
        %4547 = vmatprep.mubr.f32.mxu0 %v3820
        %4548 = vmatmul.mubr.f32.gmra.mrb[0].mxu0 %v3819
        %v4549 = vpop.f32.mrb[0].mxu0
        %v4550 = vadd.f32 %v4454, %v4549
        %v4551 = vpop.f32.mrb[0].mxu0
        %v4552 = vadd.f32 %v4458, %v4551
        %4553 = vmatprep.mubr.f32.mxu0 %v3829
        %4554 = vmatmul.mubr.f32.gmra.mrb[0].mxu0 %v3828
        %v4555 = vpop.f32.mrb[0].mxu0
        %v4556 = vadd.f32 %v4454, %v4555
        %v4557 = vpop.f32.mrb[0].mxu0
        %v4558 = vadd.f32 %v4458, %v4557
        %4559 = vmatprep.mubr.f32.mxu0 %v3838
        %4560 = vmatmul.mubr.f32.gmra.mrb[0].mxu0 %v3837
        %v4561 = vpop.f32.mrb[0].mxu0
        %v4562 = vadd.f32 %v4454, %v4561
        %v4563 = vpop.f32.mrb[0].mxu0
        %v4564 = vadd.f32 %v4458, %v4563
        %4565 = vmatprep.mubr.f32.mxu0 %v3847
        %4566 = vmatmul.mubr.f32.gmra.mrb[0].mxu0 %v3846
        %v4567 = vpop.f32.mrb[0].mxu0
        %v4568 = vadd.f32 %v4454, %v4567
        %v4569 = vpop.f32.mrb[0].mxu0
        %v4570 = vadd.f32 %v4458, %v4569
        %4571 = vmatprep.mubr.f32.mxu0 %v3856
        %4572 = vmatmul.mubr.f32.gmra.mrb[0].mxu0 %v3855
        %v4573 = vpop.f32.mrb[0].mxu0
        %v4574 = vadd.f32 %v4454, %v4573
        %v4575 = vpop.f32.mrb[0].mxu0
        %v4576 = vadd.f32 %v4458, %v4575
        %4577 = vmatprep.mubr.f32.mxu0 %v3865
        %4578 = vmatmul.mubr.f32.gmra.mrb[0].mxu0 %v3864
        %v4579 = vpop.f32.mrb[0].mxu0
        %v4580 = vadd.f32 %v4454, %v4579
        %v4581 = vpop.f32.mrb[0].mxu0
        %v4582 = vadd.f32 %v4458, %v4581
        %4583 = vdwg.mxu0
        %4584 = vmatprep.subr.mxu0 %v4002
        %4585 = vmatpush1.msra.mxu0 %v4001
        %4586 = vmatprep.subr.mxu0 %v4006
        %4587 = vmatpush1.msra.mxu0 %v4005
        %4588 = vmatprep.subr.mxu0 %v4010
        %4589 = vmatpush1.msra.mxu0 %v4009
        %4590 = vmatprep.subr.mxu0 %v4014
        %4591 = vmatpush1.msra.mxu0 %v4013
        %4592 = vmatprep.subr.mxu0 %v4018
        %4593 = vmatpush1.msra.mxu0 %v4017
        %4594 = vmatprep.subr.mxu0 %v4022
        %4595 = vmatpush1.msra.mxu0 %v4021
        %4596 = vmatprep.subr.mxu0 %v4026
        %4597 = vmatpush1.msra.mxu0 %v4025
        %4598 = vmatprep.subr.mxu0 %v4030
        %4599 = vmatpush1.msra.mxu0 %v4029
        %4600 = vmatprep.subr.mxu0 %v4034
        %4601 = vmatpush1.msra.mxu0 %v4033
        %4602 = vmatprep.subr.mxu0 %v4038
        %4603 = vmatpush1.msra.mxu0 %v4037
        %4604 = vmatprep.subr.mxu0 %v4042
        %4605 = vmatpush1.msra.mxu0 %v4041
        %4606 = vmatprep.subr.mxu0 %v4046
        %4607 = vmatpush1.msra.mxu0 %v4045
        %4608 = vmatprep.subr.mxu0 %v4050
        %4609 = vmatpush1.msra.mxu0 %v4049
        %4610 = vmatprep.subr.mxu0 %v4054
        %4611 = vmatpush1.msra.mxu0 %v4053
        %4612 = vmatprep.subr.mxu0 %v4058
        %4613 = vmatpush1.msra.mxu0 %v4057
        %4614 = vmatprep.subr.mxu0 %v4062
        %4615 = vmatpush1.msra.mxu0 %v4061
        %4616 = vmatprep.subr.mxu0 %v4066
        %4617 = vmatpush1.msra.mxu0 %v4065
        %4618 = vmatprep.subr.mxu0 %v4070
        %4619 = vmatpush1.msra.mxu0 %v4069
        %4620 = vmatprep.subr.mxu0 %v4074
        %4621 = vmatpush1.msra.mxu0 %v4073
        %4622 = vmatprep.subr.mxu0 %v4078
        %4623 = vmatpush1.msra.mxu0 %v4077
        %4624 = vmatprep.subr.mxu0 %v4082
        %4625 = vmatpush1.msra.mxu0 %v4081
        %4626 = vmatprep.subr.mxu0 %v4086
        %4627 = vmatpush1.msra.mxu0 %v4085
        %4628 = vmatprep.subr.mxu0 %v4090
        %4629 = vmatpush1.msra.mxu0 %v4089
        %4630 = vmatprep.subr.mxu0 %v4094
        %4631 = vmatpush1.msra.mxu0 %v4093
        %4632 = vmatprep.subr.mxu0 %v4098
        %4633 = vmatpush1.msra.mxu0 %v4097
        %4634 = vmatprep.subr.mxu0 %v4102
        %4635 = vmatpush1.msra.mxu0 %v4101
        %4636 = vmatprep.subr.mxu0 %v4106
        %4637 = vmatpush1.msra.mxu0 %v4105
        %4638 = vmatprep.subr.mxu0 %v4110
        %4639 = vmatpush1.msra.mxu0 %v4109
        %4640 = vmatprep.subr.mxu0 %v4114
        %4641 = vmatpush1.msra.mxu0 %v4113
        %4642 = vmatprep.subr.mxu0 %v4118
        %4643 = vmatpush1.msra.mxu0 %v4117
        %4644 = vmatprep.subr.mxu0 %v4122
        %4645 = vmatpush1.msra.mxu0 %v4121
        %4646 = vmatprep.subr.mxu0 %v4126
        %4647 = vmatpush1.msra.mxu0 %v4125
        %4648 = vmatprep.mubr.f32.mxu0 %v3804
        %4649 = vmatmul.mubr.f32.gmra.mrb[0].mxu0 %v3803
        %v4650 = vpop.f32.mrb[0].mxu0
        %v4651 = vadd.f32 %v4538, %v4650
        %v4652 = vpop.f32.mrb[0].mxu0
        %v4653 = vadd.f32 %v4540, %v4652
        %4654 = vmatprep.mubr.f32.mxu0 %v3813
        %4655 = vmatmul.mubr.f32.gmra.mrb[0].mxu0 %v3812
        %v4656 = vpop.f32.mrb[0].mxu0
        %v4657 = vadd.f32 %v4544, %v4656
        %v4658 = vpop.f32.mrb[0].mxu0
        %v4659 = vadd.f32 %v4546, %v4658
        %4660 = vmatprep.mubr.f32.mxu0 %v3822
        %4661 = vmatmul.mubr.f32.gmra.mrb[0].mxu0 %v3821
        %v4662 = vpop.f32.mrb[0].mxu0
        %v4663 = vadd.f32 %v4550, %v4662
        %v4664 = vpop.f32.mrb[0].mxu0
        %v4665 = vadd.f32 %v4552, %v4664
        %4666 = vmatprep.mubr.f32.mxu0 %v3831
        %4667 = vmatmul.mubr.f32.gmra.mrb[0].mxu0 %v3830
        %v4668 = vpop.f32.mrb[0].mxu0
        %v4669 = vadd.f32 %v4556, %v4668
        %v4670 = vpop.f32.mrb[0].mxu0
        %v4671 = vadd.f32 %v4558, %v4670
        %4672 = vmatprep.mubr.f32.mxu0 %v3840
        %4673 = vmatmul.mubr.f32.gmra.mrb[0].mxu0 %v3839
        %v4674 = vpop.f32.mrb[0].mxu0
        %v4675 = vadd.f32 %v4562, %v4674
        %v4676 = vpop.f32.mrb[0].mxu0
        %v4677 = vadd.f32 %v4564, %v4676
        %4678 = vmatprep.mubr.f32.mxu0 %v3849
        %4679 = vmatmul.mubr.f32.gmra.mrb[0].mxu0 %v3848
        %v4680 = vpop.f32.mrb[0].mxu0
        %v4681 = vadd.f32 %v4568, %v4680
        %v4682 = vpop.f32.mrb[0].mxu0
        %v4683 = vadd.f32 %v4570, %v4682
        %4684 = vmatprep.mubr.f32.mxu0 %v3858
        %4685 = vmatmul.mubr.f32.gmra.mrb[0].mxu0 %v3857
        %v4686 = vpop.f32.mrb[0].mxu0
        %v4687 = vadd.f32 %v4574, %v4686
        %v4688 = vpop.f32.mrb[0].mxu0
        %v4689 = vadd.f32 %v4576, %v4688
        %4690 = vmatprep.mubr.f32.mxu0 %v3867
        %4691 = vmatmul.mubr.f32.gmra.mrb[0].mxu0 %v3866
        %v4692 = vpop.f32.mrb[0].mxu0
        %v4693 = vadd.f32 %v4580, %v4692
        %v4694 = vpop.f32.mrb[0].mxu0
        %v4695 = vadd.f32 %v4582, %v4694
        %4696 = vdwg.mxu0
        %4697 = vmatprep.subr.mxu0 %v4130
        %4698 = vmatpush1.msra.mxu0 %v4129
        %4699 = vmatprep.subr.mxu0 %v4134
        %4700 = vmatpush1.msra.mxu0 %v4133
        %4701 = vmatprep.subr.mxu0 %v4138
        %4702 = vmatpush1.msra.mxu0 %v4137
        %4703 = vmatprep.subr.mxu0 %v4142
        %4704 = vmatpush1.msra.mxu0 %v4141
        %4705 = vmatprep.subr.mxu0 %v4146
        %4706 = vmatpush1.msra.mxu0 %v4145
        %4707 = vmatprep.subr.mxu0 %v4150
        %4708 = vmatpush1.msra.mxu0 %v4149
        %4709 = vmatprep.subr.mxu0 %v4154
        %4710 = vmatpush1.msra.mxu0 %v4153
        %4711 = vmatprep.subr.mxu0 %v4158
        %4712 = vmatpush1.msra.mxu0 %v4157
        %4713 = vmatprep.subr.mxu0 %v4162
        %4714 = vmatpush1.msra.mxu0 %v4161
        %4715 = vmatprep.subr.mxu0 %v4166
        %4716 = vmatpush1.msra.mxu0 %v4165
        %4717 = vmatprep.subr.mxu0 %v4170
        %4718 = vmatpush1.msra.mxu0 %v4169
        %4719 = vmatprep.subr.mxu0 %v4174
        %4720 = vmatpush1.msra.mxu0 %v4173
        %4721 = vmatprep.subr.mxu0 %v4178
        %4722 = vmatpush1.msra.mxu0 %v4177
        %4723 = vmatprep.subr.mxu0 %v4182
        %4724 = vmatpush1.msra.mxu0 %v4181
        %4725 = vmatprep.subr.mxu0 %v4186
        %4726 = vmatpush1.msra.mxu0 %v4185
        %4727 = vmatprep.subr.mxu0 %v4190
        %4728 = vmatpush1.msra.mxu0 %v4189
        %4729 = vmatprep.subr.mxu0 %v4194
        %4730 = vmatpush1.msra.mxu0 %v4193
        %4731 = vmatprep.subr.mxu0 %v4198
        %4732 = vmatpush1.msra.mxu0 %v4197
        %4733 = vmatprep.subr.mxu0 %v4202
        %4734 = vmatpush1.msra.mxu0 %v4201
        %4735 = vmatprep.subr.mxu0 %v4206
        %4736 = vmatpush1.msra.mxu0 %v4205
        %4737 = vmatprep.subr.mxu0 %v4210
        %4738 = vmatpush1.msra.mxu0 %v4209
        %4739 = vmatprep.subr.mxu0 %v4214
        %4740 = vmatpush1.msra.mxu0 %v4213
        %4741 = vmatprep.subr.mxu0 %v4218
        %4742 = vmatpush1.msra.mxu0 %v4217
        %4743 = vmatprep.subr.mxu0 %v4222
        %4744 = vmatpush1.msra.mxu0 %v4221
        %4745 = vmatprep.subr.mxu0 %v4226
        %4746 = vmatpush1.msra.mxu0 %v4225
        %4747 = vmatprep.subr.mxu0 %v4230
        %4748 = vmatpush1.msra.mxu0 %v4229
        %4749 = vmatprep.subr.mxu0 %v4234
        %4750 = vmatpush1.msra.mxu0 %v4233
        %4751 = vmatprep.subr.mxu0 %v4238
        %4752 = vmatpush1.msra.mxu0 %v4237
        %4753 = vmatprep.subr.mxu0 %v4242
        %4754 = vmatpush1.msra.mxu0 %v4241
        %4755 = vmatprep.subr.mxu0 %v4246
        %4756 = vmatpush1.msra.mxu0 %v4245
        %4757 = vmatprep.subr.mxu0 %v4250
        %4758 = vmatpush1.msra.mxu0 %v4249
        %4759 = vmatprep.subr.mxu0 %v4254
        %4760 = vmatpush1.msra.mxu0 %v4253
        %4761 = vmatprep.mubr.f32.mxu0 %v3806
        %4762 = vmatmul.mubr.f32.gmra.mrb[0].mxu0 %v3805
        %v4763 = vpop.f32.mrb[0].mxu0
        %v4764 = vadd.f32 %v4651, %v4763
        %v4765 = vpop.f32.mrb[0].mxu0
        %v4766 = vadd.f32 %v4653, %v4765
        %4767 = vmatprep.mubr.f32.mxu0 %v3815
        %4768 = vmatmul.mubr.f32.gmra.mrb[0].mxu0 %v3814
        %v4769 = vpop.f32.mrb[0].mxu0
        %v4770 = vadd.f32 %v4657, %v4769
        %v4771 = vpop.f32.mrb[0].mxu0
        %v4772 = vadd.f32 %v4659, %v4771
        %4773 = vmatprep.mubr.f32.mxu0 %v3824
        %4774 = vmatmul.mubr.f32.gmra.mrb[0].mxu0 %v3823
        %v4775 = vpop.f32.mrb[0].mxu0
        %v4776 = vadd.f32 %v4663, %v4775
        %v4777 = vpop.f32.mrb[0].mxu0
        %v4778 = vadd.f32 %v4665, %v4777
        %4779 = vmatprep.mubr.f32.mxu0 %v3833
        %4780 = vmatmul.mubr.f32.gmra.mrb[0].mxu0 %v3832
        %v4781 = vpop.f32.mrb[0].mxu0
        %v4782 = vadd.f32 %v4669, %v4781
        %v4783 = vpop.f32.mrb[0].mxu0
        %v4784 = vadd.f32 %v4671, %v4783
        %4785 = vmatprep.mubr.f32.mxu0 %v3842
        %4786 = vmatmul.mubr.f32.gmra.mrb[0].mxu0 %v3841
        %v4787 = vpop.f32.mrb[0].mxu0
        %v4788 = vadd.f32 %v4675, %v4787
        %v4789 = vpop.f32.mrb[0].mxu0
        %v4790 = vadd.f32 %v4677, %v4789
        %4791 = vmatprep.mubr.f32.mxu0 %v3851
        %4792 = vmatmul.mubr.f32.gmra.mrb[0].mxu0 %v3850
        %v4793 = vpop.f32.mrb[0].mxu0
        %v4794 = vadd.f32 %v4681, %v4793
        %v4795 = vpop.f32.mrb[0].mxu0
        %v4796 = vadd.f32 %v4683, %v4795
        %4797 = vmatprep.mubr.f32.mxu0 %v3860
        %4798 = vmatmul.mubr.f32.gmra.mrb[0].mxu0 %v3859
        %v4799 = vpop.f32.mrb[0].mxu0
        %v4800 = vadd.f32 %v4687, %v4799
        %v4801 = vpop.f32.mrb[0].mxu0
        %v4802 = vadd.f32 %v4689, %v4801
        %4803 = vmatprep.mubr.f32.mxu0 %v3869
        %4804 = vmatmul.mubr.f32.gmra.mrb[0].mxu0 %v3868
        %v4805 = vpop.f32.mrb[0].mxu0
        %v4806 = vadd.f32 %v4693, %v4805
        %v4807 = vpop.f32.mrb[0].mxu0
        %v4808 = vadd.f32 %v4695, %v4807
        %4809 = vdwg.mxu0
        %4810 = vmatprep.subr.mxu0 %v4258
        %4811 = vmatpush1.msra.mxu0 %v4257
        %4812 = vmatprep.subr.mxu0 %v4262
        %4813 = vmatpush1.msra.mxu0 %v4261
        %4814 = vmatprep.subr.mxu0 %v4266
        %4815 = vmatpush1.msra.mxu0 %v4265
        %4816 = vmatprep.subr.mxu0 %v4270
        %4817 = vmatpush1.msra.mxu0 %v4269
        %4818 = vmatprep.subr.mxu0 %v4274
        %4819 = vmatpush1.msra.mxu0 %v4273
        %4820 = vmatprep.subr.mxu0 %v4278
        %4821 = vmatpush1.msra.mxu0 %v4277
        %4822 = vmatprep.subr.mxu0 %v4282
        %4823 = vmatpush1.msra.mxu0 %v4281
        %4824 = vmatprep.subr.mxu0 %v4286
        %4825 = vmatpush1.msra.mxu0 %v4285
        %4826 = vmatprep.subr.mxu0 %v4290
        %4827 = vmatpush1.msra.mxu0 %v4289
        %4828 = vmatprep.subr.mxu0 %v4294
        %4829 = vmatpush1.msra.mxu0 %v4293
        %4830 = vmatprep.subr.mxu0 %v4298
        %4831 = vmatpush1.msra.mxu0 %v4297
        %4832 = vmatprep.subr.mxu0 %v4302
        %4833 = vmatpush1.msra.mxu0 %v4301
        %4834 = vmatprep.subr.mxu0 %v4306
        %4835 = vmatpush1.msra.mxu0 %v4305
        %4836 = vmatprep.subr.mxu0 %v4310
        %4837 = vmatpush1.msra.mxu0 %v4309
        %4838 = vmatprep.subr.mxu0 %v4314
        %4839 = vmatpush1.msra.mxu0 %v4313
        %4840 = vmatprep.subr.mxu0 %v4318
        %4841 = vmatpush1.msra.mxu0 %v4317
        %4842 = vmatprep.subr.mxu0 %v4322
        %4843 = vmatpush1.msra.mxu0 %v4321
        %4844 = vmatprep.subr.mxu0 %v4326
        %4845 = vmatpush1.msra.mxu0 %v4325
        %4846 = vmatprep.subr.mxu0 %v4330
        %4847 = vmatpush1.msra.mxu0 %v4329
        %4848 = vmatprep.subr.mxu0 %v4334
        %4849 = vmatpush1.msra.mxu0 %v4333
        %4850 = vmatprep.subr.mxu0 %v4338
        %4851 = vmatpush1.msra.mxu0 %v4337
        %4852 = vmatprep.subr.mxu0 %v4342
        %4853 = vmatpush1.msra.mxu0 %v4341
        %4854 = vmatprep.subr.mxu0 %v4346
        %4855 = vmatpush1.msra.mxu0 %v4345
        %4856 = vmatprep.subr.mxu0 %v4350
        %4857 = vmatpush1.msra.mxu0 %v4349
        %4858 = vmatprep.subr.mxu0 %v4354
        %4859 = vmatpush1.msra.mxu0 %v4353
        %4860 = vmatprep.subr.mxu0 %v4358
        %4861 = vmatpush1.msra.mxu0 %v4357
        %4862 = vmatprep.subr.mxu0 %v4362
        %4863 = vmatpush1.msra.mxu0 %v4361
        %4864 = vmatprep.subr.mxu0 %v4366
        %4865 = vmatpush1.msra.mxu0 %v4365
        %4866 = vmatprep.subr.mxu0 %v4370
        %4867 = vmatpush1.msra.mxu0 %v4369
        %4868 = vmatprep.subr.mxu0 %v4374
        %4869 = vmatpush1.msra.mxu0 %v4373
        %4870 = vmatprep.subr.mxu0 %v4378
        %4871 = vmatpush1.msra.mxu0 %v4377
        %4872 = vmatprep.subr.mxu0 %v4382
        %4873 = vmatpush1.msra.mxu0 %v4381
        %4874 = vmatprep.mubr.f32.mxu0 %v3808
        %4875 = vmatmul.mubr.f32.gmra.mrb[0].mxu0 %v3807
        %v4876 = vpop.f32.mrb[0].mxu0
        %v4877 = vadd.f32 %v4764, %v4876
        %v4878 = vpop.f32.mrb[0].mxu0
        %v4879 = vadd.f32 %v4766, %v4878
        %4880 = vmatprep.mubr.f32.mxu0 %v3817
        %4881 = vmatmul.mubr.f32.gmra.mrb[0].mxu0 %v3816
        %v4882 = vpop.f32.mrb[0].mxu0
        %v4883 = vadd.f32 %v4770, %v4882
        %v4884 = vpop.f32.mrb[0].mxu0
        %v4885 = vadd.f32 %v4772, %v4884
        %4886 = vmatprep.mubr.f32.mxu0 %v3826
        %4887 = vmatmul.mubr.f32.gmra.mrb[0].mxu0 %v3825
        %v4888 = vpop.f32.mrb[0].mxu0
        %v4889 = vadd.f32 %v4776, %v4888
        %v4890 = vpop.f32.mrb[0].mxu0
        %v4891 = vadd.f32 %v4778, %v4890
        %4892 = vmatprep.mubr.f32.mxu0 %v3835
        %4893 = vmatmul.mubr.f32.gmra.mrb[0].mxu0 %v3834
        %v4894 = vpop.f32.mrb[0].mxu0
        %v4895 = vadd.f32 %v4782, %v4894
        %v4896 = vpop.f32.mrb[0].mxu0
        %v4897 = vadd.f32 %v4784, %v4896
        %4898 = vmatprep.mubr.f32.mxu0 %v3844
        %4899 = vmatmul.mubr.f32.gmra.mrb[0].mxu0 %v3843
        %v4900 = vpop.f32.mrb[0].mxu0
        %v4901 = vadd.f32 %v4788, %v4900
        %v4902 = vpop.f32.mrb[0].mxu0
        %v4903 = vadd.f32 %v4790, %v4902
        %4904 = vmatprep.mubr.f32.mxu0 %v3853
        %4905 = vmatmul.mubr.f32.gmra.mrb[0].mxu0 %v3852
        %v4906 = vpop.f32.mrb[0].mxu0
        %v4907 = vadd.f32 %v4794, %v4906
        %v4908 = vpop.f32.mrb[0].mxu0
        %v4909 = vadd.f32 %v4796, %v4908
        %4910 = vmatprep.mubr.f32.mxu0 %v3862
        %4911 = vmatmul.mubr.f32.gmra.mrb[0].mxu0 %v3861
        %v4912 = vpop.f32.mrb[0].mxu0
        %v4913 = vadd.f32 %v4800, %v4912
        %v4914 = vpop.f32.mrb[0].mxu0
        %v4915 = vadd.f32 %v4802, %v4914
        %4916 = vmatprep.mubr.f32.mxu0 %v3871
        %4917 = vmatmul.mubr.f32.gmra.mrb[0].mxu0 %v3870
        %v4918 = vpop.f32.mrb[0].mxu0
        %v4919 = vadd.f32 %v4806, %v4918
        %v4920 = vpop.f32.mrb[0].mxu0
        %v4921 = vadd.f32 %v4808, %v4920
        %4922 = vdwg.mxu0
        %4923 = vmatprep.subr.mxu0 %v4386
        %4924 = vmatpush1.msra.mxu0 %v4385
        %4925 = vmatprep.subr.mxu0 %v4390
        %4926 = vmatpush1.msra.mxu0 %v4389
        %4927 = vmatprep.subr.mxu0 %v4394
        %4928 = vmatpush1.msra.mxu0 %v4393
        %4929 = vmatprep.subr.mxu0 %v4398
        %4930 = vmatpush1.msra.mxu0 %v4397
        %4931 = vmatprep.subr.mxu0 %v4402
        %4932 = vmatpush1.msra.mxu0 %v4401
        %4933 = vmatprep.subr.mxu0 %v4406
        %4934 = vmatpush1.msra.mxu0 %v4405
        %4935 = vmatprep.subr.mxu0 %v4410
        %4936 = vmatpush1.msra.mxu0 %v4409
        %4937 = vmatprep.subr.mxu0 %v4414
        %4938 = vmatpush1.msra.mxu0 %v4413
        %4939 = vmatprep.subr.mxu0 %v4418
        %4940 = vmatpush1.msra.mxu0 %v4417
        %4941 = vmatprep.subr.mxu0 %v4422
        %4942 = vmatpush1.msra.mxu0 %v4421
        %4943 = vmatprep.subr.mxu0 %v4426
        %4944 = vmatpush1.msra.mxu0 %v4425
        %4945 = vmatprep.subr.mxu0 %v4430
        %4946 = vmatpush1.msra.mxu0 %v4429
        %4947 = vmatprep.subr.mxu0 %v4434
        %4948 = vmatpush1.msra.mxu0 %v4433
        %4949 = vmatprep.subr.mxu0 %v4438
        %4950 = vmatpush1.msra.mxu0 %v4437
        %4951 = vmatprep.subr.mxu0 %v4442
        %4952 = vmatpush1.msra.mxu0 %v4441
        %4953 = vmatprep.subr.mxu0 %v4446
        %4954 = vmatpush1.msra.mxu0 %v4445
        %4955 = vmatprep.subr.mxu0 0.0
        %4956 = vmatpush1.msra.mxu0 0.0
        %4957 = vmatprep.subr.mxu0 0.0
        %4958 = vmatpush1.msra.mxu0 0.0
        %4959 = vmatprep.subr.mxu0 0.0
        %4960 = vmatpush1.msra.mxu0 0.0
        %4961 = vmatprep.subr.mxu0 0.0
        %4962 = vmatpush1.msra.mxu0 0.0
        %4963 = vmatprep.subr.mxu0 0.0
        %4964 = vmatpush1.msra.mxu0 0.0
        %4965 = vmatprep.subr.mxu0 0.0
        %4966 = vmatpush1.msra.mxu0 0.0
        %4967 = vmatprep.subr.mxu0 0.0
        %4968 = vmatpush1.msra.mxu0 0.0
        %4969 = vmatprep.subr.mxu0 0.0
        %4970 = vmatpush1.msra.mxu0 0.0
        %4971 = vmatprep.subr.mxu0 0.0
        %4972 = vmatpush1.msra.mxu0 0.0
        %4973 = vmatprep.subr.mxu0 0.0
        %4974 = vmatpush1.msra.mxu0 0.0
        %4975 = vmatprep.subr.mxu0 0.0
        %4976 = vmatpush1.msra.mxu0 0.0
        %4977 = vmatprep.subr.mxu0 0.0
        %4978 = vmatpush1.msra.mxu0 0.0
        %4979 = vmatprep.subr.mxu0 0.0
        %4980 = vmatpush1.msra.mxu0 0.0
        %4981 = vmatprep.subr.mxu0 0.0
        %4982 = vmatpush1.msra.mxu0 0.0
        %4983 = vmatprep.subr.mxu0 0.0
        %4984 = vmatpush1.msra.mxu0 0.0
        %4985 = vmatprep.subr.mxu0 0.0
        %4986 = vmatpush1.msra.mxu0 0.0
        %4987 = vmatprep.mubr.f32.mxu0 0.0
        %4988 = vmatmul.mubr.f32.gmra.mrb[0].mxu0 %v3809
        %v4989 = vpop.f32.mrb[0].mxu0
        %v4990 = vadd.f32 %v4877, %v4989
        %v4991 = vpop.f32.mrb[0].mxu0
        %v4992 = vadd.f32 %v4879, %v4991
        %4993 = vmatprep.mubr.f32.mxu0 0.0
        %4994 = vmatmul.mubr.f32.gmra.mrb[0].mxu0 %v3818
        %v4995 = vpop.f32.mrb[0].mxu0
        %v4996 = vadd.f32 %v4883, %v4995
        %v4997 = vpop.f32.mrb[0].mxu0
        %v4998 = vadd.f32 %v4885, %v4997
        %4999 = vmatprep.mubr.f32.mxu0 0.0
        %5000 = vmatmul.mubr.f32.gmra.mrb[0].mxu0 %v3827
        %v5001 = vpop.f32.mrb[0].mxu0
        %v5002 = vadd.f32 %v4889, %v5001
        %v5003 = vpop.f32.mrb[0].mxu0
        %v5004 = vadd.f32 %v4891, %v5003
        %5005 = vmatprep.mubr.f32.mxu0 0.0
        %5006 = vmatmul.mubr.f32.gmra.mrb[0].mxu0 %v3836
        %v5007 = vpop.f32.mrb[0].mxu0
        %v5008 = vadd.f32 %v4895, %v5007
        %v5009 = vpop.f32.mrb[0].mxu0
        %v5010 = vadd.f32 %v4897, %v5009
        %5011 = vmatprep.mubr.f32.mxu0 0.0
        %5012 = vmatmul.mubr.f32.gmra.mrb[0].mxu0 %v3845
        %v5013 = vpop.f32.mrb[0].mxu0
        %v5014 = vadd.f32 %v4901, %v5013
        %v5015 = vpop.f32.mrb[0].mxu0
        %v5016 = vadd.f32 %v4903, %v5015
        %5017 = vmatprep.mubr.f32.mxu0 0.0
        %5018 = vmatmul.mubr.f32.gmra.mrb[0].mxu0 %v3854
        %v5019 = vpop.f32.mrb[0].mxu0
        %v5020 = vadd.f32 %v4907, %v5019
        %v5021 = vpop.f32.mrb[0].mxu0
        %v5022 = vadd.f32 %v4909, %v5021
        %5023 = vmatprep.mubr.f32.mxu0 0.0
        %5024 = vmatmul.mubr.f32.gmra.mrb[0].mxu0 %v3863
        %v5025 = vpop.f32.mrb[0].mxu0
        %v5026 = vadd.f32 %v4913, %v5025
        %v5027 = vpop.f32.mrb[0].mxu0
        %v5028 = vadd.f32 %v4915, %v5027
        %5029 = vmatprep.mubr.f32.mxu0 0.0
        %5030 = vmatmul.mubr.f32.gmra.mrb[0].mxu0 %v3872
        %v5031 = vpop.f32.mrb[0].mxu0
        %v5032 = vadd.f32 %v4919, %v5031
        %v5033 = vpop.f32.mrb[0].mxu0
        %v5034 = vadd.f32 %v4921, %v5033
        %5035 = vdwg.mxu0
        %5036 = vmatprep.subr.mxu0 %v3876
        %5037 = vmatpush1.msra.mxu0 %v3875
        %5038 = vmatprep.subr.mxu0 %v3880
        %5039 = vmatpush1.msra.mxu0 %v3879
        %5040 = vmatprep.subr.mxu0 %v3884
        %5041 = vmatpush1.msra.mxu0 %v3883
        %5042 = vmatprep.subr.mxu0 %v3888
        %5043 = vmatpush1.msra.mxu0 %v3887
        %5044 = vmatprep.subr.mxu0 %v3892
        %5045 = vmatpush1.msra.mxu0 %v3891
        %5046 = vmatprep.subr.mxu0 %v3896
        %5047 = vmatpush1.msra.mxu0 %v3895
        %5048 = vmatprep.subr.mxu0 %v3900
        %5049 = vmatpush1.msra.mxu0 %v3899
        %5050 = vmatprep.subr.mxu0 %v3904
        %5051 = vmatpush1.msra.mxu0 %v3903
        %5052 = vmatprep.subr.mxu0 %v3908
        %5053 = vmatpush1.msra.mxu0 %v3907
        %5054 = vmatprep.subr.mxu0 %v3912
        %5055 = vmatpush1.msra.mxu0 %v3911
        %5056 = vmatprep.subr.mxu0 %v3916
        %5057 = vmatpush1.msra.mxu0 %v3915
        %5058 = vmatprep.subr.mxu0 %v3920
        %5059 = vmatpush1.msra.mxu0 %v3919
        %5060 = vmatprep.subr.mxu0 %v3924
        %5061 = vmatpush1.msra.mxu0 %v3923
        %5062 = vmatprep.subr.mxu0 %v3928
        %5063 = vmatpush1.msra.mxu0 %v3927
        %5064 = vmatprep.subr.mxu0 %v3932
        %5065 = vmatpush1.msra.mxu0 %v3931
        %5066 = vmatprep.subr.mxu0 %v3936
        %5067 = vmatpush1.msra.mxu0 %v3935
        %5068 = vmatprep.subr.mxu0 %v3940
        %5069 = vmatpush1.msra.mxu0 %v3939
        %5070 = vmatprep.subr.mxu0 %v3944
        %5071 = vmatpush1.msra.mxu0 %v3943
        %5072 = vmatprep.subr.mxu0 %v3948
        %5073 = vmatpush1.msra.mxu0 %v3947
        %5074 = vmatprep.subr.mxu0 %v3952
        %5075 = vmatpush1.msra.mxu0 %v3951
        %5076 = vmatprep.subr.mxu0 %v3956
        %5077 = vmatpush1.msra.mxu0 %v3955
        %5078 = vmatprep.subr.mxu0 %v3960
        %5079 = vmatpush1.msra.mxu0 %v3959
        %5080 = vmatprep.subr.mxu0 %v3964
        %5081 = vmatpush1.msra.mxu0 %v3963
        %5082 = vmatprep.subr.mxu0 %v3968
        %5083 = vmatpush1.msra.mxu0 %v3967
        %5084 = vmatprep.subr.mxu0 %v3972
        %5085 = vmatpush1.msra.mxu0 %v3971
        %5086 = vmatprep.subr.mxu0 %v3976
        %5087 = vmatpush1.msra.mxu0 %v3975
        %5088 = vmatprep.subr.mxu0 %v3980
        %5089 = vmatpush1.msra.mxu0 %v3979
        %5090 = vmatprep.subr.mxu0 %v3984
        %5091 = vmatpush1.msra.mxu0 %v3983
        %5092 = vmatprep.subr.mxu0 %v3988
        %5093 = vmatpush1.msra.mxu0 %v3987
        %5094 = vmatprep.subr.mxu0 %v3992
        %5095 = vmatpush1.msra.mxu0 %v3991
        %5096 = vmatprep.subr.mxu0 %v3996
        %5097 = vmatpush1.msra.mxu0 %v3995
        %5098 = vmatprep.subr.mxu0 %v4000
        %5099 = vmatpush1.msra.mxu0 %v3999
        %5100 = vmatprep.mubr.f32.mxu0 %v3802
        %5101 = vmatmul.mubr.f32.gmra.mrb[0].mxu0 %v3801
        %v5102 = vpop.f32.mrb[0].mxu0
        %v5103 = vadd.f32 %v4462, %v5102
        %v5104 = vpop.f32.mrb[0].mxu0
        %v5105 = vadd.f32 %v4466, %v5104
        %5106 = vmatprep.mubr.f32.mxu0 %v3811
        %5107 = vmatmul.mubr.f32.gmra.mrb[0].mxu0 %v3810
        %v5108 = vpop.f32.mrb[0].mxu0
        %v5109 = vadd.f32 %v4462, %v5108
        %v5110 = vpop.f32.mrb[0].mxu0
        %v5111 = vadd.f32 %v4466, %v5110
        %5112 = vmatprep.mubr.f32.mxu0 %v3820
        %5113 = vmatmul.mubr.f32.gmra.mrb[0].mxu0 %v3819
        %v5114 = vpop.f32.mrb[0].mxu0
        %v5115 = vadd.f32 %v4462, %v5114
        %v5116 = vpop.f32.mrb[0].mxu0
        %v5117 = vadd.f32 %v4466, %v5116
        %5118 = vmatprep.mubr.f32.mxu0 %v3829
        %5119 = vmatmul.mubr.f32.gmra.mrb[0].mxu0 %v3828
        %v5120 = vpop.f32.mrb[0].mxu0
        %v5121 = vadd.f32 %v4462, %v5120
        %v5122 = vpop.f32.mrb[0].mxu0
        %v5123 = vadd.f32 %v4466, %v5122
        %5124 = vmatprep.mubr.f32.mxu0 %v3838
        %5125 = vmatmul.mubr.f32.gmra.mrb[0].mxu0 %v3837
        %v5126 = vpop.f32.mrb[0].mxu0
        %v5127 = vadd.f32 %v4462, %v5126
        %v5128 = vpop.f32.mrb[0].mxu0
        %v5129 = vadd.f32 %v4466, %v5128
        %5130 = vmatprep.mubr.f32.mxu0 %v3847
        %5131 = vmatmul.mubr.f32.gmra.mrb[0].mxu0 %v3846
        %v5132 = vpop.f32.mrb[0].mxu0
        %v5133 = vadd.f32 %v4462, %v5132
        %v5134 = vpop.f32.mrb[0].mxu0
        %v5135 = vadd.f32 %v4466, %v5134
        %5136 = vmatprep.mubr.f32.mxu0 %v3856
        %5137 = vmatmul.mubr.f32.gmra.mrb[0].mxu0 %v3855
        %v5138 = vpop.f32.mrb[0].mxu0
        %v5139 = vadd.f32 %v4462, %v5138
        %v5140 = vpop.f32.mrb[0].mxu0
        %v5141 = vadd.f32 %v4466, %v5140
        %5142 = vmatprep.mubr.f32.mxu0 %v3865
        %5143 = vmatmul.mubr.f32.gmra.mrb[0].mxu0 %v3864
        %v5144 = vpop.f32.mrb[0].mxu0
        %v5145 = vadd.f32 %v4462, %v5144
        %v5146 = vpop.f32.mrb[0].mxu0
        %v5147 = vadd.f32 %v4466, %v5146
        %5148 = vdwg.mxu0
        %5149 = vmatprep.subr.mxu0 %v4004
        %5150 = vmatpush1.msra.mxu0 %v4003
        %5151 = vmatprep.subr.mxu0 %v4008
        %5152 = vmatpush1.msra.mxu0 %v4007
        %5153 = vmatprep.subr.mxu0 %v4012
        %5154 = vmatpush1.msra.mxu0 %v4011
        %5155 = vmatprep.subr.mxu0 %v4016
        %5156 = vmatpush1.msra.mxu0 %v4015
        %5157 = vmatprep.subr.mxu0 %v4020
        %5158 = vmatpush1.msra.mxu0 %v4019
        %5159 = vmatprep.subr.mxu0 %v4024
        %5160 = vmatpush1.msra.mxu0 %v4023
        %5161 = vmatprep.subr.mxu0 %v4028
        %5162 = vmatpush1.msra.mxu0 %v4027
        %5163 = vmatprep.subr.mxu0 %v4032
        %5164 = vmatpush1.msra.mxu0 %v4031
        %5165 = vmatprep.subr.mxu0 %v4036
        %5166 = vmatpush1.msra.mxu0 %v4035
        %5167 = vmatprep.subr.mxu0 %v4040
        %5168 = vmatpush1.msra.mxu0 %v4039
        %5169 = vmatprep.subr.mxu0 %v4044
        %5170 = vmatpush1.msra.mxu0 %v4043
        %5171 = vmatprep.subr.mxu0 %v4048
        %5172 = vmatpush1.msra.mxu0 %v4047
        %5173 = vmatprep.subr.mxu0 %v4052
        %5174 = vmatpush1.msra.mxu0 %v4051
        %5175 = vmatprep.subr.mxu0 %v4056
        %5176 = vmatpush1.msra.mxu0 %v4055
        %5177 = vmatprep.subr.mxu0 %v4060
        %5178 = vmatpush1.msra.mxu0 %v4059
        %5179 = vmatprep.subr.mxu0 %v4064
        %5180 = vmatpush1.msra.mxu0 %v4063
        %5181 = vmatprep.subr.mxu0 %v4068
        %5182 = vmatpush1.msra.mxu0 %v4067
        %5183 = vmatprep.subr.mxu0 %v4072
        %5184 = vmatpush1.msra.mxu0 %v4071
        %5185 = vmatprep.subr.mxu0 %v4076
        %5186 = vmatpush1.msra.mxu0 %v4075
        %5187 = vmatprep.subr.mxu0 %v4080
        %5188 = vmatpush1.msra.mxu0 %v4079
        %5189 = vmatprep.subr.mxu0 %v4084
        %5190 = vmatpush1.msra.mxu0 %v4083
        %5191 = vmatprep.subr.mxu0 %v4088
        %5192 = vmatpush1.msra.mxu0 %v4087
        %5193 = vmatprep.subr.mxu0 %v4092
        %5194 = vmatpush1.msra.mxu0 %v4091
        %5195 = vmatprep.subr.mxu0 %v4096
        %5196 = vmatpush1.msra.mxu0 %v4095
        %5197 = vmatprep.subr.mxu0 %v4100
        %5198 = vmatpush1.msra.mxu0 %v4099
        %5199 = vmatprep.subr.mxu0 %v4104
        %5200 = vmatpush1.msra.mxu0 %v4103
        %5201 = vmatprep.subr.mxu0 %v4108
        %5202 = vmatpush1.msra.mxu0 %v4107
        %5203 = vmatprep.subr.mxu0 %v4112
        %5204 = vmatpush1.msra.mxu0 %v4111
        %5205 = vmatprep.subr.mxu0 %v4116
        %5206 = vmatpush1.msra.mxu0 %v4115
        %5207 = vmatprep.subr.mxu0 %v4120
        %5208 = vmatpush1.msra.mxu0 %v4119
        %5209 = vmatprep.subr.mxu0 %v4124
        %5210 = vmatpush1.msra.mxu0 %v4123
        %5211 = vmatprep.subr.mxu0 %v4128
        %5212 = vmatpush1.msra.mxu0 %v4127
        %5213 = vmatprep.mubr.f32.mxu0 %v3804
        %5214 = vmatmul.mubr.f32.gmra.mrb[0].mxu0 %v3803
        %v5215 = vpop.f32.mrb[0].mxu0
        %v5216 = vadd.f32 %v5103, %v5215
        %v5217 = vpop.f32.mrb[0].mxu0
        %v5218 = vadd.f32 %v5105, %v5217
        %5219 = vmatprep.mubr.f32.mxu0 %v3813
        %5220 = vmatmul.mubr.f32.gmra.mrb[0].mxu0 %v3812
        %v5221 = vpop.f32.mrb[0].mxu0
        %v5222 = vadd.f32 %v5109, %v5221
        %v5223 = vpop.f32.mrb[0].mxu0
        %v5224 = vadd.f32 %v5111, %v5223
        %5225 = vmatprep.mubr.f32.mxu0 %v3822
        %5226 = vmatmul.mubr.f32.gmra.mrb[0].mxu0 %v3821
        %v5227 = vpop.f32.mrb[0].mxu0
        %v5228 = vadd.f32 %v5115, %v5227
        %v5229 = vpop.f32.mrb[0].mxu0
        %v5230 = vadd.f32 %v5117, %v5229
        %5231 = vmatprep.mubr.f32.mxu0 %v3831
        %5232 = vmatmul.mubr.f32.gmra.mrb[0].mxu0 %v3830
        %v5233 = vpop.f32.mrb[0].mxu0
        %v5234 = vadd.f32 %v5121, %v5233
        %v5235 = vpop.f32.mrb[0].mxu0
        %v5236 = vadd.f32 %v5123, %v5235
        %5237 = vmatprep.mubr.f32.mxu0 %v3840
        %5238 = vmatmul.mubr.f32.gmra.mrb[0].mxu0 %v3839
        %v5239 = vpop.f32.mrb[0].mxu0
        %v5240 = vadd.f32 %v5127, %v5239
        %v5241 = vpop.f32.mrb[0].mxu0
        %v5242 = vadd.f32 %v5129, %v5241
        %5243 = vmatprep.mubr.f32.mxu0 %v3849
        %5244 = vmatmul.mubr.f32.gmra.mrb[0].mxu0 %v3848
        %v5245 = vpop.f32.mrb[0].mxu0
        %v5246 = vadd.f32 %v5133, %v5245
        %v5247 = vpop.f32.mrb[0].mxu0
        %v5248 = vadd.f32 %v5135, %v5247
        %5249 = vmatprep.mubr.f32.mxu0 %v3858
        %5250 = vmatmul.mubr.f32.gmra.mrb[0].mxu0 %v3857
        %v5251 = vpop.f32.mrb[0].mxu0
        %v5252 = vadd.f32 %v5139, %v5251
        %v5253 = vpop.f32.mrb[0].mxu0
        %v5254 = vadd.f32 %v5141, %v5253
        %5255 = vmatprep.mubr.f32.mxu0 %v3867
        %5256 = vmatmul.mubr.f32.gmra.mrb[0].mxu0 %v3866
        %v5257 = vpop.f32.mrb[0].mxu0
        %v5258 = vadd.f32 %v5145, %v5257
        %v5259 = vpop.f32.mrb[0].mxu0
        %v5260 = vadd.f32 %v5147, %v5259
        %5261 = vdwg.mxu0
        %5262 = vmatprep.subr.mxu0 %v4132
        %5263 = vmatpush1.msra.mxu0 %v4131
        %5264 = vmatprep.subr.mxu0 %v4136
        %5265 = vmatpush1.msra.mxu0 %v4135
        %5266 = vmatprep.subr.mxu0 %v4140
        %5267 = vmatpush1.msra.mxu0 %v4139
        %5268 = vmatprep.subr.mxu0 %v4144
        %5269 = vmatpush1.msra.mxu0 %v4143
        %5270 = vmatprep.subr.mxu0 %v4148
        %5271 = vmatpush1.msra.mxu0 %v4147
        %5272 = vmatprep.subr.mxu0 %v4152
        %5273 = vmatpush1.msra.mxu0 %v4151
        %5274 = vmatprep.subr.mxu0 %v4156
        %5275 = vmatpush1.msra.mxu0 %v4155
        %5276 = vmatprep.subr.mxu0 %v4160
        %5277 = vmatpush1.msra.mxu0 %v4159
        %5278 = vmatprep.subr.mxu0 %v4164
        %5279 = vmatpush1.msra.mxu0 %v4163
        %5280 = vmatprep.subr.mxu0 %v4168
        %5281 = vmatpush1.msra.mxu0 %v4167
        %5282 = vmatprep.subr.mxu0 %v4172
        %5283 = vmatpush1.msra.mxu0 %v4171
        %5284 = vmatprep.subr.mxu0 %v4176
        %5285 = vmatpush1.msra.mxu0 %v4175
        %5286 = vmatprep.subr.mxu0 %v4180
        %5287 = vmatpush1.msra.mxu0 %v4179
        %5288 = vmatprep.subr.mxu0 %v4184
        %5289 = vmatpush1.msra.mxu0 %v4183
        %5290 = vmatprep.subr.mxu0 %v4188
        %5291 = vmatpush1.msra.mxu0 %v4187
        %5292 = vmatprep.subr.mxu0 %v4192
        %5293 = vmatpush1.msra.mxu0 %v4191
        %5294 = vmatprep.subr.mxu0 %v4196
        %5295 = vmatpush1.msra.mxu0 %v4195
        %5296 = vmatprep.subr.mxu0 %v4200
        %5297 = vmatpush1.msra.mxu0 %v4199
        %5298 = vmatprep.subr.mxu0 %v4204
        %5299 = vmatpush1.msra.mxu0 %v4203
        %5300 = vmatprep.subr.mxu0 %v4208
        %5301 = vmatpush1.msra.mxu0 %v4207
        %5302 = vmatprep.subr.mxu0 %v4212
        %5303 = vmatpush1.msra.mxu0 %v4211
        %5304 = vmatprep.subr.mxu0 %v4216
        %5305 = vmatpush1.msra.mxu0 %v4215
        %5306 = vmatprep.subr.mxu0 %v4220
        %5307 = vmatpush1.msra.mxu0 %v4219
        %5308 = vmatprep.subr.mxu0 %v4224
        %5309 = vmatpush1.msra.mxu0 %v4223
        %5310 = vmatprep.subr.mxu0 %v4228
        %5311 = vmatpush1.msra.mxu0 %v4227
        %5312 = vmatprep.subr.mxu0 %v4232
        %5313 = vmatpush1.msra.mxu0 %v4231
        %5314 = vmatprep.subr.mxu0 %v4236
        %5315 = vmatpush1.msra.mxu0 %v4235
        %5316 = vmatprep.subr.mxu0 %v4240
        %5317 = vmatpush1.msra.mxu0 %v4239
        %5318 = vmatprep.subr.mxu0 %v4244
        %5319 = vmatpush1.msra.mxu0 %v4243
        %5320 = vmatprep.subr.mxu0 %v4248
        %5321 = vmatpush1.msra.mxu0 %v4247
        %5322 = vmatprep.subr.mxu0 %v4252
        %5323 = vmatpush1.msra.mxu0 %v4251
        %5324 = vmatprep.subr.mxu0 %v4256
        %5325 = vmatpush1.msra.mxu0 %v4255
        %5326 = vmatprep.mubr.f32.mxu0 %v3806
        %5327 = vmatmul.mubr.f32.gmra.mrb[0].mxu0 %v3805
        %v5328 = vpop.f32.mrb[0].mxu0
        %v5329 = vadd.f32 %v5216, %v5328
        %v5330 = vpop.f32.mrb[0].mxu0
        %v5331 = vadd.f32 %v5218, %v5330
        %5332 = vmatprep.mubr.f32.mxu0 %v3815
        %5333 = vmatmul.mubr.f32.gmra.mrb[0].mxu0 %v3814
        %v5334 = vpop.f32.mrb[0].mxu0
        %v5335 = vadd.f32 %v5222, %v5334
        %v5336 = vpop.f32.mrb[0].mxu0
        %v5337 = vadd.f32 %v5224, %v5336
        %5338 = vmatprep.mubr.f32.mxu0 %v3824
        %5339 = vmatmul.mubr.f32.gmra.mrb[0].mxu0 %v3823
        %v5340 = vpop.f32.mrb[0].mxu0
        %v5341 = vadd.f32 %v5228, %v5340
        %v5342 = vpop.f32.mrb[0].mxu0
        %v5343 = vadd.f32 %v5230, %v5342
        %5344 = vmatprep.mubr.f32.mxu0 %v3833
        %5345 = vmatmul.mubr.f32.gmra.mrb[0].mxu0 %v3832
        %v5346 = vpop.f32.mrb[0].mxu0
        %v5347 = vadd.f32 %v5234, %v5346
        %v5348 = vpop.f32.mrb[0].mxu0
        %v5349 = vadd.f32 %v5236, %v5348
        %5350 = vmatprep.mubr.f32.mxu0 %v3842
        %5351 = vmatmul.mubr.f32.gmra.mrb[0].mxu0 %v3841
        %v5352 = vpop.f32.mrb[0].mxu0
        %v5353 = vadd.f32 %v5240, %v5352
        %v5354 = vpop.f32.mrb[0].mxu0
        %v5355 = vadd.f32 %v5242, %v5354
        %5356 = vmatprep.mubr.f32.mxu0 %v3851
        %5357 = vmatmul.mubr.f32.gmra.mrb[0].mxu0 %v3850
        %v5358 = vpop.f32.mrb[0].mxu0
        %v5359 = vadd.f32 %v5246, %v5358
        %v5360 = vpop.f32.mrb[0].mxu0
        %v5361 = vadd.f32 %v5248, %v5360
        %5362 = vmatprep.mubr.f32.mxu0 %v3860
        %5363 = vmatmul.mubr.f32.gmra.mrb[0].mxu0 %v3859
        %v5364 = vpop.f32.mrb[0].mxu0
        %v5365 = vadd.f32 %v5252, %v5364
        %v5366 = vpop.f32.mrb[0].mxu0
        %v5367 = vadd.f32 %v5254, %v5366
        %5368 = vmatprep.mubr.f32.mxu0 %v3869
        %5369 = vmatmul.mubr.f32.gmra.mrb[0].mxu0 %v3868
        %v5370 = vpop.f32.mrb[0].mxu0
        %v5371 = vadd.f32 %v5258, %v5370
        %v5372 = vpop.f32.mrb[0].mxu0
        %v5373 = vadd.f32 %v5260, %v5372
        %5374 = vdwg.mxu0
        %5375 = vmatprep.subr.mxu0 %v4260
        %5376 = vmatpush1.msra.mxu0 %v4259
        %5377 = vmatprep.subr.mxu0 %v4264
        %5378 = vmatpush1.msra.mxu0 %v4263
        %5379 = vmatprep.subr.mxu0 %v4268
        %5380 = vmatpush1.msra.mxu0 %v4267
        %5381 = vmatprep.subr.mxu0 %v4272
        %5382 = vmatpush1.msra.mxu0 %v4271
        %5383 = vmatprep.subr.mxu0 %v4276
        %5384 = vmatpush1.msra.mxu0 %v4275
        %5385 = vmatprep.subr.mxu0 %v4280
        %5386 = vmatpush1.msra.mxu0 %v4279
        %5387 = vmatprep.subr.mxu0 %v4284
        %5388 = vmatpush1.msra.mxu0 %v4283
        %5389 = vmatprep.subr.mxu0 %v4288
        %5390 = vmatpush1.msra.mxu0 %v4287
        %5391 = vmatprep.subr.mxu0 %v4292
        %5392 = vmatpush1.msra.mxu0 %v4291
        %5393 = vmatprep.subr.mxu0 %v4296
        %5394 = vmatpush1.msra.mxu0 %v4295
        %5395 = vmatprep.subr.mxu0 %v4300
        %5396 = vmatpush1.msra.mxu0 %v4299
        %5397 = vmatprep.subr.mxu0 %v4304
        %5398 = vmatpush1.msra.mxu0 %v4303
        %5399 = vmatprep.subr.mxu0 %v4308
        %5400 = vmatpush1.msra.mxu0 %v4307
        %5401 = vmatprep.subr.mxu0 %v4312
        %5402 = vmatpush1.msra.mxu0 %v4311
        %5403 = vmatprep.subr.mxu0 %v4316
        %5404 = vmatpush1.msra.mxu0 %v4315
        %5405 = vmatprep.subr.mxu0 %v4320
        %5406 = vmatpush1.msra.mxu0 %v4319
        %5407 = vmatprep.subr.mxu0 %v4324
        %5408 = vmatpush1.msra.mxu0 %v4323
        %5409 = vmatprep.subr.mxu0 %v4328
        %5410 = vmatpush1.msra.mxu0 %v4327
        %5411 = vmatprep.subr.mxu0 %v4332
        %5412 = vmatpush1.msra.mxu0 %v4331
        %5413 = vmatprep.subr.mxu0 %v4336
        %5414 = vmatpush1.msra.mxu0 %v4335
        %5415 = vmatprep.subr.mxu0 %v4340
        %5416 = vmatpush1.msra.mxu0 %v4339
        %5417 = vmatprep.subr.mxu0 %v4344
        %5418 = vmatpush1.msra.mxu0 %v4343
        %5419 = vmatprep.subr.mxu0 %v4348
        %5420 = vmatpush1.msra.mxu0 %v4347
        %5421 = vmatprep.subr.mxu0 %v4352
        %5422 = vmatpush1.msra.mxu0 %v4351
        %5423 = vmatprep.subr.mxu0 %v4356
        %5424 = vmatpush1.msra.mxu0 %v4355
        %5425 = vmatprep.subr.mxu0 %v4360
        %5426 = vmatpush1.msra.mxu0 %v4359
        %5427 = vmatprep.subr.mxu0 %v4364
        %5428 = vmatpush1.msra.mxu0 %v4363
        %5429 = vmatprep.subr.mxu0 %v4368
        %5430 = vmatpush1.msra.mxu0 %v4367
        %5431 = vmatprep.subr.mxu0 %v4372
        %5432 = vmatpush1.msra.mxu0 %v4371
        %5433 = vmatprep.subr.mxu0 %v4376
        %5434 = vmatpush1.msra.mxu0 %v4375
        %5435 = vmatprep.subr.mxu0 %v4380
        %5436 = vmatpush1.msra.mxu0 %v4379
        %5437 = vmatprep.subr.mxu0 %v4384
        %5438 = vmatpush1.msra.mxu0 %v4383
        %5439 = vmatprep.mubr.f32.mxu0 %v3808
        %5440 = vmatmul.mubr.f32.gmra.mrb[0].mxu0 %v3807
        %v5441 = vpop.f32.mrb[0].mxu0
        %v5442 = vadd.f32 %v5329, %v5441
        %v5443 = vpop.f32.mrb[0].mxu0
        %v5444 = vadd.f32 %v5331, %v5443
        %5445 = vmatprep.mubr.f32.mxu0 %v3817
        %5446 = vmatmul.mubr.f32.gmra.mrb[0].mxu0 %v3816
        %v5447 = vpop.f32.mrb[0].mxu0
        %v5448 = vadd.f32 %v5335, %v5447
        %v5449 = vpop.f32.mrb[0].mxu0
        %v5450 = vadd.f32 %v5337, %v5449
        %5451 = vmatprep.mubr.f32.mxu0 %v3826
        %5452 = vmatmul.mubr.f32.gmra.mrb[0].mxu0 %v3825
        %v5453 = vpop.f32.mrb[0].mxu0
        %v5454 = vadd.f32 %v5341, %v5453
        %v5455 = vpop.f32.mrb[0].mxu0
        %v5456 = vadd.f32 %v5343, %v5455
        %5457 = vmatprep.mubr.f32.mxu0 %v3835
        %5458 = vmatmul.mubr.f32.gmra.mrb[0].mxu0 %v3834
        %v5459 = vpop.f32.mrb[0].mxu0
        %v5460 = vadd.f32 %v5347, %v5459
        %v5461 = vpop.f32.mrb[0].mxu0
        %v5462 = vadd.f32 %v5349, %v5461
        %5463 = vmatprep.mubr.f32.mxu0 %v3844
        %5464 = vmatmul.mubr.f32.gmra.mrb[0].mxu0 %v3843
        %v5465 = vpop.f32.mrb[0].mxu0
        %v5466 = vadd.f32 %v5353, %v5465
        %v5467 = vpop.f32.mrb[0].mxu0
        %v5468 = vadd.f32 %v5355, %v5467
        %5469 = vmatprep.mubr.f32.mxu0 %v3853
        %5470 = vmatmul.mubr.f32.gmra.mrb[0].mxu0 %v3852
        %v5471 = vpop.f32.mrb[0].mxu0
        %v5472 = vadd.f32 %v5359, %v5471
        %v5473 = vpop.f32.mrb[0].mxu0
        %v5474 = vadd.f32 %v5361, %v5473
        %5475 = vmatprep.mubr.f32.mxu0 %v3862
        %5476 = vmatmul.mubr.f32.gmra.mrb[0].mxu0 %v3861
        %v5477 = vpop.f32.mrb[0].mxu0
        %v5478 = vadd.f32 %v5365, %v5477
        %v5479 = vpop.f32.mrb[0].mxu0
        %v5480 = vadd.f32 %v5367, %v5479
        %5481 = vmatprep.mubr.f32.mxu0 %v3871
        %5482 = vmatmul.mubr.f32.gmra.mrb[0].mxu0 %v3870
        %v5483 = vpop.f32.mrb[0].mxu0
        %v5484 = vadd.f32 %v5371, %v5483
        %v5485 = vpop.f32.mrb[0].mxu0
        %v5486 = vadd.f32 %v5373, %v5485
        %5487 = vdwg.mxu0
        %5488 = vmatprep.subr.mxu0 %v4388
        %5489 = vmatpush1.msra.mxu0 %v4387
        %5490 = vmatprep.subr.mxu0 %v4392
        %5491 = vmatpush1.msra.mxu0 %v4391
        %5492 = vmatprep.subr.mxu0 %v4396
        %5493 = vmatpush1.msra.mxu0 %v4395
        %5494 = vmatprep.subr.mxu0 %v4400
        %5495 = vmatpush1.msra.mxu0 %v4399
        %5496 = vmatprep.subr.mxu0 %v4404
        %5497 = vmatpush1.msra.mxu0 %v4403
        %5498 = vmatprep.subr.mxu0 %v4408
        %5499 = vmatpush1.msra.mxu0 %v4407
        %5500 = vmatprep.subr.mxu0 %v4412
        %5501 = vmatpush1.msra.mxu0 %v4411
        %5502 = vmatprep.subr.mxu0 %v4416
        %5503 = vmatpush1.msra.mxu0 %v4415
        %5504 = vmatprep.subr.mxu0 %v4420
        %5505 = vmatpush1.msra.mxu0 %v4419
        %5506 = vmatprep.subr.mxu0 %v4424
        %5507 = vmatpush1.msra.mxu0 %v4423
        %5508 = vmatprep.subr.mxu0 %v4428
        %5509 = vmatpush1.msra.mxu0 %v4427
        %5510 = vmatprep.subr.mxu0 %v4432
        %5511 = vmatpush1.msra.mxu0 %v4431
        %5512 = vmatprep.subr.mxu0 %v4436
        %5513 = vmatpush1.msra.mxu0 %v4435
        %5514 = vmatprep.subr.mxu0 %v4440
        %5515 = vmatpush1.msra.mxu0 %v4439
        %5516 = vmatprep.subr.mxu0 %v4444
        %5517 = vmatpush1.msra.mxu0 %v4443
        %5518 = vmatprep.subr.mxu0 %v4448
        %5519 = vmatpush1.msra.mxu0 %v4447
        %5520 = vmatprep.subr.mxu0 0.0
        %5521 = vmatpush1.msra.mxu0 0.0
        %5522 = vmatprep.subr.mxu0 0.0
        %5523 = vmatpush1.msra.mxu0 0.0
        %5524 = vmatprep.subr.mxu0 0.0
        %5525 = vmatpush1.msra.mxu0 0.0
        %5526 = vmatprep.subr.mxu0 0.0
        %5527 = vmatpush1.msra.mxu0 0.0
        %5528 = vmatprep.subr.mxu0 0.0
        %5529 = vmatpush1.msra.mxu0 0.0
        %5530 = vmatprep.subr.mxu0 0.0
        %5531 = vmatpush1.msra.mxu0 0.0
        %5532 = vmatprep.subr.mxu0 0.0
        %5533 = vmatpush1.msra.mxu0 0.0
        %5534 = vmatprep.subr.mxu0 0.0
        %5535 = vmatpush1.msra.mxu0 0.0
        %5536 = vmatprep.subr.mxu0 0.0
        %5537 = vmatpush1.msra.mxu0 0.0
        %5538 = vmatprep.subr.mxu0 0.0
        %5539 = vmatpush1.msra.mxu0 0.0
        %5540 = vmatprep.subr.mxu0 0.0
        %5541 = vmatpush1.msra.mxu0 0.0
        %5542 = vmatprep.subr.mxu0 0.0
        %5543 = vmatpush1.msra.mxu0 0.0
        %5544 = vmatprep.subr.mxu0 0.0
        %5545 = vmatpush1.msra.mxu0 0.0
        %5546 = vmatprep.subr.mxu0 0.0
        %5547 = vmatpush1.msra.mxu0 0.0
        %5548 = vmatprep.subr.mxu0 0.0
        %5549 = vmatpush1.msra.mxu0 0.0
        %5550 = vmatprep.subr.mxu0 0.0
        %5551 = vmatpush1.msra.mxu0 0.0
        %5552 = vmatprep.mubr.f32.mxu0 0.0
        %5553 = vmatmul.mubr.f32.gmra.mrb[0].mxu0 %v3809
        %v5554 = vpop.f32.mrb[0].mxu0
        %v5555 = vadd.f32 %v5442, %v5554
        %v5556 = vpop.f32.mrb[0].mxu0
        %v5557 = vadd.f32 %v5444, %v5556
        %5558 = vmatprep.mubr.f32.mxu0 0.0
        %5559 = vmatmul.mubr.f32.gmra.mrb[0].mxu0 %v3818
        %v5560 = vpop.f32.mrb[0].mxu0
        %v5561 = vadd.f32 %v5448, %v5560
        %v5562 = vpop.f32.mrb[0].mxu0
        %v5563 = vadd.f32 %v5450, %v5562
        %5564 = vmatprep.mubr.f32.mxu0 0.0
        %5565 = vmatmul.mubr.f32.gmra.mrb[0].mxu0 %v3827
        %v5566 = vpop.f32.mrb[0].mxu0
        %v5567 = vadd.f32 %v5454, %v5566
        %v5568 = vpop.f32.mrb[0].mxu0
        %v5569 = vadd.f32 %v5456, %v5568
        %5570 = vmatprep.mubr.f32.mxu0 0.0
        %5571 = vmatmul.mubr.f32.gmra.mrb[0].mxu0 %v3836
        %v5572 = vpop.f32.mrb[0].mxu0
        %v5573 = vadd.f32 %v5460, %v5572
        %v5574 = vpop.f32.mrb[0].mxu0
        %v5575 = vadd.f32 %v5462, %v5574
        %5576 = vmatprep.mubr.f32.mxu0 0.0
        %5577 = vmatmul.mubr.f32.gmra.mrb[0].mxu0 %v3845
        %v5578 = vpop.f32.mrb[0].mxu0
        %v5579 = vadd.f32 %v5466, %v5578
        %v5580 = vpop.f32.mrb[0].mxu0
        %v5581 = vadd.f32 %v5468, %v5580
        %5582 = vmatprep.mubr.f32.mxu0 0.0
        %5583 = vmatmul.mubr.f32.gmra.mrb[0].mxu0 %v3854
        %v5584 = vpop.f32.mrb[0].mxu0
        %v5585 = vadd.f32 %v5472, %v5584
        %v5586 = vpop.f32.mrb[0].mxu0
        %v5587 = vadd.f32 %v5474, %v5586
        %5588 = vmatprep.mubr.f32.mxu0 0.0
        %5589 = vmatmul.mubr.f32.gmra.mrb[0].mxu0 %v3863
        %v5590 = vpop.f32.mrb[0].mxu0
        %v5591 = vadd.f32 %v5478, %v5590
        %v5592 = vpop.f32.mrb[0].mxu0
        %v5593 = vadd.f32 %v5480, %v5592
        %5594 = vmatprep.mubr.f32.mxu0 0.0
        %5595 = vmatmul.mubr.f32.gmra.mrb[0].mxu0 %v3872
        %v5596 = vpop.f32.mrb[0].mxu0
        %v5597 = vadd.f32 %v5484, %v5596
        %v5598 = vpop.f32.mrb[0].mxu0
        %v5599 = vadd.f32 %v5486, %v5598
        %5600 = vdwg.mxu0
        %v5601 = vmax.f32 %v4990, 0.0
        %v5602 = vmax.f32 %v4992, 0.0
        %v5603 = vmax.f32 %v5555, 0.0
        %v5604 = vmax.f32 %v5557, 0.0
        %v5605 = vmax.f32 %v4996, 0.0
        %v5606 = vmax.f32 %v4998, 0.0
        %v5607 = vmax.f32 %v5561, 0.0
        %v5608 = vmax.f32 %v5563, 0.0
        %v5609 = vmax.f32 %v5002, 0.0
        %v5610 = vmax.f32 %v5004, 0.0
        %v5611 = vmax.f32 %v5567, 0.0
        %v5612 = vmax.f32 %v5569, 0.0
        %v5613 = vmax.f32 %v5008, 0.0
        %v5614 = vmax.f32 %v5010, 0.0
        %v5615 = vmax.f32 %v5573, 0.0
        %v5616 = vmax.f32 %v5575, 0.0
        %v5617 = vmax.f32 %v5014, 0.0
        %v5618 = vmax.f32 %v5016, 0.0
        %v5619 = vmax.f32 %v5579, 0.0
        %v5620 = vmax.f32 %v5581, 0.0
        %v5621 = vmax.f32 %v5020, 0.0
        %v5622 = vmax.f32 %v5022, 0.0
        %v5623 = vmax.f32 %v5585, 0.0
        %v5624 = vmax.f32 %v5587, 0.0
        %v5625 = vmax.f32 %v5026, 0.0
        %v5626 = vmax.f32 %v5028, 0.0
        %v5627 = vmax.f32 %v5591, 0.0
        %v5628 = vmax.f32 %v5593, 0.0
        %v5629 = vmax.f32 %v5032, 0.0
        %v5630 = vmax.f32 %v5034, 0.0
        %v5631 = vmax.f32 %v5597, 0.0
        %v5632 = vmax.f32 %v5599, 0.0
        %s5633 = scalar_lea.vmem [#allocation3], 16
        %5634 = vst [vmem:[%s5633 + $0x1] sm:$0xff] %v5601
        %5635 = vst [vmem:[%s5633 + $0x11] sm:$0xff] %v5605
        %5636 = vst [vmem:[%s5633 + $0x21] sm:$0xff] %v5609
        %5637 = vst [vmem:[%s5633 + $0x31] sm:$0xff] %v5613
        %5638 = vst [vmem:[%s5633 + $0x41] sm:$0xff] %v5617
        %5639 = vst [vmem:[%s5633 + $0x51] sm:$0xff] %v5621
        %5640 = vst [vmem:[%s5633 + $0x61] sm:$0xff] %v5625
        %5641 = vst [vmem:[%s5633 + $0x71] sm:$0xff] %v5629
        %s5642 = scalar_lea.vmem [#allocation3], 176
        %5643 = vst [vmem:[%s5642 + $0x1] sm:$0xff] %v5602
        %5644 = vst [vmem:[%s5642 + $0x11] sm:$0xff] %v5606
        %5645 = vst [vmem:[%s5642 + $0x21] sm:$0xff] %v5610
        %5646 = vst [vmem:[%s5642 + $0x31] sm:$0xff] %v5614
        %5647 = vst [vmem:[%s5642 + $0x41] sm:$0xff] %v5618
        %5648 = vst [vmem:[%s5642 + $0x51] sm:$0xff] %v5622
        %5649 = vst [vmem:[%s5642 + $0x61] sm:$0xff] %v5626
        %5650 = vst [vmem:[%s5642 + $0x71] sm:$0xff] %v5630
        %s5651 = scalar_lea.vmem [#allocation3], 336
        %5652 = vst [vmem:[%s5651 + $0x1] sm:$0xff] %v5603
        %5653 = vst [vmem:[%s5651 + $0x11] sm:$0xff] %v5607
        %5654 = vst [vmem:[%s5651 + $0x21] sm:$0xff] %v5611
        %5655 = vst [vmem:[%s5651 + $0x31] sm:$0xff] %v5615
        %5656 = vst [vmem:[%s5651 + $0x41] sm:$0xff] %v5619
        %5657 = vst [vmem:[%s5651 + $0x51] sm:$0xff] %v5623
        %5658 = vst [vmem:[%s5651 + $0x61] sm:$0xff] %v5627
        %5659 = vst [vmem:[%s5651 + $0x71] sm:$0xff] %v5631
        %s5660 = scalar_lea.vmem [#allocation3], 496
        %5661 = vst [vmem:[%s5660 + $0x1] sm:$0xff] %v5604
        %5662 = vst [vmem:[%s5660 + $0x11] sm:$0xff] %v5608
        %5663 = vst [vmem:[%s5660 + $0x21] sm:$0xff] %v5612
        %5664 = vst [vmem:[%s5660 + $0x31] sm:$0xff] %v5616
        %5665 = vst [vmem:[%s5660 + $0x41] sm:$0xff] %v5620
        %5666 = vst [vmem:[%s5660 + $0x51] sm:$0xff] %v5624
        %5667 = vst [vmem:[%s5660 + $0x61] sm:$0xff] %v5628
        %5668 = vst [vmem:[%s5660 + $0x71] sm:$0xff] %v5632
        %v5669 = vld [vmem:[%s569] sm:$0xff]
        %v5670 = vld [vmem:[%s569 + $0x10] sm:$0xff]
        %v5671 = vld [vmem:[%s569 + $0x20] sm:$0xff]
        %v5672 = vld [vmem:[%s569 + $0x30] sm:$0xff]
        %v5673 = vld [vmem:[%s569 + $0x40] sm:$0xff]
        %v5674 = vld [vmem:[%s569 + $0x50] sm:$0xff]
        %v5675 = vld [vmem:[%s569 + $0x60] sm:$0xff]
        %v5676 = vld [vmem:[%s569 + $0x70] sm:$0xff]
        %5677 = vst [vmem:[#allocation5] sm:$0xff] %v5669
        %5678 = vst [vmem:[#allocation5 + $0x48] sm:$0xff] %v5670
        %5679 = vst [vmem:[#allocation5 + $0x90] sm:$0xff] %v5671
        %5680 = vst [vmem:[#allocation5 + $0xd8] sm:$0xff] %v5672
        %5681 = vst [vmem:[#allocation5 + $0x120] sm:$0xff] %v5673
        %5682 = vst [vmem:[#allocation5 + $0x168] sm:$0xff] %v5674
        %5683 = vst [vmem:[#allocation5 + $0x1b0] sm:$0xff] %v5675
        %5684 = vst [vmem:[#allocation5 + $0x1f8] sm:$0xff] %v5676
        %v5685 = vld [vmem:[%s563 + $0x1] sm:$0xff]
        %v5686 = vld [vmem:[%s563 + $0x11] sm:$0xff]
        %v5687 = vld [vmem:[%s563 + $0x21] sm:$0xff]
        %v5688 = vld [vmem:[%s563 + $0x31] sm:$0xff]
        %v5689 = vld [vmem:[%s563 + $0x41] sm:$0xff]
        %v5690 = vld [vmem:[%s563 + $0x51] sm:$0xff]
        %v5691 = vld [vmem:[%s563 + $0x61] sm:$0xff]
        %v5692 = vld [vmem:[%s563 + $0x71] sm:$0xff]
        %5693 = vst [vmem:[#allocation5 + $0x8] sm:$0xff] %v5685
        %5694 = vst [vmem:[#allocation5 + $0x50] sm:$0xff] %v5686
        %5695 = vst [vmem:[#allocation5 + $0x98] sm:$0xff] %v5687
        %5696 = vst [vmem:[#allocation5 + $0xe0] sm:$0xff] %v5688
        %5697 = vst [vmem:[#allocation5 + $0x128] sm:$0xff] %v5689
        %5698 = vst [vmem:[#allocation5 + $0x170] sm:$0xff] %v5690
        %5699 = vst [vmem:[#allocation5 + $0x1b8] sm:$0xff] %v5691
        %5700 = vst [vmem:[#allocation5 + $0x200] sm:$0xff] %v5692
        %v5701 = vld [vmem:[%s569 + $0x1] sm:$0xff]
        %v5702 = vld [vmem:[%s569 + $0x11] sm:$0xff]
        %v5703 = vld [vmem:[%s569 + $0x21] sm:$0xff]
        %v5704 = vld [vmem:[%s569 + $0x31] sm:$0xff]
        %v5705 = vld [vmem:[%s569 + $0x41] sm:$0xff]
        %v5706 = vld [vmem:[%s569 + $0x51] sm:$0xff]
        %v5707 = vld [vmem:[%s569 + $0x61] sm:$0xff]
        %v5708 = vld [vmem:[%s569 + $0x71] sm:$0xff]
        %5709 = vst [vmem:[#allocation5 + $0x10] sm:$0xff] %v5701
        %5710 = vst [vmem:[#allocation5 + $0x58] sm:$0xff] %v5702
        %5711 = vst [vmem:[#allocation5 + $0xa0] sm:$0xff] %v5703
        %5712 = vst [vmem:[#allocation5 + $0xe8] sm:$0xff] %v5704
        %5713 = vst [vmem:[#allocation5 + $0x130] sm:$0xff] %v5705
        %5714 = vst [vmem:[#allocation5 + $0x178] sm:$0xff] %v5706
        %5715 = vst [vmem:[#allocation5 + $0x1c0] sm:$0xff] %v5707
        %5716 = vst [vmem:[#allocation5 + $0x208] sm:$0xff] %v5708
        %v5717 = vld [vmem:[%s5642] sm:$0xff]
        %v5718 = vld [vmem:[%s5642 + $0x10] sm:$0xff]
        %v5719 = vld [vmem:[%s5642 + $0x20] sm:$0xff]
        %v5720 = vld [vmem:[%s5642 + $0x30] sm:$0xff]
        %v5721 = vld [vmem:[%s5642 + $0x40] sm:$0xff]
        %v5722 = vld [vmem:[%s5642 + $0x50] sm:$0xff]
        %v5723 = vld [vmem:[%s5642 + $0x60] sm:$0xff]
        %v5724 = vld [vmem:[%s5642 + $0x70] sm:$0xff]
        %5725 = vst [vmem:[#allocation5 + $0x18] sm:$0xff] %v5717
        %5726 = vst [vmem:[#allocation5 + $0x60] sm:$0xff] %v5718
        %5727 = vst [vmem:[#allocation5 + $0xa8] sm:$0xff] %v5719
        %5728 = vst [vmem:[#allocation5 + $0xf0] sm:$0xff] %v5720
        %5729 = vst [vmem:[#allocation5 + $0x138] sm:$0xff] %v5721
        %5730 = vst [vmem:[#allocation5 + $0x180] sm:$0xff] %v5722
        %5731 = vst [vmem:[#allocation5 + $0x1c8] sm:$0xff] %v5723
        %5732 = vst [vmem:[#allocation5 + $0x210] sm:$0xff] %v5724
        %v5733 = vld [vmem:[%s5633 + $0x1] sm:$0xff]
        %v5734 = vld [vmem:[%s5633 + $0x11] sm:$0xff]
        %v5735 = vld [vmem:[%s5633 + $0x21] sm:$0xff]
        %v5736 = vld [vmem:[%s5633 + $0x31] sm:$0xff]
        %v5737 = vld [vmem:[%s5633 + $0x41] sm:$0xff]
        %v5738 = vld [vmem:[%s5633 + $0x51] sm:$0xff]
        %v5739 = vld [vmem:[%s5633 + $0x61] sm:$0xff]
        %v5740 = vld [vmem:[%s5633 + $0x71] sm:$0xff]
        %5741 = vst [vmem:[#allocation5 + $0x20] sm:$0xff] %v5733
        %5742 = vst [vmem:[#allocation5 + $0x68] sm:$0xff] %v5734
        %5743 = vst [vmem:[#allocation5 + $0xb0] sm:$0xff] %v5735
        %5744 = vst [vmem:[#allocation5 + $0xf8] sm:$0xff] %v5736
        %5745 = vst [vmem:[#allocation5 + $0x140] sm:$0xff] %v5737
        %5746 = vst [vmem:[#allocation5 + $0x188] sm:$0xff] %v5738
        %5747 = vst [vmem:[#allocation5 + $0x1d0] sm:$0xff] %v5739
        %5748 = vst [vmem:[#allocation5 + $0x218] sm:$0xff] %v5740
        %v5749 = vld [vmem:[%s5642 + $0x1] sm:$0xff]
        %v5750 = vld [vmem:[%s5642 + $0x11] sm:$0xff]
        %v5751 = vld [vmem:[%s5642 + $0x21] sm:$0xff]
        %v5752 = vld [vmem:[%s5642 + $0x31] sm:$0xff]
        %v5753 = vld [vmem:[%s5642 + $0x41] sm:$0xff]
        %v5754 = vld [vmem:[%s5642 + $0x51] sm:$0xff]
        %v5755 = vld [vmem:[%s5642 + $0x61] sm:$0xff]
        %v5756 = vld [vmem:[%s5642 + $0x71] sm:$0xff]
        %5757 = vst [vmem:[#allocation5 + $0x28] sm:$0xff] %v5749
        %5758 = vst [vmem:[#allocation5 + $0x70] sm:$0xff] %v5750
        %5759 = vst [vmem:[#allocation5 + $0xb8] sm:$0xff] %v5751
        %5760 = vst [vmem:[#allocation5 + $0x100] sm:$0xff] %v5752
        %5761 = vst [vmem:[#allocation5 + $0x148] sm:$0xff] %v5753
        %5762 = vst [vmem:[#allocation5 + $0x190] sm:$0xff] %v5754
        %5763 = vst [vmem:[#allocation5 + $0x1d8] sm:$0xff] %v5755
        %5764 = vst [vmem:[#allocation5 + $0x220] sm:$0xff] %v5756
        %v5765 = vld [vmem:[%s5660] sm:$0xff]
        %v5766 = vld [vmem:[%s5660 + $0x10] sm:$0xff]
        %v5767 = vld [vmem:[%s5660 + $0x20] sm:$0xff]
        %v5768 = vld [vmem:[%s5660 + $0x30] sm:$0xff]
        %v5769 = vld [vmem:[%s5660 + $0x40] sm:$0xff]
        %v5770 = vld [vmem:[%s5660 + $0x50] sm:$0xff]
        %v5771 = vld [vmem:[%s5660 + $0x60] sm:$0xff]
        %v5772 = vld [vmem:[%s5660 + $0x70] sm:$0xff]
        %5773 = vst [vmem:[#allocation5 + $0x30] sm:$0xff] %v5765
        %5774 = vst [vmem:[#allocation5 + $0x78] sm:$0xff] %v5766
        %5775 = vst [vmem:[#allocation5 + $0xc0] sm:$0xff] %v5767
        %5776 = vst [vmem:[#allocation5 + $0x108] sm:$0xff] %v5768
        %5777 = vst [vmem:[#allocation5 + $0x150] sm:$0xff] %v5769
        %5778 = vst [vmem:[#allocation5 + $0x198] sm:$0xff] %v5770
        %5779 = vst [vmem:[#allocation5 + $0x1e0] sm:$0xff] %v5771
        %5780 = vst [vmem:[#allocation5 + $0x228] sm:$0xff] %v5772
        %v5781 = vld [vmem:[%s5651 + $0x1] sm:$0xff]
        %v5782 = vld [vmem:[%s5651 + $0x11] sm:$0xff]
        %v5783 = vld [vmem:[%s5651 + $0x21] sm:$0xff]
        %v5784 = vld [vmem:[%s5651 + $0x31] sm:$0xff]
        %v5785 = vld [vmem:[%s5651 + $0x41] sm:$0xff]
        %v5786 = vld [vmem:[%s5651 + $0x51] sm:$0xff]
        %v5787 = vld [vmem:[%s5651 + $0x61] sm:$0xff]
        %v5788 = vld [vmem:[%s5651 + $0x71] sm:$0xff]
        %5789 = vst [vmem:[#allocation5 + $0x38] sm:$0xff] %v5781
        %5790 = vst [vmem:[#allocation5 + $0x80] sm:$0xff] %v5782
        %5791 = vst [vmem:[#allocation5 + $0xc8] sm:$0xff] %v5783
        %5792 = vst [vmem:[#allocation5 + $0x110] sm:$0xff] %v5784
        %5793 = vst [vmem:[#allocation5 + $0x158] sm:$0xff] %v5785
        %5794 = vst [vmem:[#allocation5 + $0x1a0] sm:$0xff] %v5786
        %5795 = vst [vmem:[#allocation5 + $0x1e8] sm:$0xff] %v5787
        %5796 = vst [vmem:[#allocation5 + $0x230] sm:$0xff] %v5788
        %v5797 = vld [vmem:[%s5660 + $0x1] sm:$0xff]
        %v5798 = vld [vmem:[%s5660 + $0x11] sm:$0xff]
        %v5799 = vld [vmem:[%s5660 + $0x21] sm:$0xff]
        %v5800 = vld [vmem:[%s5660 + $0x31] sm:$0xff]
        %v5801 = vld [vmem:[%s5660 + $0x41] sm:$0xff]
        %v5802 = vld [vmem:[%s5660 + $0x51] sm:$0xff]
        %v5803 = vld [vmem:[%s5660 + $0x61] sm:$0xff]
        %v5804 = vld [vmem:[%s5660 + $0x71] sm:$0xff]
        %5805 = vst [vmem:[#allocation5 + $0x40] sm:$0xff] %v5797
        %5806 = vst [vmem:[#allocation5 + $0x88] sm:$0xff] %v5798
        %5807 = vst [vmem:[#allocation5 + $0xd0] sm:$0xff] %v5799
        %5808 = vst [vmem:[#allocation5 + $0x118] sm:$0xff] %v5800
        %5809 = vst [vmem:[#allocation5 + $0x160] sm:$0xff] %v5801
        %5810 = vst [vmem:[#allocation5 + $0x1a8] sm:$0xff] %v5802
        %5811 = vst [vmem:[#allocation5 + $0x1f0] sm:$0xff] %v5803
        %5812 = vst [vmem:[#allocation5 + $0x238] sm:$0xff] %v5804
        %v5813 = vld [vmem:[%s563 + $0x1] sm:$0xff]
        %v5814 = vld [vmem:[%s563 + $0x11] sm:$0xff]
        %v5815 = vld [vmem:[%s563 + $0x21] sm:$0xff]
        %v5816 = vld [vmem:[%s563 + $0x31] sm:$0xff]
        %v5817 = vld [vmem:[%s563 + $0x41] sm:$0xff]
        %v5818 = vld [vmem:[%s563 + $0x51] sm:$0xff]
        %v5819 = vld [vmem:[%s563 + $0x61] sm:$0xff]
        %v5820 = vld [vmem:[%s563 + $0x71] sm:$0xff]
        %s5821 = scalar_lea.vmem [#allocation5], 576
        %5822 = vst [vmem:[%s5821] sm:$0xff] %v5813
        %5823 = vst [vmem:[%s5821 + $0x48] sm:$0xff] %v5814
        %5824 = vst [vmem:[%s5821 + $0x90] sm:$0xff] %v5815
        %5825 = vst [vmem:[%s5821 + $0xd8] sm:$0xff] %v5816
        %5826 = vst [vmem:[%s5821 + $0x120] sm:$0xff] %v5817
        %5827 = vst [vmem:[%s5821 + $0x168] sm:$0xff] %v5818
        %5828 = vst [vmem:[%s5821 + $0x1b0] sm:$0xff] %v5819
        %5829 = vst [vmem:[%s5821 + $0x1f8] sm:$0xff] %v5820
        %v5830 = vld [vmem:[%s569 + $0x1] sm:$0xff]
        %v5831 = vld [vmem:[%s569 + $0x11] sm:$0xff]
        %v5832 = vld [vmem:[%s569 + $0x21] sm:$0xff]
        %v5833 = vld [vmem:[%s569 + $0x31] sm:$0xff]
        %v5834 = vld [vmem:[%s569 + $0x41] sm:$0xff]
        %v5835 = vld [vmem:[%s569 + $0x51] sm:$0xff]
        %v5836 = vld [vmem:[%s569 + $0x61] sm:$0xff]
        %v5837 = vld [vmem:[%s569 + $0x71] sm:$0xff]
        %5838 = vst [vmem:[%s5821 + $0x8] sm:$0xff] %v5830
        %5839 = vst [vmem:[%s5821 + $0x50] sm:$0xff] %v5831
        %5840 = vst [vmem:[%s5821 + $0x98] sm:$0xff] %v5832
        %5841 = vst [vmem:[%s5821 + $0xe0] sm:$0xff] %v5833
        %5842 = vst [vmem:[%s5821 + $0x128] sm:$0xff] %v5834
        %5843 = vst [vmem:[%s5821 + $0x170] sm:$0xff] %v5835
        %5844 = vst [vmem:[%s5821 + $0x1b8] sm:$0xff] %v5836
        %5845 = vst [vmem:[%s5821 + $0x200] sm:$0xff] %v5837
        %v5846 = vld [vmem:[%s563 + $0x2] sm:$0xff]
        %v5847 = vld [vmem:[%s563 + $0x12] sm:$0xff]
        %v5848 = vld [vmem:[%s563 + $0x22] sm:$0xff]
        %v5849 = vld [vmem:[%s563 + $0x32] sm:$0xff]
        %v5850 = vld [vmem:[%s563 + $0x42] sm:$0xff]
        %v5851 = vld [vmem:[%s563 + $0x52] sm:$0xff]
        %v5852 = vld [vmem:[%s563 + $0x62] sm:$0xff]
        %v5853 = vld [vmem:[%s563 + $0x72] sm:$0xff]
        %5854 = vst [vmem:[%s5821 + $0x10] sm:$0xff] %v5846
        %5855 = vst [vmem:[%s5821 + $0x58] sm:$0xff] %v5847
        %5856 = vst [vmem:[%s5821 + $0xa0] sm:$0xff] %v5848
        %5857 = vst [vmem:[%s5821 + $0xe8] sm:$0xff] %v5849
        %5858 = vst [vmem:[%s5821 + $0x130] sm:$0xff] %v5850
        %5859 = vst [vmem:[%s5821 + $0x178] sm:$0xff] %v5851
        %5860 = vst [vmem:[%s5821 + $0x1c0] sm:$0xff] %v5852
        %5861 = vst [vmem:[%s5821 + $0x208] sm:$0xff] %v5853
        %v5862 = vld [vmem:[%s5633 + $0x1] sm:$0xff]
        %v5863 = vld [vmem:[%s5633 + $0x11] sm:$0xff]
        %v5864 = vld [vmem:[%s5633 + $0x21] sm:$0xff]
        %v5865 = vld [vmem:[%s5633 + $0x31] sm:$0xff]
        %v5866 = vld [vmem:[%s5633 + $0x41] sm:$0xff]
        %v5867 = vld [vmem:[%s5633 + $0x51] sm:$0xff]
        %v5868 = vld [vmem:[%s5633 + $0x61] sm:$0xff]
        %v5869 = vld [vmem:[%s5633 + $0x71] sm:$0xff]
        %5870 = vst [vmem:[%s5821 + $0x18] sm:$0xff] %v5862
        %5871 = vst [vmem:[%s5821 + $0x60] sm:$0xff] %v5863
        %5872 = vst [vmem:[%s5821 + $0xa8] sm:$0xff] %v5864
        %5873 = vst [vmem:[%s5821 + $0xf0] sm:$0xff] %v5865
        %5874 = vst [vmem:[%s5821 + $0x138] sm:$0xff] %v5866
        %5875 = vst [vmem:[%s5821 + $0x180] sm:$0xff] %v5867
        %5876 = vst [vmem:[%s5821 + $0x1c8] sm:$0xff] %v5868
        %5877 = vst [vmem:[%s5821 + $0x210] sm:$0xff] %v5869
        %v5878 = vld [vmem:[%s5642 + $0x1] sm:$0xff]
        %v5879 = vld [vmem:[%s5642 + $0x11] sm:$0xff]
        %v5880 = vld [vmem:[%s5642 + $0x21] sm:$0xff]
        %v5881 = vld [vmem:[%s5642 + $0x31] sm:$0xff]
        %v5882 = vld [vmem:[%s5642 + $0x41] sm:$0xff]
        %v5883 = vld [vmem:[%s5642 + $0x51] sm:$0xff]
        %v5884 = vld [vmem:[%s5642 + $0x61] sm:$0xff]
        %v5885 = vld [vmem:[%s5642 + $0x71] sm:$0xff]
        %5886 = vst [vmem:[%s5821 + $0x20] sm:$0xff] %v5878
        %5887 = vst [vmem:[%s5821 + $0x68] sm:$0xff] %v5879
        %5888 = vst [vmem:[%s5821 + $0xb0] sm:$0xff] %v5880
        %5889 = vst [vmem:[%s5821 + $0xf8] sm:$0xff] %v5881
        %5890 = vst [vmem:[%s5821 + $0x140] sm:$0xff] %v5882
        %5891 = vst [vmem:[%s5821 + $0x188] sm:$0xff] %v5883
        %5892 = vst [vmem:[%s5821 + $0x1d0] sm:$0xff] %v5884
        %5893 = vst [vmem:[%s5821 + $0x218] sm:$0xff] %v5885
        %v5894 = vld [vmem:[%s5633 + $0x2] sm:$0xff]
        %v5895 = vld [vmem:[%s5633 + $0x12] sm:$0xff]
        %v5896 = vld [vmem:[%s5633 + $0x22] sm:$0xff]
        %v5897 = vld [vmem:[%s5633 + $0x32] sm:$0xff]
        %v5898 = vld [vmem:[%s5633 + $0x42] sm:$0xff]
        %v5899 = vld [vmem:[%s5633 + $0x52] sm:$0xff]
        %v5900 = vld [vmem:[%s5633 + $0x62] sm:$0xff]
        %v5901 = vld [vmem:[%s5633 + $0x72] sm:$0xff]
        %5902 = vst [vmem:[%s5821 + $0x28] sm:$0xff] %v5894
        %5903 = vst [vmem:[%s5821 + $0x70] sm:$0xff] %v5895
        %5904 = vst [vmem:[%s5821 + $0xb8] sm:$0xff] %v5896
        %5905 = vst [vmem:[%s5821 + $0x100] sm:$0xff] %v5897
        %5906 = vst [vmem:[%s5821 + $0x148] sm:$0xff] %v5898
        %5907 = vst [vmem:[%s5821 + $0x190] sm:$0xff] %v5899
        %5908 = vst [vmem:[%s5821 + $0x1d8] sm:$0xff] %v5900
        %5909 = vst [vmem:[%s5821 + $0x220] sm:$0xff] %v5901
        %v5910 = vld [vmem:[%s5651 + $0x1] sm:$0xff]
        %v5911 = vld [vmem:[%s5651 + $0x11] sm:$0xff]
        %v5912 = vld [vmem:[%s5651 + $0x21] sm:$0xff]
        %v5913 = vld [vmem:[%s5651 + $0x31] sm:$0xff]
        %v5914 = vld [vmem:[%s5651 + $0x41] sm:$0xff]
        %v5915 = vld [vmem:[%s5651 + $0x51] sm:$0xff]
        %v5916 = vld [vmem:[%s5651 + $0x61] sm:$0xff]
        %v5917 = vld [vmem:[%s5651 + $0x71] sm:$0xff]
        %5918 = vst [vmem:[%s5821 + $0x30] sm:$0xff] %v5910
        %5919 = vst [vmem:[%s5821 + $0x78] sm:$0xff] %v5911
        %5920 = vst [vmem:[%s5821 + $0xc0] sm:$0xff] %v5912
        %5921 = vst [vmem:[%s5821 + $0x108] sm:$0xff] %v5913
        %5922 = vst [vmem:[%s5821 + $0x150] sm:$0xff] %v5914
        %5923 = vst [vmem:[%s5821 + $0x198] sm:$0xff] %v5915
        %5924 = vst [vmem:[%s5821 + $0x1e0] sm:$0xff] %v5916
        %5925 = vst [vmem:[%s5821 + $0x228] sm:$0xff] %v5917
        %v5926 = vld [vmem:[%s5660 + $0x1] sm:$0xff]
        %v5927 = vld [vmem:[%s5660 + $0x11] sm:$0xff]
        %v5928 = vld [vmem:[%s5660 + $0x21] sm:$0xff]
        %v5929 = vld [vmem:[%s5660 + $0x31] sm:$0xff]
        %v5930 = vld [vmem:[%s5660 + $0x41] sm:$0xff]
        %v5931 = vld [vmem:[%s5660 + $0x51] sm:$0xff]
        %v5932 = vld [vmem:[%s5660 + $0x61] sm:$0xff]
        %v5933 = vld [vmem:[%s5660 + $0x71] sm:$0xff]
        %5934 = vst [vmem:[%s5821 + $0x38] sm:$0xff] %v5926
        %5935 = vst [vmem:[%s5821 + $0x80] sm:$0xff] %v5927
        %5936 = vst [vmem:[%s5821 + $0xc8] sm:$0xff] %v5928
        %5937 = vst [vmem:[%s5821 + $0x110] sm:$0xff] %v5929
        %5938 = vst [vmem:[%s5821 + $0x158] sm:$0xff] %v5930
        %5939 = vst [vmem:[%s5821 + $0x1a0] sm:$0xff] %v5931
        %5940 = vst [vmem:[%s5821 + $0x1e8] sm:$0xff] %v5932
        %5941 = vst [vmem:[%s5821 + $0x230] sm:$0xff] %v5933
        %v5942 = vld [vmem:[%s5651 + $0x2] sm:$0xff]
        %v5943 = vld [vmem:[%s5651 + $0x12] sm:$0xff]
        %v5944 = vld [vmem:[%s5651 + $0x22] sm:$0xff]
        %v5945 = vld [vmem:[%s5651 + $0x32] sm:$0xff]
        %v5946 = vld [vmem:[%s5651 + $0x42] sm:$0xff]
        %v5947 = vld [vmem:[%s5651 + $0x52] sm:$0xff]
        %v5948 = vld [vmem:[%s5651 + $0x62] sm:$0xff]
        %v5949 = vld [vmem:[%s5651 + $0x72] sm:$0xff]
        %5950 = vst [vmem:[%s5821 + $0x40] sm:$0xff] %v5942
        %5951 = vst [vmem:[%s5821 + $0x88] sm:$0xff] %v5943
        %5952 = vst [vmem:[%s5821 + $0xd0] sm:$0xff] %v5944
        %5953 = vst [vmem:[%s5821 + $0x118] sm:$0xff] %v5945
        %5954 = vst [vmem:[%s5821 + $0x160] sm:$0xff] %v5946
        %5955 = vst [vmem:[%s5821 + $0x1a8] sm:$0xff] %v5947
        %5956 = vst [vmem:[%s5821 + $0x1f0] sm:$0xff] %v5948
        %5957 = vst [vmem:[%s5821 + $0x238] sm:$0xff] %v5949
        %v5958 = vld [vmem:[%s5642] sm:$0xff]
        %v5959 = vld [vmem:[%s5642 + $0x10] sm:$0xff]
        %v5960 = vld [vmem:[%s5642 + $0x20] sm:$0xff]
        %v5961 = vld [vmem:[%s5642 + $0x30] sm:$0xff]
        %v5962 = vld [vmem:[%s5642 + $0x40] sm:$0xff]
        %v5963 = vld [vmem:[%s5642 + $0x50] sm:$0xff]
        %v5964 = vld [vmem:[%s5642 + $0x60] sm:$0xff]
        %v5965 = vld [vmem:[%s5642 + $0x70] sm:$0xff]
        %s5966 = scalar_lea.vmem [#allocation5], 1152
        %5967 = vst [vmem:[%s5966] sm:$0xff] %v5958
        %5968 = vst [vmem:[%s5966 + $0x48] sm:$0xff] %v5959
        %5969 = vst [vmem:[%s5966 + $0x90] sm:$0xff] %v5960
        %5970 = vst [vmem:[%s5966 + $0xd8] sm:$0xff] %v5961
        %5971 = vst [vmem:[%s5966 + $0x120] sm:$0xff] %v5962
        %5972 = vst [vmem:[%s5966 + $0x168] sm:$0xff] %v5963
        %5973 = vst [vmem:[%s5966 + $0x1b0] sm:$0xff] %v5964
        %5974 = vst [vmem:[%s5966 + $0x1f8] sm:$0xff] %v5965
        %v5975 = vld [vmem:[%s5633 + $0x1] sm:$0xff]
        %v5976 = vld [vmem:[%s5633 + $0x11] sm:$0xff]
        %v5977 = vld [vmem:[%s5633 + $0x21] sm:$0xff]
        %v5978 = vld [vmem:[%s5633 + $0x31] sm:$0xff]
        %v5979 = vld [vmem:[%s5633 + $0x41] sm:$0xff]
        %v5980 = vld [vmem:[%s5633 + $0x51] sm:$0xff]
        %v5981 = vld [vmem:[%s5633 + $0x61] sm:$0xff]
        %v5982 = vld [vmem:[%s5633 + $0x71] sm:$0xff]
        %5983 = vst [vmem:[%s5966 + $0x8] sm:$0xff] %v5975
        %5984 = vst [vmem:[%s5966 + $0x50] sm:$0xff] %v5976
        %5985 = vst [vmem:[%s5966 + $0x98] sm:$0xff] %v5977
        %5986 = vst [vmem:[%s5966 + $0xe0] sm:$0xff] %v5978
        %5987 = vst [vmem:[%s5966 + $0x128] sm:$0xff] %v5979
        %5988 = vst [vmem:[%s5966 + $0x170] sm:$0xff] %v5980
        %5989 = vst [vmem:[%s5966 + $0x1b8] sm:$0xff] %v5981
        %5990 = vst [vmem:[%s5966 + $0x200] sm:$0xff] %v5982
        %v5991 = vld [vmem:[%s5642 + $0x1] sm:$0xff]
        %v5992 = vld [vmem:[%s5642 + $0x11] sm:$0xff]
        %v5993 = vld [vmem:[%s5642 + $0x21] sm:$0xff]
        %v5994 = vld [vmem:[%s5642 + $0x31] sm:$0xff]
        %v5995 = vld [vmem:[%s5642 + $0x41] sm:$0xff]
        %v5996 = vld [vmem:[%s5642 + $0x51] sm:$0xff]
        %v5997 = vld [vmem:[%s5642 + $0x61] sm:$0xff]
        %v5998 = vld [vmem:[%s5642 + $0x71] sm:$0xff]
        %5999 = vst [vmem:[%s5966 + $0x10] sm:$0xff] %v5991
        %6000 = vst [vmem:[%s5966 + $0x58] sm:$0xff] %v5992
        %6001 = vst [vmem:[%s5966 + $0xa0] sm:$0xff] %v5993
        %6002 = vst [vmem:[%s5966 + $0xe8] sm:$0xff] %v5994
        %6003 = vst [vmem:[%s5966 + $0x130] sm:$0xff] %v5995
        %6004 = vst [vmem:[%s5966 + $0x178] sm:$0xff] %v5996
        %6005 = vst [vmem:[%s5966 + $0x1c0] sm:$0xff] %v5997
        %6006 = vst [vmem:[%s5966 + $0x208] sm:$0xff] %v5998
        %v6007 = vld [vmem:[%s5660] sm:$0xff]
        %v6008 = vld [vmem:[%s5660 + $0x10] sm:$0xff]
        %v6009 = vld [vmem:[%s5660 + $0x20] sm:$0xff]
        %v6010 = vld [vmem:[%s5660 + $0x30] sm:$0xff]
        %v6011 = vld [vmem:[%s5660 + $0x40] sm:$0xff]
        %v6012 = vld [vmem:[%s5660 + $0x50] sm:$0xff]
        %v6013 = vld [vmem:[%s5660 + $0x60] sm:$0xff]
        %v6014 = vld [vmem:[%s5660 + $0x70] sm:$0xff]
        %6015 = vst [vmem:[%s5966 + $0x18] sm:$0xff] %v6007
        %6016 = vst [vmem:[%s5966 + $0x60] sm:$0xff] %v6008
        %6017 = vst [vmem:[%s5966 + $0xa8] sm:$0xff] %v6009
        %6018 = vst [vmem:[%s5966 + $0xf0] sm:$0xff] %v6010
        %6019 = vst [vmem:[%s5966 + $0x138] sm:$0xff] %v6011
        %6020 = vst [vmem:[%s5966 + $0x180] sm:$0xff] %v6012
        %6021 = vst [vmem:[%s5966 + $0x1c8] sm:$0xff] %v6013
        %6022 = vst [vmem:[%s5966 + $0x210] sm:$0xff] %v6014
        %v6023 = vld [vmem:[%s5651 + $0x1] sm:$0xff]
        %v6024 = vld [vmem:[%s5651 + $0x11] sm:$0xff]
        %v6025 = vld [vmem:[%s5651 + $0x21] sm:$0xff]
        %v6026 = vld [vmem:[%s5651 + $0x31] sm:$0xff]
        %v6027 = vld [vmem:[%s5651 + $0x41] sm:$0xff]
        %v6028 = vld [vmem:[%s5651 + $0x51] sm:$0xff]
        %v6029 = vld [vmem:[%s5651 + $0x61] sm:$0xff]
        %v6030 = vld [vmem:[%s5651 + $0x71] sm:$0xff]
        %6031 = vst [vmem:[%s5966 + $0x20] sm:$0xff] %v6023
        %6032 = vst [vmem:[%s5966 + $0x68] sm:$0xff] %v6024
        %6033 = vst [vmem:[%s5966 + $0xb0] sm:$0xff] %v6025
        %6034 = vst [vmem:[%s5966 + $0xf8] sm:$0xff] %v6026
        %6035 = vst [vmem:[%s5966 + $0x140] sm:$0xff] %v6027
        %6036 = vst [vmem:[%s5966 + $0x188] sm:$0xff] %v6028
        %6037 = vst [vmem:[%s5966 + $0x1d0] sm:$0xff] %v6029
        %6038 = vst [vmem:[%s5966 + $0x218] sm:$0xff] %v6030
        %v6039 = vld [vmem:[%s5660 + $0x1] sm:$0xff]
        %v6040 = vld [vmem:[%s5660 + $0x11] sm:$0xff]
        %v6041 = vld [vmem:[%s5660 + $0x21] sm:$0xff]
        %v6042 = vld [vmem:[%s5660 + $0x31] sm:$0xff]
        %v6043 = vld [vmem:[%s5660 + $0x41] sm:$0xff]
        %v6044 = vld [vmem:[%s5660 + $0x51] sm:$0xff]
        %v6045 = vld [vmem:[%s5660 + $0x61] sm:$0xff]
        %v6046 = vld [vmem:[%s5660 + $0x71] sm:$0xff]
        %6047 = vst [vmem:[%s5966 + $0x28] sm:$0xff] %v6039
        %6048 = vst [vmem:[%s5966 + $0x70] sm:$0xff] %v6040
        %6049 = vst [vmem:[%s5966 + $0xb8] sm:$0xff] %v6041
        %6050 = vst [vmem:[%s5966 + $0x100] sm:$0xff] %v6042
        %6051 = vst [vmem:[%s5966 + $0x148] sm:$0xff] %v6043
        %6052 = vst [vmem:[%s5966 + $0x190] sm:$0xff] %v6044
        %6053 = vst [vmem:[%s5966 + $0x1d8] sm:$0xff] %v6045
        %6054 = vst [vmem:[%s5966 + $0x220] sm:$0xff] %v6046
        %s6055 = scalar_lea.vmem [#allocation3], 192
        %v6056 = vld [vmem:[%s6055] sm:$0xff]
        %v6057 = vld [vmem:[%s6055 + $0x10] sm:$0xff]
        %v6058 = vld [vmem:[%s6055 + $0x20] sm:$0xff]
        %v6059 = vld [vmem:[%s6055 + $0x30] sm:$0xff]
        %v6060 = vld [vmem:[%s6055 + $0x40] sm:$0xff]
        %v6061 = vld [vmem:[%s6055 + $0x50] sm:$0xff]
        %v6062 = vld [vmem:[%s6055 + $0x60] sm:$0xff]
        %v6063 = vld [vmem:[%s6055 + $0x70] sm:$0xff]
        %6064 = vst [vmem:[%s5966 + $0x30] sm:$0xff] %v6056
        %6065 = vst [vmem:[%s5966 + $0x78] sm:$0xff] %v6057
        %6066 = vst [vmem:[%s5966 + $0xc0] sm:$0xff] %v6058
        %6067 = vst [vmem:[%s5966 + $0x108] sm:$0xff] %v6059
        %6068 = vst [vmem:[%s5966 + $0x150] sm:$0xff] %v6060
        %6069 = vst [vmem:[%s5966 + $0x198] sm:$0xff] %v6061
        %6070 = vst [vmem:[%s5966 + $0x1e0] sm:$0xff] %v6062
        %6071 = vst [vmem:[%s5966 + $0x228] sm:$0xff] %v6063
        %s6072 = scalar_lea.vmem [#allocation3], 32
        %v6073 = vld [vmem:[%s6072 + $0x1] sm:$0xff]
        %v6074 = vld [vmem:[%s6072 + $0x11] sm:$0xff]
        %v6075 = vld [vmem:[%s6072 + $0x21] sm:$0xff]
        %v6076 = vld [vmem:[%s6072 + $0x31] sm:$0xff]
        %v6077 = vld [vmem:[%s6072 + $0x41] sm:$0xff]
        %v6078 = vld [vmem:[%s6072 + $0x51] sm:$0xff]
        %v6079 = vld [vmem:[%s6072 + $0x61] sm:$0xff]
        %v6080 = vld [vmem:[%s6072 + $0x71] sm:$0xff]
        %6081 = vst [vmem:[%s5966 + $0x38] sm:$0xff] %v6073
        %6082 = vst [vmem:[%s5966 + $0x80] sm:$0xff] %v6074
        %6083 = vst [vmem:[%s5966 + $0xc8] sm:$0xff] %v6075
        %6084 = vst [vmem:[%s5966 + $0x110] sm:$0xff] %v6076
        %6085 = vst [vmem:[%s5966 + $0x158] sm:$0xff] %v6077
        %6086 = vst [vmem:[%s5966 + $0x1a0] sm:$0xff] %v6078
        %6087 = vst [vmem:[%s5966 + $0x1e8] sm:$0xff] %v6079
        %6088 = vst [vmem:[%s5966 + $0x230] sm:$0xff] %v6080
        %v6089 = vld [vmem:[%s6055 + $0x1] sm:$0xff]
        %v6090 = vld [vmem:[%s6055 + $0x11] sm:$0xff]
        %v6091 = vld [vmem:[%s6055 + $0x21] sm:$0xff]
        %v6092 = vld [vmem:[%s6055 + $0x31] sm:$0xff]
        %v6093 = vld [vmem:[%s6055 + $0x41] sm:$0xff]
        %v6094 = vld [vmem:[%s6055 + $0x51] sm:$0xff]
        %v6095 = vld [vmem:[%s6055 + $0x61] sm:$0xff]
        %v6096 = vld [vmem:[%s6055 + $0x71] sm:$0xff]
        %6097 = vst [vmem:[%s5966 + $0x40] sm:$0xff] %v6089
        %6098 = vst [vmem:[%s5966 + $0x88] sm:$0xff] %v6090
        %6099 = vst [vmem:[%s5966 + $0xd0] sm:$0xff] %v6091
        %6100 = vst [vmem:[%s5966 + $0x118] sm:$0xff] %v6092
        %6101 = vst [vmem:[%s5966 + $0x160] sm:$0xff] %v6093
        %6102 = vst [vmem:[%s5966 + $0x1a8] sm:$0xff] %v6094
        %6103 = vst [vmem:[%s5966 + $0x1f0] sm:$0xff] %v6095
        %6104 = vst [vmem:[%s5966 + $0x238] sm:$0xff] %v6096
        %v6105 = vld [vmem:[%s5633 + $0x1] sm:$0xff]
        %v6106 = vld [vmem:[%s5633 + $0x11] sm:$0xff]
        %v6107 = vld [vmem:[%s5633 + $0x21] sm:$0xff]
        %v6108 = vld [vmem:[%s5633 + $0x31] sm:$0xff]
        %v6109 = vld [vmem:[%s5633 + $0x41] sm:$0xff]
        %v6110 = vld [vmem:[%s5633 + $0x51] sm:$0xff]
        %v6111 = vld [vmem:[%s5633 + $0x61] sm:$0xff]
        %v6112 = vld [vmem:[%s5633 + $0x71] sm:$0xff]
        %s6113 = scalar_lea.vmem [#allocation5], 1728
        %6114 = vst [vmem:[%s6113] sm:$0xff] %v6105
        %6115 = vst [vmem:[%s6113 + $0x48] sm:$0xff] %v6106
        %6116 = vst [vmem:[%s6113 + $0x90] sm:$0xff] %v6107
        %6117 = vst [vmem:[%s6113 + $0xd8] sm:$0xff] %v6108
        %6118 = vst [vmem:[%s6113 + $0x120] sm:$0xff] %v6109
        %6119 = vst [vmem:[%s6113 + $0x168] sm:$0xff] %v6110
        %6120 = vst [vmem:[%s6113 + $0x1b0] sm:$0xff] %v6111
        %6121 = vst [vmem:[%s6113 + $0x1f8] sm:$0xff] %v6112
        %v6122 = vld [vmem:[%s5642 + $0x1] sm:$0xff]
        %v6123 = vld [vmem:[%s5642 + $0x11] sm:$0xff]
        %v6124 = vld [vmem:[%s5642 + $0x21] sm:$0xff]
        %v6125 = vld [vmem:[%s5642 + $0x31] sm:$0xff]
        %v6126 = vld [vmem:[%s5642 + $0x41] sm:$0xff]
        %v6127 = vld [vmem:[%s5642 + $0x51] sm:$0xff]
        %v6128 = vld [vmem:[%s5642 + $0x61] sm:$0xff]
        %v6129 = vld [vmem:[%s5642 + $0x71] sm:$0xff]
        %6130 = vst [vmem:[%s6113 + $0x8] sm:$0xff] %v6122
        %6131 = vst [vmem:[%s6113 + $0x50] sm:$0xff] %v6123
        %6132 = vst [vmem:[%s6113 + $0x98] sm:$0xff] %v6124
        %6133 = vst [vmem:[%s6113 + $0xe0] sm:$0xff] %v6125
        %6134 = vst [vmem:[%s6113 + $0x128] sm:$0xff] %v6126
        %6135 = vst [vmem:[%s6113 + $0x170] sm:$0xff] %v6127
        %6136 = vst [vmem:[%s6113 + $0x1b8] sm:$0xff] %v6128
        %6137 = vst [vmem:[%s6113 + $0x200] sm:$0xff] %v6129
        %v6138 = vld [vmem:[%s5633 + $0x2] sm:$0xff]
        %v6139 = vld [vmem:[%s5633 + $0x12] sm:$0xff]
        %v6140 = vld [vmem:[%s5633 + $0x22] sm:$0xff]
        %v6141 = vld [vmem:[%s5633 + $0x32] sm:$0xff]
        %v6142 = vld [vmem:[%s5633 + $0x42] sm:$0xff]
        %v6143 = vld [vmem:[%s5633 + $0x52] sm:$0xff]
        %v6144 = vld [vmem:[%s5633 + $0x62] sm:$0xff]
        %v6145 = vld [vmem:[%s5633 + $0x72] sm:$0xff]
        %6146 = vst [vmem:[%s6113 + $0x10] sm:$0xff] %v6138
        %6147 = vst [vmem:[%s6113 + $0x58] sm:$0xff] %v6139
        %6148 = vst [vmem:[%s6113 + $0xa0] sm:$0xff] %v6140
        %6149 = vst [vmem:[%s6113 + $0xe8] sm:$0xff] %v6141
        %6150 = vst [vmem:[%s6113 + $0x130] sm:$0xff] %v6142
        %6151 = vst [vmem:[%s6113 + $0x178] sm:$0xff] %v6143
        %6152 = vst [vmem:[%s6113 + $0x1c0] sm:$0xff] %v6144
        %6153 = vst [vmem:[%s6113 + $0x208] sm:$0xff] %v6145
        %v6154 = vld [vmem:[%s5651 + $0x1] sm:$0xff]
        %v6155 = vld [vmem:[%s5651 + $0x11] sm:$0xff]
        %v6156 = vld [vmem:[%s5651 + $0x21] sm:$0xff]
        %v6157 = vld [vmem:[%s5651 + $0x31] sm:$0xff]
        %v6158 = vld [vmem:[%s5651 + $0x41] sm:$0xff]
        %v6159 = vld [vmem:[%s5651 + $0x51] sm:$0xff]
        %v6160 = vld [vmem:[%s5651 + $0x61] sm:$0xff]
        %v6161 = vld [vmem:[%s5651 + $0x71] sm:$0xff]
        %6162 = vst [vmem:[%s6113 + $0x18] sm:$0xff] %v6154
        %6163 = vst [vmem:[%s6113 + $0x60] sm:$0xff] %v6155
        %6164 = vst [vmem:[%s6113 + $0xa8] sm:$0xff] %v6156
        %6165 = vst [vmem:[%s6113 + $0xf0] sm:$0xff] %v6157
        %6166 = vst [vmem:[%s6113 + $0x138] sm:$0xff] %v6158
        %6167 = vst [vmem:[%s6113 + $0x180] sm:$0xff] %v6159
        %6168 = vst [vmem:[%s6113 + $0x1c8] sm:$0xff] %v6160
        %6169 = vst [vmem:[%s6113 + $0x210] sm:$0xff] %v6161
        %v6170 = vld [vmem:[%s5660 + $0x1] sm:$0xff]
        %v6171 = vld [vmem:[%s5660 + $0x11] sm:$0xff]
        %v6172 = vld [vmem:[%s5660 + $0x21] sm:$0xff]
        %v6173 = vld [vmem:[%s5660 + $0x31] sm:$0xff]
        %v6174 = vld [vmem:[%s5660 + $0x41] sm:$0xff]
        %v6175 = vld [vmem:[%s5660 + $0x51] sm:$0xff]
        %v6176 = vld [vmem:[%s5660 + $0x61] sm:$0xff]
        %v6177 = vld [vmem:[%s5660 + $0x71] sm:$0xff]
        %6178 = vst [vmem:[%s6113 + $0x20] sm:$0xff] %v6170
        %6179 = vst [vmem:[%s6113 + $0x68] sm:$0xff] %v6171
        %6180 = vst [vmem:[%s6113 + $0xb0] sm:$0xff] %v6172
        %6181 = vst [vmem:[%s6113 + $0xf8] sm:$0xff] %v6173
        %6182 = vst [vmem:[%s6113 + $0x140] sm:$0xff] %v6174
        %6183 = vst [vmem:[%s6113 + $0x188] sm:$0xff] %v6175
        %6184 = vst [vmem:[%s6113 + $0x1d0] sm:$0xff] %v6176
        %6185 = vst [vmem:[%s6113 + $0x218] sm:$0xff] %v6177
        %v6186 = vld [vmem:[%s5651 + $0x2] sm:$0xff]
        %v6187 = vld [vmem:[%s5651 + $0x12] sm:$0xff]
        %v6188 = vld [vmem:[%s5651 + $0x22] sm:$0xff]
        %v6189 = vld [vmem:[%s5651 + $0x32] sm:$0xff]
        %v6190 = vld [vmem:[%s5651 + $0x42] sm:$0xff]
        %v6191 = vld [vmem:[%s5651 + $0x52] sm:$0xff]
        %v6192 = vld [vmem:[%s5651 + $0x62] sm:$0xff]
        %v6193 = vld [vmem:[%s5651 + $0x72] sm:$0xff]
        %6194 = vst [vmem:[%s6113 + $0x28] sm:$0xff] %v6186
        %6195 = vst [vmem:[%s6113 + $0x70] sm:$0xff] %v6187
        %6196 = vst [vmem:[%s6113 + $0xb8] sm:$0xff] %v6188
        %6197 = vst [vmem:[%s6113 + $0x100] sm:$0xff] %v6189
        %6198 = vst [vmem:[%s6113 + $0x148] sm:$0xff] %v6190
        %6199 = vst [vmem:[%s6113 + $0x190] sm:$0xff] %v6191
        %6200 = vst [vmem:[%s6113 + $0x1d8] sm:$0xff] %v6192
        %6201 = vst [vmem:[%s6113 + $0x220] sm:$0xff] %v6193
        %v6202 = vld [vmem:[%s6072 + $0x1] sm:$0xff]
        %v6203 = vld [vmem:[%s6072 + $0x11] sm:$0xff]
        %v6204 = vld [vmem:[%s6072 + $0x21] sm:$0xff]
        %v6205 = vld [vmem:[%s6072 + $0x31] sm:$0xff]
        %v6206 = vld [vmem:[%s6072 + $0x41] sm:$0xff]
        %v6207 = vld [vmem:[%s6072 + $0x51] sm:$0xff]
        %v6208 = vld [vmem:[%s6072 + $0x61] sm:$0xff]
        %v6209 = vld [vmem:[%s6072 + $0x71] sm:$0xff]
        %6210 = vst [vmem:[%s6113 + $0x30] sm:$0xff] %v6202
        %6211 = vst [vmem:[%s6113 + $0x78] sm:$0xff] %v6203
        %6212 = vst [vmem:[%s6113 + $0xc0] sm:$0xff] %v6204
        %6213 = vst [vmem:[%s6113 + $0x108] sm:$0xff] %v6205
        %6214 = vst [vmem:[%s6113 + $0x150] sm:$0xff] %v6206
        %6215 = vst [vmem:[%s6113 + $0x198] sm:$0xff] %v6207
        %6216 = vst [vmem:[%s6113 + $0x1e0] sm:$0xff] %v6208
        %6217 = vst [vmem:[%s6113 + $0x228] sm:$0xff] %v6209
        %v6218 = vld [vmem:[%s6055 + $0x1] sm:$0xff]
        %v6219 = vld [vmem:[%s6055 + $0x11] sm:$0xff]
        %v6220 = vld [vmem:[%s6055 + $0x21] sm:$0xff]
        %v6221 = vld [vmem:[%s6055 + $0x31] sm:$0xff]
        %v6222 = vld [vmem:[%s6055 + $0x41] sm:$0xff]
        %v6223 = vld [vmem:[%s6055 + $0x51] sm:$0xff]
        %v6224 = vld [vmem:[%s6055 + $0x61] sm:$0xff]
        %v6225 = vld [vmem:[%s6055 + $0x71] sm:$0xff]
        %6226 = vst [vmem:[%s6113 + $0x38] sm:$0xff] %v6218
        %6227 = vst [vmem:[%s6113 + $0x80] sm:$0xff] %v6219
        %6228 = vst [vmem:[%s6113 + $0xc8] sm:$0xff] %v6220
        %6229 = vst [vmem:[%s6113 + $0x110] sm:$0xff] %v6221
        %6230 = vst [vmem:[%s6113 + $0x158] sm:$0xff] %v6222
        %6231 = vst [vmem:[%s6113 + $0x1a0] sm:$0xff] %v6223
        %6232 = vst [vmem:[%s6113 + $0x1e8] sm:$0xff] %v6224
        %6233 = vst [vmem:[%s6113 + $0x230] sm:$0xff] %v6225
        %v6234 = vld [vmem:[%s6072 + $0x2] sm:$0xff]
        %v6235 = vld [vmem:[%s6072 + $0x12] sm:$0xff]
        %v6236 = vld [vmem:[%s6072 + $0x22] sm:$0xff]
        %v6237 = vld [vmem:[%s6072 + $0x32] sm:$0xff]
        %v6238 = vld [vmem:[%s6072 + $0x42] sm:$0xff]
        %v6239 = vld [vmem:[%s6072 + $0x52] sm:$0xff]
        %v6240 = vld [vmem:[%s6072 + $0x62] sm:$0xff]
        %v6241 = vld [vmem:[%s6072 + $0x72] sm:$0xff]
        %6242 = vst [vmem:[%s6113 + $0x40] sm:$0xff] %v6234
        %6243 = vst [vmem:[%s6113 + $0x88] sm:$0xff] %v6235
        %6244 = vst [vmem:[%s6113 + $0xd0] sm:$0xff] %v6236
        %6245 = vst [vmem:[%s6113 + $0x118] sm:$0xff] %v6237
        %6246 = vst [vmem:[%s6113 + $0x160] sm:$0xff] %v6238
        %6247 = vst [vmem:[%s6113 + $0x1a8] sm:$0xff] %v6239
        %6248 = vst [vmem:[%s6113 + $0x1f0] sm:$0xff] %v6240
        %6249 = vst [vmem:[%s6113 + $0x238] sm:$0xff] %v6241
        %v6250 = vld [vmem:[#allocation5] sm:$0xff]
        %v6251 = vld [vmem:[#allocation5 + $0x8] sm:$0xff]
        %v6252 = vld [vmem:[#allocation5 + $0x10] sm:$0xff]
        %v6253 = vld [vmem:[#allocation5 + $0x18] sm:$0xff]
        %v6254 = vld [vmem:[#allocation5 + $0x20] sm:$0xff]
        %v6255 = vld [vmem:[#allocation5 + $0x28] sm:$0xff]
        %v6256 = vld [vmem:[#allocation5 + $0x30] sm:$0xff]
        %v6257 = vld [vmem:[#allocation5 + $0x38] sm:$0xff]
        %v6258 = vld [vmem:[#allocation5 + $0x40] sm:$0xff]
        %v6259 = vld [vmem:[#allocation5 + $0x48] sm:$0xff]
        %v6260 = vld [vmem:[#allocation5 + $0x50] sm:$0xff]
        %v6261 = vld [vmem:[#allocation5 + $0x58] sm:$0xff]
        %v6262 = vld [vmem:[#allocation5 + $0x60] sm:$0xff]
        %v6263 = vld [vmem:[#allocation5 + $0x68] sm:$0xff]
        %v6264 = vld [vmem:[#allocation5 + $0x70] sm:$0xff]
        %v6265 = vld [vmem:[#allocation5 + $0x78] sm:$0xff]
        %v6266 = vld [vmem:[#allocation5 + $0x80] sm:$0xff]
        %v6267 = vld [vmem:[#allocation5 + $0x88] sm:$0xff]
        %v6268 = vld [vmem:[#allocation5 + $0x90] sm:$0xff]
        %v6269 = vld [vmem:[#allocation5 + $0x98] sm:$0xff]
        %v6270 = vld [vmem:[#allocation5 + $0xa0] sm:$0xff]
        %v6271 = vld [vmem:[#allocation5 + $0xa8] sm:$0xff]
        %v6272 = vld [vmem:[#allocation5 + $0xb0] sm:$0xff]
        %v6273 = vld [vmem:[#allocation5 + $0xb8] sm:$0xff]
        %v6274 = vld [vmem:[#allocation5 + $0xc0] sm:$0xff]
        %v6275 = vld [vmem:[#allocation5 + $0xc8] sm:$0xff]
        %v6276 = vld [vmem:[#allocation5 + $0xd0] sm:$0xff]
        %v6277 = vld [vmem:[#allocation5 + $0xd8] sm:$0xff]
        %v6278 = vld [vmem:[#allocation5 + $0xe0] sm:$0xff]
        %v6279 = vld [vmem:[#allocation5 + $0xe8] sm:$0xff]
        %v6280 = vld [vmem:[#allocation5 + $0xf0] sm:$0xff]
        %v6281 = vld [vmem:[#allocation5 + $0xf8] sm:$0xff]
        %v6282 = vld [vmem:[#allocation5 + $0x100] sm:$0xff]
        %v6283 = vld [vmem:[#allocation5 + $0x108] sm:$0xff]
        %v6284 = vld [vmem:[#allocation5 + $0x110] sm:$0xff]
        %v6285 = vld [vmem:[#allocation5 + $0x118] sm:$0xff]
        %v6286 = vld [vmem:[#allocation5 + $0x120] sm:$0xff]
        %v6287 = vld [vmem:[#allocation5 + $0x128] sm:$0xff]
        %v6288 = vld [vmem:[#allocation5 + $0x130] sm:$0xff]
        %v6289 = vld [vmem:[#allocation5 + $0x138] sm:$0xff]
        %v6290 = vld [vmem:[#allocation5 + $0x140] sm:$0xff]
        %v6291 = vld [vmem:[#allocation5 + $0x148] sm:$0xff]
        %v6292 = vld [vmem:[#allocation5 + $0x150] sm:$0xff]
        %v6293 = vld [vmem:[#allocation5 + $0x158] sm:$0xff]
        %v6294 = vld [vmem:[#allocation5 + $0x160] sm:$0xff]
        %v6295 = vld [vmem:[#allocation5 + $0x168] sm:$0xff]
        %v6296 = vld [vmem:[#allocation5 + $0x170] sm:$0xff]
        %v6297 = vld [vmem:[#allocation5 + $0x178] sm:$0xff]
        %v6298 = vld [vmem:[#allocation5 + $0x180] sm:$0xff]
        %v6299 = vld [vmem:[#allocation5 + $0x188] sm:$0xff]
        %v6300 = vld [vmem:[#allocation5 + $0x190] sm:$0xff]
        %v6301 = vld [vmem:[#allocation5 + $0x198] sm:$0xff]
        %v6302 = vld [vmem:[#allocation5 + $0x1a0] sm:$0xff]
        %v6303 = vld [vmem:[#allocation5 + $0x1a8] sm:$0xff]
        %v6304 = vld [vmem:[#allocation5 + $0x1b0] sm:$0xff]
        %v6305 = vld [vmem:[#allocation5 + $0x1b8] sm:$0xff]
        %v6306 = vld [vmem:[#allocation5 + $0x1c0] sm:$0xff]
        %v6307 = vld [vmem:[#allocation5 + $0x1c8] sm:$0xff]
        %v6308 = vld [vmem:[#allocation5 + $0x1d0] sm:$0xff]
        %v6309 = vld [vmem:[#allocation5 + $0x1d8] sm:$0xff]
        %v6310 = vld [vmem:[#allocation5 + $0x1e0] sm:$0xff]
        %v6311 = vld [vmem:[#allocation5 + $0x1e8] sm:$0xff]
        %v6312 = vld [vmem:[#allocation5 + $0x1f0] sm:$0xff]
        %v6313 = vld [vmem:[#allocation5 + $0x1f8] sm:$0xff]
        %v6314 = vld [vmem:[#allocation5 + $0x200] sm:$0xff]
        %v6315 = vld [vmem:[#allocation5 + $0x208] sm:$0xff]
        %v6316 = vld [vmem:[#allocation5 + $0x210] sm:$0xff]
        %v6317 = vld [vmem:[#allocation5 + $0x218] sm:$0xff]
        %v6318 = vld [vmem:[#allocation5 + $0x220] sm:$0xff]
        %v6319 = vld [vmem:[#allocation5 + $0x228] sm:$0xff]
        %v6320 = vld [vmem:[#allocation5 + $0x230] sm:$0xff]
        %v6321 = vld [vmem:[#allocation5 + $0x238] sm:$0xff]
        %v6322 = vld [vmem:[#allocation5 + $0x240] sm:$0xff]
        %v6323 = vld [vmem:[#allocation5 + $0x248] sm:$0xff]
        %v6324 = vld [vmem:[#allocation5 + $0x250] sm:$0xff]
        %v6325 = vld [vmem:[#allocation5 + $0x258] sm:$0xff]
        %v6326 = vld [vmem:[#allocation5 + $0x260] sm:$0xff]
        %v6327 = vld [vmem:[#allocation5 + $0x268] sm:$0xff]
        %v6328 = vld [vmem:[#allocation5 + $0x270] sm:$0xff]
        %v6329 = vld [vmem:[#allocation5 + $0x278] sm:$0xff]
        %v6330 = vld [vmem:[#allocation5 + $0x280] sm:$0xff]
        %v6331 = vld [vmem:[#allocation5 + $0x288] sm:$0xff]
        %v6332 = vld [vmem:[#allocation5 + $0x290] sm:$0xff]
        %v6333 = vld [vmem:[#allocation5 + $0x298] sm:$0xff]
        %v6334 = vld [vmem:[#allocation5 + $0x2a0] sm:$0xff]
        %v6335 = vld [vmem:[#allocation5 + $0x2a8] sm:$0xff]
        %v6336 = vld [vmem:[#allocation5 + $0x2b0] sm:$0xff]
        %v6337 = vld [vmem:[#allocation5 + $0x2b8] sm:$0xff]
        %v6338 = vld [vmem:[#allocation5 + $0x2c0] sm:$0xff]
        %v6339 = vld [vmem:[#allocation5 + $0x2c8] sm:$0xff]
        %v6340 = vld [vmem:[#allocation5 + $0x2d0] sm:$0xff]
        %v6341 = vld [vmem:[#allocation5 + $0x2d8] sm:$0xff]
        %v6342 = vld [vmem:[#allocation5 + $0x2e0] sm:$0xff]
        %v6343 = vld [vmem:[#allocation5 + $0x2e8] sm:$0xff]
        %v6344 = vld [vmem:[#allocation5 + $0x2f0] sm:$0xff]
        %v6345 = vld [vmem:[#allocation5 + $0x2f8] sm:$0xff]
        %v6346 = vld [vmem:[#allocation5 + $0x300] sm:$0xff]
        %v6347 = vld [vmem:[#allocation5 + $0x308] sm:$0xff]
        %v6348 = vld [vmem:[#allocation5 + $0x310] sm:$0xff]
        %v6349 = vld [vmem:[#allocation5 + $0x318] sm:$0xff]
        %v6350 = vld [vmem:[#allocation5 + $0x320] sm:$0xff]
        %v6351 = vld [vmem:[#allocation5 + $0x328] sm:$0xff]
        %v6352 = vld [vmem:[#allocation5 + $0x330] sm:$0xff]
        %v6353 = vld [vmem:[#allocation5 + $0x338] sm:$0xff]
        %v6354 = vld [vmem:[#allocation5 + $0x340] sm:$0xff]
        %v6355 = vld [vmem:[#allocation5 + $0x348] sm:$0xff]
        %v6356 = vld [vmem:[#allocation5 + $0x350] sm:$0xff]
        %v6357 = vld [vmem:[#allocation5 + $0x358] sm:$0xff]
        %v6358 = vld [vmem:[#allocation5 + $0x360] sm:$0xff]
        %v6359 = vld [vmem:[#allocation5 + $0x368] sm:$0xff]
        %v6360 = vld [vmem:[#allocation5 + $0x370] sm:$0xff]
        %v6361 = vld [vmem:[#allocation5 + $0x378] sm:$0xff]
        %v6362 = vld [vmem:[#allocation5 + $0x380] sm:$0xff]
        %v6363 = vld [vmem:[#allocation5 + $0x388] sm:$0xff]
        %v6364 = vld [vmem:[#allocation5 + $0x390] sm:$0xff]
        %v6365 = vld [vmem:[#allocation5 + $0x398] sm:$0xff]
        %v6366 = vld [vmem:[#allocation5 + $0x3a0] sm:$0xff]
        %v6367 = vld [vmem:[#allocation5 + $0x3a8] sm:$0xff]
        %v6368 = vld [vmem:[#allocation5 + $0x3b0] sm:$0xff]
        %v6369 = vld [vmem:[#allocation5 + $0x3b8] sm:$0xff]
        %v6370 = vld [vmem:[#allocation5 + $0x3c0] sm:$0xff]
        %v6371 = vld [vmem:[#allocation5 + $0x3c8] sm:$0xff]
        %v6372 = vld [vmem:[#allocation5 + $0x3d0] sm:$0xff]
        %v6373 = vld [vmem:[#allocation5 + $0x3d8] sm:$0xff]
        %v6374 = vld [vmem:[#allocation5 + $0x3e0] sm:$0xff]
        %v6375 = vld [vmem:[#allocation5 + $0x3e8] sm:$0xff]
        %v6376 = vld [vmem:[#allocation5 + $0x3f0] sm:$0xff]
        %v6377 = vld [vmem:[#allocation5 + $0x3f8] sm:$0xff]
        %v6378 = vld [vmem:[#allocation5 + $0x400] sm:$0xff]
        %v6379 = vld [vmem:[#allocation5 + $0x408] sm:$0xff]
        %v6380 = vld [vmem:[#allocation5 + $0x410] sm:$0xff]
        %v6381 = vld [vmem:[#allocation5 + $0x418] sm:$0xff]
        %v6382 = vld [vmem:[#allocation5 + $0x420] sm:$0xff]
        %v6383 = vld [vmem:[#allocation5 + $0x428] sm:$0xff]
        %v6384 = vld [vmem:[#allocation5 + $0x430] sm:$0xff]
        %v6385 = vld [vmem:[#allocation5 + $0x438] sm:$0xff]
        %v6386 = vld [vmem:[#allocation5 + $0x440] sm:$0xff]
        %v6387 = vld [vmem:[#allocation5 + $0x448] sm:$0xff]
        %v6388 = vld [vmem:[#allocation5 + $0x450] sm:$0xff]
        %v6389 = vld [vmem:[#allocation5 + $0x458] sm:$0xff]
        %v6390 = vld [vmem:[#allocation5 + $0x460] sm:$0xff]
        %v6391 = vld [vmem:[#allocation5 + $0x468] sm:$0xff]
        %v6392 = vld [vmem:[#allocation5 + $0x470] sm:$0xff]
        %v6393 = vld [vmem:[#allocation5 + $0x478] sm:$0xff]
        %v6394 = vld [vmem:[#allocation5 + $0x480] sm:$0xff]
        %v6395 = vld [vmem:[#allocation5 + $0x488] sm:$0xff]
        %v6396 = vld [vmem:[#allocation5 + $0x490] sm:$0xff]
        %v6397 = vld [vmem:[#allocation5 + $0x498] sm:$0xff]
        %v6398 = vld [vmem:[#allocation5 + $0x4a0] sm:$0xff]
        %v6399 = vld [vmem:[#allocation5 + $0x4a8] sm:$0xff]
        %v6400 = vld [vmem:[#allocation5 + $0x4b0] sm:$0xff]
        %v6401 = vld [vmem:[#allocation5 + $0x4b8] sm:$0xff]
        %v6402 = vld [vmem:[#allocation5 + $0x4c0] sm:$0xff]
        %v6403 = vld [vmem:[#allocation5 + $0x4c8] sm:$0xff]
        %v6404 = vld [vmem:[#allocation5 + $0x4d0] sm:$0xff]
        %v6405 = vld [vmem:[#allocation5 + $0x4d8] sm:$0xff]
        %v6406 = vld [vmem:[#allocation5 + $0x4e0] sm:$0xff]
        %v6407 = vld [vmem:[#allocation5 + $0x4e8] sm:$0xff]
        %v6408 = vld [vmem:[#allocation5 + $0x4f0] sm:$0xff]
        %v6409 = vld [vmem:[#allocation5 + $0x4f8] sm:$0xff]
        %v6410 = vld [vmem:[#allocation5 + $0x500] sm:$0xff]
        %v6411 = vld [vmem:[#allocation5 + $0x508] sm:$0xff]
        %v6412 = vld [vmem:[#allocation5 + $0x510] sm:$0xff]
        %v6413 = vld [vmem:[#allocation5 + $0x518] sm:$0xff]
        %v6414 = vld [vmem:[#allocation5 + $0x520] sm:$0xff]
        %v6415 = vld [vmem:[#allocation5 + $0x528] sm:$0xff]
        %v6416 = vld [vmem:[#allocation5 + $0x530] sm:$0xff]
        %v6417 = vld [vmem:[#allocation5 + $0x538] sm:$0xff]
        %v6418 = vld [vmem:[#allocation5 + $0x540] sm:$0xff]
        %v6419 = vld [vmem:[#allocation5 + $0x548] sm:$0xff]
        %v6420 = vld [vmem:[#allocation5 + $0x550] sm:$0xff]
        %v6421 = vld [vmem:[#allocation5 + $0x558] sm:$0xff]
        %v6422 = vld [vmem:[#allocation5 + $0x560] sm:$0xff]
        %v6423 = vld [vmem:[#allocation5 + $0x568] sm:$0xff]
        %v6424 = vld [vmem:[#allocation5 + $0x570] sm:$0xff]
        %v6425 = vld [vmem:[#allocation5 + $0x578] sm:$0xff]
        %v6426 = vld [vmem:[#allocation5 + $0x580] sm:$0xff]
        %v6427 = vld [vmem:[#allocation5 + $0x588] sm:$0xff]
        %v6428 = vld [vmem:[#allocation5 + $0x590] sm:$0xff]
        %v6429 = vld [vmem:[#allocation5 + $0x598] sm:$0xff]
        %v6430 = vld [vmem:[#allocation5 + $0x5a0] sm:$0xff]
        %v6431 = vld [vmem:[#allocation5 + $0x5a8] sm:$0xff]
        %v6432 = vld [vmem:[#allocation5 + $0x5b0] sm:$0xff]
        %v6433 = vld [vmem:[#allocation5 + $0x5b8] sm:$0xff]
        %v6434 = vld [vmem:[#allocation5 + $0x5c0] sm:$0xff]
        %v6435 = vld [vmem:[#allocation5 + $0x5c8] sm:$0xff]
        %v6436 = vld [vmem:[#allocation5 + $0x5d0] sm:$0xff]
        %v6437 = vld [vmem:[#allocation5 + $0x5d8] sm:$0xff]
        %v6438 = vld [vmem:[#allocation5 + $0x5e0] sm:$0xff]
        %v6439 = vld [vmem:[#allocation5 + $0x5e8] sm:$0xff]
        %v6440 = vld [vmem:[#allocation5 + $0x5f0] sm:$0xff]
        %v6441 = vld [vmem:[#allocation5 + $0x5f8] sm:$0xff]
        %v6442 = vld [vmem:[#allocation5 + $0x600] sm:$0xff]
        %v6443 = vld [vmem:[#allocation5 + $0x608] sm:$0xff]
        %v6444 = vld [vmem:[#allocation5 + $0x610] sm:$0xff]
        %v6445 = vld [vmem:[#allocation5 + $0x618] sm:$0xff]
        %v6446 = vld [vmem:[#allocation5 + $0x620] sm:$0xff]
        %v6447 = vld [vmem:[#allocation5 + $0x628] sm:$0xff]
        %v6448 = vld [vmem:[#allocation5 + $0x630] sm:$0xff]
        %v6449 = vld [vmem:[#allocation5 + $0x638] sm:$0xff]
        %v6450 = vld [vmem:[#allocation5 + $0x640] sm:$0xff]
        %v6451 = vld [vmem:[#allocation5 + $0x648] sm:$0xff]
        %v6452 = vld [vmem:[#allocation5 + $0x650] sm:$0xff]
        %v6453 = vld [vmem:[#allocation5 + $0x658] sm:$0xff]
        %v6454 = vld [vmem:[#allocation5 + $0x660] sm:$0xff]
        %v6455 = vld [vmem:[#allocation5 + $0x668] sm:$0xff]
        %v6456 = vld [vmem:[#allocation5 + $0x670] sm:$0xff]
        %v6457 = vld [vmem:[#allocation5 + $0x678] sm:$0xff]
        %v6458 = vld [vmem:[#allocation5 + $0x680] sm:$0xff]
        %v6459 = vld [vmem:[#allocation5 + $0x688] sm:$0xff]
        %v6460 = vld [vmem:[#allocation5 + $0x690] sm:$0xff]
        %v6461 = vld [vmem:[#allocation5 + $0x698] sm:$0xff]
        %v6462 = vld [vmem:[#allocation5 + $0x6a0] sm:$0xff]
        %v6463 = vld [vmem:[#allocation5 + $0x6a8] sm:$0xff]
        %v6464 = vld [vmem:[#allocation5 + $0x6b0] sm:$0xff]
        %v6465 = vld [vmem:[#allocation5 + $0x6b8] sm:$0xff]
        %v6466 = vld [vmem:[#allocation5 + $0x6c0] sm:$0xff]
        %v6467 = vld [vmem:[#allocation5 + $0x6c8] sm:$0xff]
        %v6468 = vld [vmem:[#allocation5 + $0x6d0] sm:$0xff]
        %v6469 = vld [vmem:[#allocation5 + $0x6d8] sm:$0xff]
        %v6470 = vld [vmem:[#allocation5 + $0x6e0] sm:$0xff]
        %v6471 = vld [vmem:[#allocation5 + $0x6e8] sm:$0xff]
        %v6472 = vld [vmem:[#allocation5 + $0x6f0] sm:$0xff]
        %v6473 = vld [vmem:[#allocation5 + $0x6f8] sm:$0xff]
        %v6474 = vld [vmem:[#allocation5 + $0x700] sm:$0xff]
        %v6475 = vld [vmem:[#allocation5 + $0x708] sm:$0xff]
        %v6476 = vld [vmem:[#allocation5 + $0x710] sm:$0xff]
        %v6477 = vld [vmem:[#allocation5 + $0x718] sm:$0xff]
        %v6478 = vld [vmem:[#allocation5 + $0x720] sm:$0xff]
        %v6479 = vld [vmem:[#allocation5 + $0x728] sm:$0xff]
        %v6480 = vld [vmem:[#allocation5 + $0x730] sm:$0xff]
        %v6481 = vld [vmem:[#allocation5 + $0x738] sm:$0xff]
        %v6482 = vld [vmem:[#allocation5 + $0x740] sm:$0xff]
        %v6483 = vld [vmem:[#allocation5 + $0x748] sm:$0xff]
        %v6484 = vld [vmem:[#allocation5 + $0x750] sm:$0xff]
        %v6485 = vld [vmem:[#allocation5 + $0x758] sm:$0xff]
        %v6486 = vld [vmem:[#allocation5 + $0x760] sm:$0xff]
        %v6487 = vld [vmem:[#allocation5 + $0x768] sm:$0xff]
        %v6488 = vld [vmem:[#allocation5 + $0x770] sm:$0xff]
        %v6489 = vld [vmem:[#allocation5 + $0x778] sm:$0xff]
        %v6490 = vld [vmem:[#allocation5 + $0x780] sm:$0xff]
        %v6491 = vld [vmem:[#allocation5 + $0x788] sm:$0xff]
        %v6492 = vld [vmem:[#allocation5 + $0x790] sm:$0xff]
        %v6493 = vld [vmem:[#allocation5 + $0x798] sm:$0xff]
        %v6494 = vld [vmem:[#allocation5 + $0x7a0] sm:$0xff]
        %v6495 = vld [vmem:[#allocation5 + $0x7a8] sm:$0xff]
        %v6496 = vld [vmem:[#allocation5 + $0x7b0] sm:$0xff]
        %v6497 = vld [vmem:[#allocation5 + $0x7b8] sm:$0xff]
        %v6498 = vld [vmem:[#allocation5 + $0x7c0] sm:$0xff]
        %v6499 = vld [vmem:[#allocation5 + $0x7c8] sm:$0xff]
        %v6500 = vld [vmem:[#allocation5 + $0x7d0] sm:$0xff]
        %v6501 = vld [vmem:[#allocation5 + $0x7d8] sm:$0xff]
        %v6502 = vld [vmem:[#allocation5 + $0x7e0] sm:$0xff]
        %v6503 = vld [vmem:[#allocation5 + $0x7e8] sm:$0xff]
        %v6504 = vld [vmem:[#allocation5 + $0x7f0] sm:$0xff]
        %v6505 = vld [vmem:[#allocation5 + $0x7f8] sm:$0xff]
        %v6506 = vld [vmem:[#allocation5 + $0x800] sm:$0xff]
        %v6507 = vld [vmem:[#allocation5 + $0x808] sm:$0xff]
        %v6508 = vld [vmem:[#allocation5 + $0x810] sm:$0xff]
        %v6509 = vld [vmem:[#allocation5 + $0x818] sm:$0xff]
        %v6510 = vld [vmem:[#allocation5 + $0x820] sm:$0xff]
        %v6511 = vld [vmem:[#allocation5 + $0x828] sm:$0xff]
        %v6512 = vld [vmem:[#allocation5 + $0x830] sm:$0xff]
        %v6513 = vld [vmem:[#allocation5 + $0x838] sm:$0xff]
        %v6514 = vld [vmem:[#allocation5 + $0x840] sm:$0xff]
        %v6515 = vld [vmem:[#allocation5 + $0x848] sm:$0xff]
        %v6516 = vld [vmem:[#allocation5 + $0x850] sm:$0xff]
        %v6517 = vld [vmem:[#allocation5 + $0x858] sm:$0xff]
        %v6518 = vld [vmem:[#allocation5 + $0x860] sm:$0xff]
        %v6519 = vld [vmem:[#allocation5 + $0x868] sm:$0xff]
        %v6520 = vld [vmem:[#allocation5 + $0x870] sm:$0xff]
        %v6521 = vld [vmem:[#allocation5 + $0x878] sm:$0xff]
        %v6522 = vld [vmem:[#allocation5 + $0x880] sm:$0xff]
        %v6523 = vld [vmem:[#allocation5 + $0x888] sm:$0xff]
        %v6524 = vld [vmem:[#allocation5 + $0x890] sm:$0xff]
        %v6525 = vld [vmem:[#allocation5 + $0x898] sm:$0xff]
        %v6526 = vld [vmem:[#allocation5 + $0x8a0] sm:$0xff]
        %v6527 = vld [vmem:[#allocation5 + $0x8a8] sm:$0xff]
        %v6528 = vld [vmem:[#allocation5 + $0x8b0] sm:$0xff]
        %v6529 = vld [vmem:[#allocation5 + $0x8b8] sm:$0xff]
        %v6530 = vld [vmem:[#allocation5 + $0x8c0] sm:$0xff]
        %v6531 = vld [vmem:[#allocation5 + $0x8c8] sm:$0xff]
        %v6532 = vld [vmem:[#allocation5 + $0x8d0] sm:$0xff]
        %v6533 = vld [vmem:[#allocation5 + $0x8d8] sm:$0xff]
        %v6534 = vld [vmem:[#allocation5 + $0x8e0] sm:$0xff]
        %v6535 = vld [vmem:[#allocation5 + $0x8e8] sm:$0xff]
        %v6536 = vld [vmem:[#allocation5 + $0x8f0] sm:$0xff]
        %v6537 = vld [vmem:[#allocation5 + $0x8f8] sm:$0xff]
        %v6538 = vld [vmem:[#allocation19] sm:$0xff]
        %v6539 = vld [vmem:[#allocation19 + $0x8] sm:$0xff]
        %v6540 = vld [vmem:[#allocation19 + $0x10] sm:$0xff]
        %v6541 = vld [vmem:[#allocation19 + $0x18] sm:$0xff]
        %v6542 = vld [vmem:[#allocation19 + $0x20] sm:$0xff]
        %v6543 = vld [vmem:[#allocation19 + $0x28] sm:$0xff]
        %v6544 = vld [vmem:[#allocation19 + $0x30] sm:$0xff]
        %v6545 = vld [vmem:[#allocation19 + $0x38] sm:$0xff]
        %v6546 = vld [vmem:[#allocation19 + $0x40] sm:$0xff]
        %v6547 = vld [vmem:[#allocation19 + $0x48] sm:$0xff]
        %v6548 = vld [vmem:[#allocation19 + $0x50] sm:$0xff]
        %v6549 = vld [vmem:[#allocation19 + $0x58] sm:$0xff]
        %v6550 = vld [vmem:[#allocation19 + $0x60] sm:$0xff]
        %v6551 = vld [vmem:[#allocation19 + $0x68] sm:$0xff]
        %v6552 = vld [vmem:[#allocation19 + $0x70] sm:$0xff]
        %v6553 = vld [vmem:[#allocation19 + $0x78] sm:$0xff]
        %v6554 = vld [vmem:[#allocation19 + $0x80] sm:$0xff]
        %v6555 = vld [vmem:[#allocation19 + $0x88] sm:$0xff]
        %v6556 = vld [vmem:[#allocation19 + $0x90] sm:$0xff]
        %v6557 = vld [vmem:[#allocation19 + $0x98] sm:$0xff]
        %v6558 = vld [vmem:[#allocation19 + $0xa0] sm:$0xff]
        %v6559 = vld [vmem:[#allocation19 + $0xa8] sm:$0xff]
        %v6560 = vld [vmem:[#allocation19 + $0xb0] sm:$0xff]
        %v6561 = vld [vmem:[#allocation19 + $0xb8] sm:$0xff]
        %v6562 = vld [vmem:[#allocation19 + $0xc0] sm:$0xff]
        %v6563 = vld [vmem:[#allocation19 + $0xc8] sm:$0xff]
        %v6564 = vld [vmem:[#allocation19 + $0xd0] sm:$0xff]
        %v6565 = vld [vmem:[#allocation19 + $0xd8] sm:$0xff]
        %v6566 = vld [vmem:[#allocation19 + $0xe0] sm:$0xff]
        %v6567 = vld [vmem:[#allocation19 + $0xe8] sm:$0xff]
        %v6568 = vld [vmem:[#allocation19 + $0xf0] sm:$0xff]
        %v6569 = vld [vmem:[#allocation19 + $0xf8] sm:$0xff]
        %v6570 = vld [vmem:[#allocation19 + $0x100] sm:$0xff]
        %v6571 = vld [vmem:[#allocation19 + $0x108] sm:$0xff]
        %v6572 = vld [vmem:[#allocation19 + $0x110] sm:$0xff]
        %v6573 = vld [vmem:[#allocation19 + $0x118] sm:$0xff]
        %v6574 = vld [vmem:[#allocation19 + $0x120] sm:$0xff]
        %v6575 = vld [vmem:[#allocation19 + $0x128] sm:$0xff]
        %v6576 = vld [vmem:[#allocation19 + $0x130] sm:$0xff]
        %v6577 = vld [vmem:[#allocation19 + $0x138] sm:$0xff]
        %v6578 = vld [vmem:[#allocation19 + $0x140] sm:$0xff]
        %v6579 = vld [vmem:[#allocation19 + $0x148] sm:$0xff]
        %v6580 = vld [vmem:[#allocation19 + $0x150] sm:$0xff]
        %v6581 = vld [vmem:[#allocation19 + $0x158] sm:$0xff]
        %v6582 = vld [vmem:[#allocation19 + $0x160] sm:$0xff]
        %v6583 = vld [vmem:[#allocation19 + $0x168] sm:$0xff]
        %v6584 = vld [vmem:[#allocation19 + $0x170] sm:$0xff]
        %v6585 = vld [vmem:[#allocation19 + $0x178] sm:$0xff]
        %v6586 = vld [vmem:[#allocation19 + $0x180] sm:$0xff]
        %v6587 = vld [vmem:[#allocation19 + $0x188] sm:$0xff]
        %v6588 = vld [vmem:[#allocation19 + $0x190] sm:$0xff]
        %v6589 = vld [vmem:[#allocation19 + $0x198] sm:$0xff]
        %v6590 = vld [vmem:[#allocation19 + $0x1a0] sm:$0xff]
        %v6591 = vld [vmem:[#allocation19 + $0x1a8] sm:$0xff]
        %v6592 = vld [vmem:[#allocation19 + $0x1b0] sm:$0xff]
        %v6593 = vld [vmem:[#allocation19 + $0x1b8] sm:$0xff]
        %v6594 = vld [vmem:[#allocation19 + $0x1c0] sm:$0xff]
        %v6595 = vld [vmem:[#allocation19 + $0x1c8] sm:$0xff]
        %v6596 = vld [vmem:[#allocation19 + $0x1d0] sm:$0xff]
        %v6597 = vld [vmem:[#allocation19 + $0x1d8] sm:$0xff]
        %v6598 = vld [vmem:[#allocation19 + $0x1e0] sm:$0xff]
        %v6599 = vld [vmem:[#allocation19 + $0x1e8] sm:$0xff]
        %v6600 = vld [vmem:[#allocation19 + $0x1f0] sm:$0xff]
        %v6601 = vld [vmem:[#allocation19 + $0x1f8] sm:$0xff]
        %v6602 = vld [vmem:[#allocation19 + $0x200] sm:$0xff]
        %v6603 = vld [vmem:[#allocation19 + $0x208] sm:$0xff]
        %v6604 = vld [vmem:[#allocation19 + $0x210] sm:$0xff]
        %v6605 = vld [vmem:[#allocation19 + $0x218] sm:$0xff]
        %v6606 = vld [vmem:[#allocation19 + $0x220] sm:$0xff]
        %v6607 = vld [vmem:[#allocation19 + $0x228] sm:$0xff]
        %v6608 = vld [vmem:[#allocation19 + $0x230] sm:$0xff]
        %v6609 = vld [vmem:[#allocation19 + $0x238] sm:$0xff]
        %v6610 = vld [vmem:[#allocation19 + $0x240] sm:$0xff]
        %v6611 = vld [vmem:[#allocation19 + $0x248] sm:$0xff]
        %v6612 = vld [vmem:[#allocation19 + $0x250] sm:$0xff]
        %v6613 = vld [vmem:[#allocation19 + $0x258] sm:$0xff]
        %v6614 = vld [vmem:[#allocation19 + $0x260] sm:$0xff]
        %v6615 = vld [vmem:[#allocation19 + $0x268] sm:$0xff]
        %v6616 = vld [vmem:[#allocation19 + $0x270] sm:$0xff]
        %v6617 = vld [vmem:[#allocation19 + $0x278] sm:$0xff]
        %v6618 = vld [vmem:[#allocation19 + $0x280] sm:$0xff]
        %v6619 = vld [vmem:[#allocation19 + $0x288] sm:$0xff]
        %v6620 = vld [vmem:[#allocation19 + $0x290] sm:$0xff]
        %v6621 = vld [vmem:[#allocation19 + $0x298] sm:$0xff]
        %v6622 = vld [vmem:[#allocation19 + $0x2a0] sm:$0xff]
        %v6623 = vld [vmem:[#allocation19 + $0x2a8] sm:$0xff]
        %v6624 = vld [vmem:[#allocation19 + $0x2b0] sm:$0xff]
        %v6625 = vld [vmem:[#allocation19 + $0x2b8] sm:$0xff]
        %v6626 = vld [vmem:[#allocation19 + $0x2c0] sm:$0xff]
        %v6627 = vld [vmem:[#allocation19 + $0x2c8] sm:$0xff]
        %v6628 = vld [vmem:[#allocation19 + $0x2d0] sm:$0xff]
        %v6629 = vld [vmem:[#allocation19 + $0x2d8] sm:$0xff]
        %v6630 = vld [vmem:[#allocation19 + $0x2e0] sm:$0xff]
        %v6631 = vld [vmem:[#allocation19 + $0x2e8] sm:$0xff]
        %v6632 = vld [vmem:[#allocation19 + $0x2f0] sm:$0xff]
        %v6633 = vld [vmem:[#allocation19 + $0x2f8] sm:$0xff]
        %v6634 = vld [vmem:[#allocation19 + $0x300] sm:$0xff]
        %v6635 = vld [vmem:[#allocation19 + $0x308] sm:$0xff]
        %v6636 = vld [vmem:[#allocation19 + $0x310] sm:$0xff]
        %v6637 = vld [vmem:[#allocation19 + $0x318] sm:$0xff]
        %v6638 = vld [vmem:[#allocation19 + $0x320] sm:$0xff]
        %v6639 = vld [vmem:[#allocation19 + $0x328] sm:$0xff]
        %v6640 = vld [vmem:[#allocation19 + $0x330] sm:$0xff]
        %v6641 = vld [vmem:[#allocation19 + $0x338] sm:$0xff]
        %v6642 = vld [vmem:[#allocation19 + $0x340] sm:$0xff]
        %v6643 = vld [vmem:[#allocation19 + $0x348] sm:$0xff]
        %v6644 = vld [vmem:[#allocation19 + $0x350] sm:$0xff]
        %v6645 = vld [vmem:[#allocation19 + $0x358] sm:$0xff]
        %v6646 = vld [vmem:[#allocation19 + $0x360] sm:$0xff]
        %v6647 = vld [vmem:[#allocation19 + $0x368] sm:$0xff]
        %v6648 = vld [vmem:[#allocation19 + $0x370] sm:$0xff]
        %v6649 = vld [vmem:[#allocation19 + $0x378] sm:$0xff]
        %v6650 = vld [vmem:[#allocation19 + $0x380] sm:$0xff]
        %v6651 = vld [vmem:[#allocation19 + $0x388] sm:$0xff]
        %v6652 = vld [vmem:[#allocation19 + $0x390] sm:$0xff]
        %v6653 = vld [vmem:[#allocation19 + $0x398] sm:$0xff]
        %v6654 = vld [vmem:[#allocation19 + $0x3a0] sm:$0xff]
        %v6655 = vld [vmem:[#allocation19 + $0x3a8] sm:$0xff]
        %v6656 = vld [vmem:[#allocation19 + $0x3b0] sm:$0xff]
        %v6657 = vld [vmem:[#allocation19 + $0x3b8] sm:$0xff]
        %v6658 = vld [vmem:[#allocation19 + $0x3c0] sm:$0xff]
        %v6659 = vld [vmem:[#allocation19 + $0x3c8] sm:$0xff]
        %v6660 = vld [vmem:[#allocation19 + $0x3d0] sm:$0xff]
        %v6661 = vld [vmem:[#allocation19 + $0x3d8] sm:$0xff]
        %v6662 = vld [vmem:[#allocation19 + $0x3e0] sm:$0xff]
        %v6663 = vld [vmem:[#allocation19 + $0x3e8] sm:$0xff]
        %v6664 = vld [vmem:[#allocation19 + $0x3f0] sm:$0xff]
        %v6665 = vld [vmem:[#allocation19 + $0x3f8] sm:$0xff]
        %v6666 = vld [vmem:[#allocation19 + $0x400] sm:$0xff]
        %v6667 = vld [vmem:[#allocation19 + $0x408] sm:$0xff]
        %v6668 = vld [vmem:[#allocation19 + $0x410] sm:$0xff]
        %v6669 = vld [vmem:[#allocation19 + $0x418] sm:$0xff]
        %v6670 = vld [vmem:[#allocation19 + $0x420] sm:$0xff]
        %v6671 = vld [vmem:[#allocation19 + $0x428] sm:$0xff]
        %v6672 = vld [vmem:[#allocation19 + $0x430] sm:$0xff]
        %v6673 = vld [vmem:[#allocation19 + $0x438] sm:$0xff]
        %v6674 = vld [vmem:[#allocation19 + $0x440] sm:$0xff]
        %v6675 = vld [vmem:[#allocation19 + $0x448] sm:$0xff]
        %v6676 = vld [vmem:[#allocation19 + $0x450] sm:$0xff]
        %v6677 = vld [vmem:[#allocation19 + $0x458] sm:$0xff]
        %v6678 = vld [vmem:[#allocation19 + $0x460] sm:$0xff]
        %v6679 = vld [vmem:[#allocation19 + $0x468] sm:$0xff]
        %v6680 = vld [vmem:[#allocation19 + $0x470] sm:$0xff]
        %v6681 = vld [vmem:[#allocation19 + $0x478] sm:$0xff]
        %v6682 = vld [vmem:[#allocation20] sm:$0x1]
        %v6684 = vlaneseq
        %v6685 = vshrl.u32 %v6684, 7
        %v6686 = vsub.s32 0, %v6685
        %v6687 = vrot.slane %v6682, %v6686
        %6689 = vmatprep.subr.mxu0 0.0
        %6690 = vmatpush1.msra.mxu0 %v6538
        %6691 = vmatprep.subr.mxu0 0.0
        %6692 = vmatpush1.msra.mxu0 %v6539
        %6693 = vmatprep.subr.mxu0 0.0
        %6694 = vmatpush1.msra.mxu0 %v6540
        %6695 = vmatprep.subr.mxu0 0.0
        %6696 = vmatpush1.msra.mxu0 %v6541
        %6697 = vmatprep.subr.mxu0 0.0
        %6698 = vmatpush1.msra.mxu0 %v6542
        %6699 = vmatprep.subr.mxu0 0.0
        %6700 = vmatpush1.msra.mxu0 %v6543
        %6701 = vmatprep.subr.mxu0 0.0
        %6702 = vmatpush1.msra.mxu0 %v6544
        %6703 = vmatprep.subr.mxu0 0.0
        %6704 = vmatpush1.msra.mxu0 %v6545
        %6705 = vmatprep.subr.mxu0 0.0
        %6706 = vmatpush1.msra.mxu0 %v6546
        %6707 = vmatprep.subr.mxu0 0.0
        %6708 = vmatpush1.msra.mxu0 %v6547
        %6709 = vmatprep.subr.mxu0 0.0
        %6710 = vmatpush1.msra.mxu0 %v6548
        %6711 = vmatprep.subr.mxu0 0.0
        %6712 = vmatpush1.msra.mxu0 %v6549
        %6713 = vmatprep.subr.mxu0 0.0
        %6714 = vmatpush1.msra.mxu0 %v6550
        %6715 = vmatprep.subr.mxu0 0.0
        %6716 = vmatpush1.msra.mxu0 %v6551
        %6717 = vmatprep.subr.mxu0 0.0
        %6718 = vmatpush1.msra.mxu0 %v6552
        %6719 = vmatprep.subr.mxu0 0.0
        %6720 = vmatpush1.msra.mxu0 %v6553
        %6721 = vmatprep.subr.mxu0 0.0
        %6722 = vmatpush1.msra.mxu0 %v6554
        %6723 = vmatprep.subr.mxu0 0.0
        %6724 = vmatpush1.msra.mxu0 %v6555
        %6725 = vmatprep.subr.mxu0 0.0
        %6726 = vmatpush1.msra.mxu0 %v6556
        %6727 = vmatprep.subr.mxu0 0.0
        %6728 = vmatpush1.msra.mxu0 %v6557
        %6729 = vmatprep.subr.mxu0 0.0
        %6730 = vmatpush1.msra.mxu0 %v6558
        %6731 = vmatprep.subr.mxu0 0.0
        %6732 = vmatpush1.msra.mxu0 %v6559
        %6733 = vmatprep.subr.mxu0 0.0
        %6734 = vmatpush1.msra.mxu0 %v6560
        %6735 = vmatprep.subr.mxu0 0.0
        %6736 = vmatpush1.msra.mxu0 %v6561
        %6737 = vmatprep.subr.mxu0 0.0
        %6738 = vmatpush1.msra.mxu0 %v6562
        %6739 = vmatprep.subr.mxu0 0.0
        %6740 = vmatpush1.msra.mxu0 %v6563
        %6741 = vmatprep.subr.mxu0 0.0
        %6742 = vmatpush1.msra.mxu0 %v6564
        %6743 = vmatprep.subr.mxu0 0.0
        %6744 = vmatpush1.msra.mxu0 %v6565
        %6745 = vmatprep.subr.mxu0 0.0
        %6746 = vmatpush1.msra.mxu0 %v6566
        %6747 = vmatprep.subr.mxu0 0.0
        %6748 = vmatpush1.msra.mxu0 %v6567
        %6749 = vmatprep.subr.mxu0 0.0
        %6750 = vmatpush1.msra.mxu0 %v6568
        %6751 = vmatprep.subr.mxu0 0.0
        %6752 = vmatpush1.msra.mxu0 %v6569
        %6753 = vmatprep.mubr.f32.mxu0 %v6251
        %6754 = vmatmul.mubr.f32.gmra.mrb[0].mxu0 %v6250
        %v6755 = vpop.f32.mrb[0].mxu0
        %v6756 = vadd.f32 %v6687, %v6755
        %v6757 = vpop.f32.mrb[0].mxu0
        %6758 = vmatprep.mubr.f32.mxu0 %v6260
        %6759 = vmatmul.mubr.f32.gmra.mrb[0].mxu0 %v6259
        %v6760 = vpop.f32.mrb[0].mxu0
        %v6761 = vadd.f32 %v6687, %v6760
        %v6762 = vpop.f32.mrb[0].mxu0
        %6763 = vmatprep.mubr.f32.mxu0 %v6269
        %6764 = vmatmul.mubr.f32.gmra.mrb[0].mxu0 %v6268
        %v6765 = vpop.f32.mrb[0].mxu0
        %v6766 = vadd.f32 %v6687, %v6765
        %v6767 = vpop.f32.mrb[0].mxu0
        %6768 = vmatprep.mubr.f32.mxu0 %v6278
        %6769 = vmatmul.mubr.f32.gmra.mrb[0].mxu0 %v6277
        %v6770 = vpop.f32.mrb[0].mxu0
        %v6771 = vadd.f32 %v6687, %v6770
        %v6772 = vpop.f32.mrb[0].mxu0
        %6773 = vmatprep.mubr.f32.mxu0 %v6287
        %6774 = vmatmul.mubr.f32.gmra.mrb[0].mxu0 %v6286
        %v6775 = vpop.f32.mrb[0].mxu0
        %v6776 = vadd.f32 %v6687, %v6775
        %v6777 = vpop.f32.mrb[0].mxu0
        %6778 = vmatprep.mubr.f32.mxu0 %v6296
        %6779 = vmatmul.mubr.f32.gmra.mrb[0].mxu0 %v6295
        %v6780 = vpop.f32.mrb[0].mxu0
        %v6781 = vadd.f32 %v6687, %v6780
        %v6782 = vpop.f32.mrb[0].mxu0
        %6783 = vmatprep.mubr.f32.mxu0 %v6305
        %6784 = vmatmul.mubr.f32.gmra.mrb[0].mxu0 %v6304
        %v6785 = vpop.f32.mrb[0].mxu0
        %v6786 = vadd.f32 %v6687, %v6785
        %v6787 = vpop.f32.mrb[0].mxu0
        %6788 = vmatprep.mubr.f32.mxu0 %v6314
        %6789 = vmatmul.mubr.f32.gmra.mrb[0].mxu0 %v6313
        %v6790 = vpop.f32.mrb[0].mxu0
        %v6791 = vadd.f32 %v6687, %v6790
        %v6792 = vpop.f32.mrb[0].mxu0
        %6793 = vmatprep.mubr.f32.mxu0 %v6323
        %6794 = vmatmul.mubr.f32.gmra.mrb[0].mxu0 %v6322
        %v6795 = vpop.f32.mrb[0].mxu0
        %v6796 = vadd.f32 %v6687, %v6795
        %v6797 = vpop.f32.mrb[0].mxu0
        %6798 = vmatprep.mubr.f32.mxu0 %v6332
        %6799 = vmatmul.mubr.f32.gmra.mrb[0].mxu0 %v6331
        %v6800 = vpop.f32.mrb[0].mxu0
        %v6801 = vadd.f32 %v6687, %v6800
        %v6802 = vpop.f32.mrb[0].mxu0
        %6803 = vmatprep.mubr.f32.mxu0 %v6341
        %6804 = vmatmul.mubr.f32.gmra.mrb[0].mxu0 %v6340
        %v6805 = vpop.f32.mrb[0].mxu0
        %v6806 = vadd.f32 %v6687, %v6805
        %v6807 = vpop.f32.mrb[0].mxu0
        %6808 = vmatprep.mubr.f32.mxu0 %v6350
        %6809 = vmatmul.mubr.f32.gmra.mrb[0].mxu0 %v6349
        %v6810 = vpop.f32.mrb[0].mxu0
        %v6811 = vadd.f32 %v6687, %v6810
        %v6812 = vpop.f32.mrb[0].mxu0
        %6813 = vmatprep.mubr.f32.mxu0 %v6359
        %6814 = vmatmul.mubr.f32.gmra.mrb[0].mxu0 %v6358
        %v6815 = vpop.f32.mrb[0].mxu0
        %v6816 = vadd.f32 %v6687, %v6815
        %v6817 = vpop.f32.mrb[0].mxu0
        %6818 = vmatprep.mubr.f32.mxu0 %v6368
        %6819 = vmatmul.mubr.f32.gmra.mrb[0].mxu0 %v6367
        %v6820 = vpop.f32.mrb[0].mxu0
        %v6821 = vadd.f32 %v6687, %v6820
        %v6822 = vpop.f32.mrb[0].mxu0
        %6823 = vmatprep.mubr.f32.mxu0 %v6377
        %6824 = vmatmul.mubr.f32.gmra.mrb[0].mxu0 %v6376
        %v6825 = vpop.f32.mrb[0].mxu0
        %v6826 = vadd.f32 %v6687, %v6825
        %v6827 = vpop.f32.mrb[0].mxu0
        %6828 = vmatprep.mubr.f32.mxu0 %v6386
        %6829 = vmatmul.mubr.f32.gmra.mrb[0].mxu0 %v6385
        %v6830 = vpop.f32.mrb[0].mxu0
        %v6831 = vadd.f32 %v6687, %v6830
        %v6832 = vpop.f32.mrb[0].mxu0
        %6833 = vmatprep.mubr.f32.mxu0 %v6395
        %6834 = vmatmul.mubr.f32.gmra.mrb[0].mxu0 %v6394
        %v6835 = vpop.f32.mrb[0].mxu0
        %v6836 = vadd.f32 %v6687, %v6835
        %v6837 = vpop.f32.mrb[0].mxu0
        %6838 = vmatprep.mubr.f32.mxu0 %v6404
        %6839 = vmatmul.mubr.f32.gmra.mrb[0].mxu0 %v6403
        %v6840 = vpop.f32.mrb[0].mxu0
        %v6841 = vadd.f32 %v6687, %v6840
        %v6842 = vpop.f32.mrb[0].mxu0
        %6843 = vmatprep.mubr.f32.mxu0 %v6413
        %6844 = vmatmul.mubr.f32.gmra.mrb[0].mxu0 %v6412
        %v6845 = vpop.f32.mrb[0].mxu0
        %v6846 = vadd.f32 %v6687, %v6845
        %v6847 = vpop.f32.mrb[0].mxu0
        %6848 = vmatprep.mubr.f32.mxu0 %v6422
        %6849 = vmatmul.mubr.f32.gmra.mrb[0].mxu0 %v6421
        %v6850 = vpop.f32.mrb[0].mxu0
        %v6851 = vadd.f32 %v6687, %v6850
        %v6852 = vpop.f32.mrb[0].mxu0
        %6853 = vmatprep.mubr.f32.mxu0 %v6431
        %6854 = vmatmul.mubr.f32.gmra.mrb[0].mxu0 %v6430
        %v6855 = vpop.f32.mrb[0].mxu0
        %v6856 = vadd.f32 %v6687, %v6855
        %v6857 = vpop.f32.mrb[0].mxu0
        %6858 = vmatprep.mubr.f32.mxu0 %v6440
        %6859 = vmatmul.mubr.f32.gmra.mrb[0].mxu0 %v6439
        %v6860 = vpop.f32.mrb[0].mxu0
        %v6861 = vadd.f32 %v6687, %v6860
        %v6862 = vpop.f32.mrb[0].mxu0
        %6863 = vmatprep.mubr.f32.mxu0 %v6449
        %6864 = vmatmul.mubr.f32.gmra.mrb[0].mxu0 %v6448
        %v6865 = vpop.f32.mrb[0].mxu0
        %v6866 = vadd.f32 %v6687, %v6865
        %v6867 = vpop.f32.mrb[0].mxu0
        %6868 = vmatprep.mubr.f32.mxu0 %v6458
        %6869 = vmatmul.mubr.f32.gmra.mrb[0].mxu0 %v6457
        %v6870 = vpop.f32.mrb[0].mxu0
        %v6871 = vadd.f32 %v6687, %v6870
        %v6872 = vpop.f32.mrb[0].mxu0
        %6873 = vmatprep.mubr.f32.mxu0 %v6467
        %6874 = vmatmul.mubr.f32.gmra.mrb[0].mxu0 %v6466
        %v6875 = vpop.f32.mrb[0].mxu0
        %v6876 = vadd.f32 %v6687, %v6875
        %v6877 = vpop.f32.mrb[0].mxu0
        %6878 = vmatprep.mubr.f32.mxu0 %v6476
        %6879 = vmatmul.mubr.f32.gmra.mrb[0].mxu0 %v6475
        %v6880 = vpop.f32.mrb[0].mxu0
        %v6881 = vadd.f32 %v6687, %v6880
        %v6882 = vpop.f32.mrb[0].mxu0
        %6883 = vmatprep.mubr.f32.mxu0 %v6485
        %6884 = vmatmul.mubr.f32.gmra.mrb[0].mxu0 %v6484
        %v6885 = vpop.f32.mrb[0].mxu0
        %v6886 = vadd.f32 %v6687, %v6885
        %v6887 = vpop.f32.mrb[0].mxu0
        %6888 = vmatprep.mubr.f32.mxu0 %v6494
        %6889 = vmatmul.mubr.f32.gmra.mrb[0].mxu0 %v6493
        %v6890 = vpop.f32.mrb[0].mxu0
        %v6891 = vadd.f32 %v6687, %v6890
        %v6892 = vpop.f32.mrb[0].mxu0
        %6893 = vmatprep.mubr.f32.mxu0 %v6503
        %6894 = vmatmul.mubr.f32.gmra.mrb[0].mxu0 %v6502
        %v6895 = vpop.f32.mrb[0].mxu0
        %v6896 = vadd.f32 %v6687, %v6895
        %v6897 = vpop.f32.mrb[0].mxu0
        %6898 = vmatprep.mubr.f32.mxu0 %v6512
        %6899 = vmatmul.mubr.f32.gmra.mrb[0].mxu0 %v6511
        %v6900 = vpop.f32.mrb[0].mxu0
        %v6901 = vadd.f32 %v6687, %v6900
        %v6902 = vpop.f32.mrb[0].mxu0
        %6903 = vmatprep.mubr.f32.mxu0 %v6521
        %6904 = vmatmul.mubr.f32.gmra.mrb[0].mxu0 %v6520
        %v6905 = vpop.f32.mrb[0].mxu0
        %v6906 = vadd.f32 %v6687, %v6905
        %v6907 = vpop.f32.mrb[0].mxu0
        %6908 = vmatprep.mubr.f32.mxu0 %v6530
        %6909 = vmatmul.mubr.f32.gmra.mrb[0].mxu0 %v6529
        %v6910 = vpop.f32.mrb[0].mxu0
        %v6911 = vadd.f32 %v6687, %v6910
        %v6912 = vpop.f32.mrb[0].mxu0
        %6913 = vdwg.mxu0
        %6914 = vmatprep.subr.mxu0 0.0
        %6915 = vmatpush1.msra.mxu0 %v6570
        %6916 = vmatprep.subr.mxu0 0.0
        %6917 = vmatpush1.msra.mxu0 %v6571
        %6918 = vmatprep.subr.mxu0 0.0
        %6919 = vmatpush1.msra.mxu0 %v6572
        %6920 = vmatprep.subr.mxu0 0.0
        %6921 = vmatpush1.msra.mxu0 %v6573
        %6922 = vmatprep.subr.mxu0 0.0
        %6923 = vmatpush1.msra.mxu0 %v6574
        %6924 = vmatprep.subr.mxu0 0.0
        %6925 = vmatpush1.msra.mxu0 %v6575
        %6926 = vmatprep.subr.mxu0 0.0
        %6927 = vmatpush1.msra.mxu0 %v6576
        %6928 = vmatprep.subr.mxu0 0.0
        %6929 = vmatpush1.msra.mxu0 %v6577
        %6930 = vmatprep.subr.mxu0 0.0
        %6931 = vmatpush1.msra.mxu0 %v6578
        %6932 = vmatprep.subr.mxu0 0.0
        %6933 = vmatpush1.msra.mxu0 %v6579
        %6934 = vmatprep.subr.mxu0 0.0
        %6935 = vmatpush1.msra.mxu0 %v6580
        %6936 = vmatprep.subr.mxu0 0.0
        %6937 = vmatpush1.msra.mxu0 %v6581
        %6938 = vmatprep.subr.mxu0 0.0
        %6939 = vmatpush1.msra.mxu0 %v6582
        %6940 = vmatprep.subr.mxu0 0.0
        %6941 = vmatpush1.msra.mxu0 %v6583
        %6942 = vmatprep.subr.mxu0 0.0
        %6943 = vmatpush1.msra.mxu0 %v6584
        %6944 = vmatprep.subr.mxu0 0.0
        %6945 = vmatpush1.msra.mxu0 %v6585
        %6946 = vmatprep.subr.mxu0 0.0
        %6947 = vmatpush1.msra.mxu0 %v6586
        %6948 = vmatprep.subr.mxu0 0.0
        %6949 = vmatpush1.msra.mxu0 %v6587
        %6950 = vmatprep.subr.mxu0 0.0
        %6951 = vmatpush1.msra.mxu0 %v6588
        %6952 = vmatprep.subr.mxu0 0.0
        %6953 = vmatpush1.msra.mxu0 %v6589
        %6954 = vmatprep.subr.mxu0 0.0
        %6955 = vmatpush1.msra.mxu0 %v6590
        %6956 = vmatprep.subr.mxu0 0.0
        %6957 = vmatpush1.msra.mxu0 %v6591
        %6958 = vmatprep.subr.mxu0 0.0
        %6959 = vmatpush1.msra.mxu0 %v6592
        %6960 = vmatprep.subr.mxu0 0.0
        %6961 = vmatpush1.msra.mxu0 %v6593
        %6962 = vmatprep.subr.mxu0 0.0
        %6963 = vmatpush1.msra.mxu0 %v6594
        %6964 = vmatprep.subr.mxu0 0.0
        %6965 = vmatpush1.msra.mxu0 %v6595
        %6966 = vmatprep.subr.mxu0 0.0
        %6967 = vmatpush1.msra.mxu0 %v6596
        %6968 = vmatprep.subr.mxu0 0.0
        %6969 = vmatpush1.msra.mxu0 %v6597
        %6970 = vmatprep.subr.mxu0 0.0
        %6971 = vmatpush1.msra.mxu0 %v6598
        %6972 = vmatprep.subr.mxu0 0.0
        %6973 = vmatpush1.msra.mxu0 %v6599
        %6974 = vmatprep.subr.mxu0 0.0
        %6975 = vmatpush1.msra.mxu0 %v6600
        %6976 = vmatprep.subr.mxu0 0.0
        %6977 = vmatpush1.msra.mxu0 %v6601
        %6978 = vmatprep.mubr.f32.mxu0 %v6253
        %6979 = vmatmul.mubr.f32.gmra.mrb[0].mxu0 %v6252
        %v6980 = vpop.f32.mrb[0].mxu0
        %v6981 = vadd.f32 %v6756, %v6980
        %v6982 = vpop.f32.mrb[0].mxu0
        %6983 = vmatprep.mubr.f32.mxu0 %v6262
        %6984 = vmatmul.mubr.f32.gmra.mrb[0].mxu0 %v6261
        %v6985 = vpop.f32.mrb[0].mxu0
        %v6986 = vadd.f32 %v6761, %v6985
        %v6987 = vpop.f32.mrb[0].mxu0
        %6988 = vmatprep.mubr.f32.mxu0 %v6271
        %6989 = vmatmul.mubr.f32.gmra.mrb[0].mxu0 %v6270
        %v6990 = vpop.f32.mrb[0].mxu0
        %v6991 = vadd.f32 %v6766, %v6990
        %v6992 = vpop.f32.mrb[0].mxu0
        %6993 = vmatprep.mubr.f32.mxu0 %v6280
        %6994 = vmatmul.mubr.f32.gmra.mrb[0].mxu0 %v6279
        %v6995 = vpop.f32.mrb[0].mxu0
        %v6996 = vadd.f32 %v6771, %v6995
        %v6997 = vpop.f32.mrb[0].mxu0
        %6998 = vmatprep.mubr.f32.mxu0 %v6289
        %6999 = vmatmul.mubr.f32.gmra.mrb[0].mxu0 %v6288
        %v7000 = vpop.f32.mrb[0].mxu0
        %v7001 = vadd.f32 %v6776, %v7000
        %v7002 = vpop.f32.mrb[0].mxu0
        %7003 = vmatprep.mubr.f32.mxu0 %v6298
        %7004 = vmatmul.mubr.f32.gmra.mrb[0].mxu0 %v6297
        %v7005 = vpop.f32.mrb[0].mxu0
        %v7006 = vadd.f32 %v6781, %v7005
        %v7007 = vpop.f32.mrb[0].mxu0
        %7008 = vmatprep.mubr.f32.mxu0 %v6307
        %7009 = vmatmul.mubr.f32.gmra.mrb[0].mxu0 %v6306
        %v7010 = vpop.f32.mrb[0].mxu0
        %v7011 = vadd.f32 %v6786, %v7010
        %v7012 = vpop.f32.mrb[0].mxu0
        %7013 = vmatprep.mubr.f32.mxu0 %v6316
        %7014 = vmatmul.mubr.f32.gmra.mrb[0].mxu0 %v6315
        %v7015 = vpop.f32.mrb[0].mxu0
        %v7016 = vadd.f32 %v6791, %v7015
        %v7017 = vpop.f32.mrb[0].mxu0
        %7018 = vmatprep.mubr.f32.mxu0 %v6325
        %7019 = vmatmul.mubr.f32.gmra.mrb[0].mxu0 %v6324
        %v7020 = vpop.f32.mrb[0].mxu0
        %v7021 = vadd.f32 %v6796, %v7020
        %v7022 = vpop.f32.mrb[0].mxu0
        %7023 = vmatprep.mubr.f32.mxu0 %v6334
        %7024 = vmatmul.mubr.f32.gmra.mrb[0].mxu0 %v6333
        %v7025 = vpop.f32.mrb[0].mxu0
        %v7026 = vadd.f32 %v6801, %v7025
        %v7027 = vpop.f32.mrb[0].mxu0
        %7028 = vmatprep.mubr.f32.mxu0 %v6343
        %7029 = vmatmul.mubr.f32.gmra.mrb[0].mxu0 %v6342
        %v7030 = vpop.f32.mrb[0].mxu0
        %v7031 = vadd.f32 %v6806, %v7030
        %v7032 = vpop.f32.mrb[0].mxu0
        %7033 = vmatprep.mubr.f32.mxu0 %v6352
        %7034 = vmatmul.mubr.f32.gmra.mrb[0].mxu0 %v6351
        %v7035 = vpop.f32.mrb[0].mxu0
        %v7036 = vadd.f32 %v6811, %v7035
        %v7037 = vpop.f32.mrb[0].mxu0
        %7038 = vmatprep.mubr.f32.mxu0 %v6361
        %7039 = vmatmul.mubr.f32.gmra.mrb[0].mxu0 %v6360
        %v7040 = vpop.f32.mrb[0].mxu0
        %v7041 = vadd.f32 %v6816, %v7040
        %v7042 = vpop.f32.mrb[0].mxu0
        %7043 = vmatprep.mubr.f32.mxu0 %v6370
        %7044 = vmatmul.mubr.f32.gmra.mrb[0].mxu0 %v6369
        %v7045 = vpop.f32.mrb[0].mxu0
        %v7046 = vadd.f32 %v6821, %v7045
        %v7047 = vpop.f32.mrb[0].mxu0
        %7048 = vmatprep.mubr.f32.mxu0 %v6379
        %7049 = vmatmul.mubr.f32.gmra.mrb[0].mxu0 %v6378
        %v7050 = vpop.f32.mrb[0].mxu0
        %v7051 = vadd.f32 %v6826, %v7050
        %v7052 = vpop.f32.mrb[0].mxu0
        %7053 = vmatprep.mubr.f32.mxu0 %v6388
        %7054 = vmatmul.mubr.f32.gmra.mrb[0].mxu0 %v6387
        %v7055 = vpop.f32.mrb[0].mxu0
        %v7056 = vadd.f32 %v6831, %v7055
        %v7057 = vpop.f32.mrb[0].mxu0
        %7058 = vmatprep.mubr.f32.mxu0 %v6397
        %7059 = vmatmul.mubr.f32.gmra.mrb[0].mxu0 %v6396
        %v7060 = vpop.f32.mrb[0].mxu0
        %v7061 = vadd.f32 %v6836, %v7060
        %v7062 = vpop.f32.mrb[0].mxu0
        %7063 = vmatprep.mubr.f32.mxu0 %v6406
        %7064 = vmatmul.mubr.f32.gmra.mrb[0].mxu0 %v6405
        %v7065 = vpop.f32.mrb[0].mxu0
        %v7066 = vadd.f32 %v6841, %v7065
        %v7067 = vpop.f32.mrb[0].mxu0
        %7068 = vmatprep.mubr.f32.mxu0 %v6415
        %7069 = vmatmul.mubr.f32.gmra.mrb[0].mxu0 %v6414
        %v7070 = vpop.f32.mrb[0].mxu0
        %v7071 = vadd.f32 %v6846, %v7070
        %v7072 = vpop.f32.mrb[0].mxu0
        %7073 = vmatprep.mubr.f32.mxu0 %v6424
        %7074 = vmatmul.mubr.f32.gmra.mrb[0].mxu0 %v6423
        %v7075 = vpop.f32.mrb[0].mxu0
        %v7076 = vadd.f32 %v6851, %v7075
        %v7077 = vpop.f32.mrb[0].mxu0
        %7078 = vmatprep.mubr.f32.mxu0 %v6433
        %7079 = vmatmul.mubr.f32.gmra.mrb[0].mxu0 %v6432
        %v7080 = vpop.f32.mrb[0].mxu0
        %v7081 = vadd.f32 %v6856, %v7080
        %v7082 = vpop.f32.mrb[0].mxu0
        %7083 = vmatprep.mubr.f32.mxu0 %v6442
        %7084 = vmatmul.mubr.f32.gmra.mrb[0].mxu0 %v6441
        %v7085 = vpop.f32.mrb[0].mxu0
        %v7086 = vadd.f32 %v6861, %v7085
        %v7087 = vpop.f32.mrb[0].mxu0
        %7088 = vmatprep.mubr.f32.mxu0 %v6451
        %7089 = vmatmul.mubr.f32.gmra.mrb[0].mxu0 %v6450
        %v7090 = vpop.f32.mrb[0].mxu0
        %v7091 = vadd.f32 %v6866, %v7090
        %v7092 = vpop.f32.mrb[0].mxu0
        %7093 = vmatprep.mubr.f32.mxu0 %v6460
        %7094 = vmatmul.mubr.f32.gmra.mrb[0].mxu0 %v6459
        %v7095 = vpop.f32.mrb[0].mxu0
        %v7096 = vadd.f32 %v6871, %v7095
        %v7097 = vpop.f32.mrb[0].mxu0
        %7098 = vmatprep.mubr.f32.mxu0 %v6469
        %7099 = vmatmul.mubr.f32.gmra.mrb[0].mxu0 %v6468
        %v7100 = vpop.f32.mrb[0].mxu0
        %v7101 = vadd.f32 %v6876, %v7100
        %v7102 = vpop.f32.mrb[0].mxu0
        %7103 = vmatprep.mubr.f32.mxu0 %v6478
        %7104 = vmatmul.mubr.f32.gmra.mrb[0].mxu0 %v6477
        %v7105 = vpop.f32.mrb[0].mxu0
        %v7106 = vadd.f32 %v6881, %v7105
        %v7107 = vpop.f32.mrb[0].mxu0
        %7108 = vmatprep.mubr.f32.mxu0 %v6487
        %7109 = vmatmul.mubr.f32.gmra.mrb[0].mxu0 %v6486
        %v7110 = vpop.f32.mrb[0].mxu0
        %v7111 = vadd.f32 %v6886, %v7110
        %v7112 = vpop.f32.mrb[0].mxu0
        %7113 = vmatprep.mubr.f32.mxu0 %v6496
        %7114 = vmatmul.mubr.f32.gmra.mrb[0].mxu0 %v6495
        %v7115 = vpop.f32.mrb[0].mxu0
        %v7116 = vadd.f32 %v6891, %v7115
        %v7117 = vpop.f32.mrb[0].mxu0
        %7118 = vmatprep.mubr.f32.mxu0 %v6505
        %7119 = vmatmul.mubr.f32.gmra.mrb[0].mxu0 %v6504
        %v7120 = vpop.f32.mrb[0].mxu0
        %v7121 = vadd.f32 %v6896, %v7120
        %v7122 = vpop.f32.mrb[0].mxu0
        %7123 = vmatprep.mubr.f32.mxu0 %v6514
        %7124 = vmatmul.mubr.f32.gmra.mrb[0].mxu0 %v6513
        %v7125 = vpop.f32.mrb[0].mxu0
        %v7126 = vadd.f32 %v6901, %v7125
        %v7127 = vpop.f32.mrb[0].mxu0
        %7128 = vmatprep.mubr.f32.mxu0 %v6523
        %7129 = vmatmul.mubr.f32.gmra.mrb[0].mxu0 %v6522
        %v7130 = vpop.f32.mrb[0].mxu0
        %v7131 = vadd.f32 %v6906, %v7130
        %v7132 = vpop.f32.mrb[0].mxu0
        %7133 = vmatprep.mubr.f32.mxu0 %v6532
        %7134 = vmatmul.mubr.f32.gmra.mrb[0].mxu0 %v6531
        %v7135 = vpop.f32.mrb[0].mxu0
        %v7136 = vadd.f32 %v6911, %v7135
        %v7137 = vpop.f32.mrb[0].mxu0
        %7138 = vdwg.mxu0
        %7139 = vmatprep.subr.mxu0 0.0
        %7140 = vmatpush1.msra.mxu0 %v6602
        %7141 = vmatprep.subr.mxu0 0.0
        %7142 = vmatpush1.msra.mxu0 %v6603
        %7143 = vmatprep.subr.mxu0 0.0
        %7144 = vmatpush1.msra.mxu0 %v6604
        %7145 = vmatprep.subr.mxu0 0.0
        %7146 = vmatpush1.msra.mxu0 %v6605
        %7147 = vmatprep.subr.mxu0 0.0
        %7148 = vmatpush1.msra.mxu0 %v6606
        %7149 = vmatprep.subr.mxu0 0.0
        %7150 = vmatpush1.msra.mxu0 %v6607
        %7151 = vmatprep.subr.mxu0 0.0
        %7152 = vmatpush1.msra.mxu0 %v6608
        %7153 = vmatprep.subr.mxu0 0.0
        %7154 = vmatpush1.msra.mxu0 %v6609
        %7155 = vmatprep.subr.mxu0 0.0
        %7156 = vmatpush1.msra.mxu0 %v6610
        %7157 = vmatprep.subr.mxu0 0.0
        %7158 = vmatpush1.msra.mxu0 %v6611
        %7159 = vmatprep.subr.mxu0 0.0
        %7160 = vmatpush1.msra.mxu0 %v6612
        %7161 = vmatprep.subr.mxu0 0.0
        %7162 = vmatpush1.msra.mxu0 %v6613
        %7163 = vmatprep.subr.mxu0 0.0
        %7164 = vmatpush1.msra.mxu0 %v6614
        %7165 = vmatprep.subr.mxu0 0.0
        %7166 = vmatpush1.msra.mxu0 %v6615
        %7167 = vmatprep.subr.mxu0 0.0
        %7168 = vmatpush1.msra.mxu0 %v6616
        %7169 = vmatprep.subr.mxu0 0.0
        %7170 = vmatpush1.msra.mxu0 %v6617
        %7171 = vmatprep.subr.mxu0 0.0
        %7172 = vmatpush1.msra.mxu0 %v6618
        %7173 = vmatprep.subr.mxu0 0.0
        %7174 = vmatpush1.msra.mxu0 %v6619
        %7175 = vmatprep.subr.mxu0 0.0
        %7176 = vmatpush1.msra.mxu0 %v6620
        %7177 = vmatprep.subr.mxu0 0.0
        %7178 = vmatpush1.msra.mxu0 %v6621
        %7179 = vmatprep.subr.mxu0 0.0
        %7180 = vmatpush1.msra.mxu0 %v6622
        %7181 = vmatprep.subr.mxu0 0.0
        %7182 = vmatpush1.msra.mxu0 %v6623
        %7183 = vmatprep.subr.mxu0 0.0
        %7184 = vmatpush1.msra.mxu0 %v6624
        %7185 = vmatprep.subr.mxu0 0.0
        %7186 = vmatpush1.msra.mxu0 %v6625
        %7187 = vmatprep.subr.mxu0 0.0
        %7188 = vmatpush1.msra.mxu0 %v6626
        %7189 = vmatprep.subr.mxu0 0.0
        %7190 = vmatpush1.msra.mxu0 %v6627
        %7191 = vmatprep.subr.mxu0 0.0
        %7192 = vmatpush1.msra.mxu0 %v6628
        %7193 = vmatprep.subr.mxu0 0.0
        %7194 = vmatpush1.msra.mxu0 %v6629
        %7195 = vmatprep.subr.mxu0 0.0
        %7196 = vmatpush1.msra.mxu0 %v6630
        %7197 = vmatprep.subr.mxu0 0.0
        %7198 = vmatpush1.msra.mxu0 %v6631
        %7199 = vmatprep.subr.mxu0 0.0
        %7200 = vmatpush1.msra.mxu0 %v6632
        %7201 = vmatprep.subr.mxu0 0.0
        %7202 = vmatpush1.msra.mxu0 %v6633
        %7203 = vmatprep.mubr.f32.mxu0 %v6255
        %7204 = vmatmul.mubr.f32.gmra.mrb[0].mxu0 %v6254
        %v7205 = vpop.f32.mrb[0].mxu0
        %v7206 = vadd.f32 %v6981, %v7205
        %v7207 = vpop.f32.mrb[0].mxu0
        %7208 = vmatprep.mubr.f32.mxu0 %v6264
        %7209 = vmatmul.mubr.f32.gmra.mrb[0].mxu0 %v6263
        %v7210 = vpop.f32.mrb[0].mxu0
        %v7211 = vadd.f32 %v6986, %v7210
        %v7212 = vpop.f32.mrb[0].mxu0
        %7213 = vmatprep.mubr.f32.mxu0 %v6273
        %7214 = vmatmul.mubr.f32.gmra.mrb[0].mxu0 %v6272
        %v7215 = vpop.f32.mrb[0].mxu0
        %v7216 = vadd.f32 %v6991, %v7215
        %v7217 = vpop.f32.mrb[0].mxu0
        %7218 = vmatprep.mubr.f32.mxu0 %v6282
        %7219 = vmatmul.mubr.f32.gmra.mrb[0].mxu0 %v6281
        %v7220 = vpop.f32.mrb[0].mxu0
        %v7221 = vadd.f32 %v6996, %v7220
        %v7222 = vpop.f32.mrb[0].mxu0
        %7223 = vmatprep.mubr.f32.mxu0 %v6291
        %7224 = vmatmul.mubr.f32.gmra.mrb[0].mxu0 %v6290
        %v7225 = vpop.f32.mrb[0].mxu0
        %v7226 = vadd.f32 %v7001, %v7225
        %v7227 = vpop.f32.mrb[0].mxu0
        %7228 = vmatprep.mubr.f32.mxu0 %v6300
        %7229 = vmatmul.mubr.f32.gmra.mrb[0].mxu0 %v6299
        %v7230 = vpop.f32.mrb[0].mxu0
        %v7231 = vadd.f32 %v7006, %v7230
        %v7232 = vpop.f32.mrb[0].mxu0
        %7233 = vmatprep.mubr.f32.mxu0 %v6309
        %7234 = vmatmul.mubr.f32.gmra.mrb[0].mxu0 %v6308
        %v7235 = vpop.f32.mrb[0].mxu0
        %v7236 = vadd.f32 %v7011, %v7235
        %v7237 = vpop.f32.mrb[0].mxu0
        %7238 = vmatprep.mubr.f32.mxu0 %v6318
        %7239 = vmatmul.mubr.f32.gmra.mrb[0].mxu0 %v6317
        %v7240 = vpop.f32.mrb[0].mxu0
        %v7241 = vadd.f32 %v7016, %v7240
        %v7242 = vpop.f32.mrb[0].mxu0
        %7243 = vmatprep.mubr.f32.mxu0 %v6327
        %7244 = vmatmul.mubr.f32.gmra.mrb[0].mxu0 %v6326
        %v7245 = vpop.f32.mrb[0].mxu0
        %v7246 = vadd.f32 %v7021, %v7245
        %v7247 = vpop.f32.mrb[0].mxu0
        %7248 = vmatprep.mubr.f32.mxu0 %v6336
        %7249 = vmatmul.mubr.f32.gmra.mrb[0].mxu0 %v6335
        %v7250 = vpop.f32.mrb[0].mxu0
        %v7251 = vadd.f32 %v7026, %v7250
        %v7252 = vpop.f32.mrb[0].mxu0
        %7253 = vmatprep.mubr.f32.mxu0 %v6345
        %7254 = vmatmul.mubr.f32.gmra.mrb[0].mxu0 %v6344
        %v7255 = vpop.f32.mrb[0].mxu0
        %v7256 = vadd.f32 %v7031, %v7255
        %v7257 = vpop.f32.mrb[0].mxu0
        %7258 = vmatprep.mubr.f32.mxu0 %v6354
        %7259 = vmatmul.mubr.f32.gmra.mrb[0].mxu0 %v6353
        %v7260 = vpop.f32.mrb[0].mxu0
        %v7261 = vadd.f32 %v7036, %v7260
        %v7262 = vpop.f32.mrb[0].mxu0
        %7263 = vmatprep.mubr.f32.mxu0 %v6363
        %7264 = vmatmul.mubr.f32.gmra.mrb[0].mxu0 %v6362
        %v7265 = vpop.f32.mrb[0].mxu0
        %v7266 = vadd.f32 %v7041, %v7265
        %v7267 = vpop.f32.mrb[0].mxu0
        %7268 = vmatprep.mubr.f32.mxu0 %v6372
        %7269 = vmatmul.mubr.f32.gmra.mrb[0].mxu0 %v6371
        %v7270 = vpop.f32.mrb[0].mxu0
        %v7271 = vadd.f32 %v7046, %v7270
        %v7272 = vpop.f32.mrb[0].mxu0
        %7273 = vmatprep.mubr.f32.mxu0 %v6381
        %7274 = vmatmul.mubr.f32.gmra.mrb[0].mxu0 %v6380
        %v7275 = vpop.f32.mrb[0].mxu0
        %v7276 = vadd.f32 %v7051, %v7275
        %v7277 = vpop.f32.mrb[0].mxu0
        %7278 = vmatprep.mubr.f32.mxu0 %v6390
        %7279 = vmatmul.mubr.f32.gmra.mrb[0].mxu0 %v6389
        %v7280 = vpop.f32.mrb[0].mxu0
        %v7281 = vadd.f32 %v7056, %v7280
        %v7282 = vpop.f32.mrb[0].mxu0
        %7283 = vmatprep.mubr.f32.mxu0 %v6399
        %7284 = vmatmul.mubr.f32.gmra.mrb[0].mxu0 %v6398
        %v7285 = vpop.f32.mrb[0].mxu0
        %v7286 = vadd.f32 %v7061, %v7285
        %v7287 = vpop.f32.mrb[0].mxu0
        %7288 = vmatprep.mubr.f32.mxu0 %v6408
        %7289 = vmatmul.mubr.f32.gmra.mrb[0].mxu0 %v6407
        %v7290 = vpop.f32.mrb[0].mxu0
        %v7291 = vadd.f32 %v7066, %v7290
        %v7292 = vpop.f32.mrb[0].mxu0
        %7293 = vmatprep.mubr.f32.mxu0 %v6417
        %7294 = vmatmul.mubr.f32.gmra.mrb[0].mxu0 %v6416
        %v7295 = vpop.f32.mrb[0].mxu0
        %v7296 = vadd.f32 %v7071, %v7295
        %v7297 = vpop.f32.mrb[0].mxu0
        %7298 = vmatprep.mubr.f32.mxu0 %v6426
        %7299 = vmatmul.mubr.f32.gmra.mrb[0].mxu0 %v6425
        %v7300 = vpop.f32.mrb[0].mxu0
        %v7301 = vadd.f32 %v7076, %v7300
        %v7302 = vpop.f32.mrb[0].mxu0
        %7303 = vmatprep.mubr.f32.mxu0 %v6435
        %7304 = vmatmul.mubr.f32.gmra.mrb[0].mxu0 %v6434
        %v7305 = vpop.f32.mrb[0].mxu0
        %v7306 = vadd.f32 %v7081, %v7305
        %v7307 = vpop.f32.mrb[0].mxu0
        %7308 = vmatprep.mubr.f32.mxu0 %v6444
        %7309 = vmatmul.mubr.f32.gmra.mrb[0].mxu0 %v6443
        %v7310 = vpop.f32.mrb[0].mxu0
        %v7311 = vadd.f32 %v7086, %v7310
        %v7312 = vpop.f32.mrb[0].mxu0
        %7313 = vmatprep.mubr.f32.mxu0 %v6453
        %7314 = vmatmul.mubr.f32.gmra.mrb[0].mxu0 %v6452
        %v7315 = vpop.f32.mrb[0].mxu0
        %v7316 = vadd.f32 %v7091, %v7315
        %v7317 = vpop.f32.mrb[0].mxu0
        %7318 = vmatprep.mubr.f32.mxu0 %v6462
        %7319 = vmatmul.mubr.f32.gmra.mrb[0].mxu0 %v6461
        %v7320 = vpop.f32.mrb[0].mxu0
        %v7321 = vadd.f32 %v7096, %v7320
        %v7322 = vpop.f32.mrb[0].mxu0
        %7323 = vmatprep.mubr.f32.mxu0 %v6471
        %7324 = vmatmul.mubr.f32.gmra.mrb[0].mxu0 %v6470
        %v7325 = vpop.f32.mrb[0].mxu0
        %v7326 = vadd.f32 %v7101, %v7325
        %v7327 = vpop.f32.mrb[0].mxu0
        %7328 = vmatprep.mubr.f32.mxu0 %v6480
        %7329 = vmatmul.mubr.f32.gmra.mrb[0].mxu0 %v6479
        %v7330 = vpop.f32.mrb[0].mxu0
        %v7331 = vadd.f32 %v7106, %v7330
        %v7332 = vpop.f32.mrb[0].mxu0
        %7333 = vmatprep.mubr.f32.mxu0 %v6489
        %7334 = vmatmul.mubr.f32.gmra.mrb[0].mxu0 %v6488
        %v7335 = vpop.f32.mrb[0].mxu0
        %v7336 = vadd.f32 %v7111, %v7335
        %v7337 = vpop.f32.mrb[0].mxu0
        %7338 = vmatprep.mubr.f32.mxu0 %v6498
        %7339 = vmatmul.mubr.f32.gmra.mrb[0].mxu0 %v6497
        %v7340 = vpop.f32.mrb[0].mxu0
        %v7341 = vadd.f32 %v7116, %v7340
        %v7342 = vpop.f32.mrb[0].mxu0
        %7343 = vmatprep.mubr.f32.mxu0 %v6507
        %7344 = vmatmul.mubr.f32.gmra.mrb[0].mxu0 %v6506
        %v7345 = vpop.f32.mrb[0].mxu0
        %v7346 = vadd.f32 %v7121, %v7345
        %v7347 = vpop.f32.mrb[0].mxu0
        %7348 = vmatprep.mubr.f32.mxu0 %v6516
        %7349 = vmatmul.mubr.f32.gmra.mrb[0].mxu0 %v6515
        %v7350 = vpop.f32.mrb[0].mxu0
        %v7351 = vadd.f32 %v7126, %v7350
        %v7352 = vpop.f32.mrb[0].mxu0
        %7353 = vmatprep.mubr.f32.mxu0 %v6525
        %7354 = vmatmul.mubr.f32.gmra.mrb[0].mxu0 %v6524
        %v7355 = vpop.f32.mrb[0].mxu0
        %v7356 = vadd.f32 %v7131, %v7355
        %v7357 = vpop.f32.mrb[0].mxu0
        %7358 = vmatprep.mubr.f32.mxu0 %v6534
        %7359 = vmatmul.mubr.f32.gmra.mrb[0].mxu0 %v6533
        %v7360 = vpop.f32.mrb[0].mxu0
        %v7361 = vadd.f32 %v7136, %v7360
        %v7362 = vpop.f32.mrb[0].mxu0
        %7363 = vdwg.mxu0
        %7364 = vmatprep.subr.mxu0 0.0
        %7365 = vmatpush1.msra.mxu0 %v6634
        %7366 = vmatprep.subr.mxu0 0.0
        %7367 = vmatpush1.msra.mxu0 %v6635
        %7368 = vmatprep.subr.mxu0 0.0
        %7369 = vmatpush1.msra.mxu0 %v6636
        %7370 = vmatprep.subr.mxu0 0.0
        %7371 = vmatpush1.msra.mxu0 %v6637
        %7372 = vmatprep.subr.mxu0 0.0
        %7373 = vmatpush1.msra.mxu0 %v6638
        %7374 = vmatprep.subr.mxu0 0.0
        %7375 = vmatpush1.msra.mxu0 %v6639
        %7376 = vmatprep.subr.mxu0 0.0
        %7377 = vmatpush1.msra.mxu0 %v6640
        %7378 = vmatprep.subr.mxu0 0.0
        %7379 = vmatpush1.msra.mxu0 %v6641
        %7380 = vmatprep.subr.mxu0 0.0
        %7381 = vmatpush1.msra.mxu0 %v6642
        %7382 = vmatprep.subr.mxu0 0.0
        %7383 = vmatpush1.msra.mxu0 %v6643
        %7384 = vmatprep.subr.mxu0 0.0
        %7385 = vmatpush1.msra.mxu0 %v6644
        %7386 = vmatprep.subr.mxu0 0.0
        %7387 = vmatpush1.msra.mxu0 %v6645
        %7388 = vmatprep.subr.mxu0 0.0
        %7389 = vmatpush1.msra.mxu0 %v6646
        %7390 = vmatprep.subr.mxu0 0.0
        %7391 = vmatpush1.msra.mxu0 %v6647
        %7392 = vmatprep.subr.mxu0 0.0
        %7393 = vmatpush1.msra.mxu0 %v6648
        %7394 = vmatprep.subr.mxu0 0.0
        %7395 = vmatpush1.msra.mxu0 %v6649
        %7396 = vmatprep.subr.mxu0 0.0
        %7397 = vmatpush1.msra.mxu0 %v6650
        %7398 = vmatprep.subr.mxu0 0.0
        %7399 = vmatpush1.msra.mxu0 %v6651
        %7400 = vmatprep.subr.mxu0 0.0
        %7401 = vmatpush1.msra.mxu0 %v6652
        %7402 = vmatprep.subr.mxu0 0.0
        %7403 = vmatpush1.msra.mxu0 %v6653
        %7404 = vmatprep.subr.mxu0 0.0
        %7405 = vmatpush1.msra.mxu0 %v6654
        %7406 = vmatprep.subr.mxu0 0.0
        %7407 = vmatpush1.msra.mxu0 %v6655
        %7408 = vmatprep.subr.mxu0 0.0
        %7409 = vmatpush1.msra.mxu0 %v6656
        %7410 = vmatprep.subr.mxu0 0.0
        %7411 = vmatpush1.msra.mxu0 %v6657
        %7412 = vmatprep.subr.mxu0 0.0
        %7413 = vmatpush1.msra.mxu0 %v6658
        %7414 = vmatprep.subr.mxu0 0.0
        %7415 = vmatpush1.msra.mxu0 %v6659
        %7416 = vmatprep.subr.mxu0 0.0
        %7417 = vmatpush1.msra.mxu0 %v6660
        %7418 = vmatprep.subr.mxu0 0.0
        %7419 = vmatpush1.msra.mxu0 %v6661
        %7420 = vmatprep.subr.mxu0 0.0
        %7421 = vmatpush1.msra.mxu0 %v6662
        %7422 = vmatprep.subr.mxu0 0.0
        %7423 = vmatpush1.msra.mxu0 %v6663
        %7424 = vmatprep.subr.mxu0 0.0
        %7425 = vmatpush1.msra.mxu0 %v6664
        %7426 = vmatprep.subr.mxu0 0.0
        %7427 = vmatpush1.msra.mxu0 %v6665
        %7428 = vmatprep.mubr.f32.mxu0 %v6257
        %7429 = vmatmul.mubr.f32.gmra.mrb[0].mxu0 %v6256
        %v7430 = vpop.f32.mrb[0].mxu0
        %v7431 = vadd.f32 %v7206, %v7430
        %v7432 = vpop.f32.mrb[0].mxu0
        %7433 = vmatprep.mubr.f32.mxu0 %v6266
        %7434 = vmatmul.mubr.f32.gmra.mrb[0].mxu0 %v6265
        %v7435 = vpop.f32.mrb[0].mxu0
        %v7436 = vadd.f32 %v7211, %v7435
        %v7437 = vpop.f32.mrb[0].mxu0
        %7438 = vmatprep.mubr.f32.mxu0 %v6275
        %7439 = vmatmul.mubr.f32.gmra.mrb[0].mxu0 %v6274
        %v7440 = vpop.f32.mrb[0].mxu0
        %v7441 = vadd.f32 %v7216, %v7440
        %v7442 = vpop.f32.mrb[0].mxu0
        %7443 = vmatprep.mubr.f32.mxu0 %v6284
        %7444 = vmatmul.mubr.f32.gmra.mrb[0].mxu0 %v6283
        %v7445 = vpop.f32.mrb[0].mxu0
        %v7446 = vadd.f32 %v7221, %v7445
        %v7447 = vpop.f32.mrb[0].mxu0
        %7448 = vmatprep.mubr.f32.mxu0 %v6293
        %7449 = vmatmul.mubr.f32.gmra.mrb[0].mxu0 %v6292
        %v7450 = vpop.f32.mrb[0].mxu0
        %v7451 = vadd.f32 %v7226, %v7450
        %v7452 = vpop.f32.mrb[0].mxu0
        %7453 = vmatprep.mubr.f32.mxu0 %v6302
        %7454 = vmatmul.mubr.f32.gmra.mrb[0].mxu0 %v6301
        %v7455 = vpop.f32.mrb[0].mxu0
        %v7456 = vadd.f32 %v7231, %v7455
        %v7457 = vpop.f32.mrb[0].mxu0
        %7458 = vmatprep.mubr.f32.mxu0 %v6311
        %7459 = vmatmul.mubr.f32.gmra.mrb[0].mxu0 %v6310
        %v7460 = vpop.f32.mrb[0].mxu0
        %v7461 = vadd.f32 %v7236, %v7460
        %v7462 = vpop.f32.mrb[0].mxu0
        %7463 = vmatprep.mubr.f32.mxu0 %v6320
        %7464 = vmatmul.mubr.f32.gmra.mrb[0].mxu0 %v6319
        %v7465 = vpop.f32.mrb[0].mxu0
        %v7466 = vadd.f32 %v7241, %v7465
        %v7467 = vpop.f32.mrb[0].mxu0
        %7468 = vmatprep.mubr.f32.mxu0 %v6329
        %7469 = vmatmul.mubr.f32.gmra.mrb[0].mxu0 %v6328
        %v7470 = vpop.f32.mrb[0].mxu0
        %v7471 = vadd.f32 %v7246, %v7470
        %v7472 = vpop.f32.mrb[0].mxu0
        %7473 = vmatprep.mubr.f32.mxu0 %v6338
        %7474 = vmatmul.mubr.f32.gmra.mrb[0].mxu0 %v6337
        %v7475 = vpop.f32.mrb[0].mxu0
        %v7476 = vadd.f32 %v7251, %v7475
        %v7477 = vpop.f32.mrb[0].mxu0
        %7478 = vmatprep.mubr.f32.mxu0 %v6347
        %7479 = vmatmul.mubr.f32.gmra.mrb[0].mxu0 %v6346
        %v7480 = vpop.f32.mrb[0].mxu0
        %v7481 = vadd.f32 %v7256, %v7480
        %v7482 = vpop.f32.mrb[0].mxu0
        %7483 = vmatprep.mubr.f32.mxu0 %v6356
        %7484 = vmatmul.mubr.f32.gmra.mrb[0].mxu0 %v6355
        %v7485 = vpop.f32.mrb[0].mxu0
        %v7486 = vadd.f32 %v7261, %v7485
        %v7487 = vpop.f32.mrb[0].mxu0
        %7488 = vmatprep.mubr.f32.mxu0 %v6365
        %7489 = vmatmul.mubr.f32.gmra.mrb[0].mxu0 %v6364
        %v7490 = vpop.f32.mrb[0].mxu0
        %v7491 = vadd.f32 %v7266, %v7490
        %v7492 = vpop.f32.mrb[0].mxu0
        %7493 = vmatprep.mubr.f32.mxu0 %v6374
        %7494 = vmatmul.mubr.f32.gmra.mrb[0].mxu0 %v6373
        %v7495 = vpop.f32.mrb[0].mxu0
        %v7496 = vadd.f32 %v7271, %v7495
        %v7497 = vpop.f32.mrb[0].mxu0
        %7498 = vmatprep.mubr.f32.mxu0 %v6383
        %7499 = vmatmul.mubr.f32.gmra.mrb[0].mxu0 %v6382
        %v7500 = vpop.f32.mrb[0].mxu0
        %v7501 = vadd.f32 %v7276, %v7500
        %v7502 = vpop.f32.mrb[0].mxu0
        %7503 = vmatprep.mubr.f32.mxu0 %v6392
        %7504 = vmatmul.mubr.f32.gmra.mrb[0].mxu0 %v6391
        %v7505 = vpop.f32.mrb[0].mxu0
        %v7506 = vadd.f32 %v7281, %v7505
        %v7507 = vpop.f32.mrb[0].mxu0
        %7508 = vmatprep.mubr.f32.mxu0 %v6401
        %7509 = vmatmul.mubr.f32.gmra.mrb[0].mxu0 %v6400
        %v7510 = vpop.f32.mrb[0].mxu0
        %v7511 = vadd.f32 %v7286, %v7510
        %v7512 = vpop.f32.mrb[0].mxu0
        %7513 = vmatprep.mubr.f32.mxu0 %v6410
        %7514 = vmatmul.mubr.f32.gmra.mrb[0].mxu0 %v6409
        %v7515 = vpop.f32.mrb[0].mxu0
        %v7516 = vadd.f32 %v7291, %v7515
        %v7517 = vpop.f32.mrb[0].mxu0
        %7518 = vmatprep.mubr.f32.mxu0 %v6419
        %7519 = vmatmul.mubr.f32.gmra.mrb[0].mxu0 %v6418
        %v7520 = vpop.f32.mrb[0].mxu0
        %v7521 = vadd.f32 %v7296, %v7520
        %v7522 = vpop.f32.mrb[0].mxu0
        %7523 = vmatprep.mubr.f32.mxu0 %v6428
        %7524 = vmatmul.mubr.f32.gmra.mrb[0].mxu0 %v6427
        %v7525 = vpop.f32.mrb[0].mxu0
        %v7526 = vadd.f32 %v7301, %v7525
        %v7527 = vpop.f32.mrb[0].mxu0
        %7528 = vmatprep.mubr.f32.mxu0 %v6437
        %7529 = vmatmul.mubr.f32.gmra.mrb[0].mxu0 %v6436
        %v7530 = vpop.f32.mrb[0].mxu0
        %v7531 = vadd.f32 %v7306, %v7530
        %v7532 = vpop.f32.mrb[0].mxu0
        %7533 = vmatprep.mubr.f32.mxu0 %v6446
        %7534 = vmatmul.mubr.f32.gmra.mrb[0].mxu0 %v6445
        %v7535 = vpop.f32.mrb[0].mxu0
        %v7536 = vadd.f32 %v7311, %v7535
        %v7537 = vpop.f32.mrb[0].mxu0
        %7538 = vmatprep.mubr.f32.mxu0 %v6455
        %7539 = vmatmul.mubr.f32.gmra.mrb[0].mxu0 %v6454
        %v7540 = vpop.f32.mrb[0].mxu0
        %v7541 = vadd.f32 %v7316, %v7540
        %v7542 = vpop.f32.mrb[0].mxu0
        %7543 = vmatprep.mubr.f32.mxu0 %v6464
        %7544 = vmatmul.mubr.f32.gmra.mrb[0].mxu0 %v6463
        %v7545 = vpop.f32.mrb[0].mxu0
        %v7546 = vadd.f32 %v7321, %v7545
        %v7547 = vpop.f32.mrb[0].mxu0
        %7548 = vmatprep.mubr.f32.mxu0 %v6473
        %7549 = vmatmul.mubr.f32.gmra.mrb[0].mxu0 %v6472
        %v7550 = vpop.f32.mrb[0].mxu0
        %v7551 = vadd.f32 %v7326, %v7550
        %v7552 = vpop.f32.mrb[0].mxu0
        %7553 = vmatprep.mubr.f32.mxu0 %v6482
        %7554 = vmatmul.mubr.f32.gmra.mrb[0].mxu0 %v6481
        %v7555 = vpop.f32.mrb[0].mxu0
        %v7556 = vadd.f32 %v7331, %v7555
        %v7557 = vpop.f32.mrb[0].mxu0
        %7558 = vmatprep.mubr.f32.mxu0 %v6491
        %7559 = vmatmul.mubr.f32.gmra.mrb[0].mxu0 %v6490
        %v7560 = vpop.f32.mrb[0].mxu0
        %v7561 = vadd.f32 %v7336, %v7560
        %v7562 = vpop.f32.mrb[0].mxu0
        %7563 = vmatprep.mubr.f32.mxu0 %v6500
        %7564 = vmatmul.mubr.f32.gmra.mrb[0].mxu0 %v6499
        %v7565 = vpop.f32.mrb[0].mxu0
        %v7566 = vadd.f32 %v7341, %v7565
        %v7567 = vpop.f32.mrb[0].mxu0
        %7568 = vmatprep.mubr.f32.mxu0 %v6509
        %7569 = vmatmul.mubr.f32.gmra.mrb[0].mxu0 %v6508
        %v7570 = vpop.f32.mrb[0].mxu0
        %v7571 = vadd.f32 %v7346, %v7570
        %v7572 = vpop.f32.mrb[0].mxu0
        %7573 = vmatprep.mubr.f32.mxu0 %v6518
        %7574 = vmatmul.mubr.f32.gmra.mrb[0].mxu0 %v6517
        %v7575 = vpop.f32.mrb[0].mxu0
        %v7576 = vadd.f32 %v7351, %v7575
        %v7577 = vpop.f32.mrb[0].mxu0
        %7578 = vmatprep.mubr.f32.mxu0 %v6527
        %7579 = vmatmul.mubr.f32.gmra.mrb[0].mxu0 %v6526
        %v7580 = vpop.f32.mrb[0].mxu0
        %v7581 = vadd.f32 %v7356, %v7580
        %v7582 = vpop.f32.mrb[0].mxu0
        %7583 = vmatprep.mubr.f32.mxu0 %v6536
        %7584 = vmatmul.mubr.f32.gmra.mrb[0].mxu0 %v6535
        %v7585 = vpop.f32.mrb[0].mxu0
        %v7586 = vadd.f32 %v7361, %v7585
        %v7587 = vpop.f32.mrb[0].mxu0
        %7588 = vdwg.mxu0
        %7589 = vmatprep.subr.mxu0 0.0
        %7590 = vmatpush1.msra.mxu0 %v6666
        %7591 = vmatprep.subr.mxu0 0.0
        %7592 = vmatpush1.msra.mxu0 %v6667
        %7593 = vmatprep.subr.mxu0 0.0
        %7594 = vmatpush1.msra.mxu0 %v6668
        %7595 = vmatprep.subr.mxu0 0.0
        %7596 = vmatpush1.msra.mxu0 %v6669
        %7597 = vmatprep.subr.mxu0 0.0
        %7598 = vmatpush1.msra.mxu0 %v6670
        %7599 = vmatprep.subr.mxu0 0.0
        %7600 = vmatpush1.msra.mxu0 %v6671
        %7601 = vmatprep.subr.mxu0 0.0
        %7602 = vmatpush1.msra.mxu0 %v6672
        %7603 = vmatprep.subr.mxu0 0.0
        %7604 = vmatpush1.msra.mxu0 %v6673
        %7605 = vmatprep.subr.mxu0 0.0
        %7606 = vmatpush1.msra.mxu0 %v6674
        %7607 = vmatprep.subr.mxu0 0.0
        %7608 = vmatpush1.msra.mxu0 %v6675
        %7609 = vmatprep.subr.mxu0 0.0
        %7610 = vmatpush1.msra.mxu0 %v6676
        %7611 = vmatprep.subr.mxu0 0.0
        %7612 = vmatpush1.msra.mxu0 %v6677
        %7613 = vmatprep.subr.mxu0 0.0
        %7614 = vmatpush1.msra.mxu0 %v6678
        %7615 = vmatprep.subr.mxu0 0.0
        %7616 = vmatpush1.msra.mxu0 %v6679
        %7617 = vmatprep.subr.mxu0 0.0
        %7618 = vmatpush1.msra.mxu0 %v6680
        %7619 = vmatprep.subr.mxu0 0.0
        %7620 = vmatpush1.msra.mxu0 %v6681
        %7621 = vmatprep.subr.mxu0 0.0
        %7622 = vmatpush1.msra.mxu0 0.0
        %7623 = vmatprep.subr.mxu0 0.0
        %7624 = vmatpush1.msra.mxu0 0.0
        %7625 = vmatprep.subr.mxu0 0.0
        %7626 = vmatpush1.msra.mxu0 0.0
        %7627 = vmatprep.subr.mxu0 0.0
        %7628 = vmatpush1.msra.mxu0 0.0
        %7629 = vmatprep.subr.mxu0 0.0
        %7630 = vmatpush1.msra.mxu0 0.0
        %7631 = vmatprep.subr.mxu0 0.0
        %7632 = vmatpush1.msra.mxu0 0.0
        %7633 = vmatprep.subr.mxu0 0.0
        %7634 = vmatpush1.msra.mxu0 0.0
        %7635 = vmatprep.subr.mxu0 0.0
        %7636 = vmatpush1.msra.mxu0 0.0
        %7637 = vmatprep.subr.mxu0 0.0
        %7638 = vmatpush1.msra.mxu0 0.0
        %7639 = vmatprep.subr.mxu0 0.0
        %7640 = vmatpush1.msra.mxu0 0.0
        %7641 = vmatprep.subr.mxu0 0.0
        %7642 = vmatpush1.msra.mxu0 0.0
        %7643 = vmatprep.subr.mxu0 0.0
        %7644 = vmatpush1.msra.mxu0 0.0
        %7645 = vmatprep.subr.mxu0 0.0
        %7646 = vmatpush1.msra.mxu0 0.0
        %7647 = vmatprep.subr.mxu0 0.0
        %7648 = vmatpush1.msra.mxu0 0.0
        %7649 = vmatprep.subr.mxu0 0.0
        %7650 = vmatpush1.msra.mxu0 0.0
        %7651 = vmatprep.subr.mxu0 0.0
        %7652 = vmatpush1.msra.mxu0 0.0
        %7653 = vmatprep.mubr.f32.mxu0 0.0
        %7654 = vmatmul.mubr.f32.gmra.mrb[0].mxu0 %v6258
        %v7655 = vpop.f32.mrb[0].mxu0
        %v7656 = vadd.f32 %v7431, %v7655
        %v7657 = vpop.f32.mrb[0].mxu0
        %7658 = vmatprep.mubr.f32.mxu0 0.0
        %7659 = vmatmul.mubr.f32.gmra.mrb[0].mxu0 %v6267
        %v7660 = vpop.f32.mrb[0].mxu0
        %v7661 = vadd.f32 %v7436, %v7660
        %v7662 = vpop.f32.mrb[0].mxu0
        %7663 = vmatprep.mubr.f32.mxu0 0.0
        %7664 = vmatmul.mubr.f32.gmra.mrb[0].mxu0 %v6276
        %v7665 = vpop.f32.mrb[0].mxu0
        %v7666 = vadd.f32 %v7441, %v7665
        %v7667 = vpop.f32.mrb[0].mxu0
        %7668 = vmatprep.mubr.f32.mxu0 0.0
        %7669 = vmatmul.mubr.f32.gmra.mrb[0].mxu0 %v6285
        %v7670 = vpop.f32.mrb[0].mxu0
        %v7671 = vadd.f32 %v7446, %v7670
        %v7672 = vpop.f32.mrb[0].mxu0
        %7673 = vmatprep.mubr.f32.mxu0 0.0
        %7674 = vmatmul.mubr.f32.gmra.mrb[0].mxu0 %v6294
        %v7675 = vpop.f32.mrb[0].mxu0
        %v7676 = vadd.f32 %v7451, %v7675
        %v7677 = vpop.f32.mrb[0].mxu0
        %7678 = vmatprep.mubr.f32.mxu0 0.0
        %7679 = vmatmul.mubr.f32.gmra.mrb[0].mxu0 %v6303
        %v7680 = vpop.f32.mrb[0].mxu0
        %v7681 = vadd.f32 %v7456, %v7680
        %v7682 = vpop.f32.mrb[0].mxu0
        %7683 = vmatprep.mubr.f32.mxu0 0.0
        %7684 = vmatmul.mubr.f32.gmra.mrb[0].mxu0 %v6312
        %v7685 = vpop.f32.mrb[0].mxu0
        %v7686 = vadd.f32 %v7461, %v7685
        %v7687 = vpop.f32.mrb[0].mxu0
        %7688 = vmatprep.mubr.f32.mxu0 0.0
        %7689 = vmatmul.mubr.f32.gmra.mrb[0].mxu0 %v6321
        %v7690 = vpop.f32.mrb[0].mxu0
        %v7691 = vadd.f32 %v7466, %v7690
        %v7692 = vpop.f32.mrb[0].mxu0
        %7693 = vmatprep.mubr.f32.mxu0 0.0
        %7694 = vmatmul.mubr.f32.gmra.mrb[0].mxu0 %v6330
        %v7695 = vpop.f32.mrb[0].mxu0
        %v7696 = vadd.f32 %v7471, %v7695
        %v7697 = vpop.f32.mrb[0].mxu0
        %7698 = vmatprep.mubr.f32.mxu0 0.0
        %7699 = vmatmul.mubr.f32.gmra.mrb[0].mxu0 %v6339
        %v7700 = vpop.f32.mrb[0].mxu0
        %v7701 = vadd.f32 %v7476, %v7700
        %v7702 = vpop.f32.mrb[0].mxu0
        %7703 = vmatprep.mubr.f32.mxu0 0.0
        %7704 = vmatmul.mubr.f32.gmra.mrb[0].mxu0 %v6348
        %v7705 = vpop.f32.mrb[0].mxu0
        %v7706 = vadd.f32 %v7481, %v7705
        %v7707 = vpop.f32.mrb[0].mxu0
        %7708 = vmatprep.mubr.f32.mxu0 0.0
        %7709 = vmatmul.mubr.f32.gmra.mrb[0].mxu0 %v6357
        %v7710 = vpop.f32.mrb[0].mxu0
        %v7711 = vadd.f32 %v7486, %v7710
        %v7712 = vpop.f32.mrb[0].mxu0
        %7713 = vmatprep.mubr.f32.mxu0 0.0
        %7714 = vmatmul.mubr.f32.gmra.mrb[0].mxu0 %v6366
        %v7715 = vpop.f32.mrb[0].mxu0
        %v7716 = vadd.f32 %v7491, %v7715
        %v7717 = vpop.f32.mrb[0].mxu0
        %7718 = vmatprep.mubr.f32.mxu0 0.0
        %7719 = vmatmul.mubr.f32.gmra.mrb[0].mxu0 %v6375
        %v7720 = vpop.f32.mrb[0].mxu0
        %v7721 = vadd.f32 %v7496, %v7720
        %v7722 = vpop.f32.mrb[0].mxu0
        %7723 = vmatprep.mubr.f32.mxu0 0.0
        %7724 = vmatmul.mubr.f32.gmra.mrb[0].mxu0 %v6384
        %v7725 = vpop.f32.mrb[0].mxu0
        %v7726 = vadd.f32 %v7501, %v7725
        %v7727 = vpop.f32.mrb[0].mxu0
        %7728 = vmatprep.mubr.f32.mxu0 0.0
        %7729 = vmatmul.mubr.f32.gmra.mrb[0].mxu0 %v6393
        %v7730 = vpop.f32.mrb[0].mxu0
        %v7731 = vadd.f32 %v7506, %v7730
        %v7732 = vpop.f32.mrb[0].mxu0
        %7733 = vmatprep.mubr.f32.mxu0 0.0
        %7734 = vmatmul.mubr.f32.gmra.mrb[0].mxu0 %v6402
        %v7735 = vpop.f32.mrb[0].mxu0
        %v7736 = vadd.f32 %v7511, %v7735
        %v7737 = vpop.f32.mrb[0].mxu0
        %7738 = vmatprep.mubr.f32.mxu0 0.0
        %7739 = vmatmul.mubr.f32.gmra.mrb[0].mxu0 %v6411
        %v7740 = vpop.f32.mrb[0].mxu0
        %v7741 = vadd.f32 %v7516, %v7740
        %v7742 = vpop.f32.mrb[0].mxu0
        %7743 = vmatprep.mubr.f32.mxu0 0.0
        %7744 = vmatmul.mubr.f32.gmra.mrb[0].mxu0 %v6420
        %v7745 = vpop.f32.mrb[0].mxu0
        %v7746 = vadd.f32 %v7521, %v7745
        %v7747 = vpop.f32.mrb[0].mxu0
        %7748 = vmatprep.mubr.f32.mxu0 0.0
        %7749 = vmatmul.mubr.f32.gmra.mrb[0].mxu0 %v6429
        %v7750 = vpop.f32.mrb[0].mxu0
        %v7751 = vadd.f32 %v7526, %v7750
        %v7752 = vpop.f32.mrb[0].mxu0
        %7753 = vmatprep.mubr.f32.mxu0 0.0
        %7754 = vmatmul.mubr.f32.gmra.mrb[0].mxu0 %v6438
        %v7755 = vpop.f32.mrb[0].mxu0
        %v7756 = vadd.f32 %v7531, %v7755
        %v7757 = vpop.f32.mrb[0].mxu0
        %7758 = vmatprep.mubr.f32.mxu0 0.0
        %7759 = vmatmul.mubr.f32.gmra.mrb[0].mxu0 %v6447
        %v7760 = vpop.f32.mrb[0].mxu0
        %v7761 = vadd.f32 %v7536, %v7760
        %v7762 = vpop.f32.mrb[0].mxu0
        %7763 = vmatprep.mubr.f32.mxu0 0.0
        %7764 = vmatmul.mubr.f32.gmra.mrb[0].mxu0 %v6456
        %v7765 = vpop.f32.mrb[0].mxu0
        %v7766 = vadd.f32 %v7541, %v7765
        %v7767 = vpop.f32.mrb[0].mxu0
        %7768 = vmatprep.mubr.f32.mxu0 0.0
        %7769 = vmatmul.mubr.f32.gmra.mrb[0].mxu0 %v6465
        %v7770 = vpop.f32.mrb[0].mxu0
        %v7771 = vadd.f32 %v7546, %v7770
        %v7772 = vpop.f32.mrb[0].mxu0
        %7773 = vmatprep.mubr.f32.mxu0 0.0
        %7774 = vmatmul.mubr.f32.gmra.mrb[0].mxu0 %v6474
        %v7775 = vpop.f32.mrb[0].mxu0
        %v7776 = vadd.f32 %v7551, %v7775
        %v7777 = vpop.f32.mrb[0].mxu0
        %7778 = vmatprep.mubr.f32.mxu0 0.0
        %7779 = vmatmul.mubr.f32.gmra.mrb[0].mxu0 %v6483
        %v7780 = vpop.f32.mrb[0].mxu0
        %v7781 = vadd.f32 %v7556, %v7780
        %v7782 = vpop.f32.mrb[0].mxu0
        %7783 = vmatprep.mubr.f32.mxu0 0.0
        %7784 = vmatmul.mubr.f32.gmra.mrb[0].mxu0 %v6492
        %v7785 = vpop.f32.mrb[0].mxu0
        %v7786 = vadd.f32 %v7561, %v7785
        %v7787 = vpop.f32.mrb[0].mxu0
        %7788 = vmatprep.mubr.f32.mxu0 0.0
        %7789 = vmatmul.mubr.f32.gmra.mrb[0].mxu0 %v6501
        %v7790 = vpop.f32.mrb[0].mxu0
        %v7791 = vadd.f32 %v7566, %v7790
        %v7792 = vpop.f32.mrb[0].mxu0
        %7793 = vmatprep.mubr.f32.mxu0 0.0
        %7794 = vmatmul.mubr.f32.gmra.mrb[0].mxu0 %v6510
        %v7795 = vpop.f32.mrb[0].mxu0
        %v7796 = vadd.f32 %v7571, %v7795
        %v7797 = vpop.f32.mrb[0].mxu0
        %7798 = vmatprep.mubr.f32.mxu0 0.0
        %7799 = vmatmul.mubr.f32.gmra.mrb[0].mxu0 %v6519
        %v7800 = vpop.f32.mrb[0].mxu0
        %v7801 = vadd.f32 %v7576, %v7800
        %v7802 = vpop.f32.mrb[0].mxu0
        %7803 = vmatprep.mubr.f32.mxu0 0.0
        %7804 = vmatmul.mubr.f32.gmra.mrb[0].mxu0 %v6528
        %v7805 = vpop.f32.mrb[0].mxu0
        %v7806 = vadd.f32 %v7581, %v7805
        %v7807 = vpop.f32.mrb[0].mxu0
        %7808 = vmatprep.mubr.f32.mxu0 0.0
        %7809 = vmatmul.mubr.f32.gmra.mrb[0].mxu0 %v6537
        %v7810 = vpop.f32.mrb[0].mxu0
        %v7811 = vadd.f32 %v7586, %v7810
        %v7812 = vpop.f32.mrb[0].mxu0
        %7813 = vdwg.mxu0
        %7814 = vst [vmem:[%s526] sm:$0xff] %v7656
        %7815 = vst [vmem:[%s526 + $0x8] sm:$0xff] %v7661
        %7816 = vst [vmem:[%s526 + $0x10] sm:$0xff] %v7666
        %7817 = vst [vmem:[%s526 + $0x18] sm:$0xff] %v7671
        %7818 = vst [vmem:[%s526 + $0x20] sm:$0xff] %v7676
        %7819 = vst [vmem:[%s526 + $0x28] sm:$0xff] %v7681
        %7820 = vst [vmem:[%s526 + $0x30] sm:$0xff] %v7686
        %7821 = vst [vmem:[%s526 + $0x38] sm:$0xff] %v7691
        %7822 = vst [vmem:[%s526 + $0x40] sm:$0xff] %v7696
        %7823 = vst [vmem:[%s526 + $0x48] sm:$0xff] %v7701
        %7824 = vst [vmem:[%s526 + $0x50] sm:$0xff] %v7706
        %7825 = vst [vmem:[%s526 + $0x58] sm:$0xff] %v7711
        %7826 = vst [vmem:[%s526 + $0x60] sm:$0xff] %v7716
        %7827 = vst [vmem:[%s526 + $0x68] sm:$0xff] %v7721
        %7828 = vst [vmem:[%s526 + $0x70] sm:$0xff] %v7726
        %7829 = vst [vmem:[%s526 + $0x78] sm:$0xff] %v7731
        %7830 = vst [vmem:[%s526 + $0x80] sm:$0xff] %v7736
        %7831 = vst [vmem:[%s526 + $0x88] sm:$0xff] %v7741
        %7832 = vst [vmem:[%s526 + $0x90] sm:$0xff] %v7746
        %7833 = vst [vmem:[%s526 + $0x98] sm:$0xff] %v7751
        %7834 = vst [vmem:[%s526 + $0xa0] sm:$0xff] %v7756
        %7835 = vst [vmem:[%s526 + $0xa8] sm:$0xff] %v7761
        %7836 = vst [vmem:[%s526 + $0xb0] sm:$0xff] %v7766
        %7837 = vst [vmem:[%s526 + $0xb8] sm:$0xff] %v7771
        %7838 = vst [vmem:[%s526 + $0xc0] sm:$0xff] %v7776
        %7839 = vst [vmem:[%s526 + $0xc8] sm:$0xff] %v7781
        %7840 = vst [vmem:[%s526 + $0xd0] sm:$0xff] %v7786
        %7841 = vst [vmem:[%s526 + $0xd8] sm:$0xff] %v7791
        %7842 = vst [vmem:[%s526 + $0xe0] sm:$0xff] %v7796
        %7843 = vst [vmem:[%s526 + $0xe8] sm:$0xff] %v7801
        %7844 = vst [vmem:[%s526 + $0xf0] sm:$0xff] %v7806
        %7845 = vst [vmem:[%s526 + $0xf8] sm:$0xff] %v7811
        %p7846 = scmp.lt.s32.totalorder %s28, 1
        %s7847 = scalar_select %p7846, %s28, 1
        %s7848 = smul.addr %s7847, 32
        %s7849 = smul.addr %s7848, 8
        %s7850 = scalar_lea.vmem %s11, %s7849
        // Predicated region
        $region105: #{decoder_forward.1} parent=63 // pred_check
          %p7851 = pneg %p282
        $region106: #{decoder_forward.1} parent=63 // pred_check_branch
          %7853 = sbr.rel (%p7851) target = $region108
        $region107: #{decoder_forward.1} parent=63 // pred_region
          _
        $region108: #{decoder_forward.1} parent=63 // pred_fallthru
          _
      $region64: #{decoder_forward.1} parent=5 // pred_fallthru
        _
      %p7854 = scmp.le.s32.totalorder 2, %s23
      // Predicated region
      $region109: #{decoder_forward.1} parent=5 // pred_check
        %p7855 = pneg %p7854
      $region110: #{decoder_forward.1} parent=5 // pred_check_branch
        %7857 = sbr.rel (%p7855) target = $region112
      $region111: #{decoder_forward.1} parent=5 // pred_region
        %s7858 = ssub.s32 %s23, 2
        // Predicated region
        $region113: #{decoder_forward.1} parent=111 // pred_check
          %p7859 = pneg %p288
        $region114: #{decoder_forward.1} parent=111 // pred_check_branch
          %7861 = sbr.rel (%p7859) target = $region116
        $region115: #{decoder_forward.1} parent=111 // pred_region
          %p7862 = scmp.lt.s32.totalorder %s29, 1
          %s7863 = scalar_select %p7862, %s29, 1
          %s7864 = smul.addr %s7863, 32
          %s7865 = smul.addr %s7864, 8
          %s7866 = scalar_lea.vmem %s11, %s7865
        $region116: #{decoder_forward.1} parent=111 // pred_fallthru
          _
      $region112: #{decoder_forward.1} parent=5 // pred_fallthru
        _
    $region6: #{decoder_forward.1} parent=1 // loop_footer
      %s27 = sadd.s32 1, %s23
    $region7: #{decoder_forward.1} parent=1 // loop_footer_branch
      %22 = sbr.rel target = $region3
    $region8: #{decoder_forward.1} parent=1 // loop_exit
      _
    %7867 = vsyncpa [#allocation7], 1
    %s7868 = scalar_lea.sflag [#allocation7], 1
    %7869 = vsyncpa %s7868, 1
    %7870 = vsyncpa [#allocation9], 1
    %7871 = vsyncpa [#allocation12], 1
    %7872 = vsyncpa [#allocation15], 1
    %7873 = vsyncpa [#allocation18], 1
    %7874 = vsyncpa [#allocation21], 1

</llo_original>
